<compile_context>
chip_gen: v5e
topology: v5e:2x2
jax: 0.10.0
libtpu: 0.0.40
codegen_flags: <defaults>
</compile_context>

<pallas_src>
import functools

import jax
import jax.numpy as jnp
import numpy as np
from jax import lax
from jax.experimental import pallas as pl
from jax.experimental.pallas import tpu as pltpu


def _sigmoid(v):
    # exp lowers to the EUP slot; exact reciprocal keeps full f32 accuracy.
    return pl.reciprocal(1.0 + jnp.exp(-v), approx=False)


# ----------------------------------------------------------------------------
# Tile-size / VMEM helpers.
# ----------------------------------------------------------------------------
_VMEM_TILE_BUDGET = 24 << 20       # double-buffered working-set target (v7x-safe)


def _pick_spatial_tile(S, C, max_tile=8192, budget_bytes=_VMEM_TILE_BUDGET):
    """Largest multiple-of-128 divisor of S whose double-buffered in+out
    blocks (worst of kernels 1 and 3) fit the VMEM budget."""
    per_lane = 2 * 4 * max(C + 2, 2 * C + 1)      # f32, 2 buffers per block
    cap = max(128, min(max_tile, budget_bytes // per_lane))
    best = 0
    t = 128
    while t <= cap:
        if S % t == 0:
            best = t
        t += 128
    if best:
        return best
    # No multiple-of-128 divisor under the cap: fall back to the full extent
    # (still correct, but single-buffers the whole slab).
    # TODO(synk): mask the ragged tail in-kernel instead of falling back.
    return S


def _compiler_params(sems, tile_bytes):
    # Explicit scoped-VMEM limit: at least the default 32 MiB, plus headroom
    # over the actual double-buffered working set of this call.
    limit = int(max(tile_bytes + (4 << 20), 32 << 20))
    return pltpu.CompilerParams(dimension_semantics=sems,
                                vmem_limit_bytes=limit)


# ----------------------------------------------------------------------------
# Kernel 1: spatial avg/max pooling (tiled, accumulated) + channel-MLP,
#           plus the per-tile channel-wise mean/max maps for SpatialAttention.
# ----------------------------------------------------------------------------
def _pool_mlp_kernel(x_ref, w1a_ref, w1b_ref, b1_ref, w2_ref, b2_ref,
                     ca_ref, pooled_ref, sum_sc, max_sc, *, inv_spatial):
    # NOTE: the accumulator init/finalize below requires the S-tile axis to be
    # the innermost (last) grid axis so every n visits s = 0 .. nS-1 in order.
    s_idx = pl.program_id(1)

    @pl.when(s_idx == 0)
    def _init():
        sum_sc[...] = jnp.zeros_like(sum_sc)
        max_sc[...] = jnp.full_like(max_sc, -jnp.inf)

    x = x_ref[0]                                            # (C, tS)

    # Running spatial reductions for the channel-attention branch.
    sum_sc[...] = sum_sc[...] + jnp.sum(x, axis=-1, keepdims=True)   # (C, 1)
    max_sc[...] = jnp.maximum(max_sc[...], jnp.max(x, axis=-1, keepdims=True))

    # Channel-wise mean / max maps for the spatial-attention branch: two
    # separate row stores (no sublane concatenate / relayout).
    pooled_ref[0, 0:1] = jnp.mean(x, axis=0, keepdims=True)          # (1, tS)
    pooled_ref[0, 1:2] = jnp.max(x, axis=0, keepdims=True)           # (1, tS)

    @pl.when(s_idx == pl.num_programs(1) - 1)
    def _finalize():
        avg_col = sum_sc[...] * inv_spatial                 # (C, 1)
        max_col = max_sc[...]                               # (C, 1)
        # fc1(concat([avg, max])) == W1a @ avg + W1b @ max + b1 (column form).
        h = (jnp.dot(w1a_ref[...], avg_col, preferred_element_type=jnp.float32)
             + jnp.dot(w1b_ref[...], max_col, preferred_element_type=jnp.float32)
             + b1_ref[...])                                 # (H1, 1)
        h = jnp.maximum(h, 0.0)
        ca = (jnp.dot(w2_ref[...], h, preferred_element_type=jnp.float32)
              + b2_ref[...])                                # (C, 1)
        ca_ref[0] = _sigmoid(ca)


# ----------------------------------------------------------------------------
# Kernel 2: 7x7x7 Conv3d(2->4) + ReLU + 1x1x1 Conv3d(4->1) + sigmoid -> sa.
# The pooled map is zero-padded into a VMEM scratch with CI folded into the
# lane axis; kw+ci are folded into the banded GEMM contraction (K = CI*Wp).
# Partial sums accumulate in registers; the 1x1 conv is a VPU weighted sum.
# ----------------------------------------------------------------------------
def _conv_sa_kernel(pooled_ref, band_ref, conv2_ref, sa_ref, xp_pad,
                    *, D, H, W, KS, CI, O1, pad, d_chunk):
    Wp = W + 2 * pad
    half = pl.program_id(1)
    d_off = pl.multiple_of(half * d_chunk, d_chunk)
    mh = d_chunk * H

    # In-kernel zero padding of the pooled map, channels folded into lanes:
    # xp_pad[dp, hp, ci*Wp + wp] = pooled[ci, dp-pad, hp-pad, wp-pad].
    xp_pad[...] = jnp.zeros_like(xp_pad)
    for ci in range(CI):
        xp_pad[pad:pad + D, pad:pad + H,
               ci * Wp + pad:ci * Wp + pad + W] = pooled_ref[0, ci]

    # 7x7 tap loop of banded GEMMs (kw and ci folded into K), register acc.
    acc = None
    for kd in range(KS):
        for kh in range(KS):
            a = xp_pad[pl.ds(d_off + kd, d_chunk), kh:kh + H, :]
            a2 = a.reshape(mh, CI * Wp)
            part = jnp.dot(a2, band_ref[kd * KS + kh],
                           preferred_element_type=jnp.float32)   # (mh, O1*W)
            acc = part if acc is None else acc + part
    hidden = jnp.maximum(acc, 0.0)                                # (mh, O1*W)

    # 1x1x1 conv (O1 -> 1): VPU weighted sum over the O1 lane groups,
    # driven by SMEM scalars (no block-diagonal matmul, no kron weights).
    s = None
    for o in range(O1):
        term = conv2_ref[o] * hidden[:, o * W:(o + 1) * W]
        s = term if s is None else s + term
    sa_ref[0] = _sigmoid(s)                                       # (mh, W)


# ----------------------------------------------------------------------------
# Kernel 3: att = sa * ca (broadcast), anti = 1 - att.  Lane-dense (C, tS)
# blocks; this is the HBM-bandwidth-dominant stage.
# ----------------------------------------------------------------------------
def _broadcast_kernel(ca_ref, sa_ref, att_ref, anti_ref):
    att = ca_ref[0] * sa_ref[0]                  # (C, 1) * (1, tS) -> (C, tS)
    att_ref[0] = att
    anti_ref[0] = 1.0 - att


# ----------------------------------------------------------------------------
# Parameter preparation (hoisted out of the per-step forward): depends only on
# the module weights and the static spatial shape, so it is built once on the
# host and reused across forwards.
# ----------------------------------------------------------------------------
def prepare_attention_params(params, spatial_shape):
    fc1_w, fc1_b, fc2_w, fc2_b, conv1_w, conv2_w = params
    D, H, W = (int(s) for s in spatial_shape)
    conv1 = np.asarray(conv1_w, np.float32)          # (O1, CI, KS, KS, KS)
    O1, CI, KS = conv1.shape[0], conv1.shape[1], conv1.shape[-1]
    pad = KS // 2
    Wp = W + 2 * pad
    C = int(fc2_w.shape[0])
    H1 = int(fc1_w.shape[0])

    # Banded weight matrix for the in-kernel GEMM formulation of the 7x7x7
    # conv: band[kd*KS+kh, ci*Wp + u, o*W + w] = conv1[o, ci, kd, kh, u - w]
    # (zero outside 0 <= u - w < KS).
    band = np.zeros((KS * KS, CI * Wp, O1 * W), np.float32)
    for kd in range(KS):
        for kh in range(KS):
            for ci in range(CI):
                for o in range(O1):
                    for w in range(W):
                        band[kd * KS + kh,
                             ci * Wp + w:ci * Wp + w + KS,
                             o * W + w] = conv1[o, ci, kd, kh, :]

    w1a = jnp.asarray(fc1_w[:, :C])                  # acts on the avg half
    w1b = jnp.asarray(fc1_w[:, C:])                  # acts on the max half
    b1 = jnp.asarray(fc1_b).reshape(H1, 1)
    w2 = jnp.asarray(fc2_w)                          # (C, H1)
    b2 = jnp.asarray(fc2_b).reshape(C, 1)
    conv2_flat = jnp.asarray(np.asarray(conv2_w, np.float32).reshape(O1))
    return (w1a, w1b, b1, w2, b2, jnp.asarray(band), conv2_flat)


def attention_forward(x, prepared, *, max_tile_s=8192):
    w1a, w1b, b1, w2, b2, band, conv2_flat = prepared
    N, C, D, H, W = x.shape
    S = D * H * W
    H1 = w1a.shape[0]
    O1 = conv2_flat.shape[0]
    CI = 2
    KS = int(round(band.shape[0] ** 0.5))
    pad = KS // 2
    Dp, Hp, Wp = D + 2 * pad, H + 2 * pad, W + 2 * pad
    assert band.shape == (KS * KS, CI * Wp, O1 * W), "band/spatial mismatch"

    tS = _pick_spatial_tile(S, C, max_tile_s)
    nS = S // tS
    x_flat = x.reshape(N, C, S)

    # ---- kernel 1: pooling (tiled over S, innermost axis) + channel MLP ----
    k1_bytes = 2 * 4 * (C + 2) * tS
    ca, pooled = pl.pallas_call(
        functools.partial(_pool_mlp_kernel, inv_spatial=1.0 / S),
        grid=(N, nS),
        in_specs=[
            pl.BlockSpec((1, C, tS), lambda n, s: (n, 0, s)),
            pl.BlockSpec((H1, C), lambda n, s: (0, 0)),
            pl.BlockSpec((H1, C), lambda n, s: (0, 0)),
            pl.BlockSpec((H1, 1), lambda n, s: (0, 0)),
            pl.BlockSpec((C, H1), lambda n, s: (0, 0)),
            pl.BlockSpec((C, 1), lambda n, s: (0, 0)),
        ],
        out_specs=(
            pl.BlockSpec((1, C, 1), lambda n, s: (n, 0, 0)),
            pl.BlockSpec((1, 2, tS), lambda n, s: (n, 0, s)),
        ),
        out_shape=(
            jax.ShapeDtypeStruct((N, C, 1), jnp.float32),
            jax.ShapeDtypeStruct((N, 2, S), jnp.float32),
        ),
        scratch_shapes=[
            pltpu.VMEM((C, 1), jnp.float32),
            pltpu.VMEM((C, 1), jnp.float32),
        ],
        compiler_params=_compiler_params(("parallel", "arbitrary"), k1_bytes),
    )(x_flat, w1a, w1b, b1, w2, b2)

    pooled5 = pooled.reshape(N, CI, D, H, W)

    # ---- kernel 2: spatial-attention conv -> sa ----------------------------
    # Split the D axis in two ("parallel") so both v7x TensorCores have work
    # even at small N; harmless on single-TC chips.
    d_split = 2 if (D % 2 == 0 and ((D // 2) * H) % 8 == 0) else 1
    d_chunk = D // d_split
    k2_bytes = 4 * (2 * int(band.size) + 2 * CI * S + Dp * Hp * CI * Wp
                    + 2 * (S // d_split))
    sa = pl.pallas_call(
        functools.partial(_conv_sa_kernel, D=D, H=H, W=W, KS=KS, CI=CI, O1=O1,
                          pad=pad, d_chunk=d_chunk),
        grid=(N, d_split),
        in_specs=[
            pl.BlockSpec((1, CI, D, H, W), lambda n, h: (n, 0, 0, 0, 0)),
            pl.BlockSpec((KS * KS, CI * Wp, O1 * W), lambda n, h: (0, 0, 0)),
            pl.BlockSpec(memory_space=pltpu.MemorySpace.SMEM),
        ],
        out_specs=pl.BlockSpec((1, d_chunk * H, W), lambda n, h: (n, h, 0)),
        out_shape=jax.ShapeDtypeStruct((N, D * H, W), jnp.float32),
        scratch_shapes=[pltpu.VMEM((Dp, Hp, CI * Wp), jnp.float32)],
        compiler_params=_compiler_params(("parallel", "parallel"), k2_bytes),
    )(pooled5, band, conv2_flat)

    # (N, D*H, W) -> (N, 1, S) is a free contiguous reshape (same layout).
    sa_flat = sa.reshape(N, 1, S)

    # ---- kernel 3: att = sa * ca, anti = 1 - att (tiled over S) ------------
    k3_bytes = 2 * 4 * (2 * C + 1) * tS
    att_flat, anti_flat = pl.pallas_call(
        _broadcast_kernel,
        grid=(N, nS),
        in_specs=[
            pl.BlockSpec((1, C, 1), lambda n, s: (n, 0, 0)),
            pl.BlockSpec((1, 1, tS), lambda n, s: (n, 0, s)),
        ],
        out_specs=(
            pl.BlockSpec((1, C, tS), lambda n, s: (n, 0, s)),
            pl.BlockSpec((1, C, tS), lambda n, s: (n, 0, s)),
        ),
        out_shape=(
            jax.ShapeDtypeStruct((N, C, S), jnp.float32),
            jax.ShapeDtypeStruct((N, C, S), jnp.float32),
        ),
        compiler_params=_compiler_params(("parallel", "parallel"), k3_bytes),
    )(ca, sa_flat)

    attention = att_flat.reshape(N, C, D, H, W)
    anti_attention = anti_flat.reshape(N, C, D, H, W)
    return attention, anti_attention


def reference_forward(x, params):
    """Pure-JAX reference matching the PyTorch forward semantics."""
    fc1_w, fc1_b, fc2_w, fc2_b, conv1_w, conv2_w = params
    pad = conv1_w.shape[-1] // 2
    avg = jnp.mean(x, axis=(2, 3, 4))
    mx = jnp.max(x, axis=(2, 3, 4))
    feat = jnp.concatenate([avg, mx], axis=1)
    h = jnp.maximum(feat @ fc1_w.T + fc1_b, 0.0)
    ca = jax.nn.sigmoid(h @ fc2_w.T + fc2_b)

    c_mean = jnp.mean(x, axis=1, keepdims=True)
    c_max = jnp.max(x, axis=1, keepdims=True)
    p = jnp.concatenate([c_mean, c_max], axis=1)
    dn1 = lax.conv_dimension_numbers(p.shape, conv1_w.shape,
                                     ('NCDHW', 'OIDHW', 'NCDHW'))
    y = lax.conv_general_dilated(p, conv1_w, (1, 1, 1), [(pad, pad)] * 3,
                                 dimension_numbers=dn1)
    y = jnp.maximum(y, 0.0)
    dn2 = lax.conv_dimension_numbers(y.shape, conv2_w.shape,
                                     ('NCDHW', 'OIDHW', 'NCDHW'))
    y = lax.conv_general_dilated(y, conv2_w, (1, 1, 1), [(0, 0)] * 3,
                                 dimension_numbers=dn2)
    sa = jax.nn.sigmoid(y)                                   # (N, 1, D, H, W)
    att = sa * ca[:, :, None, None, None]
    return att, 1.0 - att


if __name__ == "__main__":
    key = jax.random.PRNGKey(0)
    N, C, D, H, W = 2, 4, 16, 16, 16
    ratio = 2
    ks = 7
    kx, k1, k2, k3, k4, k5, k6 = jax.random.split(key, 7)

    x = jax.random.normal(kx, (N, C, D, H, W), jnp.float32)

    # Parameters (shapes implied by ChannelAttention/SpatialAttention __init__).
    fc1_w = 0.3 * jax.random.normal(k1, (2 * C * ratio, 2 * C), jnp.float32)
    fc1_b = 0.1 * jax.random.normal(k2, (2 * C * ratio,), jnp.float32)
    fc2_w = 0.3 * jax.random.normal(k3, (C, 2 * C * ratio), jnp.float32)
    fc2_b = 0.1 * jax.random.normal(k4, (C,), jnp.float32)
    conv1_w = 0.05 * jax.random.normal(k5, (2 * ratio, 2, ks, ks, ks), jnp.float32)
    conv2_w = 0.3 * jax.random.normal(k6, (1, 2 * ratio, 1, 1, 1), jnp.float32)
    params = (fc1_w, fc1_b, fc2_w, fc2_b, conv1_w, conv2_w)

    # Hoisted once: banded conv weights, split fc1, flattened 1x1 conv weights.
    prepared = prepare_attention_params(params, (D, H, W))

    # max_tile_s=2048 -> S=4096 runs in 2 tiles: exercises the accumulate path
    # while keeping lane-dense 2048-wide blocks.
    fwd = jax.jit(functools.partial(attention_forward, max_tile_s=2048))
    att, anti = fwd(x, prepared)
    jax.block_until_ready((att, anti))

    att_ref, anti_ref = reference_forward(x, params)
    assert att.shape == (N, C, D, H, W) and anti.shape == (N, C, D, H, W)
    np.testing.assert_allclose(np.asarray(att), np.asarray(att_ref),
                               rtol=2e-3, atol=2e-3)
    np.testing.assert_allclose(np.asarray(anti), np.asarray(anti_ref),
                               rtol=2e-3, atol=2e-3)
    print("KERNEL_OK")
</pallas_src>

<mosaic_0001>
module attributes {stable_mosaic.version = 11 : i64} {
  func.func @_pool_mlp_kernel(%arg0: i32, %arg1: i32, %arg2: memref<1x4x2048xf32, #tpu.memory_space<vmem>>, %arg3: memref<16x4xf32, #tpu.memory_space<vmem>>, %arg4: memref<16x4xf32, #tpu.memory_space<vmem>>, %arg5: memref<16x1xf32, #tpu.memory_space<vmem>>, %arg6: memref<4x16xf32, #tpu.memory_space<vmem>>, %arg7: memref<4x1xf32, #tpu.memory_space<vmem>>, %arg8: memref<1x4x1xf32, #tpu.memory_space<vmem>>, %arg9: memref<1x2x2048xf32, #tpu.memory_space<vmem>>, %arg10: memref<4x1xf32, #tpu.memory_space<vmem>>, %arg11: memref<4x1xf32, #tpu.memory_space<vmem>>) attributes {dimension_semantics = [#tpu.dimension_semantics<parallel>, #tpu.dimension_semantics<arbitrary>], iteration_bounds = array<i64: 2, 2>, scalar_prefetch = 0 : i64, scratch_operands = 2 : i64, tpu.core_type = #tpu.core_type<tc>, window_params = [{transform_indices = @transform_0, window_bounds = array<i64: 1, 4, 2048>}, {pipeline_mode = #tpu.pipeline_mode<synchronous>, transform_indices = @transform_1, window_bounds = array<i64: 16, 4>}, {pipeline_mode = #tpu.pipeline_mode<synchronous>, transform_indices = @transform_2, window_bounds = array<i64: 16, 4>}, {pipeline_mode = #tpu.pipeline_mode<synchronous>, transform_indices = @transform_3, window_bounds = array<i64: 16, 1>}, {pipeline_mode = #tpu.pipeline_mode<synchronous>, transform_indices = @transform_4, window_bounds = array<i64: 4, 16>}, {pipeline_mode = #tpu.pipeline_mode<synchronous>, transform_indices = @transform_5, window_bounds = array<i64: 4, 1>}, {transform_indices = @transform_6, window_bounds = array<i64: 1, 4, 1>}, {transform_indices = @transform_7, window_bounds = array<i64: 1, 2, 2048>}]} {
    %c0_i32 = arith.constant 0 : i32
    %0 = arith.cmpi eq, %arg1, %c0_i32 : i32
    %1 = arith.extui %0 : i1 to i32
    %c0_i32_0 = arith.constant 0 : i32
    %2 = arith.cmpi ne, %1, %c0_i32_0 : i32
    scf.if %2 {
      %cst_21 = arith.constant 0.000000e+00 : f32
      %30 = vector.broadcast %cst_21 : f32 to vector<4x1xf32>
      %c0_22 = arith.constant 0 : index
      %c0_23 = arith.constant 0 : index
      %31 = vector.load %arg10[%c0_22, %c0_23] : memref<4x1xf32, #tpu.memory_space<vmem>>, vector<4x1xf32>
      tpu.vector_store %arg10[%c0_22, %c0_23], %30 {strides = array<i32>} : memref<4x1xf32, #tpu.memory_space<vmem>>, vector<4x1xf32>,
      %cst_24 = arith.constant 0xFF800000 : f32
      %32 = vector.broadcast %cst_24 : f32 to vector<4x1xf32>
      %c0_25 = arith.constant 0 : index
      %c0_26 = arith.constant 0 : index
      %33 = vector.load %arg11[%c0_25, %c0_26] : memref<4x1xf32, #tpu.memory_space<vmem>>, vector<4x1xf32>
      tpu.vector_store %arg11[%c0_25, %c0_26], %32 {strides = array<i32>} : memref<4x1xf32, #tpu.memory_space<vmem>>, vector<4x1xf32>,
    } else {
    }
    %c0 = arith.constant 0 : index
    %c0_1 = arith.constant 0 : index
    %c0_2 = arith.constant 0 : index
    %3 = vector.load %arg2[%c0, %c0_1, %c0_2] : memref<1x4x2048xf32, #tpu.memory_space<vmem>>, vector<1x4x2048xf32>
    %4 = vector.shape_cast %3 : vector<1x4x2048xf32> to vector<4x2048xf32>
    %c0_3 = arith.constant 0 : index
    %c0_4 = arith.constant 0 : index
    %5 = vector.load %arg10[%c0_3, %c0_4] : memref<4x1xf32, #tpu.memory_space<vmem>>, vector<4x1xf32>
    %cst = arith.constant dense<0.000000e+00> : vector<4xf32>
    %6 = vector.multi_reduction <add>, %4, %cst [1] : vector<4x2048xf32> to vector<4xf32>
    %7 = vector.shape_cast %6 : vector<4xf32> to vector<4x1xf32>
    %8 = arith.addf %5, %7 : vector<4x1xf32>
    %c0_5 = arith.constant 0 : index
    %c0_6 = arith.constant 0 : index
    %9 = vector.load %arg10[%c0_5, %c0_6] : memref<4x1xf32, #tpu.memory_space<vmem>>, vector<4x1xf32>
    tpu.vector_store %arg10[%c0_5, %c0_6], %8 {strides = array<i32>} : memref<4x1xf32, #tpu.memory_space<vmem>>, vector<4x1xf32>,
    %c0_7 = arith.constant 0 : index
    %c0_8 = arith.constant 0 : index
    %10 = vector.load %arg11[%c0_7, %c0_8] : memref<4x1xf32, #tpu.memory_space<vmem>>, vector<4x1xf32>
    %cst_9 = arith.constant dense<0xFF800000> : vector<4xf32>
    %11 = vector.multi_reduction <maximumf>, %4, %cst_9 [1] : vector<4x2048xf32> to vector<4xf32>
    %12 = vector.shape_cast %11 : vector<4xf32> to vector<4x1xf32>
    %13 = arith.maximumf %10, %12 : vector<4x1xf32>
    %c0_10 = arith.constant 0 : index
    %c0_11 = arith.constant 0 : index
    %14 = vector.load %arg11[%c0_10, %c0_11] : memref<4x1xf32, #tpu.memory_space<vmem>>, vector<4x1xf32>
    tpu.vector_store %arg11[%c0_10, %c0_11], %13 {strides = array<i32>} : memref<4x1xf32, #tpu.memory_space<vmem>>, vector<4x1xf32>,
    %cst_12 = arith.constant dense<0.000000e+00> : vector<2048xf32>
    %15 = vector.multi_reduction <add>, %4, %cst_12 [0] : vector<4x2048xf32> to vector<2048xf32>
    %16 = vector.shape_cast %15 : vector<2048xf32> to vector<1x2048xf32>
    %cst_13 = arith.constant 4.000000e+00 : f32
    %17 = vector.broadcast %cst_13 : f32 to vector<1x2048xf32>
    %18 = arith.divf %16, %17 : vector<1x2048xf32>
    %c0_14 = arith.constant 0 : index
    %c0_15 = arith.constant 0 : index
    %c0_16 = arith.constant 0 : index
    %19 = vector.load %arg9[%c0_14, %c0_15, %c0_16] : memref<1x2x2048xf32, #tpu.memory_space<vmem>>, vector<1x1x2048xf32>
    %20 = vector.shape_cast %19 : vector<1x1x2048xf32> to vector<1x2048xf32>
    %21 = vector.shape_cast %18 : vector<1x2048xf32> to vector<1x1x2048xf32>
    tpu.vector_store %arg9[%c0_14, %c0_15, %c0_16], %21 {strides = array<i32>} : memref<1x2x2048xf32, #tpu.memory_space<vmem>>, vector<1x1x2048xf32>,
    %cst_17 = arith.constant dense<0xFF800000> : vector<2048xf32>
    %22 = vector.multi_reduction <maximumf>, %4, %cst_17 [0] : vector<4x2048xf32> to vector<2048xf32>
    %23 = vector.shape_cast %22 : vector<2048xf32> to vector<1x2048xf32>
    %c0_18 = arith.constant 0 : index
    %c1 = arith.constant 1 : index
    %c0_19 = arith.constant 0 : index
    %24 = vector.load %arg9[%c0_18, %c1, %c0_19] : memref<1x2x2048xf32, #tpu.memory_space<vmem>>, vector<1x1x2048xf32>
    %25 = vector.shape_cast %24 : vector<1x1x2048xf32> to vector<1x2048xf32>
    %26 = vector.shape_cast %23 : vector<1x2048xf32> to vector<1x1x2048xf32>
    tpu.vector_store %arg9[%c0_18, %c1, %c0_19], %26 {strides = array<i32>} : memref<1x2x2048xf32, #tpu.memory_space<vmem>>, vector<1x1x2048xf32>,
    %c1_i32 = arith.constant 1 : i32
    %27 = arith.cmpi eq, %arg1, %c1_i32 : i32
    %28 = arith.extui %27 : i1 to i32
    %c0_i32_20 = arith.constant 0 : i32
    %29 = arith.cmpi ne, %28, %c0_i32_20 : i32
    scf.if %29 {
      %c0_21 = arith.constant 0 : index
      %c0_22 = arith.constant 0 : index
      %30 = vector.load %arg10[%c0_21, %c0_22] : memref<4x1xf32, #tpu.memory_space<vmem>>, vector<4x1xf32>
      %cst_23 = arith.constant 2.44140625E-4 : f32
      %31 = vector.broadcast %cst_23 : f32 to vector<4x1xf32>
      %32 = arith.mulf %30, %31 : vector<4x1xf32>
      %c0_24 = arith.constant 0 : index
      %c0_25 = arith.constant 0 : index
      %33 = vector.load %arg11[%c0_24, %c0_25] : memref<4x1xf32, #tpu.memory_space<vmem>>, vector<4x1xf32>
      %c0_26 = arith.constant 0 : index
      %c0_27 = arith.constant 0 : index
      %34 = vector.load %arg3[%c0_26, %c0_27] : memref<16x4xf32, #tpu.memory_space<vmem>>, vector<16x4xf32>
      %cst_28 = arith.constant dense<0.000000e+00> : vector<16x1xf32>
      %35 = tpu.matmul %34, %32, %cst_28 {dimension_numbers = #tpu.dot_dimension_numbers<[1], [0], [0], [1], [0, 0, 1, 1], [], []>} : vector<16x4xf32>, vector<4x1xf32>, vector<16x1xf32> -> vector<16x1xf32>
      %c0_29 = arith.constant 0 : index
      %c0_30 = arith.constant 0 : index
      %36 = vector.load %arg4[%c0_29, %c0_30] : memref<16x4xf32, #tpu.memory_space<vmem>>, vector<16x4xf32>
      %cst_31 = arith.constant dense<0.000000e+00> : vector<16x1xf32>
      %37 = tpu.matmul %36, %33, %cst_31 {dimension_numbers = #tpu.dot_dimension_numbers<[1], [0], [0], [1], [0, 0, 1, 1], [], []>} : vector<16x4xf32>, vector<4x1xf32>, vector<16x1xf32> -> vector<16x1xf32>
      %38 = arith.addf %35, %37 : vector<16x1xf32>
      %c0_32 = arith.constant 0 : index
      %c0_33 = arith.constant 0 : index
      %39 = vector.load %arg5[%c0_32, %c0_33] : memref<16x1xf32, #tpu.memory_space<vmem>>, vector<16x1xf32>
      %40 = arith.addf %38, %39 : vector<16x1xf32>
      %cst_34 = arith.constant 0.000000e+00 : f32
      %41 = vector.broadcast %cst_34 : f32 to vector<16x1xf32>
      %42 = arith.maximumf %40, %41 : vector<16x1xf32>
      %c0_35 = arith.constant 0 : index
      %c0_36 = arith.constant 0 : index
      %43 = vector.load %arg6[%c0_35, %c0_36] : memref<4x16xf32, #tpu.memory_space<vmem>>, vector<4x16xf32>
      %cst_37 = arith.constant dense<0.000000e+00> : vector<4x1xf32>
      %44 = tpu.matmul %43, %42, %cst_37 {dimension_numbers = #tpu.dot_dimension_numbers<[1], [0], [0], [1], [0, 0, 1, 1], [], []>} : vector<4x16xf32>, vector<16x1xf32>, vector<4x1xf32> -> vector<4x1xf32>
      %c0_38 = arith.constant 0 : index
      %c0_39 = arith.constant 0 : index
      %45 = vector.load %arg7[%c0_38, %c0_39] : memref<4x1xf32, #tpu.memory_space<vmem>>, vector<4x1xf32>
      %46 = arith.addf %44, %45 : vector<4x1xf32>
      %cst_40 = arith.constant 0.000000e+00 : f32
      %47 = vector.broadcast %cst_40 : f32 to vector<4x1xf32>
      %48 = arith.subf %47, %46 : vector<4x1xf32>
      %49 = math.exp %48 : vector<4x1xf32>
      %cst_41 = arith.constant 1.000000e+00 : f32
      %50 = vector.broadcast %cst_41 : f32 to vector<4x1xf32>
      %51 = arith.addf %50, %49 : vector<4x1xf32>
      %52 = tpu.reciprocal %51 : vector<4x1xf32> -> vector<4x1xf32>
      %c0_42 = arith.constant 0 : index
      %c0_43 = arith.constant 0 : index
      %c0_44 = arith.constant 0 : index
      %53 = vector.load %arg8[%c0_42, %c0_43, %c0_44] : memref<1x4x1xf32, #tpu.memory_space<vmem>>, vector<1x4x1xf32>
      %54 = vector.shape_cast %53 : vector<1x4x1xf32> to vector<4x1xf32>
      %55 = vector.shape_cast %52 : vector<4x1xf32> to vector<1x4x1xf32>
      tpu.vector_store %arg8[%c0_42, %c0_43, %c0_44], %55 {strides = array<i32>} : memref<1x4x1xf32, #tpu.memory_space<vmem>>, vector<1x4x1xf32>,
    } else {
    }
    return
  }
  func.func @transform_0(%arg0: i32, %arg1: i32) -> (i32, i32, i32) {
    %c0_i32 = arith.constant 0 : i32
    %c0_i32_0 = arith.constant 0 : i32
    return %arg0, %c0_i32, %arg1 : i32, i32, i32
  }
  func.func @transform_1(%arg0: i32, %arg1: i32) -> (i32, i32) {
    %c0_i32 = arith.constant 0 : i32
    %c0_i32_0 = arith.constant 0 : i32
    %c0_i32_1 = arith.constant 0 : i32
    return %c0_i32, %c0_i32_0 : i32, i32
  }
  func.func @transform_2(%arg0: i32, %arg1: i32) -> (i32, i32) {
    %c0_i32 = arith.constant 0 : i32
    %c0_i32_0 = arith.constant 0 : i32
    %c0_i32_1 = arith.constant 0 : i32
    return %c0_i32, %c0_i32_0 : i32, i32
  }
  func.func @transform_3(%arg0: i32, %arg1: i32) -> (i32, i32) {
    %c0_i32 = arith.constant 0 : i32
    %c0_i32_0 = arith.constant 0 : i32
    %c0_i32_1 = arith.constant 0 : i32
    return %c0_i32, %c0_i32_0 : i32, i32
  }
  func.func @transform_4(%arg0: i32, %arg1: i32) -> (i32, i32) {
    %c0_i32 = arith.constant 0 : i32
    %c0_i32_0 = arith.constant 0 : i32
    %c0_i32_1 = arith.constant 0 : i32
    return %c0_i32, %c0_i32_0 : i32, i32
  }
  func.func @transform_5(%arg0: i32, %arg1: i32) -> (i32, i32) {
    %c0_i32 = arith.constant 0 : i32
    %c0_i32_0 = arith.constant 0 : i32
    %c0_i32_1 = arith.constant 0 : i32
    return %c0_i32, %c0_i32_0 : i32, i32
  }
  func.func @transform_6(%arg0: i32, %arg1: i32) -> (i32, i32, i32) {
    %c0_i32 = arith.constant 0 : i32
    %c0_i32_0 = arith.constant 0 : i32
    %c0_i32_1 = arith.constant 0 : i32
    return %arg0, %c0_i32, %c0_i32_0 : i32, i32, i32
  }
  func.func @transform_7(%arg0: i32, %arg1: i32) -> (i32, i32, i32) {
    %c0_i32 = arith.constant 0 : i32
    %c0_i32_0 = arith.constant 0 : i32
    return %arg0, %c0_i32, %arg1 : i32, i32, i32
  }
}

module attributes {stable_mosaic.version = 11 : i64} {
  func.func @_conv_sa_kernel(%arg0: i32, %arg1: i32, %arg2: memref<1x2x16x16x16xf32, #tpu.memory_space<vmem>>, %arg3: memref<49x44x64xf32, #tpu.memory_space<vmem>>, %arg4: memref<4xf32, #tpu.memory_space<smem>>, %arg5: memref<1x128x16xf32, #tpu.memory_space<vmem>>, %arg6: memref<22x22x44xf32, #tpu.memory_space<vmem>>) attributes {dimension_semantics = [#tpu.dimension_semantics<parallel>, #tpu.dimension_semantics<parallel>], iteration_bounds = array<i64: 2, 2>, scalar_prefetch = 0 : i64, scratch_operands = 1 : i64, tpu.core_type = #tpu.core_type<tc>, window_params = [{transform_indices = @transform_0, window_bounds = array<i64: 1, 2, 16, 16, 16>}, {pipeline_mode = #tpu.pipeline_mode<synchronous>, transform_indices = @transform_1, window_bounds = array<i64: 49, 44, 64>}, {transform_indices = @transform_2, window_bounds = array<i64: 4>}, {transform_indices = @transform_3, window_bounds = array<i64: 1, 128, 16>}]} {
    %c8_i32 = arith.constant 8 : i32
    %0 = arith.muli %arg1, %c8_i32 : i32
    %1 = tpu.assume_multiple %0, 8 : i32
    %cst = arith.constant 0.000000e+00 : f32
    %2 = vector.broadcast %cst : f32 to vector<22x22x44xf32>
    %c0 = arith.constant 0 : index
    %c0_0 = arith.constant 0 : index
    %c0_1 = arith.constant 0 : index
    %3 = vector.load %arg6[%c0, %c0_0, %c0_1] : memref<22x22x44xf32, #tpu.memory_space<vmem>>, vector<22x22x44xf32>
    tpu.vector_store %arg6[%c0, %c0_0, %c0_1], %2 {strides = array<i32>} : memref<22x22x44xf32, #tpu.memory_space<vmem>>, vector<22x22x44xf32>,
    %c0_2 = arith.constant 0 : index
    %c0_3 = arith.constant 0 : index
    %c0_4 = arith.constant 0 : index
    %c0_5 = arith.constant 0 : index
    %c0_6 = arith.constant 0 : index
    %4 = vector.load %arg2[%c0_2, %c0_3, %c0_4, %c0_5, %c0_6] : memref<1x2x16x16x16xf32, #tpu.memory_space<vmem>>, vector<1x1x16x16x16xf32>
    %5 = vector.shape_cast %4 : vector<1x1x16x16x16xf32> to vector<16x16x16xf32>
    %c3 = arith.constant 3 : index
    %c3_7 = arith.constant 3 : index
    %c3_8 = arith.constant 3 : index
    %6 = vector.load %arg6[%c3, %c3_7, %c3_8] : memref<22x22x44xf32, #tpu.memory_space<vmem>>, vector<16x16x16xf32>
    tpu.vector_store %arg6[%c3, %c3_7, %c3_8], %5 {strides = array<i32>} : memref<22x22x44xf32, #tpu.memory_space<vmem>>, vector<16x16x16xf32>,
    %c0_9 = arith.constant 0 : index
    %c1 = arith.constant 1 : index
    %c0_10 = arith.constant 0 : index
    %c0_11 = arith.constant 0 : index
    %c0_12 = arith.constant 0 : index
    %7 = vector.load %arg2[%c0_9, %c1, %c0_10, %c0_11, %c0_12] : memref<1x2x16x16x16xf32, #tpu.memory_space<vmem>>, vector<1x1x16x16x16xf32>
    %8 = vector.shape_cast %7 : vector<1x1x16x16x16xf32> to vector<16x16x16xf32>
    %c3_13 = arith.constant 3 : index
    %c3_14 = arith.constant 3 : index
    %c25 = arith.constant 25 : index
    %9 = vector.load %arg6[%c3_13, %c3_14, %c25] : memref<22x22x44xf32, #tpu.memory_space<vmem>>, vector<16x16x16xf32>
    tpu.vector_store %arg6[%c3_13, %c3_14, %c25], %8 {strides = array<i32>} : memref<22x22x44xf32, #tpu.memory_space<vmem>>, vector<16x16x16xf32>,
    %c0_i32 = arith.constant 0 : i32
    %10 = arith.addi %1, %c0_i32 : i32
    %11 = arith.index_cast %10 : i32 to index
    %c0_15 = arith.constant 0 : index
    %c0_16 = arith.constant 0 : index
    %12 = vector.load %arg6[%11, %c0_15, %c0_16] : memref<22x22x44xf32, #tpu.memory_space<vmem>>, vector<8x16x44xf32>
    %13 = vector.shape_cast %12 : vector<8x16x44xf32> to vector<128x44xf32>
    %c0_17 = arith.constant 0 : index
    %c0_18 = arith.constant 0 : index
    %c0_19 = arith.constant 0 : index
    %14 = vector.load %arg3[%c0_17, %c0_18, %c0_19] : memref<49x44x64xf32, #tpu.memory_space<vmem>>, vector<1x44x64xf32>
    %15 = vector.shape_cast %14 : vector<1x44x64xf32> to vector<44x64xf32>
    %cst_20 = arith.constant dense<0.000000e+00> : vector<128x64xf32>
    %16 = tpu.matmul %13, %15, %cst_20 {dimension_numbers = #tpu.dot_dimension_numbers<[1], [0], [0], [1], [0, 0, 1, 1], [], []>} : vector<128x44xf32>, vector<44x64xf32>, vector<128x64xf32> -> vector<128x64xf32>
    %c0_i32_21 = arith.constant 0 : i32
    %17 = arith.addi %1, %c0_i32_21 : i32
    %18 = arith.index_cast %17 : i32 to index
    %c1_22 = arith.constant 1 : index
    %c0_23 = arith.constant 0 : index
    %19 = vector.load %arg6[%18, %c1_22, %c0_23] : memref<22x22x44xf32, #tpu.memory_space<vmem>>, vector<8x16x44xf32>
    %20 = vector.shape_cast %19 : vector<8x16x44xf32> to vector<128x44xf32>
    %c1_24 = arith.constant 1 : index
    %c0_25 = arith.constant 0 : index
    %c0_26 = arith.constant 0 : index
    %21 = vector.load %arg3[%c1_24, %c0_25, %c0_26] : memref<49x44x64xf32, #tpu.memory_space<vmem>>, vector<1x44x64xf32>
    %22 = vector.shape_cast %21 : vector<1x44x64xf32> to vector<44x64xf32>
    %cst_27 = arith.constant dense<0.000000e+00> : vector<128x64xf32>
    %23 = tpu.matmul %20, %22, %cst_27 {dimension_numbers = #tpu.dot_dimension_numbers<[1], [0], [0], [1], [0, 0, 1, 1], [], []>} : vector<128x44xf32>, vector<44x64xf32>, vector<128x64xf32> -> vector<128x64xf32>
    %24 = arith.addf %16, %23 : vector<128x64xf32>
    %c0_i32_28 = arith.constant 0 : i32
    %25 = arith.addi %1, %c0_i32_28 : i32
    %26 = arith.index_cast %25 : i32 to index
    %c2 = arith.constant 2 : index
    %c0_29 = arith.constant 0 : index
    %27 = vector.load %arg6[%26, %c2, %c0_29] : memref<22x22x44xf32, #tpu.memory_space<vmem>>, vector<8x16x44xf32>
    %28 = vector.shape_cast %27 : vector<8x16x44xf32> to vector<128x44xf32>
    %c2_30 = arith.constant 2 : index
    %c0_31 = arith.constant 0 : index
    %c0_32 = arith.constant 0 : index
    %29 = vector.load %arg3[%c2_30, %c0_31, %c0_32] : memref<49x44x64xf32, #tpu.memory_space<vmem>>, vector<1x44x64xf32>
    %30 = vector.shape_cast %29 : vector<1x44x64xf32> to vector<44x64xf32>
    %cst_33 = arith.constant dense<0.000000e+00> : vector<128x64xf32>
    %31 = tpu.matmul %28, %30, %cst_33 {dimension_numbers = #tpu.dot_dimension_numbers<[1], [0], [0], [1], [0, 0, 1, 1], [], []>} : vector<128x44xf32>, vector<44x64xf32>, vector<128x64xf32> -> vector<128x64xf32>
    %32 = arith.addf %24, %31 : vector<128x64xf32>
    %c0_i32_34 = arith.constant 0 : i32
    %33 = arith.addi %1, %c0_i32_34 : i32
    %34 = arith.index_cast %33 : i32 to index
    %c3_35 = arith.constant 3 : index
    %c0_36 = arith.constant 0 : index
    %35 = vector.load %arg6[%34, %c3_35, %c0_36] : memref<22x22x44xf32, #tpu.memory_space<vmem>>, vector<8x16x44xf32>
    %36 = vector.shape_cast %35 : vector<8x16x44xf32> to vector<128x44xf32>
    %c3_37 = arith.constant 3 : index
    %c0_38 = arith.constant 0 : index
    %c0_39 = arith.constant 0 : index
    %37 = vector.load %arg3[%c3_37, %c0_38, %c0_39] : memref<49x44x64xf32, #tpu.memory_space<vmem>>, vector<1x44x64xf32>
    %38 = vector.shape_cast %37 : vector<1x44x64xf32> to vector<44x64xf32>
    %cst_40 = arith.constant dense<0.000000e+00> : vector<128x64xf32>
    %39 = tpu.matmul %36, %38, %cst_40 {dimension_numbers = #tpu.dot_dimension_numbers<[1], [0], [0], [1], [0, 0, 1, 1], [], []>} : vector<128x44xf32>, vector<44x64xf32>, vector<128x64xf32> -> vector<128x64xf32>
    %40 = arith.addf %32, %39 : vector<128x64xf32>
    %c0_i32_41 = arith.constant 0 : i32
    %41 = arith.addi %1, %c0_i32_41 : i32
    %42 = arith.index_cast %41 : i32 to index
    %c4 = arith.constant 4 : index
    %c0_42 = arith.constant 0 : index
    %43 = vector.load %arg6[%42, %c4, %c0_42] : memref<22x22x44xf32, #tpu.memory_space<vmem>>, vector<8x16x44xf32>
    %44 = vector.shape_cast %43 : vector<8x16x44xf32> to vector<128x44xf32>
    %c4_43 = arith.constant 4 : index
    %c0_44 = arith.constant 0 : index
    %c0_45 = arith.constant 0 : index
    %45 = vector.load %arg3[%c4_43, %c0_44, %c0_45] : memref<49x44x64xf32, #tpu.memory_space<vmem>>, vector<1x44x64xf32>
    %46 = vector.shape_cast %45 : vector<1x44x64xf32> to vector<44x64xf32>
    %cst_46 = arith.constant dense<0.000000e+00> : vector<128x64xf32>
    %47 = tpu.matmul %44, %46, %cst_46 {dimension_numbers = #tpu.dot_dimension_numbers<[1], [0], [0], [1], [0, 0, 1, 1], [], []>} : vector<128x44xf32>, vector<44x64xf32>, vector<128x64xf32> -> vector<128x64xf32>
    %48 = arith.addf %40, %47 : vector<128x64xf32>
    %c0_i32_47 = arith.constant 0 : i32
    %49 = arith.addi %1, %c0_i32_47 : i32
    %50 = arith.index_cast %49 : i32 to index
    %c5 = arith.constant 5 : index
    %c0_48 = arith.constant 0 : index
    %51 = vector.load %arg6[%50, %c5, %c0_48] : memref<22x22x44xf32, #tpu.memory_space<vmem>>, vector<8x16x44xf32>
    %52 = vector.shape_cast %51 : vector<8x16x44xf32> to vector<128x44xf32>
    %c5_49 = arith.constant 5 : index
    %c0_50 = arith.constant 0 : index
    %c0_51 = arith.constant 0 : index
    %53 = vector.load %arg3[%c5_49, %c0_50, %c0_51] : memref<49x44x64xf32, #tpu.memory_space<vmem>>, vector<1x44x64xf32>
    %54 = vector.shape_cast %53 : vector<1x44x64xf32> to vector<44x64xf32>
    %cst_52 = arith.constant dense<0.000000e+00> : vector<128x64xf32>
    %55 = tpu.matmul %52, %54, %cst_52 {dimension_numbers = #tpu.dot_dimension_numbers<[1], [0], [0], [1], [0, 0, 1, 1], [], []>} : vector<128x44xf32>, vector<44x64xf32>, vector<128x64xf32> -> vector<128x64xf32>
    %56 = arith.addf %48, %55 : vector<128x64xf32>
    %c0_i32_53 = arith.constant 0 : i32
    %57 = arith.addi %1, %c0_i32_53 : i32
    %58 = arith.index_cast %57 : i32 to index
    %c6 = arith.constant 6 : index
    %c0_54 = arith.constant 0 : index
    %59 = vector.load %arg6[%58, %c6, %c0_54] : memref<22x22x44xf32, #tpu.memory_space<vmem>>, vector<8x16x44xf32>
    %60 = vector.shape_cast %59 : vector<8x16x44xf32> to vector<128x44xf32>
    %c6_55 = arith.constant 6 : index
    %c0_56 = arith.constant 0 : index
    %c0_57 = arith.constant 0 : index
    %61 = vector.load %arg3[%c6_55, %c0_56, %c0_57] : memref<49x44x64xf32, #tpu.memory_space<vmem>>, vector<1x44x64xf32>
    %62 = vector.shape_cast %61 : vector<1x44x64xf32> to vector<44x64xf32>
    %cst_58 = arith.constant dense<0.000000e+00> : vector<128x64xf32>
    %63 = tpu.matmul %60, %62, %cst_58 {dimension_numbers = #tpu.dot_dimension_numbers<[1], [0], [0], [1], [0, 0, 1, 1], [], []>} : vector<128x44xf32>, vector<44x64xf32>, vector<128x64xf32> -> vector<128x64xf32>
    %64 = arith.addf %56, %63 : vector<128x64xf32>
    %c1_i32 = arith.constant 1 : i32
    %65 = arith.addi %1, %c1_i32 : i32
    %66 = arith.index_cast %65 : i32 to index
    %c0_59 = arith.constant 0 : index
    %c0_60 = arith.constant 0 : index
    %67 = vector.load %arg6[%66, %c0_59, %c0_60] : memref<22x22x44xf32, #tpu.memory_space<vmem>>, vector<8x16x44xf32>
    %68 = vector.shape_cast %67 : vector<8x16x44xf32> to vector<128x44xf32>
    %c7 = arith.constant 7 : index
    %c0_61 = arith.constant 0 : index
    %c0_62 = arith.constant 0 : index
    %69 = vector.load %arg3[%c7, %c0_61, %c0_62] : memref<49x44x64xf32, #tpu.memory_space<vmem>>, vector<1x44x64xf32>
    %70 = vector.shape_cast %69 : vector<1x44x64xf32> to vector<44x64xf32>
    %cst_63 = arith.constant dense<0.000000e+00> : vector<128x64xf32>
    %71 = tpu.matmul %68, %70, %cst_63 {dimension_numbers = #tpu.dot_dimension_numbers<[1], [0], [0], [1], [0, 0, 1, 1], [], []>} : vector<128x44xf32>, vector<44x64xf32>, vector<128x64xf32> -> vector<128x64xf32>
    %72 = arith.addf %64, %71 : vector<128x64xf32>
    %c1_i32_64 = arith.constant 1 : i32
    %73 = arith.addi %1, %c1_i32_64 : i32
    %74 = arith.index_cast %73 : i32 to index
    %c1_65 = arith.constant 1 : index
    %c0_66 = arith.constant 0 : index
    %75 = vector.load %arg6[%74, %c1_65, %c0_66] : memref<22x22x44xf32, #tpu.memory_space<vmem>>, vector<8x16x44xf32>
    %76 = vector.shape_cast %75 : vector<8x16x44xf32> to vector<128x44xf32>
    %c8 = arith.constant 8 : index
    %c0_67 = arith.constant 0 : index
    %c0_68 = arith.constant 0 : index
    %77 = vector.load %arg3[%c8, %c0_67, %c0_68] : memref<49x44x64xf32, #tpu.memory_space<vmem>>, vector<1x44x64xf32>
    %78 = vector.shape_cast %77 : vector<1x44x64xf32> to vector<44x64xf32>
    %cst_69 = arith.constant dense<0.000000e+00> : vector<128x64xf32>
    %79 = tpu.matmul %76, %78, %cst_69 {dimension_numbers = #tpu.dot_dimension_numbers<[1], [0], [0], [1], [0, 0, 1, 1], [], []>} : vector<128x44xf32>, vector<44x64xf32>, vector<128x64xf32> -> vector<128x64xf32>
    %80 = arith.addf %72, %79 : vector<128x64xf32>
    %c1_i32_70 = arith.constant 1 : i32
    %81 = arith.addi %1, %c1_i32_70 : i32
    %82 = arith.index_cast %81 : i32 to index
    %c2_71 = arith.constant 2 : index
    %c0_72 = arith.constant 0 : index
    %83 = vector.load %arg6[%82, %c2_71, %c0_72] : memref<22x22x44xf32, #tpu.memory_space<vmem>>, vector<8x16x44xf32>
    %84 = vector.shape_cast %83 : vector<8x16x44xf32> to vector<128x44xf32>
    %c9 = arith.constant 9 : index
    %c0_73 = arith.constant 0 : index
    %c0_74 = arith.constant 0 : index
    %85 = vector.load %arg3[%c9, %c0_73, %c0_74] : memref<49x44x64xf32, #tpu.memory_space<vmem>>, vector<1x44x64xf32>
    %86 = vector.shape_cast %85 : vector<1x44x64xf32> to vector<44x64xf32>
    %cst_75 = arith.constant dense<0.000000e+00> : vector<128x64xf32>
    %87 = tpu.matmul %84, %86, %cst_75 {dimension_numbers = #tpu.dot_dimension_numbers<[1], [0], [0], [1], [0, 0, 1, 1], [], []>} : vector<128x44xf32>, vector<44x64xf32>, vector<128x64xf32> -> vector<128x64xf32>
    %88 = arith.addf %80, %87 : vector<128x64xf32>
    %c1_i32_76 = arith.constant 1 : i32
    %89 = arith.addi %1, %c1_i32_76 : i32
    %90 = arith.index_cast %89 : i32 to index
    %c3_77 = arith.constant 3 : index
    %c0_78 = arith.constant 0 : index
    %91 = vector.load %arg6[%90, %c3_77, %c0_78] : memref<22x22x44xf32, #tpu.memory_space<vmem>>, vector<8x16x44xf32>
    %92 = vector.shape_cast %91 : vector<8x16x44xf32> to vector<128x44xf32>
    %c10 = arith.constant 10 : index
    %c0_79 = arith.constant 0 : index
    %c0_80 = arith.constant 0 : index
    %93 = vector.load %arg3[%c10, %c0_79, %c0_80] : memref<49x44x64xf32, #tpu.memory_space<vmem>>, vector<1x44x64xf32>
    %94 = vector.shape_cast %93 : vector<1x44x64xf32> to vector<44x64xf32>
    %cst_81 = arith.constant dense<0.000000e+00> : vector<128x64xf32>
    %95 = tpu.matmul %92, %94, %cst_81 {dimension_numbers = #tpu.dot_dimension_numbers<[1], [0], [0], [1], [0, 0, 1, 1], [], []>} : vector<128x44xf32>, vector<44x64xf32>, vector<128x64xf32> -> vector<128x64xf32>
    %96 = arith.addf %88, %95 : vector<128x64xf32>
    %c1_i32_82 = arith.constant 1 : i32
    %97 = arith.addi %1, %c1_i32_82 : i32
    %98 = arith.index_cast %97 : i32 to index
    %c4_83 = arith.constant 4 : index
    %c0_84 = arith.constant 0 : index
    %99 = vector.load %arg6[%98, %c4_83, %c0_84] : memref<22x22x44xf32, #tpu.memory_space<vmem>>, vector<8x16x44xf32>
    %100 = vector.shape_cast %99 : vector<8x16x44xf32> to vector<128x44xf32>
    %c11 = arith.constant 11 : index
    %c0_85 = arith.constant 0 : index
    %c0_86 = arith.constant 0 : index
    %101 = vector.load %arg3[%c11, %c0_85, %c0_86] : memref<49x44x64xf32, #tpu.memory_space<vmem>>, vector<1x44x64xf32>
    %102 = vector.shape_cast %101 : vector<1x44x64xf32> to vector<44x64xf32>
    %cst_87 = arith.constant dense<0.000000e+00> : vector<128x64xf32>
    %103 = tpu.matmul %100, %102, %cst_87 {dimension_numbers = #tpu.dot_dimension_numbers<[1], [0], [0], [1], [0, 0, 1, 1], [], []>} : vector<128x44xf32>, vector<44x64xf32>, vector<128x64xf32> -> vector<128x64xf32>
    %104 = arith.addf %96, %103 : vector<128x64xf32>
    %c1_i32_88 = arith.constant 1 : i32
    %105 = arith.addi %1, %c1_i32_88 : i32
    %106 = arith.index_cast %105 : i32 to index
    %c5_89 = arith.constant 5 : index
    %c0_90 = arith.constant 0 : index
    %107 = vector.load %arg6[%106, %c5_89, %c0_90] : memref<22x22x44xf32, #tpu.memory_space<vmem>>, vector<8x16x44xf32>
    %108 = vector.shape_cast %107 : vector<8x16x44xf32> to vector<128x44xf32>
    %c12 = arith.constant 12 : index
    %c0_91 = arith.constant 0 : index
    %c0_92 = arith.constant 0 : index
    %109 = vector.load %arg3[%c12, %c0_91, %c0_92] : memref<49x44x64xf32, #tpu.memory_space<vmem>>, vector<1x44x64xf32>
    %110 = vector.shape_cast %109 : vector<1x44x64xf32> to vector<44x64xf32>
    %cst_93 = arith.constant dense<0.000000e+00> : vector<128x64xf32>
    %111 = tpu.matmul %108, %110, %cst_93 {dimension_numbers = #tpu.dot_dimension_numbers<[1], [0], [0], [1], [0, 0, 1, 1], [], []>} : vector<128x44xf32>, vector<44x64xf32>, vector<128x64xf32> -> vector<128x64xf32>
    %112 = arith.addf %104, %111 : vector<128x64xf32>
    %c1_i32_94 = arith.constant 1 : i32
    %113 = arith.addi %1, %c1_i32_94 : i32
    %114 = arith.index_cast %113 : i32 to index
    %c6_95 = arith.constant 6 : index
    %c0_96 = arith.constant 0 : index
    %115 = vector.load %arg6[%114, %c6_95, %c0_96] : memref<22x22x44xf32, #tpu.memory_space<vmem>>, vector<8x16x44xf32>
    %116 = vector.shape_cast %115 : vector<8x16x44xf32> to vector<128x44xf32>
    %c13 = arith.constant 13 : index
    %c0_97 = arith.constant 0 : index
    %c0_98 = arith.constant 0 : index
    %117 = vector.load %arg3[%c13, %c0_97, %c0_98] : memref<49x44x64xf32, #tpu.memory_space<vmem>>, vector<1x44x64xf32>
    %118 = vector.shape_cast %117 : vector<1x44x64xf32> to vector<44x64xf32>
    %cst_99 = arith.constant dense<0.000000e+00> : vector<128x64xf32>
    %119 = tpu.matmul %116, %118, %cst_99 {dimension_numbers = #tpu.dot_dimension_numbers<[1], [0], [0], [1], [0, 0, 1, 1], [], []>} : vector<128x44xf32>, vector<44x64xf32>, vector<128x64xf32> -> vector<128x64xf32>
    %120 = arith.addf %112, %119 : vector<128x64xf32>
    %c2_i32 = arith.constant 2 : i32
    %121 = arith.addi %1, %c2_i32 : i32
    %122 = arith.index_cast %121 : i32 to index
    %c0_100 = arith.constant 0 : index
    %c0_101 = arith.constant 0 : index
    %123 = vector.load %arg6[%122, %c0_100, %c0_101] : memref<22x22x44xf32, #tpu.memory_space<vmem>>, vector<8x16x44xf32>
    %124 = vector.shape_cast %123 : vector<8x16x44xf32> to vector<128x44xf32>
    %c14 = arith.constant 14 : index
    %c0_102 = arith.constant 0 : index
    %c0_103 = arith.constant 0 : index
    %125 = vector.load %arg3[%c14, %c0_102, %c0_103] : memref<49x44x64xf32, #tpu.memory_space<vmem>>, vector<1x44x64xf32>
    %126 = vector.shape_cast %125 : vector<1x44x64xf32> to vector<44x64xf32>
    %cst_104 = arith.constant dense<0.000000e+00> : vector<128x64xf32>
    %127 = tpu.matmul %124, %126, %cst_104 {dimension_numbers = #tpu.dot_dimension_numbers<[1], [0], [0], [1], [0, 0, 1, 1], [], []>} : vector<128x44xf32>, vector<44x64xf32>, vector<128x64xf32> -> vector<128x64xf32>
    %128 = arith.addf %120, %127 : vector<128x64xf32>
    %c2_i32_105 = arith.constant 2 : i32
    %129 = arith.addi %1, %c2_i32_105 : i32
    %130 = arith.index_cast %129 : i32 to index
    %c1_106 = arith.constant 1 : index
    %c0_107 = arith.constant 0 : index
    %131 = vector.load %arg6[%130, %c1_106, %c0_107] : memref<22x22x44xf32, #tpu.memory_space<vmem>>, vector<8x16x44xf32>
    %132 = vector.shape_cast %131 : vector<8x16x44xf32> to vector<128x44xf32>
    %c15 = arith.constant 15 : index
    %c0_108 = arith.constant 0 : index
    %c0_109 = arith.constant 0 : index
    %133 = vector.load %arg3[%c15, %c0_108, %c0_109] : memref<49x44x64xf32, #tpu.memory_space<vmem>>, vector<1x44x64xf32>
    %134 = vector.shape_cast %133 : vector<1x44x64xf32> to vector<44x64xf32>
    %cst_110 = arith.constant dense<0.000000e+00> : vector<128x64xf32>
    %135 = tpu.matmul %132, %134, %cst_110 {dimension_numbers = #tpu.dot_dimension_numbers<[1], [0], [0], [1], [0, 0, 1, 1], [], []>} : vector<128x44xf32>, vector<44x64xf32>, vector<128x64xf32> -> vector<128x64xf32>
    %136 = arith.addf %128, %135 : vector<128x64xf32>
    %c2_i32_111 = arith.constant 2 : i32
    %137 = arith.addi %1, %c2_i32_111 : i32
    %138 = arith.index_cast %137 : i32 to index
    %c2_112 = arith.constant 2 : index
    %c0_113 = arith.constant 0 : index
    %139 = vector.load %arg6[%138, %c2_112, %c0_113] : memref<22x22x44xf32, #tpu.memory_space<vmem>>, vector<8x16x44xf32>
    %140 = vector.shape_cast %139 : vector<8x16x44xf32> to vector<128x44xf32>
    %c16 = arith.constant 16 : index
    %c0_114 = arith.constant 0 : index
    %c0_115 = arith.constant 0 : index
    %141 = vector.load %arg3[%c16, %c0_114, %c0_115] : memref<49x44x64xf32, #tpu.memory_space<vmem>>, vector<1x44x64xf32>
    %142 = vector.shape_cast %141 : vector<1x44x64xf32> to vector<44x64xf32>
    %cst_116 = arith.constant dense<0.000000e+00> : vector<128x64xf32>
    %143 = tpu.matmul %140, %142, %cst_116 {dimension_numbers = #tpu.dot_dimension_numbers<[1], [0], [0], [1], [0, 0, 1, 1], [], []>} : vector<128x44xf32>, vector<44x64xf32>, vector<128x64xf32> -> vector<128x64xf32>
    %144 = arith.addf %136, %143 : vector<128x64xf32>
    %c2_i32_117 = arith.constant 2 : i32
    %145 = arith.addi %1, %c2_i32_117 : i32
    %146 = arith.index_cast %145 : i32 to index
    %c3_118 = arith.constant 3 : index
    %c0_119 = arith.constant 0 : index
    %147 = vector.load %arg6[%146, %c3_118, %c0_119] : memref<22x22x44xf32, #tpu.memory_space<vmem>>, vector<8x16x44xf32>
    %148 = vector.shape_cast %147 : vector<8x16x44xf32> to vector<128x44xf32>
    %c17 = arith.constant 17 : index
    %c0_120 = arith.constant 0 : index
    %c0_121 = arith.constant 0 : index
    %149 = vector.load %arg3[%c17, %c0_120, %c0_121] : memref<49x44x64xf32, #tpu.memory_space<vmem>>, vector<1x44x64xf32>
    %150 = vector.shape_cast %149 : vector<1x44x64xf32> to vector<44x64xf32>
    %cst_122 = arith.constant dense<0.000000e+00> : vector<128x64xf32>
    %151 = tpu.matmul %148, %150, %cst_122 {dimension_numbers = #tpu.dot_dimension_numbers<[1], [0], [0], [1], [0, 0, 1, 1], [], []>} : vector<128x44xf32>, vector<44x64xf32>, vector<128x64xf32> -> vector<128x64xf32>
    %152 = arith.addf %144, %151 : vector<128x64xf32>
    %c2_i32_123 = arith.constant 2 : i32
    %153 = arith.addi %1, %c2_i32_123 : i32
    %154 = arith.index_cast %153 : i32 to index
    %c4_124 = arith.constant 4 : index
    %c0_125 = arith.constant 0 : index
    %155 = vector.load %arg6[%154, %c4_124, %c0_125] : memref<22x22x44xf32, #tpu.memory_space<vmem>>, vector<8x16x44xf32>
    %156 = vector.shape_cast %155 : vector<8x16x44xf32> to vector<128x44xf32>
    %c18 = arith.constant 18 : index
    %c0_126 = arith.constant 0 : index
    %c0_127 = arith.constant 0 : index
    %157 = vector.load %arg3[%c18, %c0_126, %c0_127] : memref<49x44x64xf32, #tpu.memory_space<vmem>>, vector<1x44x64xf32>
    %158 = vector.shape_cast %157 : vector<1x44x64xf32> to vector<44x64xf32>
    %cst_128 = arith.constant dense<0.000000e+00> : vector<128x64xf32>
    %159 = tpu.matmul %156, %158, %cst_128 {dimension_numbers = #tpu.dot_dimension_numbers<[1], [0], [0], [1], [0, 0, 1, 1], [], []>} : vector<128x44xf32>, vector<44x64xf32>, vector<128x64xf32> -> vector<128x64xf32>
    %160 = arith.addf %152, %159 : vector<128x64xf32>
    %c2_i32_129 = arith.constant 2 : i32
    %161 = arith.addi %1, %c2_i32_129 : i32
    %162 = arith.index_cast %161 : i32 to index
    %c5_130 = arith.constant 5 : index
    %c0_131 = arith.constant 0 : index
    %163 = vector.load %arg6[%162, %c5_130, %c0_131] : memref<22x22x44xf32, #tpu.memory_space<vmem>>, vector<8x16x44xf32>
    %164 = vector.shape_cast %163 : vector<8x16x44xf32> to vector<128x44xf32>
    %c19 = arith.constant 19 : index
    %c0_132 = arith.constant 0 : index
    %c0_133 = arith.constant 0 : index
    %165 = vector.load %arg3[%c19, %c0_132, %c0_133] : memref<49x44x64xf32, #tpu.memory_space<vmem>>, vector<1x44x64xf32>
    %166 = vector.shape_cast %165 : vector<1x44x64xf32> to vector<44x64xf32>
    %cst_134 = arith.constant dense<0.000000e+00> : vector<128x64xf32>
    %167 = tpu.matmul %164, %166, %cst_134 {dimension_numbers = #tpu.dot_dimension_numbers<[1], [0], [0], [1], [0, 0, 1, 1], [], []>} : vector<128x44xf32>, vector<44x64xf32>, vector<128x64xf32> -> vector<128x64xf32>
    %168 = arith.addf %160, %167 : vector<128x64xf32>
    %c2_i32_135 = arith.constant 2 : i32
    %169 = arith.addi %1, %c2_i32_135 : i32
    %170 = arith.index_cast %169 : i32 to index
    %c6_136 = arith.constant 6 : index
    %c0_137 = arith.constant 0 : index
    %171 = vector.load %arg6[%170, %c6_136, %c0_137] : memref<22x22x44xf32, #tpu.memory_space<vmem>>, vector<8x16x44xf32>
    %172 = vector.shape_cast %171 : vector<8x16x44xf32> to vector<128x44xf32>
    %c20 = arith.constant 20 : index
    %c0_138 = arith.constant 0 : index
    %c0_139 = arith.constant 0 : index
    %173 = vector.load %arg3[%c20, %c0_138, %c0_139] : memref<49x44x64xf32, #tpu.memory_space<vmem>>, vector<1x44x64xf32>
    %174 = vector.shape_cast %173 : vector<1x44x64xf32> to vector<44x64xf32>
    %cst_140 = arith.constant dense<0.000000e+00> : vector<128x64xf32>
    %175 = tpu.matmul %172, %174, %cst_140 {dimension_numbers = #tpu.dot_dimension_numbers<[1], [0], [0], [1], [0, 0, 1, 1], [], []>} : vector<128x44xf32>, vector<44x64xf32>, vector<128x64xf32> -> vector<128x64xf32>
    %176 = arith.addf %168, %175 : vector<128x64xf32>
    %c3_i32 = arith.constant 3 : i32
    %177 = arith.addi %1, %c3_i32 : i32
    %178 = arith.index_cast %177 : i32 to index
    %c0_141 = arith.constant 0 : index
    %c0_142 = arith.constant 0 : index
    %179 = vector.load %arg6[%178, %c0_141, %c0_142] : memref<22x22x44xf32, #tpu.memory_space<vmem>>, vector<8x16x44xf32>
    %180 = vector.shape_cast %179 : vector<8x16x44xf32> to vector<128x44xf32>
    %c21 = arith.constant 21 : index
    %c0_143 = arith.constant 0 : index
    %c0_144 = arith.constant 0 : index
    %181 = vector.load %arg3[%c21, %c0_143, %c0_144] : memref<49x44x64xf32, #tpu.memory_space<vmem>>, vector<1x44x64xf32>
    %182 = vector.shape_cast %181 : vector<1x44x64xf32> to vector<44x64xf32>
    %cst_145 = arith.constant dense<0.000000e+00> : vector<128x64xf32>
    %183 = tpu.matmul %180, %182, %cst_145 {dimension_numbers = #tpu.dot_dimension_numbers<[1], [0], [0], [1], [0, 0, 1, 1], [], []>} : vector<128x44xf32>, vector<44x64xf32>, vector<128x64xf32> -> vector<128x64xf32>
    %184 = arith.addf %176, %183 : vector<128x64xf32>
    %c3_i32_146 = arith.constant 3 : i32
    %185 = arith.addi %1, %c3_i32_146 : i32
    %186 = arith.index_cast %185 : i32 to index
    %c1_147 = arith.constant 1 : index
    %c0_148 = arith.constant 0 : index
    %187 = vector.load %arg6[%186, %c1_147, %c0_148] : memref<22x22x44xf32, #tpu.memory_space<vmem>>, vector<8x16x44xf32>
    %188 = vector.shape_cast %187 : vector<8x16x44xf32> to vector<128x44xf32>
    %c22 = arith.constant 22 : index
    %c0_149 = arith.constant 0 : index
    %c0_150 = arith.constant 0 : index
    %189 = vector.load %arg3[%c22, %c0_149, %c0_150] : memref<49x44x64xf32, #tpu.memory_space<vmem>>, vector<1x44x64xf32>
    %190 = vector.shape_cast %189 : vector<1x44x64xf32> to vector<44x64xf32>
    %cst_151 = arith.constant dense<0.000000e+00> : vector<128x64xf32>
    %191 = tpu.matmul %188, %190, %cst_151 {dimension_numbers = #tpu.dot_dimension_numbers<[1], [0], [0], [1], [0, 0, 1, 1], [], []>} : vector<128x44xf32>, vector<44x64xf32>, vector<128x64xf32> -> vector<128x64xf32>
    %192 = arith.addf %184, %191 : vector<128x64xf32>
    %c3_i32_152 = arith.constant 3 : i32
    %193 = arith.addi %1, %c3_i32_152 : i32
    %194 = arith.index_cast %193 : i32 to index
    %c2_153 = arith.constant 2 : index
    %c0_154 = arith.constant 0 : index
    %195 = vector.load %arg6[%194, %c2_153, %c0_154] : memref<22x22x44xf32, #tpu.memory_space<vmem>>, vector<8x16x44xf32>
    %196 = vector.shape_cast %195 : vector<8x16x44xf32> to vector<128x44xf32>
    %c23 = arith.constant 23 : index
    %c0_155 = arith.constant 0 : index
    %c0_156 = arith.constant 0 : index
    %197 = vector.load %arg3[%c23, %c0_155, %c0_156] : memref<49x44x64xf32, #tpu.memory_space<vmem>>, vector<1x44x64xf32>
    %198 = vector.shape_cast %197 : vector<1x44x64xf32> to vector<44x64xf32>
    %cst_157 = arith.constant dense<0.000000e+00> : vector<128x64xf32>
    %199 = tpu.matmul %196, %198, %cst_157 {dimension_numbers = #tpu.dot_dimension_numbers<[1], [0], [0], [1], [0, 0, 1, 1], [], []>} : vector<128x44xf32>, vector<44x64xf32>, vector<128x64xf32> -> vector<128x64xf32>
    %200 = arith.addf %192, %199 : vector<128x64xf32>
    %c3_i32_158 = arith.constant 3 : i32
    %201 = arith.addi %1, %c3_i32_158 : i32
    %202 = arith.index_cast %201 : i32 to index
    %c3_159 = arith.constant 3 : index
    %c0_160 = arith.constant 0 : index
    %203 = vector.load %arg6[%202, %c3_159, %c0_160] : memref<22x22x44xf32, #tpu.memory_space<vmem>>, vector<8x16x44xf32>
    %204 = vector.shape_cast %203 : vector<8x16x44xf32> to vector<128x44xf32>
    %c24 = arith.constant 24 : index
    %c0_161 = arith.constant 0 : index
    %c0_162 = arith.constant 0 : index
    %205 = vector.load %arg3[%c24, %c0_161, %c0_162] : memref<49x44x64xf32, #tpu.memory_space<vmem>>, vector<1x44x64xf32>
    %206 = vector.shape_cast %205 : vector<1x44x64xf32> to vector<44x64xf32>
    %cst_163 = arith.constant dense<0.000000e+00> : vector<128x64xf32>
    %207 = tpu.matmul %204, %206, %cst_163 {dimension_numbers = #tpu.dot_dimension_numbers<[1], [0], [0], [1], [0, 0, 1, 1], [], []>} : vector<128x44xf32>, vector<44x64xf32>, vector<128x64xf32> -> vector<128x64xf32>
    %208 = arith.addf %200, %207 : vector<128x64xf32>
    %c3_i32_164 = arith.constant 3 : i32
    %209 = arith.addi %1, %c3_i32_164 : i32
    %210 = arith.index_cast %209 : i32 to index
    %c4_165 = arith.constant 4 : index
    %c0_166 = arith.constant 0 : index
    %211 = vector.load %arg6[%210, %c4_165, %c0_166] : memref<22x22x44xf32, #tpu.memory_space<vmem>>, vector<8x16x44xf32>
    %212 = vector.shape_cast %211 : vector<8x16x44xf32> to vector<128x44xf32>
    %c25_167 = arith.constant 25 : index
    %c0_168 = arith.constant 0 : index
    %c0_169 = arith.constant 0 : index
    %213 = vector.load %arg3[%c25_167, %c0_168, %c0_169] : memref<49x44x64xf32, #tpu.memory_space<vmem>>, vector<1x44x64xf32>
    %214 = vector.shape_cast %213 : vector<1x44x64xf32> to vector<44x64xf32>
    %cst_170 = arith.constant dense<0.000000e+00> : vector<128x64xf32>
    %215 = tpu.matmul %212, %214, %cst_170 {dimension_numbers = #tpu.dot_dimension_numbers<[1], [0], [0], [1], [0, 0, 1, 1], [], []>} : vector<128x44xf32>, vector<44x64xf32>, vector<128x64xf32> -> vector<128x64xf32>
    %216 = arith.addf %208, %215 : vector<128x64xf32>
    %c3_i32_171 = arith.constant 3 : i32
    %217 = arith.addi %1, %c3_i32_171 : i32
    %218 = arith.index_cast %217 : i32 to index
    %c5_172 = arith.constant 5 : index
    %c0_173 = arith.constant 0 : index
    %219 = vector.load %arg6[%218, %c5_172, %c0_173] : memref<22x22x44xf32, #tpu.memory_space<vmem>>, vector<8x16x44xf32>
    %220 = vector.shape_cast %219 : vector<8x16x44xf32> to vector<128x44xf32>
    %c26 = arith.constant 26 : index
    %c0_174 = arith.constant 0 : index
    %c0_175 = arith.constant 0 : index
    %221 = vector.load %arg3[%c26, %c0_174, %c0_175] : memref<49x44x64xf32, #tpu.memory_space<vmem>>, vector<1x44x64xf32>
    %222 = vector.shape_cast %221 : vector<1x44x64xf32> to vector<44x64xf32>
    %cst_176 = arith.constant dense<0.000000e+00> : vector<128x64xf32>
    %223 = tpu.matmul %220, %222, %cst_176 {dimension_numbers = #tpu.dot_dimension_numbers<[1], [0], [0], [1], [0, 0, 1, 1], [], []>} : vector<128x44xf32>, vector<44x64xf32>, vector<128x64xf32> -> vector<128x64xf32>
    %224 = arith.addf %216, %223 : vector<128x64xf32>
    %c3_i32_177 = arith.constant 3 : i32
    %225 = arith.addi %1, %c3_i32_177 : i32
    %226 = arith.index_cast %225 : i32 to index
    %c6_178 = arith.constant 6 : index
    %c0_179 = arith.constant 0 : index
    %227 = vector.load %arg6[%226, %c6_178, %c0_179] : memref<22x22x44xf32, #tpu.memory_space<vmem>>, vector<8x16x44xf32>
    %228 = vector.shape_cast %227 : vector<8x16x44xf32> to vector<128x44xf32>
    %c27 = arith.constant 27 : index
    %c0_180 = arith.constant 0 : index
    %c0_181 = arith.constant 0 : index
    %229 = vector.load %arg3[%c27, %c0_180, %c0_181] : memref<49x44x64xf32, #tpu.memory_space<vmem>>, vector<1x44x64xf32>
    %230 = vector.shape_cast %229 : vector<1x44x64xf32> to vector<44x64xf32>
    %cst_182 = arith.constant dense<0.000000e+00> : vector<128x64xf32>
    %231 = tpu.matmul %228, %230, %cst_182 {dimension_numbers = #tpu.dot_dimension_numbers<[1], [0], [0], [1], [0, 0, 1, 1], [], []>} : vector<128x44xf32>, vector<44x64xf32>, vector<128x64xf32> -> vector<128x64xf32>
    %232 = arith.addf %224, %231 : vector<128x64xf32>
    %c4_i32 = arith.constant 4 : i32
    %233 = arith.addi %1, %c4_i32 : i32
    %234 = arith.index_cast %233 : i32 to index
    %c0_183 = arith.constant 0 : index
    %c0_184 = arith.constant 0 : index
    %235 = vector.load %arg6[%234, %c0_183, %c0_184] : memref<22x22x44xf32, #tpu.memory_space<vmem>>, vector<8x16x44xf32>
    %236 = vector.shape_cast %235 : vector<8x16x44xf32> to vector<128x44xf32>
    %c28 = arith.constant 28 : index
    %c0_185 = arith.constant 0 : index
    %c0_186 = arith.constant 0 : index
    %237 = vector.load %arg3[%c28, %c0_185, %c0_186] : memref<49x44x64xf32, #tpu.memory_space<vmem>>, vector<1x44x64xf32>
    %238 = vector.shape_cast %237 : vector<1x44x64xf32> to vector<44x64xf32>
    %cst_187 = arith.constant dense<0.000000e+00> : vector<128x64xf32>
    %239 = tpu.matmul %236, %238, %cst_187 {dimension_numbers = #tpu.dot_dimension_numbers<[1], [0], [0], [1], [0, 0, 1, 1], [], []>} : vector<128x44xf32>, vector<44x64xf32>, vector<128x64xf32> -> vector<128x64xf32>
    %240 = arith.addf %232, %239 : vector<128x64xf32>
    %c4_i32_188 = arith.constant 4 : i32
    %241 = arith.addi %1, %c4_i32_188 : i32
    %242 = arith.index_cast %241 : i32 to index
    %c1_189 = arith.constant 1 : index
    %c0_190 = arith.constant 0 : index
    %243 = vector.load %arg6[%242, %c1_189, %c0_190] : memref<22x22x44xf32, #tpu.memory_space<vmem>>, vector<8x16x44xf32>
    %244 = vector.shape_cast %243 : vector<8x16x44xf32> to vector<128x44xf32>
    %c29 = arith.constant 29 : index
    %c0_191 = arith.constant 0 : index
    %c0_192 = arith.constant 0 : index
    %245 = vector.load %arg3[%c29, %c0_191, %c0_192] : memref<49x44x64xf32, #tpu.memory_space<vmem>>, vector<1x44x64xf32>
    %246 = vector.shape_cast %245 : vector<1x44x64xf32> to vector<44x64xf32>
    %cst_193 = arith.constant dense<0.000000e+00> : vector<128x64xf32>
    %247 = tpu.matmul %244, %246, %cst_193 {dimension_numbers = #tpu.dot_dimension_numbers<[1], [0], [0], [1], [0, 0, 1, 1], [], []>} : vector<128x44xf32>, vector<44x64xf32>, vector<128x64xf32> -> vector<128x64xf32>
    %248 = arith.addf %240, %247 : vector<128x64xf32>
    %c4_i32_194 = arith.constant 4 : i32
    %249 = arith.addi %1, %c4_i32_194 : i32
    %250 = arith.index_cast %249 : i32 to index
    %c2_195 = arith.constant 2 : index
    %c0_196 = arith.constant 0 : index
    %251 = vector.load %arg6[%250, %c2_195, %c0_196] : memref<22x22x44xf32, #tpu.memory_space<vmem>>, vector<8x16x44xf32>
    %252 = vector.shape_cast %251 : vector<8x16x44xf32> to vector<128x44xf32>
    %c30 = arith.constant 30 : index
    %c0_197 = arith.constant 0 : index
    %c0_198 = arith.constant 0 : index
    %253 = vector.load %arg3[%c30, %c0_197, %c0_198] : memref<49x44x64xf32, #tpu.memory_space<vmem>>, vector<1x44x64xf32>
    %254 = vector.shape_cast %253 : vector<1x44x64xf32> to vector<44x64xf32>
    %cst_199 = arith.constant dense<0.000000e+00> : vector<128x64xf32>
    %255 = tpu.matmul %252, %254, %cst_199 {dimension_numbers = #tpu.dot_dimension_numbers<[1], [0], [0], [1], [0, 0, 1, 1], [], []>} : vector<128x44xf32>, vector<44x64xf32>, vector<128x64xf32> -> vector<128x64xf32>
    %256 = arith.addf %248, %255 : vector<128x64xf32>
    %c4_i32_200 = arith.constant 4 : i32
    %257 = arith.addi %1, %c4_i32_200 : i32
    %258 = arith.index_cast %257 : i32 to index
    %c3_201 = arith.constant 3 : index
    %c0_202 = arith.constant 0 : index
    %259 = vector.load %arg6[%258, %c3_201, %c0_202] : memref<22x22x44xf32, #tpu.memory_space<vmem>>, vector<8x16x44xf32>
    %260 = vector.shape_cast %259 : vector<8x16x44xf32> to vector<128x44xf32>
    %c31 = arith.constant 31 : index
    %c0_203 = arith.constant 0 : index
    %c0_204 = arith.constant 0 : index
    %261 = vector.load %arg3[%c31, %c0_203, %c0_204] : memref<49x44x64xf32, #tpu.memory_space<vmem>>, vector<1x44x64xf32>
    %262 = vector.shape_cast %261 : vector<1x44x64xf32> to vector<44x64xf32>
    %cst_205 = arith.constant dense<0.000000e+00> : vector<128x64xf32>
    %263 = tpu.matmul %260, %262, %cst_205 {dimension_numbers = #tpu.dot_dimension_numbers<[1], [0], [0], [1], [0, 0, 1, 1], [], []>} : vector<128x44xf32>, vector<44x64xf32>, vector<128x64xf32> -> vector<128x64xf32>
    %264 = arith.addf %256, %263 : vector<128x64xf32>
    %c4_i32_206 = arith.constant 4 : i32
    %265 = arith.addi %1, %c4_i32_206 : i32
    %266 = arith.index_cast %265 : i32 to index
    %c4_207 = arith.constant 4 : index
    %c0_208 = arith.constant 0 : index
    %267 = vector.load %arg6[%266, %c4_207, %c0_208] : memref<22x22x44xf32, #tpu.memory_space<vmem>>, vector<8x16x44xf32>
    %268 = vector.shape_cast %267 : vector<8x16x44xf32> to vector<128x44xf32>
    %c32 = arith.constant 32 : index
    %c0_209 = arith.constant 0 : index
    %c0_210 = arith.constant 0 : index
    %269 = vector.load %arg3[%c32, %c0_209, %c0_210] : memref<49x44x64xf32, #tpu.memory_space<vmem>>, vector<1x44x64xf32>
    %270 = vector.shape_cast %269 : vector<1x44x64xf32> to vector<44x64xf32>
    %cst_211 = arith.constant dense<0.000000e+00> : vector<128x64xf32>
    %271 = tpu.matmul %268, %270, %cst_211 {dimension_numbers = #tpu.dot_dimension_numbers<[1], [0], [0], [1], [0, 0, 1, 1], [], []>} : vector<128x44xf32>, vector<44x64xf32>, vector<128x64xf32> -> vector<128x64xf32>
    %272 = arith.addf %264, %271 : vector<128x64xf32>
    %c4_i32_212 = arith.constant 4 : i32
    %273 = arith.addi %1, %c4_i32_212 : i32
    %274 = arith.index_cast %273 : i32 to index
    %c5_213 = arith.constant 5 : index
    %c0_214 = arith.constant 0 : index
    %275 = vector.load %arg6[%274, %c5_213, %c0_214] : memref<22x22x44xf32, #tpu.memory_space<vmem>>, vector<8x16x44xf32>
    %276 = vector.shape_cast %275 : vector<8x16x44xf32> to vector<128x44xf32>
    %c33 = arith.constant 33 : index
    %c0_215 = arith.constant 0 : index
    %c0_216 = arith.constant 0 : index
    %277 = vector.load %arg3[%c33, %c0_215, %c0_216] : memref<49x44x64xf32, #tpu.memory_space<vmem>>, vector<1x44x64xf32>
    %278 = vector.shape_cast %277 : vector<1x44x64xf32> to vector<44x64xf32>
    %cst_217 = arith.constant dense<0.000000e+00> : vector<128x64xf32>
    %279 = tpu.matmul %276, %278, %cst_217 {dimension_numbers = #tpu.dot_dimension_numbers<[1], [0], [0], [1], [0, 0, 1, 1], [], []>} : vector<128x44xf32>, vector<44x64xf32>, vector<128x64xf32> -> vector<128x64xf32>
    %280 = arith.addf %272, %279 : vector<128x64xf32>
    %c4_i32_218 = arith.constant 4 : i32
    %281 = arith.addi %1, %c4_i32_218 : i32
    %282 = arith.index_cast %281 : i32 to index
    %c6_219 = arith.constant 6 : index
    %c0_220 = arith.constant 0 : index
    %283 = vector.load %arg6[%282, %c6_219, %c0_220] : memref<22x22x44xf32, #tpu.memory_space<vmem>>, vector<8x16x44xf32>
    %284 = vector.shape_cast %283 : vector<8x16x44xf32> to vector<128x44xf32>
    %c34 = arith.constant 34 : index
    %c0_221 = arith.constant 0 : index
    %c0_222 = arith.constant 0 : index
    %285 = vector.load %arg3[%c34, %c0_221, %c0_222] : memref<49x44x64xf32, #tpu.memory_space<vmem>>, vector<1x44x64xf32>
    %286 = vector.shape_cast %285 : vector<1x44x64xf32> to vector<44x64xf32>
    %cst_223 = arith.constant dense<0.000000e+00> : vector<128x64xf32>
    %287 = tpu.matmul %284, %286, %cst_223 {dimension_numbers = #tpu.dot_dimension_numbers<[1], [0], [0], [1], [0, 0, 1, 1], [], []>} : vector<128x44xf32>, vector<44x64xf32>, vector<128x64xf32> -> vector<128x64xf32>
    %288 = arith.addf %280, %287 : vector<128x64xf32>
    %c5_i32 = arith.constant 5 : i32
    %289 = arith.addi %1, %c5_i32 : i32
    %290 = arith.index_cast %289 : i32 to index
    %c0_224 = arith.constant 0 : index
    %c0_225 = arith.constant 0 : index
    %291 = vector.load %arg6[%290, %c0_224, %c0_225] : memref<22x22x44xf32, #tpu.memory_space<vmem>>, vector<8x16x44xf32>
    %292 = vector.shape_cast %291 : vector<8x16x44xf32> to vector<128x44xf32>
    %c35 = arith.constant 35 : index
    %c0_226 = arith.constant 0 : index
    %c0_227 = arith.constant 0 : index
    %293 = vector.load %arg3[%c35, %c0_226, %c0_227] : memref<49x44x64xf32, #tpu.memory_space<vmem>>, vector<1x44x64xf32>
    %294 = vector.shape_cast %293 : vector<1x44x64xf32> to vector<44x64xf32>
    %cst_228 = arith.constant dense<0.000000e+00> : vector<128x64xf32>
    %295 = tpu.matmul %292, %294, %cst_228 {dimension_numbers = #tpu.dot_dimension_numbers<[1], [0], [0], [1], [0, 0, 1, 1], [], []>} : vector<128x44xf32>, vector<44x64xf32>, vector<128x64xf32> -> vector<128x64xf32>
    %296 = arith.addf %288, %295 : vector<128x64xf32>
    %c5_i32_229 = arith.constant 5 : i32
    %297 = arith.addi %1, %c5_i32_229 : i32
    %298 = arith.index_cast %297 : i32 to index
    %c1_230 = arith.constant 1 : index
    %c0_231 = arith.constant 0 : index
    %299 = vector.load %arg6[%298, %c1_230, %c0_231] : memref<22x22x44xf32, #tpu.memory_space<vmem>>, vector<8x16x44xf32>
    %300 = vector.shape_cast %299 : vector<8x16x44xf32> to vector<128x44xf32>
    %c36 = arith.constant 36 : index
    %c0_232 = arith.constant 0 : index
    %c0_233 = arith.constant 0 : index
    %301 = vector.load %arg3[%c36, %c0_232, %c0_233] : memref<49x44x64xf32, #tpu.memory_space<vmem>>, vector<1x44x64xf32>
    %302 = vector.shape_cast %301 : vector<1x44x64xf32> to vector<44x64xf32>
    %cst_234 = arith.constant dense<0.000000e+00> : vector<128x64xf32>
    %303 = tpu.matmul %300, %302, %cst_234 {dimension_numbers = #tpu.dot_dimension_numbers<[1], [0], [0], [1], [0, 0, 1, 1], [], []>} : vector<128x44xf32>, vector<44x64xf32>, vector<128x64xf32> -> vector<128x64xf32>
    %304 = arith.addf %296, %303 : vector<128x64xf32>
    %c5_i32_235 = arith.constant 5 : i32
    %305 = arith.addi %1, %c5_i32_235 : i32
    %306 = arith.index_cast %305 : i32 to index
    %c2_236 = arith.constant 2 : index
    %c0_237 = arith.constant 0 : index
    %307 = vector.load %arg6[%306, %c2_236, %c0_237] : memref<22x22x44xf32, #tpu.memory_space<vmem>>, vector<8x16x44xf32>
    %308 = vector.shape_cast %307 : vector<8x16x44xf32> to vector<128x44xf32>
    %c37 = arith.constant 37 : index
    %c0_238 = arith.constant 0 : index
    %c0_239 = arith.constant 0 : index
    %309 = vector.load %arg3[%c37, %c0_238, %c0_239] : memref<49x44x64xf32, #tpu.memory_space<vmem>>, vector<1x44x64xf32>
    %310 = vector.shape_cast %309 : vector<1x44x64xf32> to vector<44x64xf32>
    %cst_240 = arith.constant dense<0.000000e+00> : vector<128x64xf32>
    %311 = tpu.matmul %308, %310, %cst_240 {dimension_numbers = #tpu.dot_dimension_numbers<[1], [0], [0], [1], [0, 0, 1, 1], [], []>} : vector<128x44xf32>, vector<44x64xf32>, vector<128x64xf32> -> vector<128x64xf32>
    %312 = arith.addf %304, %311 : vector<128x64xf32>
    %c5_i32_241 = arith.constant 5 : i32
    %313 = arith.addi %1, %c5_i32_241 : i32
    %314 = arith.index_cast %313 : i32 to index
    %c3_242 = arith.constant 3 : index
    %c0_243 = arith.constant 0 : index
    %315 = vector.load %arg6[%314, %c3_242, %c0_243] : memref<22x22x44xf32, #tpu.memory_space<vmem>>, vector<8x16x44xf32>
    %316 = vector.shape_cast %315 : vector<8x16x44xf32> to vector<128x44xf32>
    %c38 = arith.constant 38 : index
    %c0_244 = arith.constant 0 : index
    %c0_245 = arith.constant 0 : index
    %317 = vector.load %arg3[%c38, %c0_244, %c0_245] : memref<49x44x64xf32, #tpu.memory_space<vmem>>, vector<1x44x64xf32>
    %318 = vector.shape_cast %317 : vector<1x44x64xf32> to vector<44x64xf32>
    %cst_246 = arith.constant dense<0.000000e+00> : vector<128x64xf32>
    %319 = tpu.matmul %316, %318, %cst_246 {dimension_numbers = #tpu.dot_dimension_numbers<[1], [0], [0], [1], [0, 0, 1, 1], [], []>} : vector<128x44xf32>, vector<44x64xf32>, vector<128x64xf32> -> vector<128x64xf32>
    %320 = arith.addf %312, %319 : vector<128x64xf32>
    %c5_i32_247 = arith.constant 5 : i32
    %321 = arith.addi %1, %c5_i32_247 : i32
    %322 = arith.index_cast %321 : i32 to index
    %c4_248 = arith.constant 4 : index
    %c0_249 = arith.constant 0 : index
    %323 = vector.load %arg6[%322, %c4_248, %c0_249] : memref<22x22x44xf32, #tpu.memory_space<vmem>>, vector<8x16x44xf32>
    %324 = vector.shape_cast %323 : vector<8x16x44xf32> to vector<128x44xf32>
    %c39 = arith.constant 39 : index
    %c0_250 = arith.constant 0 : index
    %c0_251 = arith.constant 0 : index
    %325 = vector.load %arg3[%c39, %c0_250, %c0_251] : memref<49x44x64xf32, #tpu.memory_space<vmem>>, vector<1x44x64xf32>
    %326 = vector.shape_cast %325 : vector<1x44x64xf32> to vector<44x64xf32>
    %cst_252 = arith.constant dense<0.000000e+00> : vector<128x64xf32>
    %327 = tpu.matmul %324, %326, %cst_252 {dimension_numbers = #tpu.dot_dimension_numbers<[1], [0], [0], [1], [0, 0, 1, 1], [], []>} : vector<128x44xf32>, vector<44x64xf32>, vector<128x64xf32> -> vector<128x64xf32>
    %328 = arith.addf %320, %327 : vector<128x64xf32>
    %c5_i32_253 = arith.constant 5 : i32
    %329 = arith.addi %1, %c5_i32_253 : i32
    %330 = arith.index_cast %329 : i32 to index
    %c5_254 = arith.constant 5 : index
    %c0_255 = arith.constant 0 : index
    %331 = vector.load %arg6[%330, %c5_254, %c0_255] : memref<22x22x44xf32, #tpu.memory_space<vmem>>, vector<8x16x44xf32>
    %332 = vector.shape_cast %331 : vector<8x16x44xf32> to vector<128x44xf32>
    %c40 = arith.constant 40 : index
    %c0_256 = arith.constant 0 : index
    %c0_257 = arith.constant 0 : index
    %333 = vector.load %arg3[%c40, %c0_256, %c0_257] : memref<49x44x64xf32, #tpu.memory_space<vmem>>, vector<1x44x64xf32>
    %334 = vector.shape_cast %333 : vector<1x44x64xf32> to vector<44x64xf32>
    %cst_258 = arith.constant dense<0.000000e+00> : vector<128x64xf32>
    %335 = tpu.matmul %332, %334, %cst_258 {dimension_numbers = #tpu.dot_dimension_numbers<[1], [0], [0], [1], [0, 0, 1, 1], [], []>} : vector<128x44xf32>, vector<44x64xf32>, vector<128x64xf32> -> vector<128x64xf32>
    %336 = arith.addf %328, %335 : vector<128x64xf32>
    %c5_i32_259 = arith.constant 5 : i32
    %337 = arith.addi %1, %c5_i32_259 : i32
    %338 = arith.index_cast %337 : i32 to index
    %c6_260 = arith.constant 6 : index
    %c0_261 = arith.constant 0 : index
    %339 = vector.load %arg6[%338, %c6_260, %c0_261] : memref<22x22x44xf32, #tpu.memory_space<vmem>>, vector<8x16x44xf32>
    %340 = vector.shape_cast %339 : vector<8x16x44xf32> to vector<128x44xf32>
    %c41 = arith.constant 41 : index
    %c0_262 = arith.constant 0 : index
    %c0_263 = arith.constant 0 : index
    %341 = vector.load %arg3[%c41, %c0_262, %c0_263] : memref<49x44x64xf32, #tpu.memory_space<vmem>>, vector<1x44x64xf32>
    %342 = vector.shape_cast %341 : vector<1x44x64xf32> to vector<44x64xf32>
    %cst_264 = arith.constant dense<0.000000e+00> : vector<128x64xf32>
    %343 = tpu.matmul %340, %342, %cst_264 {dimension_numbers = #tpu.dot_dimension_numbers<[1], [0], [0], [1], [0, 0, 1, 1], [], []>} : vector<128x44xf32>, vector<44x64xf32>, vector<128x64xf32> -> vector<128x64xf32>
    %344 = arith.addf %336, %343 : vector<128x64xf32>
    %c6_i32 = arith.constant 6 : i32
    %345 = arith.addi %1, %c6_i32 : i32
    %346 = arith.index_cast %345 : i32 to index
    %c0_265 = arith.constant 0 : index
    %c0_266 = arith.constant 0 : index
    %347 = vector.load %arg6[%346, %c0_265, %c0_266] : memref<22x22x44xf32, #tpu.memory_space<vmem>>, vector<8x16x44xf32>
    %348 = vector.shape_cast %347 : vector<8x16x44xf32> to vector<128x44xf32>
    %c42 = arith.constant 42 : index
    %c0_267 = arith.constant 0 : index
    %c0_268 = arith.constant 0 : index
    %349 = vector.load %arg3[%c42, %c0_267, %c0_268] : memref<49x44x64xf32, #tpu.memory_space<vmem>>, vector<1x44x64xf32>
    %350 = vector.shape_cast %349 : vector<1x44x64xf32> to vector<44x64xf32>
    %cst_269 = arith.constant dense<0.000000e+00> : vector<128x64xf32>
    %351 = tpu.matmul %348, %350, %cst_269 {dimension_numbers = #tpu.dot_dimension_numbers<[1], [0], [0], [1], [0, 0, 1, 1], [], []>} : vector<128x44xf32>, vector<44x64xf32>, vector<128x64xf32> -> vector<128x64xf32>
    %352 = arith.addf %344, %351 : vector<128x64xf32>
    %c6_i32_270 = arith.constant 6 : i32
    %353 = arith.addi %1, %c6_i32_270 : i32
    %354 = arith.index_cast %353 : i32 to index
    %c1_271 = arith.constant 1 : index
    %c0_272 = arith.constant 0 : index
    %355 = vector.load %arg6[%354, %c1_271, %c0_272] : memref<22x22x44xf32, #tpu.memory_space<vmem>>, vector<8x16x44xf32>
    %356 = vector.shape_cast %355 : vector<8x16x44xf32> to vector<128x44xf32>
    %c43 = arith.constant 43 : index
    %c0_273 = arith.constant 0 : index
    %c0_274 = arith.constant 0 : index
    %357 = vector.load %arg3[%c43, %c0_273, %c0_274] : memref<49x44x64xf32, #tpu.memory_space<vmem>>, vector<1x44x64xf32>
    %358 = vector.shape_cast %357 : vector<1x44x64xf32> to vector<44x64xf32>
    %cst_275 = arith.constant dense<0.000000e+00> : vector<128x64xf32>
    %359 = tpu.matmul %356, %358, %cst_275 {dimension_numbers = #tpu.dot_dimension_numbers<[1], [0], [0], [1], [0, 0, 1, 1], [], []>} : vector<128x44xf32>, vector<44x64xf32>, vector<128x64xf32> -> vector<128x64xf32>
    %360 = arith.addf %352, %359 : vector<128x64xf32>
    %c6_i32_276 = arith.constant 6 : i32
    %361 = arith.addi %1, %c6_i32_276 : i32
    %362 = arith.index_cast %361 : i32 to index
    %c2_277 = arith.constant 2 : index
    %c0_278 = arith.constant 0 : index
    %363 = vector.load %arg6[%362, %c2_277, %c0_278] : memref<22x22x44xf32, #tpu.memory_space<vmem>>, vector<8x16x44xf32>
    %364 = vector.shape_cast %363 : vector<8x16x44xf32> to vector<128x44xf32>
    %c44 = arith.constant 44 : index
    %c0_279 = arith.constant 0 : index
    %c0_280 = arith.constant 0 : index
    %365 = vector.load %arg3[%c44, %c0_279, %c0_280] : memref<49x44x64xf32, #tpu.memory_space<vmem>>, vector<1x44x64xf32>
    %366 = vector.shape_cast %365 : vector<1x44x64xf32> to vector<44x64xf32>
    %cst_281 = arith.constant dense<0.000000e+00> : vector<128x64xf32>
    %367 = tpu.matmul %364, %366, %cst_281 {dimension_numbers = #tpu.dot_dimension_numbers<[1], [0], [0], [1], [0, 0, 1, 1], [], []>} : vector<128x44xf32>, vector<44x64xf32>, vector<128x64xf32> -> vector<128x64xf32>
    %368 = arith.addf %360, %367 : vector<128x64xf32>
    %c6_i32_282 = arith.constant 6 : i32
    %369 = arith.addi %1, %c6_i32_282 : i32
    %370 = arith.index_cast %369 : i32 to index
    %c3_283 = arith.constant 3 : index
    %c0_284 = arith.constant 0 : index
    %371 = vector.load %arg6[%370, %c3_283, %c0_284] : memref<22x22x44xf32, #tpu.memory_space<vmem>>, vector<8x16x44xf32>
    %372 = vector.shape_cast %371 : vector<8x16x44xf32> to vector<128x44xf32>
    %c45 = arith.constant 45 : index
    %c0_285 = arith.constant 0 : index
    %c0_286 = arith.constant 0 : index
    %373 = vector.load %arg3[%c45, %c0_285, %c0_286] : memref<49x44x64xf32, #tpu.memory_space<vmem>>, vector<1x44x64xf32>
    %374 = vector.shape_cast %373 : vector<1x44x64xf32> to vector<44x64xf32>
    %cst_287 = arith.constant dense<0.000000e+00> : vector<128x64xf32>
    %375 = tpu.matmul %372, %374, %cst_287 {dimension_numbers = #tpu.dot_dimension_numbers<[1], [0], [0], [1], [0, 0, 1, 1], [], []>} : vector<128x44xf32>, vector<44x64xf32>, vector<128x64xf32> -> vector<128x64xf32>
    %376 = arith.addf %368, %375 : vector<128x64xf32>
    %c6_i32_288 = arith.constant 6 : i32
    %377 = arith.addi %1, %c6_i32_288 : i32
    %378 = arith.index_cast %377 : i32 to index
    %c4_289 = arith.constant 4 : index
    %c0_290 = arith.constant 0 : index
    %379 = vector.load %arg6[%378, %c4_289, %c0_290] : memref<22x22x44xf32, #tpu.memory_space<vmem>>, vector<8x16x44xf32>
    %380 = vector.shape_cast %379 : vector<8x16x44xf32> to vector<128x44xf32>
    %c46 = arith.constant 46 : index
    %c0_291 = arith.constant 0 : index
    %c0_292 = arith.constant 0 : index
    %381 = vector.load %arg3[%c46, %c0_291, %c0_292] : memref<49x44x64xf32, #tpu.memory_space<vmem>>, vector<1x44x64xf32>
    %382 = vector.shape_cast %381 : vector<1x44x64xf32> to vector<44x64xf32>
    %cst_293 = arith.constant dense<0.000000e+00> : vector<128x64xf32>
    %383 = tpu.matmul %380, %382, %cst_293 {dimension_numbers = #tpu.dot_dimension_numbers<[1], [0], [0], [1], [0, 0, 1, 1], [], []>} : vector<128x44xf32>, vector<44x64xf32>, vector<128x64xf32> -> vector<128x64xf32>
    %384 = arith.addf %376, %383 : vector<128x64xf32>
    %c6_i32_294 = arith.constant 6 : i32
    %385 = arith.addi %1, %c6_i32_294 : i32
    %386 = arith.index_cast %385 : i32 to index
    %c5_295 = arith.constant 5 : index
    %c0_296 = arith.constant 0 : index
    %387 = vector.load %arg6[%386, %c5_295, %c0_296] : memref<22x22x44xf32, #tpu.memory_space<vmem>>, vector<8x16x44xf32>
    %388 = vector.shape_cast %387 : vector<8x16x44xf32> to vector<128x44xf32>
    %c47 = arith.constant 47 : index
    %c0_297 = arith.constant 0 : index
    %c0_298 = arith.constant 0 : index
    %389 = vector.load %arg3[%c47, %c0_297, %c0_298] : memref<49x44x64xf32, #tpu.memory_space<vmem>>, vector<1x44x64xf32>
    %390 = vector.shape_cast %389 : vector<1x44x64xf32> to vector<44x64xf32>
    %cst_299 = arith.constant dense<0.000000e+00> : vector<128x64xf32>
    %391 = tpu.matmul %388, %390, %cst_299 {dimension_numbers = #tpu.dot_dimension_numbers<[1], [0], [0], [1], [0, 0, 1, 1], [], []>} : vector<128x44xf32>, vector<44x64xf32>, vector<128x64xf32> -> vector<128x64xf32>
    %392 = arith.addf %384, %391 : vector<128x64xf32>
    %c6_i32_300 = arith.constant 6 : i32
    %393 = arith.addi %1, %c6_i32_300 : i32
    %394 = arith.index_cast %393 : i32 to index
    %c6_301 = arith.constant 6 : index
    %c0_302 = arith.constant 0 : index
    %395 = vector.load %arg6[%394, %c6_301, %c0_302] : memref<22x22x44xf32, #tpu.memory_space<vmem>>, vector<8x16x44xf32>
    %396 = vector.shape_cast %395 : vector<8x16x44xf32> to vector<128x44xf32>
    %c48 = arith.constant 48 : index
    %c0_303 = arith.constant 0 : index
    %c0_304 = arith.constant 0 : index
    %397 = vector.load %arg3[%c48, %c0_303, %c0_304] : memref<49x44x64xf32, #tpu.memory_space<vmem>>, vector<1x44x64xf32>
    %398 = vector.shape_cast %397 : vector<1x44x64xf32> to vector<44x64xf32>
    %cst_305 = arith.constant dense<0.000000e+00> : vector<128x64xf32>
    %399 = tpu.matmul %396, %398, %cst_305 {dimension_numbers = #tpu.dot_dimension_numbers<[1], [0], [0], [1], [0, 0, 1, 1], [], []>} : vector<128x44xf32>, vector<44x64xf32>, vector<128x64xf32> -> vector<128x64xf32>
    %400 = arith.addf %392, %399 : vector<128x64xf32>
    %cst_306 = arith.constant 0.000000e+00 : f32
    %401 = vector.broadcast %cst_306 : f32 to vector<128x64xf32>
    %402 = arith.maximumf %400, %401 : vector<128x64xf32>
    %c0_307 = arith.constant 0 : index
    %403 = memref.load %arg4[%c0_307] : memref<4xf32, #tpu.memory_space<smem>>
    %404 = vector.extract_strided_slice %402 {offsets = [0, 0], sizes = [128, 16], strides = [1, 1]} : vector<128x64xf32> to vector<128x16xf32>
    %405 = vector.broadcast %403 : f32 to vector<128x16xf32>
    %406 = arith.mulf %405, %404 : vector<128x16xf32>
    %c1_308 = arith.constant 1 : index
    %407 = memref.load %arg4[%c1_308] : memref<4xf32, #tpu.memory_space<smem>>
    %408 = vector.extract_strided_slice %402 {offsets = [0, 16], sizes = [128, 16], strides = [1, 1]} : vector<128x64xf32> to vector<128x16xf32>
    %409 = vector.broadcast %407 : f32 to vector<128x16xf32>
    %410 = arith.mulf %409, %408 : vector<128x16xf32>
    %411 = arith.addf %406, %410 : vector<128x16xf32>
    %c2_309 = arith.constant 2 : index
    %412 = memref.load %arg4[%c2_309] : memref<4xf32, #tpu.memory_space<smem>>
    %413 = vector.extract_strided_slice %402 {offsets = [0, 32], sizes = [128, 16], strides = [1, 1]} : vector<128x64xf32> to vector<128x16xf32>
    %414 = vector.broadcast %412 : f32 to vector<128x16xf32>
    %415 = arith.mulf %414, %413 : vector<128x16xf32>
    %416 = arith.addf %411, %415 : vector<128x16xf32>
    %c3_310 = arith.constant 3 : index
    %417 = memref.load %arg4[%c3_310] : memref<4xf32, #tpu.memory_space<smem>>
    %418 = vector.extract_strided_slice %402 {offsets = [0, 48], sizes = [128, 16], strides = [1, 1]} : vector<128x64xf32> to vector<128x16xf32>
    %419 = vector.broadcast %417 : f32 to vector<128x16xf32>
    %420 = arith.mulf %419, %418 : vector<128x16xf32>
    %421 = arith.addf %416, %420 : vector<128x16xf32>
    %cst_311 = arith.constant 0.000000e+00 : f32
    %422 = vector.broadcast %cst_311 : f32 to vector<128x16xf32>
    %423 = arith.subf %422, %421 : vector<128x16xf32>
    %424 = math.exp %423 : vector<128x16xf32>
    %cst_312 = arith.constant 1.000000e+00 : f32
    %425 = vector.broadcast %cst_312 : f32 to vector<128x16xf32>
    %426 = arith.addf %425, %424 : vector<128x16xf32>
    %427 = tpu.reciprocal %426 : vector<128x16xf32> -> vector<128x16xf32>
    %c0_313 = arith.constant 0 : index
    %c0_314 = arith.constant 0 : index
    %c0_315 = arith.constant 0 : index
    %428 = vector.load %arg5[%c0_313, %c0_314, %c0_315] : memref<1x128x16xf32, #tpu.memory_space<vmem>>, vector<1x128x16xf32>
    %429 = vector.shape_cast %428 : vector<1x128x16xf32> to vector<128x16xf32>
    %430 = vector.shape_cast %427 : vector<128x16xf32> to vector<1x128x16xf32>
    tpu.vector_store %arg5[%c0_313, %c0_314, %c0_315], %430 {strides = array<i32>} : memref<1x128x16xf32, #tpu.memory_space<vmem>>, vector<1x128x16xf32>,
    return
  }
  func.func @transform_0(%arg0: i32, %arg1: i32) -> (i32, i32, i32, i32, i32) {
    %c0_i32 = arith.constant 0 : i32
    %c0_i32_0 = arith.constant 0 : i32
    %c0_i32_1 = arith.constant 0 : i32
    %c0_i32_2 = arith.constant 0 : i32
    %c0_i32_3 = arith.constant 0 : i32
    return %arg0, %c0_i32, %c0_i32_0, %c0_i32_1, %c0_i32_2 : i32, i32, i32, i32, i32
  }
  func.func @transform_1(%arg0: i32, %arg1: i32) -> (i32, i32, i32) {
    %c0_i32 = arith.constant 0 : i32
    %c0_i32_0 = arith.constant 0 : i32
    %c0_i32_1 = arith.constant 0 : i32
    %c0_i32_2 = arith.constant 0 : i32
    return %c0_i32, %c0_i32_0, %c0_i32_1 : i32, i32, i32
  }
  func.func @transform_2(%arg0: i32, %arg1: i32) -> i32 {
    %c0_i32 = arith.constant 0 : i32
    %c0_i32_0 = arith.constant 0 : i32
    return %c0_i32 : i32
  }
  func.func @transform_3(%arg0: i32, %arg1: i32) -> (i32, i32, i32) {
    %c0_i32 = arith.constant 0 : i32
    %c0_i32_0 = arith.constant 0 : i32
    return %arg0, %arg1, %c0_i32 : i32, i32, i32
  }
}

module attributes {stable_mosaic.version = 11 : i64} {
  func.func @_broadcast_kernel(%arg0: i32, %arg1: i32, %arg2: memref<1x4x1xf32, #tpu.memory_space<vmem>>, %arg3: memref<1x1x2048xf32, #tpu.memory_space<vmem>>, %arg4: memref<1x4x2048xf32, #tpu.memory_space<vmem>>, %arg5: memref<1x4x2048xf32, #tpu.memory_space<vmem>>) attributes {dimension_semantics = [#tpu.dimension_semantics<parallel>, #tpu.dimension_semantics<parallel>], iteration_bounds = array<i64: 2, 2>, scalar_prefetch = 0 : i64, scratch_operands = 0 : i64, tpu.core_type = #tpu.core_type<tc>, window_params = [{transform_indices = @transform_0, window_bounds = array<i64: 1, 4, 1>}, {transform_indices = @transform_1, window_bounds = array<i64: 1, 1, 2048>}, {transform_indices = @transform_2, window_bounds = array<i64: 1, 4, 2048>}, {transform_indices = @transform_3, window_bounds = array<i64: 1, 4, 2048>}]} {
    %c0 = arith.constant 0 : index
    %c0_0 = arith.constant 0 : index
    %c0_1 = arith.constant 0 : index
    %0 = vector.load %arg2[%c0, %c0_0, %c0_1] : memref<1x4x1xf32, #tpu.memory_space<vmem>>, vector<1x4x1xf32>
    %1 = vector.shape_cast %0 : vector<1x4x1xf32> to vector<4x1xf32>
    %c0_2 = arith.constant 0 : index
    %c0_3 = arith.constant 0 : index
    %c0_4 = arith.constant 0 : index
    %2 = vector.load %arg3[%c0_2, %c0_3, %c0_4] : memref<1x1x2048xf32, #tpu.memory_space<vmem>>, vector<1x1x2048xf32>
    %3 = vector.shape_cast %2 : vector<1x1x2048xf32> to vector<1x2048xf32>
    %4 = vector.broadcast %1 : vector<4x1xf32> to vector<4x2048xf32>
    %5 = vector.broadcast %3 : vector<1x2048xf32> to vector<4x2048xf32>
    %6 = arith.mulf %4, %5 : vector<4x2048xf32>
    %c0_5 = arith.constant 0 : index
    %c0_6 = arith.constant 0 : index
    %c0_7 = arith.constant 0 : index
    %7 = vector.load %arg4[%c0_5, %c0_6, %c0_7] : memref<1x4x2048xf32, #tpu.memory_space<vmem>>, vector<1x4x2048xf32>
    %8 = vector.shape_cast %7 : vector<1x4x2048xf32> to vector<4x2048xf32>
    %9 = vector.shape_cast %6 : vector<4x2048xf32> to vector<1x4x2048xf32>
    tpu.vector_store %arg4[%c0_5, %c0_6, %c0_7], %9 {strides = array<i32>} : memref<1x4x2048xf32, #tpu.memory_space<vmem>>, vector<1x4x2048xf32>,
    %cst = arith.constant 1.000000e+00 : f32
    %10 = vector.broadcast %cst : f32 to vector<4x2048xf32>
    %11 = arith.subf %10, %6 : vector<4x2048xf32>
    %c0_8 = arith.constant 0 : index
    %c0_9 = arith.constant 0 : index
    %c0_10 = arith.constant 0 : index
    %12 = vector.load %arg5[%c0_8, %c0_9, %c0_10] : memref<1x4x2048xf32, #tpu.memory_space<vmem>>, vector<1x4x2048xf32>
    %13 = vector.shape_cast %12 : vector<1x4x2048xf32> to vector<4x2048xf32>
    %14 = vector.shape_cast %11 : vector<4x2048xf32> to vector<1x4x2048xf32>
    tpu.vector_store %arg5[%c0_8, %c0_9, %c0_10], %14 {strides = array<i32>} : memref<1x4x2048xf32, #tpu.memory_space<vmem>>, vector<1x4x2048xf32>,
    return
  }
  func.func @transform_0(%arg0: i32, %arg1: i32) -> (i32, i32, i32) {
    %c0_i32 = arith.constant 0 : i32
    %c0_i32_0 = arith.constant 0 : i32
    %c0_i32_1 = arith.constant 0 : i32
    return %arg0, %c0_i32, %c0_i32_0 : i32, i32, i32
  }
  func.func @transform_1(%arg0: i32, %arg1: i32) -> (i32, i32, i32) {
    %c0_i32 = arith.constant 0 : i32
    %c0_i32_0 = arith.constant 0 : i32
    return %arg0, %c0_i32, %arg1 : i32, i32, i32
  }
  func.func @transform_2(%arg0: i32, %arg1: i32) -> (i32, i32, i32) {
    %c0_i32 = arith.constant 0 : i32
    %c0_i32_0 = arith.constant 0 : i32
    return %arg0, %c0_i32, %arg1 : i32, i32, i32
  }
  func.func @transform_3(%arg0: i32, %arg1: i32) -> (i32, i32, i32) {
    %c0_i32 = arith.constant 0 : i32
    %c0_i32_0 = arith.constant 0 : i32
    return %arg0, %c0_i32, %arg1 : i32, i32, i32
  }
}

</mosaic_0001>

<llo_original>
// kernel: attention_forward.3
$region0: #{attention_forward.3}
  #allocation0 [shape = 'u32[]', space=smem, size = 0x4, offset = 0x4, fixed_abs, tag = 'smem constant byte address 0x4 - core index']
  #allocation1 [shape = 'u32[72,128]{1,0:T(1,128)}', space=vmem, size = 0x9000, scoped, tag = 'internal scratch']
  #allocation2 [shape = 'f32[4,1]{1,0:T(4,128)}', space=vmem, size = 0x800, scoped, tag = 'scratch operand']
  #allocation3 [shape = 'f32[4,1]{1,0:T(4,128)}', space=vmem, size = 0x800, scoped, tag = 'scratch operand']
  %s0 = inlined_call_operand.vmem [shape: f32[2,4,4096], index: 0, kind: input, shape index: {}]
  %s1 = inlined_call_operand.vmem [shape: f32[16,4], index: 1, kind: input, shape index: {}]
  %s2 = inlined_call_operand.vmem [shape: f32[16,4], index: 2, kind: input, shape index: {}]
  %s3 = inlined_call_operand.vmem [shape: f32[16,1], index: 3, kind: input, shape index: {}]
  %s4 = inlined_call_operand.vmem [shape: f32[4,16], index: 4, kind: input, shape index: {}]
  %s5 = inlined_call_operand.vmem [shape: f32[4,1], index: 5, kind: input, shape index: {}]
  %s6 = inlined_call_operand.vmem [shape: f32[2,4,1], index: 6, kind: output, shape index: {0}]
  %s7 = inlined_call_operand.vmem [shape: f32[2,2,4096], index: 7, kind: output, shape index: {1}]
  %8 = xla_tuple %s6, %s7
  %s9 = sld [smem:[#allocation0]]
  $region73: #{attention_forward.3} parent=0
    _
  %s11 = ssub.s32 1, %s9
  %s12 = scalar_select 0, %s11, %s9
  loop: start=0, step=1, limit=6
  $region2: #{attention_forward.3} parent=0 // loop_pre_header
    _
  $region3: #{attention_forward.3} parent=0 // loop_header
    %s14 = sphi 0, %s18
    %p15 = scmp.ge.s32.totalorder %s14, 6
    %s21 = sphi 0, %s33
    %s22 = sphi 0, %s29
    %s23 = sphi 0, %s21
    %s24 = sphi 0, %s22
    %s25 = sphi 0, %s23
    %s26 = sphi 0, %s24
    %s38 = sphi 0, %s40
    %s41 = sphi 0, %s38
    %s42 = sphi 0, %s41
    %s58 = sphi 0, %s42
    %s62 = sphi 0, %s62
    %s64 = sphi 0, %s62
    %s65 = sphi 0, %s64
    %s79 = sphi 0, %s65
    %s83 = sphi 0, %s83
    %s85 = sphi 0, %s83
    %s86 = sphi 0, %s85
    %s100 = sphi 0, %s86
    %s104 = sphi 0, %s104
    %s106 = sphi 0, %s104
    %s107 = sphi 0, %s106
    %s121 = sphi 0, %s107
    %s125 = sphi 0, %s125
    %s127 = sphi 0, %s125
    %s128 = sphi 0, %s127
    %s142 = sphi 0, %s128
    %s146 = sphi 0, %s146
    %s148 = sphi 0, %s146
    %s149 = sphi 0, %s148
    %s163 = sphi 0, %s149
    %s169 = sphi 0, %s171
    %s172 = sphi 0, %s169
    %s173 = sphi 0, %s172
    %s189 = sphi 0, %s173
    %s197 = sphi 0, %s199
    %s200 = sphi 0, %s197
    %s201 = sphi 0, %s200
    %s217 = sphi 0, %s201
  $region4: #{attention_forward.3} parent=0 // loop_header_branch
    %17 = sbr.rel (%p15) target = $region8
  $region5: #{attention_forward.3} parent=0 // loop_body
    %s19 = ssub.s32 %s14, 1
    %s20 = ssub.s32 %s14, 2
    %s27 = sadd.s32 1, %s22
    %p28 = scmp.ge.s32.totalorder %s27, 2
    %s29 = scalar_select %p28, 0, %s27
    %s30 = sadd.s32 1, %s21
    %s31 = scalar_select %p28, %s30, %s21
    %p32 = scmp.ge.s32.totalorder %s31, 2
    %s33 = scalar_select %p32, 0, %s31
    %s34 = ssub.s32 %s21, %s33
    %s35 = ssub.s32 %s22, %s29
    %s36 = sor.u32 %s34, %s35
    %p37 = scmp.eq.s32.totalorder %s36, 0
    %s39 = sadd.s32 %s38, 1
    %s40 = scalar_select %p37, %s38, %s39
    %p43 = pneg %p37
    %p44 = scmp.eq.s32.totalorder %s14, 3
    %p45 = por %p43, %p44
    %p46 = scmp.ne.s32.totalorder %s38, %s41
    %p47 = scmp.eq.s32.totalorder %s14, 0
    %p48 = por %p46, %p47
    %p49 = scmp.ne.s32.totalorder %s38, %s41
    %p50 = scmp.eq.s32.totalorder %s19, 3
    %p51 = por %p49, %p50
    %p52 = scmp.ne.s32.totalorder %s41, %s42
    %p53 = scmp.eq.s32.totalorder %s19, 0
    %p54 = por %p52, %p53
    %p55 = scmp.ne.s32.totalorder %s41, %s42
    %p56 = scmp.eq.s32.totalorder %s20, 3
    %p57 = por %p55, %p56
    %p59 = scmp.ne.s32.totalorder %s42, %s58
    %p60 = scmp.eq.s32.totalorder %s20, 0
    %p61 = por %p59, %p60
    %s63 = sadd.s32 %s62, 1
    %p66 = scmp.eq.s32.totalorder %s14, 3
    %p67 = scmp.ne.s32.totalorder %s62, %s64
    %p68 = scmp.eq.s32.totalorder %s14, 0
    %p69 = por %p67, %p68
    %p70 = scmp.ne.s32.totalorder %s62, %s64
    %p71 = scmp.eq.s32.totalorder %s19, 3
    %p72 = por %p70, %p71
    %p73 = scmp.ne.s32.totalorder %s64, %s65
    %p74 = scmp.eq.s32.totalorder %s19, 0
    %p75 = por %p73, %p74
    %p76 = scmp.ne.s32.totalorder %s64, %s65
    %p77 = scmp.eq.s32.totalorder %s20, 3
    %p78 = por %p76, %p77
    %p80 = scmp.ne.s32.totalorder %s65, %s79
    %p81 = scmp.eq.s32.totalorder %s20, 0
    %p82 = por %p80, %p81
    %s84 = sadd.s32 %s83, 1
    %p87 = scmp.eq.s32.totalorder %s14, 3
    %p88 = scmp.ne.s32.totalorder %s83, %s85
    %p89 = scmp.eq.s32.totalorder %s14, 0
    %p90 = por %p88, %p89
    %p91 = scmp.ne.s32.totalorder %s83, %s85
    %p92 = scmp.eq.s32.totalorder %s19, 3
    %p93 = por %p91, %p92
    %p94 = scmp.ne.s32.totalorder %s85, %s86
    %p95 = scmp.eq.s32.totalorder %s19, 0
    %p96 = por %p94, %p95
    %p97 = scmp.ne.s32.totalorder %s85, %s86
    %p98 = scmp.eq.s32.totalorder %s20, 3
    %p99 = por %p97, %p98
    %p101 = scmp.ne.s32.totalorder %s86, %s100
    %p102 = scmp.eq.s32.totalorder %s20, 0
    %p103 = por %p101, %p102
    %s105 = sadd.s32 %s104, 1
    %p108 = scmp.eq.s32.totalorder %s14, 3
    %p109 = scmp.ne.s32.totalorder %s104, %s106
    %p110 = scmp.eq.s32.totalorder %s14, 0
    %p111 = por %p109, %p110
    %p112 = scmp.ne.s32.totalorder %s104, %s106
    %p113 = scmp.eq.s32.totalorder %s19, 3
    %p114 = por %p112, %p113
    %p115 = scmp.ne.s32.totalorder %s106, %s107
    %p116 = scmp.eq.s32.totalorder %s19, 0
    %p117 = por %p115, %p116
    %p118 = scmp.ne.s32.totalorder %s106, %s107
    %p119 = scmp.eq.s32.totalorder %s20, 3
    %p120 = por %p118, %p119
    %p122 = scmp.ne.s32.totalorder %s107, %s121
    %p123 = scmp.eq.s32.totalorder %s20, 0
    %p124 = por %p122, %p123
    %s126 = sadd.s32 %s125, 1
    %p129 = scmp.eq.s32.totalorder %s14, 3
    %p130 = scmp.ne.s32.totalorder %s125, %s127
    %p131 = scmp.eq.s32.totalorder %s14, 0
    %p132 = por %p130, %p131
    %p133 = scmp.ne.s32.totalorder %s125, %s127
    %p134 = scmp.eq.s32.totalorder %s19, 3
    %p135 = por %p133, %p134
    %p136 = scmp.ne.s32.totalorder %s127, %s128
    %p137 = scmp.eq.s32.totalorder %s19, 0
    %p138 = por %p136, %p137
    %p139 = scmp.ne.s32.totalorder %s127, %s128
    %p140 = scmp.eq.s32.totalorder %s20, 3
    %p141 = por %p139, %p140
    %p143 = scmp.ne.s32.totalorder %s128, %s142
    %p144 = scmp.eq.s32.totalorder %s20, 0
    %p145 = por %p143, %p144
    %s147 = sadd.s32 %s146, 1
    %p150 = scmp.eq.s32.totalorder %s14, 3
    %p151 = scmp.ne.s32.totalorder %s146, %s148
    %p152 = scmp.eq.s32.totalorder %s14, 0
    %p153 = por %p151, %p152
    %p154 = scmp.ne.s32.totalorder %s146, %s148
    %p155 = scmp.eq.s32.totalorder %s19, 3
    %p156 = por %p154, %p155
    %p157 = scmp.ne.s32.totalorder %s148, %s149
    %p158 = scmp.eq.s32.totalorder %s19, 0
    %p159 = por %p157, %p158
    %p160 = scmp.ne.s32.totalorder %s148, %s149
    %p161 = scmp.eq.s32.totalorder %s20, 3
    %p162 = por %p160, %p161
    %p164 = scmp.ne.s32.totalorder %s149, %s163
    %p165 = scmp.eq.s32.totalorder %s20, 0
    %p166 = por %p164, %p165
    %s167 = ssub.s32 %s21, %s33
    %p168 = scmp.eq.s32.totalorder %s167, 0
    %s170 = sadd.s32 %s169, 1
    %s171 = scalar_select %p168, %s169, %s170
    %p174 = pneg %p168
    %p175 = scmp.eq.s32.totalorder %s14, 3
    %p176 = por %p174, %p175
    %p177 = scmp.ne.s32.totalorder %s169, %s172
    %p178 = scmp.eq.s32.totalorder %s14, 0
    %p179 = por %p177, %p178
    %p180 = scmp.ne.s32.totalorder %s169, %s172
    %p181 = scmp.eq.s32.totalorder %s19, 3
    %p182 = por %p180, %p181
    %p183 = scmp.ne.s32.totalorder %s172, %s173
    %p184 = scmp.eq.s32.totalorder %s19, 0
    %p185 = por %p183, %p184
    %p186 = scmp.ne.s32.totalorder %s172, %s173
    %p187 = scmp.eq.s32.totalorder %s20, 3
    %p188 = por %p186, %p187
    %p190 = scmp.ne.s32.totalorder %s173, %s189
    %p191 = scmp.eq.s32.totalorder %s20, 0
    %p192 = por %p190, %p191
    %s193 = ssub.s32 %s21, %s33
    %s194 = ssub.s32 %s22, %s29
    %s195 = sor.u32 %s193, %s194
    %p196 = scmp.eq.s32.totalorder %s195, 0
    %s198 = sadd.s32 %s197, 1
    %s199 = scalar_select %p196, %s197, %s198
    %p202 = pneg %p196
    %p203 = scmp.eq.s32.totalorder %s14, 3
    %p204 = por %p202, %p203
    %p205 = scmp.ne.s32.totalorder %s197, %s200
    %p206 = scmp.eq.s32.totalorder %s14, 0
    %p207 = por %p205, %p206
    %p208 = scmp.ne.s32.totalorder %s197, %s200
    %p209 = scmp.eq.s32.totalorder %s19, 3
    %p210 = por %p208, %p209
    %p211 = scmp.ne.s32.totalorder %s200, %s201
    %p212 = scmp.eq.s32.totalorder %s19, 0
    %p213 = por %p211, %p212
    %p214 = scmp.ne.s32.totalorder %s200, %s201
    %p215 = scmp.eq.s32.totalorder %s20, 3
    %p216 = por %p214, %p215
    %p218 = scmp.ne.s32.totalorder %s201, %s217
    %p219 = scmp.eq.s32.totalorder %s20, 0
    %p220 = por %p218, %p219
    %p221 = scmp.le.s32.totalorder 1, %s14
    %p222 = scmp.lt.s32.totalorder %s14, 5
    %p223 = pnand %p221, %p222
    %p224 = pneg %p223
    // Predicated region
    $region9: #{attention_forward.3} parent=5 // pred_check
      _
    $region10: #{attention_forward.3} parent=5 // pred_check_branch
      %226 = sbr.rel (%p223) target = $region12
    $region11: #{attention_forward.3} parent=5 // pred_region
      %s227 = ssub.s32 %s14, 1
      // Predicated region
      $region13: #{attention_forward.3} parent=11 // pred_check
        %p228 = pneg %p75
      $region14: #{attention_forward.3} parent=11 // pred_check_branch
        %230 = sbr.rel (%p228) target = $region16
      $region15: #{attention_forward.3} parent=11 // pred_region
        _
      $region16: #{attention_forward.3} parent=11 // pred_fallthru
        _
      // Predicated region
      $region17: #{attention_forward.3} parent=11 // pred_check
        %p231 = pneg %p96
      $region18: #{attention_forward.3} parent=11 // pred_check_branch
        %233 = sbr.rel (%p231) target = $region20
      $region19: #{attention_forward.3} parent=11 // pred_region
        _
      $region20: #{attention_forward.3} parent=11 // pred_fallthru
        _
      // Predicated region
      $region21: #{attention_forward.3} parent=11 // pred_check
        %p234 = pneg %p117
      $region22: #{attention_forward.3} parent=11 // pred_check_branch
        %236 = sbr.rel (%p234) target = $region24
      $region23: #{attention_forward.3} parent=11 // pred_region
        _
      $region24: #{attention_forward.3} parent=11 // pred_fallthru
        _
      // Predicated region
      $region25: #{attention_forward.3} parent=11 // pred_check
        %p237 = pneg %p138
      $region26: #{attention_forward.3} parent=11 // pred_check_branch
        %239 = sbr.rel (%p237) target = $region28
      $region27: #{attention_forward.3} parent=11 // pred_region
        _
      $region28: #{attention_forward.3} parent=11 // pred_fallthru
        _
      // Predicated region
      $region29: #{attention_forward.3} parent=11 // pred_check
        %p240 = pneg %p159
      $region30: #{attention_forward.3} parent=11 // pred_check_branch
        %242 = sbr.rel (%p240) target = $region32
      $region31: #{attention_forward.3} parent=11 // pred_region
        _
      $region32: #{attention_forward.3} parent=11 // pred_fallthru
        _
    $region12: #{attention_forward.3} parent=5 // pred_fallthru
      _
    %p243 = scmp.lt.s32.totalorder %s14, 4
    // Predicated region
    $region33: #{attention_forward.3} parent=5 // pred_check
      %p244 = pneg %p243
    $region34: #{attention_forward.3} parent=5 // pred_check_branch
      %246 = sbr.rel (%p244) target = $region36
    $region35: #{attention_forward.3} parent=5 // pred_region
      // Predicated region
      $region37: #{attention_forward.3} parent=35 // pred_check
        %p247 = pneg %p48
      $region38: #{attention_forward.3} parent=35 // pred_check_branch
        %249 = sbr.rel (%p247) target = $region40
      $region39: #{attention_forward.3} parent=35 // pred_region
        %s250 = smul.u32 16, %s22
        %p251 = scmp.lt.s32.totalorder %s21, 1
        %s252 = scalar_select %p251, %s21, 1
        %p253 = scmp.lt.s32.totalorder %s250, 31
        %s254 = scalar_select %p253, %s250, 31
        %s255 = smul.addr %s252, 32
        %s256 = sadd.s32 %s254, %s255
        %s257 = smul.addr %s256, 4
        %s258 = scalar_lea.vmem %s0, %s257
        %s259 = smul.u32 16, %s22
      $region40: #{attention_forward.3} parent=35 // pred_fallthru
        _
    $region36: #{attention_forward.3} parent=5 // pred_fallthru
      _
    %p260 = scmp.le.s32.totalorder 1, %s14
    %p261 = scmp.lt.s32.totalorder %s14, 5
    %p262 = pnand %p260, %p261
    %p263 = pneg %p262
    // Predicated region
    $region41: #{attention_forward.3} parent=5 // pred_check
      _
    $region42: #{attention_forward.3} parent=5 // pred_check_branch
      %265 = sbr.rel (%p262) target = $region44
    $region43: #{attention_forward.3} parent=5 // pred_region
      %s266 = ssub.s32 %s14, 1
      %s267 = smul.u32 16, %s24
      %p268 = scmp.lt.s32.totalorder %s23, 1
      %s269 = scalar_select %p268, %s23, 1
      %p270 = scmp.lt.s32.totalorder %s267, 31
      %s271 = scalar_select %p270, %s267, 31
      %s272 = smul.addr %s269, 32
      %s273 = sadd.s32 %s271, %s272
      %s274 = smul.addr %s273, 4
      %s275 = scalar_lea.vmem %s0, %s274
      %p276 = pneg %p54
      %p277 = pneg %p51
      %p278 = pneg %p75
      %p279 = pneg %p72
      %p280 = pneg %p96
      %p281 = pneg %p93
      %p282 = pneg %p117
      %p283 = pneg %p114
      %p284 = pneg %p138
      %p285 = pneg %p135
      %p286 = pneg %p159
      %p287 = pneg %p156
      %p288 = pneg %p185
      %p289 = pneg %p182
      %p290 = scmp.lt.s32.totalorder %s23, 1
      %s291 = scalar_select %p290, %s23, 1
      %s292 = smul.addr %s291, 4
      %s293 = scalar_lea.vmem %s6, %s292
      %p294 = pneg %p213
      %p295 = pneg %p210
      %s296 = smul.u32 16, %s24
      %p297 = scmp.lt.s32.totalorder %s23, 1
      %s298 = scalar_select %p297, %s23, 1
      %p299 = scmp.lt.s32.totalorder %s296, 31
      %s300 = scalar_select %p299, %s296, 31
      %s301 = smul.addr %s298, 32
      %s302 = sadd.s32 %s300, %s301
      %s303 = smul.addr %s302, 2
      %s304 = scalar_lea.vmem %s7, %s303
      %s305 = smul.u32 16, %s24
      %p306 = scmp.lt.s32.totalorder %s23, 1
      %s307 = scalar_select %p306, %s23, 1
      %p308 = scmp.lt.s32.totalorder %s305, 31
      %s309 = scalar_select %p308, %s305, 31
      %s310 = smul.addr %s307, 32
      %s311 = sadd.s32 %s309, %s310
      %s312 = smul.addr %s311, 4
      %s313 = scalar_lea.vmem %s0, %s312
      %s314 = smul.u32 16, %s24
      %p315 = scmp.lt.s32.totalorder %s23, 1
      %s316 = scalar_select %p315, %s23, 1
      %s317 = smul.addr %s316, 4
      %s318 = scalar_lea.vmem %s6, %s317
      %s319 = smul.u32 16, %s24
      %p320 = scmp.lt.s32.totalorder %s23, 1
      %s321 = scalar_select %p320, %s23, 1
      %p322 = scmp.lt.s32.totalorder %s319, 31
      %s323 = scalar_select %p322, %s319, 31
      %s324 = smul.addr %s321, 32
      %s325 = sadd.s32 %s323, %s324
      %s326 = smul.addr %s325, 2
      %s327 = scalar_lea.vmem %s7, %s326
      %s328 = smul.u32 16, %s24
      %p329 = scmp.eq.s32.totalorder %s24, 0
      // Predicated region
      $region45: #{attention_forward.3} parent=43 // pred_check
        %p330 = pneg %p329
      $region46: #{attention_forward.3} parent=43 // pred_check_branch
        %332 = sbr.rel (%p330) target = $region48
      $region47: #{attention_forward.3} parent=43 // pred_region
        %vm333 = vcmask 3072
        %334 = vst.msk [vmem:[#allocation2] sm:$0xf] %vm333, 0.0
        %335 = vst.msk [vmem:[#allocation3] sm:$0xf] %vm333, -inf
      $region48: #{attention_forward.3} parent=43 // pred_fallthru
        _
      %v336 = vld [vmem:[%s313] sm:$0xff]
      %v337 = vld [vmem:[%s313 + $0x8] sm:$0xff]
      %v338 = vld [vmem:[%s313 + $0x10] sm:$0xff]
      %v339 = vld [vmem:[%s313 + $0x18] sm:$0xff]
      %v340 = vld [vmem:[%s313 + $0x20] sm:$0xff]
      %v341 = vld [vmem:[%s313 + $0x28] sm:$0xff]
      %v342 = vld [vmem:[%s313 + $0x30] sm:$0xff]
      %v343 = vld [vmem:[%s313 + $0x38] sm:$0xff]
      %v344 = vld [vmem:[#allocation2] sm:$0xf]
      %353 = vst [vmem:[#allocation1] ss:$2 sm:$0xff] %v336
      %s354 = scalar_lea.vmem [#allocation1], 16
      %355 = vst [vmem:[%s354] ss:$2 sm:$0xff] %v337
      %s356 = scalar_lea.vmem [#allocation1], 32
      %357 = vst [vmem:[%s356] ss:$2 sm:$0xff] %v338
      %s358 = scalar_lea.vmem [#allocation1], 48
      %359 = vst [vmem:[%s358] ss:$2 sm:$0xff] %v339
      %v360 = vld.sshfl [vmem:[#allocation1] sm:$0xff pattern:$0x75316420]
      %v361 = vld.sshfl [vmem:[#allocation1 + $0x8] sm:$0xff pattern:$0x75316420]
      %v362 = vld.sshfl [vmem:[#allocation1 + $0x10] sm:$0xff pattern:$0x75316420]
      %v363 = vld.sshfl [vmem:[#allocation1 + $0x18] sm:$0xff pattern:$0x75316420]
      %v364 = vld.sshfl [vmem:[#allocation1 + $0x20] sm:$0xff pattern:$0x75316420]
      %v365 = vld.sshfl [vmem:[#allocation1 + $0x28] sm:$0xff pattern:$0x75316420]
      %v366 = vld.sshfl [vmem:[#allocation1 + $0x30] sm:$0xff pattern:$0x75316420]
      %v367 = vld.sshfl [vmem:[#allocation1 + $0x38] sm:$0xff pattern:$0x75316420]
      %368 = vst [vmem:[#allocation1] ss:$2 sm:$0xff] %v340
      %369 = vst [vmem:[%s354] ss:$2 sm:$0xff] %v341
      %370 = vst [vmem:[%s356] ss:$2 sm:$0xff] %v342
      %371 = vst [vmem:[%s358] ss:$2 sm:$0xff] %v343
      %v372 = vld.sshfl [vmem:[#allocation1] sm:$0xff pattern:$0x75316420]
      %v373 = vld.sshfl [vmem:[#allocation1 + $0x8] sm:$0xff pattern:$0x75316420]
      %v374 = vld.sshfl [vmem:[#allocation1 + $0x10] sm:$0xff pattern:$0x75316420]
      %v375 = vld.sshfl [vmem:[#allocation1 + $0x18] sm:$0xff pattern:$0x75316420]
      %v376 = vld.sshfl [vmem:[#allocation1 + $0x20] sm:$0xff pattern:$0x75316420]
      %v377 = vld.sshfl [vmem:[#allocation1 + $0x28] sm:$0xff pattern:$0x75316420]
      %v378 = vld.sshfl [vmem:[#allocation1 + $0x30] sm:$0xff pattern:$0x75316420]
      %v379 = vld.sshfl [vmem:[#allocation1 + $0x38] sm:$0xff pattern:$0x75316420]
      %vm396 = vcmask 1043456
      %v397 = vsel %vm396, %v360, 0.0
      %v398 = vsel %vm396, %v361, 0.0
      %v399 = vadd.f32 %v397, %v398
      %v400 = vsel %vm396, %v362, 0.0
      %v401 = vadd.f32 %v399, %v400
      %v402 = vsel %vm396, %v363, 0.0
      %v403 = vadd.f32 %v401, %v402
      %v404 = vsel %vm396, %v364, 0.0
      %v405 = vadd.f32 %v403, %v404
      %v406 = vsel %vm396, %v365, 0.0
      %v407 = vadd.f32 %v405, %v406
      %v408 = vsel %vm396, %v366, 0.0
      %v409 = vadd.f32 %v407, %v408
      %v410 = vsel %vm396, %v367, 0.0
      %v411 = vadd.f32 %v409, %v410
      %v412 = vsel %vm396, %v372, 0.0
      %v413 = vadd.f32 %v411, %v412
      %v414 = vsel %vm396, %v373, 0.0
      %v415 = vadd.f32 %v413, %v414
      %v416 = vsel %vm396, %v374, 0.0
      %v417 = vadd.f32 %v415, %v416
      %v418 = vsel %vm396, %v375, 0.0
      %v419 = vadd.f32 %v417, %v418
      %v420 = vsel %vm396, %v376, 0.0
      %v421 = vadd.f32 %v419, %v420
      %v422 = vsel %vm396, %v377, 0.0
      %v423 = vadd.f32 %v421, %v422
      %v424 = vsel %vm396, %v378, 0.0
      %v425 = vadd.f32 %v423, %v424
      %v426 = vsel %vm396, %v379, 0.0
      %v427 = vadd.f32 %v425, %v426
      %428 = vadd.xlane.f32.xlu0 %v427
      %v429 = vpop.xlane.xlu0 %428
      %v430 = vadd.f32 %v344, %v429
      %vm431 = vcmask 3072
      %432 = vst.msk [vmem:[#allocation2] sm:$0xf] %vm431, %v430
      %v433 = vld [vmem:[#allocation3] sm:$0xf]
      %434 = vst [vmem:[#allocation1] ss:$2 sm:$0xff] %v336
      %s435 = scalar_lea.vmem [#allocation1], 16
      %436 = vst [vmem:[%s435] ss:$2 sm:$0xff] %v337
      %s437 = scalar_lea.vmem [#allocation1], 32
      %438 = vst [vmem:[%s437] ss:$2 sm:$0xff] %v338
      %s439 = scalar_lea.vmem [#allocation1], 48
      %440 = vst [vmem:[%s439] ss:$2 sm:$0xff] %v339
      %v441 = vld.sshfl [vmem:[#allocation1] sm:$0xff pattern:$0x75316420]
      %v442 = vld.sshfl [vmem:[#allocation1 + $0x8] sm:$0xff pattern:$0x75316420]
      %v443 = vld.sshfl [vmem:[#allocation1 + $0x10] sm:$0xff pattern:$0x75316420]
      %v444 = vld.sshfl [vmem:[#allocation1 + $0x18] sm:$0xff pattern:$0x75316420]
      %v445 = vld.sshfl [vmem:[#allocation1 + $0x20] sm:$0xff pattern:$0x75316420]
      %v446 = vld.sshfl [vmem:[#allocation1 + $0x28] sm:$0xff pattern:$0x75316420]
      %v447 = vld.sshfl [vmem:[#allocation1 + $0x30] sm:$0xff pattern:$0x75316420]
      %v448 = vld.sshfl [vmem:[#allocation1 + $0x38] sm:$0xff pattern:$0x75316420]
      %449 = vst [vmem:[#allocation1] ss:$2 sm:$0xff] %v340
      %450 = vst [vmem:[%s435] ss:$2 sm:$0xff] %v341
      %451 = vst [vmem:[%s437] ss:$2 sm:$0xff] %v342
      %452 = vst [vmem:[%s439] ss:$2 sm:$0xff] %v343
      %v453 = vld.sshfl [vmem:[#allocation1] sm:$0xff pattern:$0x75316420]
      %v454 = vld.sshfl [vmem:[#allocation1 + $0x8] sm:$0xff pattern:$0x75316420]
      %v455 = vld.sshfl [vmem:[#allocation1 + $0x10] sm:$0xff pattern:$0x75316420]
      %v456 = vld.sshfl [vmem:[#allocation1 + $0x18] sm:$0xff pattern:$0x75316420]
      %v457 = vld.sshfl [vmem:[#allocation1 + $0x20] sm:$0xff pattern:$0x75316420]
      %v458 = vld.sshfl [vmem:[#allocation1 + $0x28] sm:$0xff pattern:$0x75316420]
      %v459 = vld.sshfl [vmem:[#allocation1 + $0x30] sm:$0xff pattern:$0x75316420]
      %v460 = vld.sshfl [vmem:[#allocation1 + $0x38] sm:$0xff pattern:$0x75316420]
      %v477 = vsel %vm396, %v441, -inf
      %v478 = vsel %vm396, %v442, -inf
      %v479 = vsel %vm396, %v443, -inf
      %v480 = vsel %vm396, %v444, -inf
      %v481 = vsel %vm396, %v445, -inf
      %v482 = vmax.f32 %v477, %v481
      %v483 = vsel %vm396, %v446, -inf
      %v484 = vmax.f32 %v478, %v483
      %v485 = vsel %vm396, %v447, -inf
      %v486 = vmax.f32 %v479, %v485
      %v487 = vsel %vm396, %v448, -inf
      %v488 = vmax.f32 %v480, %v487
      %v489 = vsel %vm396, %v453, -inf
      %v490 = vmax.f32 %v482, %v489
      %v491 = vsel %vm396, %v454, -inf
      %v492 = vmax.f32 %v484, %v491
      %v493 = vsel %vm396, %v455, -inf
      %v494 = vmax.f32 %v486, %v493
      %v495 = vsel %vm396, %v456, -inf
      %v496 = vmax.f32 %v488, %v495
      %v497 = vsel %vm396, %v457, -inf
      %v498 = vmax.f32 %v490, %v497
      %v499 = vsel %vm396, %v458, -inf
      %v500 = vmax.f32 %v492, %v499
      %v501 = vsel %vm396, %v459, -inf
      %v502 = vmax.f32 %v494, %v501
      %v503 = vsel %vm396, %v460, -inf
      %v504 = vmax.f32 %v496, %v503
      %v505 = vmax.f32 %v498, %v500
      %v506 = vmax.f32 %v502, %v504
      %v507 = vmax.f32 %v505, %v506
      %508 = vmax.xlane.f32.xlu0 %v507
      %v509 = vpop.xlane.xlu0 %508
      %v510 = vmax.f32 %v433, %v509
      %511 = vst.msk [vmem:[#allocation3] sm:$0xf] %vm431, %v510
      %512 = vst [vmem:[#allocation1] ss:$2 sm:$0xff] %v336
      %s513 = scalar_lea.vmem [#allocation1], 16
      %514 = vst [vmem:[%s513] ss:$2 sm:$0xff] %v337
      %s515 = scalar_lea.vmem [#allocation1], 32
      %516 = vst [vmem:[%s515] ss:$2 sm:$0xff] %v338
      %s517 = scalar_lea.vmem [#allocation1], 48
      %518 = vst [vmem:[%s517] ss:$2 sm:$0xff] %v339
      %v519 = vld.sshfl [vmem:[#allocation1] sm:$0xff pattern:$0x75316420]
      %v520 = vld.sshfl [vmem:[#allocation1 + $0x8] sm:$0xff pattern:$0x75316420]
      %v521 = vld.sshfl [vmem:[#allocation1 + $0x10] sm:$0xff pattern:$0x75316420]
      %v522 = vld.sshfl [vmem:[#allocation1 + $0x18] sm:$0xff pattern:$0x75316420]
      %v523 = vld.sshfl [vmem:[#allocation1 + $0x20] sm:$0xff pattern:$0x75316420]
      %v524 = vld.sshfl [vmem:[#allocation1 + $0x28] sm:$0xff pattern:$0x75316420]
      %v525 = vld.sshfl [vmem:[#allocation1 + $0x30] sm:$0xff pattern:$0x75316420]
      %v526 = vld.sshfl [vmem:[#allocation1 + $0x38] sm:$0xff pattern:$0x75316420]
      %527 = vst [vmem:[#allocation1] ss:$2 sm:$0xff] %v340
      %528 = vst [vmem:[%s513] ss:$2 sm:$0xff] %v341
      %529 = vst [vmem:[%s515] ss:$2 sm:$0xff] %v342
      %530 = vst [vmem:[%s517] ss:$2 sm:$0xff] %v343
      %v531 = vld.sshfl [vmem:[#allocation1] sm:$0xff pattern:$0x75316420]
      %v532 = vld.sshfl [vmem:[#allocation1 + $0x8] sm:$0xff pattern:$0x75316420]
      %v533 = vld.sshfl [vmem:[#allocation1 + $0x10] sm:$0xff pattern:$0x75316420]
      %v534 = vld.sshfl [vmem:[#allocation1 + $0x18] sm:$0xff pattern:$0x75316420]
      %v535 = vld.sshfl [vmem:[#allocation1 + $0x20] sm:$0xff pattern:$0x75316420]
      %v536 = vld.sshfl [vmem:[#allocation1 + $0x28] sm:$0xff pattern:$0x75316420]
      %v537 = vld.sshfl [vmem:[#allocation1 + $0x30] sm:$0xff pattern:$0x75316420]
      %v538 = vld.sshfl [vmem:[#allocation1 + $0x38] sm:$0xff pattern:$0x75316420]
      %v555 = vsel %vm396, %v519, 0.0
      %v556 = vrot.slane %v555, 4
      %v557 = vadd.f32 %v555, %v556
      %v558 = vrot.slane %v557, 2
      %v559 = vadd.f32 %v557, %v558
      %v560 = vrot.slane %v559, 1
      %v561 = vadd.f32 %v559, %v560
      %v562 = vsel %vm396, %v520, 0.0
      %v563 = vrot.slane %v562, 4
      %v564 = vadd.f32 %v562, %v563
      %v565 = vrot.slane %v564, 2
      %v566 = vadd.f32 %v564, %v565
      %v567 = vrot.slane %v566, 1
      %v568 = vadd.f32 %v566, %v567
      %v569 = vsel %vm396, %v521, 0.0
      %v570 = vrot.slane %v569, 4
      %v571 = vadd.f32 %v569, %v570
      %v572 = vrot.slane %v571, 2
      %v573 = vadd.f32 %v571, %v572
      %v574 = vrot.slane %v573, 1
      %v575 = vadd.f32 %v573, %v574
      %v576 = vsel %vm396, %v522, 0.0
      %v577 = vrot.slane %v576, 4
      %v578 = vadd.f32 %v576, %v577
      %v579 = vrot.slane %v578, 2
      %v580 = vadd.f32 %v578, %v579
      %v581 = vrot.slane %v580, 1
      %v582 = vadd.f32 %v580, %v581
      %v583 = vsel %vm396, %v523, 0.0
      %v584 = vrot.slane %v583, 4
      %v585 = vadd.f32 %v583, %v584
      %v586 = vrot.slane %v585, 2
      %v587 = vadd.f32 %v585, %v586
      %v588 = vrot.slane %v587, 1
      %v589 = vadd.f32 %v587, %v588
      %v590 = vsel %vm396, %v524, 0.0
      %v591 = vrot.slane %v590, 4
      %v592 = vadd.f32 %v590, %v591
      %v593 = vrot.slane %v592, 2
      %v594 = vadd.f32 %v592, %v593
      %v595 = vrot.slane %v594, 1
      %v596 = vadd.f32 %v594, %v595
      %v597 = vsel %vm396, %v525, 0.0
      %v598 = vrot.slane %v597, 4
      %v599 = vadd.f32 %v597, %v598
      %v600 = vrot.slane %v599, 2
      %v601 = vadd.f32 %v599, %v600
      %v602 = vrot.slane %v601, 1
      %v603 = vadd.f32 %v601, %v602
      %v604 = vsel %vm396, %v526, 0.0
      %v605 = vrot.slane %v604, 4
      %v606 = vadd.f32 %v604, %v605
      %v607 = vrot.slane %v606, 2
      %v608 = vadd.f32 %v606, %v607
      %v609 = vrot.slane %v608, 1
      %v610 = vadd.f32 %v608, %v609
      %v611 = vsel %vm396, %v531, 0.0
      %v612 = vrot.slane %v611, 4
      %v613 = vadd.f32 %v611, %v612
      %v614 = vrot.slane %v613, 2
      %v615 = vadd.f32 %v613, %v614
      %v616 = vrot.slane %v615, 1
      %v617 = vadd.f32 %v615, %v616
      %v618 = vsel %vm396, %v532, 0.0
      %v619 = vrot.slane %v618, 4
      %v620 = vadd.f32 %v618, %v619
      %v621 = vrot.slane %v620, 2
      %v622 = vadd.f32 %v620, %v621
      %v623 = vrot.slane %v622, 1
      %v624 = vadd.f32 %v622, %v623
      %v625 = vsel %vm396, %v533, 0.0
      %v626 = vrot.slane %v625, 4
      %v627 = vadd.f32 %v625, %v626
      %v628 = vrot.slane %v627, 2
      %v629 = vadd.f32 %v627, %v628
      %v630 = vrot.slane %v629, 1
      %v631 = vadd.f32 %v629, %v630
      %v632 = vsel %vm396, %v534, 0.0
      %v633 = vrot.slane %v632, 4
      %v634 = vadd.f32 %v632, %v633
      %v635 = vrot.slane %v634, 2
      %v636 = vadd.f32 %v634, %v635
      %v637 = vrot.slane %v636, 1
      %v638 = vadd.f32 %v636, %v637
      %v639 = vsel %vm396, %v535, 0.0
      %v640 = vrot.slane %v639, 4
      %v641 = vadd.f32 %v639, %v640
      %v642 = vrot.slane %v641, 2
      %v643 = vadd.f32 %v641, %v642
      %v644 = vrot.slane %v643, 1
      %v645 = vadd.f32 %v643, %v644
      %v646 = vsel %vm396, %v536, 0.0
      %v647 = vrot.slane %v646, 4
      %v648 = vadd.f32 %v646, %v647
      %v649 = vrot.slane %v648, 2
      %v650 = vadd.f32 %v648, %v649
      %v651 = vrot.slane %v650, 1
      %v652 = vadd.f32 %v650, %v651
      %v653 = vsel %vm396, %v537, 0.0
      %v654 = vrot.slane %v653, 4
      %v655 = vadd.f32 %v653, %v654
      %v656 = vrot.slane %v655, 2
      %v657 = vadd.f32 %v655, %v656
      %v658 = vrot.slane %v657, 1
      %v659 = vadd.f32 %v657, %v658
      %v660 = vsel %vm396, %v538, 0.0
      %v661 = vrot.slane %v660, 4
      %v662 = vadd.f32 %v660, %v661
      %v663 = vrot.slane %v662, 2
      %v664 = vadd.f32 %v662, %v663
      %v665 = vrot.slane %v664, 1
      %v666 = vadd.f32 %v664, %v665
      %v667 = vrcp.pop 4.0
      %v668 = vmul.f32 4.0, %v667
      %v669 = vsub.f32 1.0, %v668
      %v670 = vmul.f32 %v667, %v669
      %v671 = vadd.f32 %v667, %v670
      %vm672 = vweird.f32 %v667
      %v673 = vsel %vm672, %v667, %v671
      %v674 = vmul.f32 %v561, %v673
      %v675 = vmul.f32 %v568, %v673
      %v676 = vmul.f32 %v575, %v673
      %v677 = vmul.f32 %v582, %v673
      %v678 = vmul.f32 %v589, %v673
      %v679 = vmul.f32 %v596, %v673
      %v680 = vmul.f32 %v603, %v673
      %v681 = vmul.f32 %v610, %v673
      %v682 = vmul.f32 %v617, %v673
      %v683 = vmul.f32 %v624, %v673
      %v684 = vmul.f32 %v631, %v673
      %v685 = vmul.f32 %v638, %v673
      %v686 = vmul.f32 %v645, %v673
      %v687 = vmul.f32 %v652, %v673
      %v688 = vmul.f32 %v659, %v673
      %v689 = vmul.f32 %v666, %v673
      %v706 = vrot.slane %v675, 7
      %v707 = vrot.slane %v676, 6
      %v708 = vrot.slane %v677, 5
      %v709 = vrot.slane %v678, 4
      %v710 = vrot.slane %v679, 3
      %v711 = vrot.slane %v680, 2
      %v712 = vrot.slane %v681, 1
      %v713 = vrot.slane %v683, 7
      %v714 = vrot.slane %v684, 6
      %v715 = vrot.slane %v685, 5
      %v716 = vrot.slane %v686, 4
      %v717 = vrot.slane %v687, 3
      %v718 = vrot.slane %v688, 2
      %v719 = vrot.slane %v689, 1
      %vm720 = vcmask 1040384
      %v721 = vsel %vm720, %v674, %v706
      %vm722 = vcmask 1042434
      %v723 = vsel %vm722, %v707, %v708
      %vm724 = vcmask 1041408
      %v725 = vsel %vm724, %v721, %v723
      %vm726 = vcmask 1044484
      %v727 = vsel %vm726, %v709, %v710
      %vm728 = vcmask 1046534
      %v729 = vsel %vm728, %v711, %v712
      %vm730 = vcmask 1045508
      %v731 = vsel %vm730, %v727, %v729
      %v732 = vsel %vm396, %v725, %v731
      %v733 = vsel %vm720, %v682, %v713
      %v734 = vsel %vm722, %v714, %v715
      %v735 = vsel %vm724, %v733, %v734
      %v736 = vsel %vm726, %v716, %v717
      %v737 = vsel %vm728, %v718, %v719
      %v738 = vsel %vm730, %v736, %v737
      %v739 = vsel %vm396, %v735, %v738
      %742 = vst [vmem:[%s327] ss:$2 sm:$0xff] %v732
      %s743 = scalar_lea.vmem %s327, 16
      %744 = vst [vmem:[%s743] ss:$2 sm:$0xff] %v739
      %745 = vst [vmem:[#allocation1] ss:$2 sm:$0xff] %v336
      %s746 = scalar_lea.vmem [#allocation1], 16
      %747 = vst [vmem:[%s746] ss:$2 sm:$0xff] %v337
      %s748 = scalar_lea.vmem [#allocation1], 32
      %749 = vst [vmem:[%s748] ss:$2 sm:$0xff] %v338
      %s750 = scalar_lea.vmem [#allocation1], 48
      %751 = vst [vmem:[%s750] ss:$2 sm:$0xff] %v339
      %v752 = vld.sshfl [vmem:[#allocation1] sm:$0xff pattern:$0x75316420]
      %v753 = vld.sshfl [vmem:[#allocation1 + $0x8] sm:$0xff pattern:$0x75316420]
      %v754 = vld.sshfl [vmem:[#allocation1 + $0x10] sm:$0xff pattern:$0x75316420]
      %v755 = vld.sshfl [vmem:[#allocation1 + $0x18] sm:$0xff pattern:$0x75316420]
      %v756 = vld.sshfl [vmem:[#allocation1 + $0x20] sm:$0xff pattern:$0x75316420]
      %v757 = vld.sshfl [vmem:[#allocation1 + $0x28] sm:$0xff pattern:$0x75316420]
      %v758 = vld.sshfl [vmem:[#allocation1 + $0x30] sm:$0xff pattern:$0x75316420]
      %v759 = vld.sshfl [vmem:[#allocation1 + $0x38] sm:$0xff pattern:$0x75316420]
      %760 = vst [vmem:[#allocation1] ss:$2 sm:$0xff] %v340
      %761 = vst [vmem:[%s746] ss:$2 sm:$0xff] %v341
      %762 = vst [vmem:[%s748] ss:$2 sm:$0xff] %v342
      %763 = vst [vmem:[%s750] ss:$2 sm:$0xff] %v343
      %v764 = vld.sshfl [vmem:[#allocation1] sm:$0xff pattern:$0x75316420]
      %v765 = vld.sshfl [vmem:[#allocation1 + $0x8] sm:$0xff pattern:$0x75316420]
      %v766 = vld.sshfl [vmem:[#allocation1 + $0x10] sm:$0xff pattern:$0x75316420]
      %v767 = vld.sshfl [vmem:[#allocation1 + $0x18] sm:$0xff pattern:$0x75316420]
      %v768 = vld.sshfl [vmem:[#allocation1 + $0x20] sm:$0xff pattern:$0x75316420]
      %v769 = vld.sshfl [vmem:[#allocation1 + $0x28] sm:$0xff pattern:$0x75316420]
      %v770 = vld.sshfl [vmem:[#allocation1 + $0x30] sm:$0xff pattern:$0x75316420]
      %v771 = vld.sshfl [vmem:[#allocation1 + $0x38] sm:$0xff pattern:$0x75316420]
      %v788 = vsel %vm396, %v752, -inf
      %v789 = vrot.slane %v788, 4
      %v790 = vmax.f32 %v788, %v789
      %v791 = vrot.slane %v790, 2
      %v792 = vmax.f32 %v790, %v791
      %v793 = vrot.slane %v792, 1
      %v794 = vmax.f32 %v792, %v793
      %v795 = vsel %vm396, %v753, -inf
      %v796 = vrot.slane %v795, 4
      %v797 = vmax.f32 %v795, %v796
      %v798 = vrot.slane %v797, 2
      %v799 = vmax.f32 %v797, %v798
      %v800 = vrot.slane %v799, 1
      %v801 = vmax.f32 %v799, %v800
      %v802 = vsel %vm396, %v754, -inf
      %v803 = vrot.slane %v802, 4
      %v804 = vmax.f32 %v802, %v803
      %v805 = vrot.slane %v804, 2
      %v806 = vmax.f32 %v804, %v805
      %v807 = vrot.slane %v806, 1
      %v808 = vmax.f32 %v806, %v807
      %v809 = vsel %vm396, %v755, -inf
      %v810 = vrot.slane %v809, 4
      %v811 = vmax.f32 %v809, %v810
      %v812 = vrot.slane %v811, 2
      %v813 = vmax.f32 %v811, %v812
      %v814 = vrot.slane %v813, 1
      %v815 = vmax.f32 %v813, %v814
      %v816 = vsel %vm396, %v756, -inf
      %v817 = vrot.slane %v816, 4
      %v818 = vmax.f32 %v816, %v817
      %v819 = vrot.slane %v818, 2
      %v820 = vmax.f32 %v818, %v819
      %v821 = vrot.slane %v820, 1
      %v822 = vmax.f32 %v820, %v821
      %v823 = vsel %vm396, %v757, -inf
      %v824 = vrot.slane %v823, 4
      %v825 = vmax.f32 %v823, %v824
      %v826 = vrot.slane %v825, 2
      %v827 = vmax.f32 %v825, %v826
      %v828 = vrot.slane %v827, 1
      %v829 = vmax.f32 %v827, %v828
      %v830 = vsel %vm396, %v758, -inf
      %v831 = vrot.slane %v830, 4
      %v832 = vmax.f32 %v830, %v831
      %v833 = vrot.slane %v832, 2
      %v834 = vmax.f32 %v832, %v833
      %v835 = vrot.slane %v834, 1
      %v836 = vmax.f32 %v834, %v835
      %v837 = vsel %vm396, %v759, -inf
      %v838 = vrot.slane %v837, 4
      %v839 = vmax.f32 %v837, %v838
      %v840 = vrot.slane %v839, 2
      %v841 = vmax.f32 %v839, %v840
      %v842 = vrot.slane %v841, 1
      %v843 = vmax.f32 %v841, %v842
      %v844 = vsel %vm396, %v764, -inf
      %v845 = vrot.slane %v844, 4
      %v846 = vmax.f32 %v844, %v845
      %v847 = vrot.slane %v846, 2
      %v848 = vmax.f32 %v846, %v847
      %v849 = vrot.slane %v848, 1
      %v850 = vmax.f32 %v848, %v849
      %v851 = vsel %vm396, %v765, -inf
      %v852 = vrot.slane %v851, 4
      %v853 = vmax.f32 %v851, %v852
      %v854 = vrot.slane %v853, 2
      %v855 = vmax.f32 %v853, %v854
      %v856 = vrot.slane %v855, 1
      %v857 = vmax.f32 %v855, %v856
      %v858 = vsel %vm396, %v766, -inf
      %v859 = vrot.slane %v858, 4
      %v860 = vmax.f32 %v858, %v859
      %v861 = vrot.slane %v860, 2
      %v862 = vmax.f32 %v860, %v861
      %v863 = vrot.slane %v862, 1
      %v864 = vmax.f32 %v862, %v863
      %v865 = vsel %vm396, %v767, -inf
      %v866 = vrot.slane %v865, 4
      %v867 = vmax.f32 %v865, %v866
      %v868 = vrot.slane %v867, 2
      %v869 = vmax.f32 %v867, %v868
      %v870 = vrot.slane %v869, 1
      %v871 = vmax.f32 %v869, %v870
      %v872 = vsel %vm396, %v768, -inf
      %v873 = vrot.slane %v872, 4
      %v874 = vmax.f32 %v872, %v873
      %v875 = vrot.slane %v874, 2
      %v876 = vmax.f32 %v874, %v875
      %v877 = vrot.slane %v876, 1
      %v878 = vmax.f32 %v876, %v877
      %v879 = vsel %vm396, %v769, -inf
      %v880 = vrot.slane %v879, 4
      %v881 = vmax.f32 %v879, %v880
      %v882 = vrot.slane %v881, 2
      %v883 = vmax.f32 %v881, %v882
      %v884 = vrot.slane %v883, 1
      %v885 = vmax.f32 %v883, %v884
      %v886 = vsel %vm396, %v770, -inf
      %v887 = vrot.slane %v886, 4
      %v888 = vmax.f32 %v886, %v887
      %v889 = vrot.slane %v888, 2
      %v890 = vmax.f32 %v888, %v889
      %v891 = vrot.slane %v890, 1
      %v892 = vmax.f32 %v890, %v891
      %v893 = vsel %vm396, %v771, -inf
      %v894 = vrot.slane %v893, 4
      %v895 = vmax.f32 %v893, %v894
      %v896 = vrot.slane %v895, 2
      %v897 = vmax.f32 %v895, %v896
      %v898 = vrot.slane %v897, 1
      %v899 = vmax.f32 %v897, %v898
      %v916 = vrot.slane %v801, 7
      %v917 = vrot.slane %v808, 6
      %v918 = vrot.slane %v815, 5
      %v919 = vrot.slane %v822, 4
      %v920 = vrot.slane %v829, 3
      %v921 = vrot.slane %v836, 2
      %v922 = vrot.slane %v843, 1
      %v923 = vrot.slane %v857, 7
      %v924 = vrot.slane %v864, 6
      %v925 = vrot.slane %v871, 5
      %v926 = vrot.slane %v878, 4
      %v927 = vrot.slane %v885, 3
      %v928 = vrot.slane %v892, 2
      %v929 = vrot.slane %v899, 1
      %v930 = vsel %vm720, %v794, %v916
      %v931 = vsel %vm722, %v917, %v918
      %v932 = vsel %vm724, %v930, %v931
      %v933 = vsel %vm726, %v919, %v920
      %v934 = vsel %vm728, %v921, %v922
      %v935 = vsel %vm730, %v933, %v934
      %v936 = vsel %vm396, %v932, %v935
      %v937 = vsel %vm720, %v850, %v923
      %v938 = vsel %vm722, %v924, %v925
      %v939 = vsel %vm724, %v937, %v938
      %v940 = vsel %vm726, %v926, %v927
      %v941 = vsel %vm728, %v928, %v929
      %v942 = vsel %vm730, %v940, %v941
      %v943 = vsel %vm396, %v939, %v942
      %s946 = scalar_lea.vmem %s327, 1
      %947 = vst [vmem:[%s946] ss:$2 sm:$0xff] %v936
      %s948 = scalar_lea.vmem %s327, 17
      %949 = vst [vmem:[%s948] ss:$2 sm:$0xff] %v943
      %p950 = scmp.eq.s32.totalorder %s24, 1
      // Predicated region
      $region49: #{attention_forward.3} parent=43 // pred_check
        %p951 = pneg %p950
      $region50: #{attention_forward.3} parent=43 // pred_check_branch
        %953 = sbr.rel (%p951) target = $region52
      $region51: #{attention_forward.3} parent=43 // pred_region
        %v954 = vld [vmem:[#allocation2] sm:$0xf]
        %v955 = vmul.f32 %v954, 0.00024414063
        %v956 = vld [vmem:[#allocation3] sm:$0xf]
        %v957 = vld [vmem:[%s1] sm:$0xff]
        %v958 = vld [vmem:[%s1 + $0x8] sm:$0xff]
        %v959 = vld [vmem:[%s2] sm:$0xff]
        %v960 = vld [vmem:[%s2 + $0x8] sm:$0xff]
        %vm961 = vcmask 31744
        %v963 = vsel %vm961, %v959, 0
        %v966 = vsel %vm961, %v960, 0
        %v969 = vsel %vm396, %v956, 0
        %971 = vmatpush.msra.mxu0 0.0
        %972 = vmatpush.msra.mxu0 0.0
        %973 = vmatpush.msra.mxu0 0.0
        %974 = vmatpush.msra.mxu0 0.0
        %975 = vmatpush.msra.mxu0 0.0
        %976 = vmatpush.msra.mxu0 0.0
        %977 = vmatpush.msra.mxu0 0.0
        %978 = vmatpush.msra.mxu0 0.0
        %979 = vmatpush.msra.mxu0 0.0
        %980 = vmatpush.msra.mxu0 0.0
        %981 = vmatpush.msra.mxu0 0.0
        %982 = vmatpush.msra.mxu0 0.0
        %983 = vmatpush.msra.mxu0 0.0
        %984 = vmatpush.msra.mxu0 0.0
        %985 = vmatpush.msra.mxu0 0.0
        %986 = vmatpush.msra.mxu0 %v969
        %987 = vmatmul.f32.gmra.mxu0 %v963
        %v988 = vpop.f32.mrf.mxu0
        %v989 = vadd.f32 0.0, %v988
        %990 = vmatmul.f32.gmra.mxu0 %v966
        %v991 = vpop.f32.mrf.mxu0
        %v992 = vadd.f32 0.0, %v991
        %993 = vdwg.mxu0
        %v995 = vsel %vm961, %v957, 0
        %v998 = vsel %vm961, %v958, 0
        %v1001 = vsel %vm396, %v955, 0
        %1003 = vmatpush.msra.mxu0 0.0
        %1004 = vmatpush.msra.mxu0 0.0
        %1005 = vmatpush.msra.mxu0 0.0
        %1006 = vmatpush.msra.mxu0 0.0
        %1007 = vmatpush.msra.mxu0 0.0
        %1008 = vmatpush.msra.mxu0 0.0
        %1009 = vmatpush.msra.mxu0 0.0
        %1010 = vmatpush.msra.mxu0 0.0
        %1011 = vmatpush.msra.mxu0 0.0
        %1012 = vmatpush.msra.mxu0 0.0
        %1013 = vmatpush.msra.mxu0 0.0
        %1014 = vmatpush.msra.mxu0 0.0
        %1015 = vmatpush.msra.mxu0 0.0
        %1016 = vmatpush.msra.mxu0 0.0
        %1017 = vmatpush.msra.mxu0 0.0
        %1018 = vmatpush.msra.mxu0 %v1001
        %1019 = vmatmul.f32.gmra.mxu0 %v995
        %v1020 = vpop.f32.mrf.mxu0
        %v1021 = vadd.f32 %v989, %v1020
        %1022 = vmatmul.f32.gmra.mxu0 %v998
        %v1023 = vpop.f32.mrf.mxu0
        %v1024 = vadd.f32 %v992, %v1023
        %1025 = vdwg.mxu0
        %v1026 = vld [vmem:[%s3] sm:$0xff]
        %v1027 = vld [vmem:[%s3 + $0x8] sm:$0xff]
        %v1028 = vadd.f32 %v1021, %v1026
        %v1029 = vadd.f32 %v1024, %v1027
        %v1030 = vmax.f32 %v1028, 0.0
        %v1031 = vmax.f32 %v1029, 0.0
        %v1032 = vld [vmem:[%s4] sm:$0xf]
        %v1033 = vld [vmem:[%s5] sm:$0xf]
        %vm1034 = vcmask 130048
        %v1036 = vsel %vm1034, %v1032, 0
        %1038 = vmatpush.msra.mxu0 0.0
        %1039 = vmatpush.msra.mxu0 0.0
        %1040 = vmatpush.msra.mxu0 0.0
        %1041 = vmatpush.msra.mxu0 0.0
        %1042 = vmatpush.msra.mxu0 0.0
        %1043 = vmatpush.msra.mxu0 0.0
        %1044 = vmatpush.msra.mxu0 0.0
        %1045 = vmatpush.msra.mxu0 0.0
        %1046 = vmatpush.msra.mxu0 0.0
        %1047 = vmatpush.msra.mxu0 0.0
        %1048 = vmatpush.msra.mxu0 0.0
        %1049 = vmatpush.msra.mxu0 0.0
        %1050 = vmatpush.msra.mxu0 0.0
        %1051 = vmatpush.msra.mxu0 0.0
        %1052 = vmatpush.msra.mxu0 %v1031
        %1053 = vmatpush.msra.mxu0 %v1030
        %1054 = vmatmul.f32.gmra.mxu0 %v1036
        %v1055 = vpop.f32.mrf.mxu0
        %v1056 = vadd.f32 %v1033, %v1055
        %1057 = vdwg.mxu0
        %v1058 = vsub.f32 0.0, %v1056
        %v1059 = vmul.f32 %v1058, 1.442695
        %v1060 = vpow.pop %v1059
        %v1061 = vadd.f32 %v1060, 1.0
        %v1062 = vrcp.pop %v1061
        %v1063 = vmul.f32 %v1061, %v1062
        %v1064 = vsub.f32 1.0, %v1063
        %v1065 = vmul.f32 %v1062, %v1064
        %v1066 = vadd.f32 %v1062, %v1065
        %vm1067 = vweird.f32 %v1061
        %vm1068 = vweird.f32 %v1062
        %vm1069 = vmor %vm1067, %vm1068
        %v1070 = vsel %vm1069, %v1062, %v1066
        %v1071 = vand.u32 2147483647, %v1061
        %vm1072 = vcmp.eq.f32.partialorder %v1071, 8.507059e+37
        %v1073 = vand.u32 %v1061, 2147483648
        %v1074 = vor.u32 1.1754944e-38, %v1073
        %v1075 = vsel %vm1072, %v1074, %v1070
        %1076 = vst.msk [vmem:[%s318] sm:$0xf] %vm431, %v1075
      $region52: #{attention_forward.3} parent=43 // pred_fallthru
        _
      %p1077 = scmp.lt.s32.totalorder %s23, 1
      %s1078 = scalar_select %p1077, %s23, 1
      %s1079 = smul.addr %s1078, 4
      %s1080 = scalar_lea.vmem %s6, %s1079
      %s1081 = smul.u32 16, %s24
      %p1082 = scmp.lt.s32.totalorder %s23, 1
      %s1083 = scalar_select %p1082, %s23, 1
      %p1084 = scmp.lt.s32.totalorder %s1081, 31
      %s1085 = scalar_select %p1084, %s1081, 31
      %s1086 = smul.addr %s1083, 32
      %s1087 = sadd.s32 %s1085, %s1086
      %s1088 = smul.addr %s1087, 2
      %s1089 = scalar_lea.vmem %s7, %s1088
      // Predicated region
      $region53: #{attention_forward.3} parent=43 // pred_check
        %p1090 = pneg %p182
      $region54: #{attention_forward.3} parent=43 // pred_check_branch
        %1092 = sbr.rel (%p1090) target = $region56
      $region55: #{attention_forward.3} parent=43 // pred_region
        _
      $region56: #{attention_forward.3} parent=43 // pred_fallthru
        _
      // Predicated region
      $region57: #{attention_forward.3} parent=43 // pred_check
        %p1093 = pneg %p210
      $region58: #{attention_forward.3} parent=43 // pred_check_branch
        %1095 = sbr.rel (%p1093) target = $region60
      $region59: #{attention_forward.3} parent=43 // pred_region
        %s1096 = smul.u32 16, %s24
      $region60: #{attention_forward.3} parent=43 // pred_fallthru
        _
    $region44: #{attention_forward.3} parent=5 // pred_fallthru
      _
    %p1097 = scmp.le.s32.totalorder 2, %s14
    // Predicated region
    $region61: #{attention_forward.3} parent=5 // pred_check
      %p1098 = pneg %p1097
    $region62: #{attention_forward.3} parent=5 // pred_check_branch
      %1100 = sbr.rel (%p1098) target = $region64
    $region63: #{attention_forward.3} parent=5 // pred_region
      %s1101 = ssub.s32 %s14, 2
      // Predicated region
      $region65: #{attention_forward.3} parent=63 // pred_check
        %p1102 = pneg %p188
      $region66: #{attention_forward.3} parent=63 // pred_check_branch
        %1104 = sbr.rel (%p1102) target = $region68
      $region67: #{attention_forward.3} parent=63 // pred_region
        %p1105 = scmp.lt.s32.totalorder %s25, 1
        %s1106 = scalar_select %p1105, %s25, 1
        %s1107 = smul.addr %s1106, 4
        %s1108 = scalar_lea.vmem %s6, %s1107
      $region68: #{attention_forward.3} parent=63 // pred_fallthru
        _
      // Predicated region
      $region69: #{attention_forward.3} parent=63 // pred_check
        %p1109 = pneg %p216
      $region70: #{attention_forward.3} parent=63 // pred_check_branch
        %1111 = sbr.rel (%p1109) target = $region72
      $region71: #{attention_forward.3} parent=63 // pred_region
        %s1112 = smul.u32 16, %s26
        %p1113 = scmp.lt.s32.totalorder %s25, 1
        %s1114 = scalar_select %p1113, %s25, 1
        %p1115 = scmp.lt.s32.totalorder %s1112, 31
        %s1116 = scalar_select %p1115, %s1112, 31
        %s1117 = smul.addr %s1114, 32
        %s1118 = sadd.s32 %s1116, %s1117
        %s1119 = smul.addr %s1118, 2
        %s1120 = scalar_lea.vmem %s7, %s1119
      $region72: #{attention_forward.3} parent=63 // pred_fallthru
        _
    $region64: #{attention_forward.3} parent=5 // pred_fallthru
      _
  $region6: #{attention_forward.3} parent=0 // loop_footer
    %s18 = sadd.s32 1, %s14
  $region7: #{attention_forward.3} parent=0 // loop_footer_branch
    %13 = sbr.rel target = $region3
  $region8: #{attention_forward.3} parent=0 // loop_exit
    _

// kernel: attention_forward.5
$region0: #{attention_forward.5}
  #allocation0 [shape = 'u32[]', space=smem, size = 0x4, offset = 0x4, fixed_abs, tag = 'smem constant byte address 0x4 - core index']
  #allocation1 [shape = 'u32[72,128]{1,0:T(1,128)}', space=vmem, size = 0x9000, scoped, tag = 'internal scratch']
  %s0 = inlined_call_operand.vmem [shape: f32[2,4,1], index: 0, kind: input, shape index: {}]
  %s1 = inlined_call_operand.vmem [shape: f32[2,1,4096], index: 1, kind: input, shape index: {}]
  %s2 = inlined_call_operand.vmem [shape: f32[2,4,4096], index: 2, kind: output, shape index: {0}]
  %s3 = inlined_call_operand.vmem [shape: f32[2,4,4096], index: 3, kind: output, shape index: {1}]
  %4 = xla_tuple %s2, %s3
  %s5 = sld [smem:[#allocation0]]
  $region49: #{attention_forward.5} parent=0
    _
  %s7 = ssub.s32 1, %s5
  %s8 = scalar_select 0, %s7, %s5
  loop: start=0, step=1, limit=6
  $region2: #{attention_forward.5} parent=0 // loop_pre_header
    _
  $region3: #{attention_forward.5} parent=0 // loop_header
    %s10 = sphi 0, %s14
    %p11 = scmp.ge.s32.totalorder %s10, 6
    %s17 = sphi 0, %s29
    %s18 = sphi 0, %s25
    %s19 = sphi 0, %s17
    %s20 = sphi 0, %s18
    %s21 = sphi 0, %s19
    %s22 = sphi 0, %s20
    %s32 = sphi 0, %s34
    %s35 = sphi 0, %s32
    %s36 = sphi 0, %s35
    %s52 = sphi 0, %s36
    %s60 = sphi 0, %s62
    %s63 = sphi 0, %s60
    %s64 = sphi 0, %s63
    %s80 = sphi 0, %s64
    %s88 = sphi 0, %s90
    %s91 = sphi 0, %s88
    %s92 = sphi 0, %s91
    %s108 = sphi 0, %s92
    %s116 = sphi 0, %s118
    %s119 = sphi 0, %s116
    %s120 = sphi 0, %s119
    %s136 = sphi 0, %s120
  $region4: #{attention_forward.5} parent=0 // loop_header_branch
    %13 = sbr.rel (%p11) target = $region8
  $region5: #{attention_forward.5} parent=0 // loop_body
    %s15 = ssub.s32 %s10, 1
    %s16 = ssub.s32 %s10, 2
    %s23 = sadd.s32 1, %s18
    %p24 = scmp.ge.s32.totalorder %s23, 2
    %s25 = scalar_select %p24, 0, %s23
    %s26 = sadd.s32 1, %s17
    %s27 = scalar_select %p24, %s26, %s17
    %p28 = scmp.ge.s32.totalorder %s27, 2
    %s29 = scalar_select %p28, 0, %s27
    %s30 = ssub.s32 %s17, %s29
    %p31 = scmp.eq.s32.totalorder %s30, 0
    %s33 = sadd.s32 %s32, 1
    %s34 = scalar_select %p31, %s32, %s33
    %p37 = pneg %p31
    %p38 = scmp.eq.s32.totalorder %s10, 3
    %p39 = por %p37, %p38
    %p40 = scmp.ne.s32.totalorder %s32, %s35
    %p41 = scmp.eq.s32.totalorder %s10, 0
    %p42 = por %p40, %p41
    %p43 = scmp.ne.s32.totalorder %s32, %s35
    %p44 = scmp.eq.s32.totalorder %s15, 3
    %p45 = por %p43, %p44
    %p46 = scmp.ne.s32.totalorder %s35, %s36
    %p47 = scmp.eq.s32.totalorder %s15, 0
    %p48 = por %p46, %p47
    %p49 = scmp.ne.s32.totalorder %s35, %s36
    %p50 = scmp.eq.s32.totalorder %s16, 3
    %p51 = por %p49, %p50
    %p53 = scmp.ne.s32.totalorder %s36, %s52
    %p54 = scmp.eq.s32.totalorder %s16, 0
    %p55 = por %p53, %p54
    %s56 = ssub.s32 %s17, %s29
    %s57 = ssub.s32 %s18, %s25
    %s58 = sor.u32 %s56, %s57
    %p59 = scmp.eq.s32.totalorder %s58, 0
    %s61 = sadd.s32 %s60, 1
    %s62 = scalar_select %p59, %s60, %s61
    %p65 = pneg %p59
    %p66 = scmp.eq.s32.totalorder %s10, 3
    %p67 = por %p65, %p66
    %p68 = scmp.ne.s32.totalorder %s60, %s63
    %p69 = scmp.eq.s32.totalorder %s10, 0
    %p70 = por %p68, %p69
    %p71 = scmp.ne.s32.totalorder %s60, %s63
    %p72 = scmp.eq.s32.totalorder %s15, 3
    %p73 = por %p71, %p72
    %p74 = scmp.ne.s32.totalorder %s63, %s64
    %p75 = scmp.eq.s32.totalorder %s15, 0
    %p76 = por %p74, %p75
    %p77 = scmp.ne.s32.totalorder %s63, %s64
    %p78 = scmp.eq.s32.totalorder %s16, 3
    %p79 = por %p77, %p78
    %p81 = scmp.ne.s32.totalorder %s64, %s80
    %p82 = scmp.eq.s32.totalorder %s16, 0
    %p83 = por %p81, %p82
    %s84 = ssub.s32 %s17, %s29
    %s85 = ssub.s32 %s18, %s25
    %s86 = sor.u32 %s84, %s85
    %p87 = scmp.eq.s32.totalorder %s86, 0
    %s89 = sadd.s32 %s88, 1
    %s90 = scalar_select %p87, %s88, %s89
    %p93 = pneg %p87
    %p94 = scmp.eq.s32.totalorder %s10, 3
    %p95 = por %p93, %p94
    %p96 = scmp.ne.s32.totalorder %s88, %s91
    %p97 = scmp.eq.s32.totalorder %s10, 0
    %p98 = por %p96, %p97
    %p99 = scmp.ne.s32.totalorder %s88, %s91
    %p100 = scmp.eq.s32.totalorder %s15, 3
    %p101 = por %p99, %p100
    %p102 = scmp.ne.s32.totalorder %s91, %s92
    %p103 = scmp.eq.s32.totalorder %s15, 0
    %p104 = por %p102, %p103
    %p105 = scmp.ne.s32.totalorder %s91, %s92
    %p106 = scmp.eq.s32.totalorder %s16, 3
    %p107 = por %p105, %p106
    %p109 = scmp.ne.s32.totalorder %s92, %s108
    %p110 = scmp.eq.s32.totalorder %s16, 0
    %p111 = por %p109, %p110
    %s112 = ssub.s32 %s17, %s29
    %s113 = ssub.s32 %s18, %s25
    %s114 = sor.u32 %s112, %s113
    %p115 = scmp.eq.s32.totalorder %s114, 0
    %s117 = sadd.s32 %s116, 1
    %s118 = scalar_select %p115, %s116, %s117
    %p121 = pneg %p115
    %p122 = scmp.eq.s32.totalorder %s10, 3
    %p123 = por %p121, %p122
    %p124 = scmp.ne.s32.totalorder %s116, %s119
    %p125 = scmp.eq.s32.totalorder %s10, 0
    %p126 = por %p124, %p125
    %p127 = scmp.ne.s32.totalorder %s116, %s119
    %p128 = scmp.eq.s32.totalorder %s15, 3
    %p129 = por %p127, %p128
    %p130 = scmp.ne.s32.totalorder %s119, %s120
    %p131 = scmp.eq.s32.totalorder %s15, 0
    %p132 = por %p130, %p131
    %p133 = scmp.ne.s32.totalorder %s119, %s120
    %p134 = scmp.eq.s32.totalorder %s16, 3
    %p135 = por %p133, %p134
    %p137 = scmp.ne.s32.totalorder %s120, %s136
    %p138 = scmp.eq.s32.totalorder %s16, 0
    %p139 = por %p137, %p138
    %p140 = scmp.le.s32.totalorder 1, %s10
    %p141 = scmp.lt.s32.totalorder %s10, 5
    %p142 = pnand %p140, %p141
    %p143 = pneg %p142
    // Predicated region
    $region9: #{attention_forward.5} parent=5 // pred_check
      _
    $region10: #{attention_forward.5} parent=5 // pred_check_branch
      %145 = sbr.rel (%p142) target = $region12
    $region11: #{attention_forward.5} parent=5 // pred_region
      %s146 = ssub.s32 %s10, 1
    $region12: #{attention_forward.5} parent=5 // pred_fallthru
      _
    %p147 = scmp.lt.s32.totalorder %s10, 4
    // Predicated region
    $region13: #{attention_forward.5} parent=5 // pred_check
      %p148 = pneg %p147
    $region14: #{attention_forward.5} parent=5 // pred_check_branch
      %150 = sbr.rel (%p148) target = $region16
    $region15: #{attention_forward.5} parent=5 // pred_region
      // Predicated region
      $region17: #{attention_forward.5} parent=15 // pred_check
        %p151 = pneg %p42
      $region18: #{attention_forward.5} parent=15 // pred_check_branch
        %153 = sbr.rel (%p151) target = $region20
      $region19: #{attention_forward.5} parent=15 // pred_region
        %p154 = scmp.lt.s32.totalorder %s17, 1
        %s155 = scalar_select %p154, %s17, 1
        %s156 = smul.addr %s155, 4
        %s157 = scalar_lea.vmem %s0, %s156
      $region20: #{attention_forward.5} parent=15 // pred_fallthru
        _
      // Predicated region
      $region21: #{attention_forward.5} parent=15 // pred_check
        %p158 = pneg %p70
      $region22: #{attention_forward.5} parent=15 // pred_check_branch
        %160 = sbr.rel (%p158) target = $region24
      $region23: #{attention_forward.5} parent=15 // pred_region
        %s161 = smul.u32 16, %s18
        %p162 = scmp.lt.s32.totalorder %s17, 1
        %s163 = scalar_select %p162, %s17, 1
        %p164 = scmp.lt.s32.totalorder %s161, 31
        %s165 = scalar_select %p164, %s161, 31
        %s166 = smul.addr %s163, 32
        %s167 = sadd.s32 %s165, %s166
        %s168 = scalar_lea.vmem %s1, %s167
        %s169 = smul.u32 16, %s18
      $region24: #{attention_forward.5} parent=15 // pred_fallthru
        _
    $region16: #{attention_forward.5} parent=5 // pred_fallthru
      _
    %p170 = scmp.le.s32.totalorder 1, %s10
    %p171 = scmp.lt.s32.totalorder %s10, 5
    %p172 = pnand %p170, %p171
    %p173 = pneg %p172
    // Predicated region
    $region25: #{attention_forward.5} parent=5 // pred_check
      _
    $region26: #{attention_forward.5} parent=5 // pred_check_branch
      %175 = sbr.rel (%p172) target = $region28
    $region27: #{attention_forward.5} parent=5 // pred_region
      %s176 = ssub.s32 %s10, 1
      %p177 = scmp.lt.s32.totalorder %s19, 1
      %s178 = scalar_select %p177, %s19, 1
      %s179 = smul.addr %s178, 4
      %s180 = scalar_lea.vmem %s0, %s179
      %p181 = pneg %p48
      %p182 = pneg %p45
      %s183 = smul.u32 16, %s20
      %p184 = scmp.lt.s32.totalorder %s19, 1
      %s185 = scalar_select %p184, %s19, 1
      %p186 = scmp.lt.s32.totalorder %s183, 31
      %s187 = scalar_select %p186, %s183, 31
      %s188 = smul.addr %s185, 32
      %s189 = sadd.s32 %s187, %s188
      %s190 = scalar_lea.vmem %s1, %s189
      %p191 = pneg %p76
      %p192 = pneg %p73
      %p193 = pneg %p104
      %p194 = pneg %p101
      %s195 = smul.u32 16, %s20
      %p196 = scmp.lt.s32.totalorder %s19, 1
      %s197 = scalar_select %p196, %s19, 1
      %p198 = scmp.lt.s32.totalorder %s195, 31
      %s199 = scalar_select %p198, %s195, 31
      %s200 = smul.addr %s197, 32
      %s201 = sadd.s32 %s199, %s200
      %s202 = smul.addr %s201, 4
      %s203 = scalar_lea.vmem %s2, %s202
      %p204 = pneg %p132
      %p205 = pneg %p129
      %s206 = smul.u32 16, %s20
      %p207 = scmp.lt.s32.totalorder %s19, 1
      %s208 = scalar_select %p207, %s19, 1
      %p209 = scmp.lt.s32.totalorder %s206, 31
      %s210 = scalar_select %p209, %s206, 31
      %s211 = smul.addr %s208, 32
      %s212 = sadd.s32 %s210, %s211
      %s213 = smul.addr %s212, 4
      %s214 = scalar_lea.vmem %s3, %s213
      %p215 = scmp.lt.s32.totalorder %s19, 1
      %s216 = scalar_select %p215, %s19, 1
      %s217 = smul.addr %s216, 4
      %s218 = scalar_lea.vmem %s0, %s217
      %s219 = smul.u32 16, %s20
      %p220 = scmp.lt.s32.totalorder %s19, 1
      %s221 = scalar_select %p220, %s19, 1
      %p222 = scmp.lt.s32.totalorder %s219, 31
      %s223 = scalar_select %p222, %s219, 31
      %s224 = smul.addr %s221, 32
      %s225 = sadd.s32 %s223, %s224
      %s226 = scalar_lea.vmem %s1, %s225
      %s227 = smul.u32 16, %s20
      %s228 = smul.u32 16, %s20
      %p229 = scmp.lt.s32.totalorder %s19, 1
      %s230 = scalar_select %p229, %s19, 1
      %p231 = scmp.lt.s32.totalorder %s228, 31
      %s232 = scalar_select %p231, %s228, 31
      %s233 = smul.addr %s230, 32
      %s234 = sadd.s32 %s232, %s233
      %s235 = smul.addr %s234, 4
      %s236 = scalar_lea.vmem %s2, %s235
      %s237 = smul.u32 16, %s20
      %s238 = smul.u32 16, %s20
      %p239 = scmp.lt.s32.totalorder %s19, 1
      %s240 = scalar_select %p239, %s19, 1
      %p241 = scmp.lt.s32.totalorder %s238, 31
      %s242 = scalar_select %p241, %s238, 31
      %s243 = smul.addr %s240, 32
      %s244 = sadd.s32 %s242, %s243
      %s245 = smul.addr %s244, 4
      %s246 = scalar_lea.vmem %s3, %s245
      %s247 = smul.u32 16, %s20
      %v248 = vld [vmem:[%s218] sm:$0xf]
      %v249 = vld [vmem:[%s226] sm:$0xff]
      %v250 = vld [vmem:[%s226 + $0x8] sm:$0xff]
      %252 = vset.pattern.permute.xlu0 0
      %253 = vperm.xlu0 %252, %v248
      %v254 = vpop.permute.xlu0 %253
      %v258 = vperm.slane %v249, 0
      %v259 = vperm.slane %v249, 1
      %v260 = vperm.slane %v249, 2
      %v261 = vperm.slane %v249, 3
      %v262 = vperm.slane %v249, 4
      %v263 = vperm.slane %v249, 5
      %v264 = vperm.slane %v249, 6
      %v265 = vperm.slane %v249, 7
      %v266 = vperm.slane %v250, 0
      %v267 = vperm.slane %v250, 1
      %v268 = vperm.slane %v250, 2
      %v269 = vperm.slane %v250, 3
      %v270 = vperm.slane %v250, 4
      %v271 = vperm.slane %v250, 5
      %v272 = vperm.slane %v250, 6
      %v273 = vperm.slane %v250, 7
      %v290 = vmul.f32 %v254, %v258
      %v291 = vmul.f32 %v254, %v259
      %v292 = vmul.f32 %v254, %v260
      %v293 = vmul.f32 %v254, %v261
      %v294 = vmul.f32 %v254, %v262
      %v295 = vmul.f32 %v254, %v263
      %v296 = vmul.f32 %v254, %v264
      %v297 = vmul.f32 %v254, %v265
      %v298 = vmul.f32 %v254, %v266
      %v299 = vmul.f32 %v254, %v267
      %v300 = vmul.f32 %v254, %v268
      %v301 = vmul.f32 %v254, %v269
      %v302 = vmul.f32 %v254, %v270
      %v303 = vmul.f32 %v254, %v271
      %v304 = vmul.f32 %v254, %v272
      %v305 = vmul.f32 %v254, %v273
      %v322 = vrot.slane %v291, 4
      %v323 = vrot.slane %v293, 4
      %v324 = vrot.slane %v295, 4
      %v325 = vrot.slane %v297, 4
      %v326 = vrot.slane %v299, 4
      %v327 = vrot.slane %v301, 4
      %v328 = vrot.slane %v303, 4
      %v329 = vrot.slane %v305, 4
      %vm330 = vcmask 1043456
      %v331 = vsel %vm330, %v290, %v322
      %v332 = vsel %vm330, %v292, %v323
      %v333 = vsel %vm330, %v294, %v324
      %v334 = vsel %vm330, %v296, %v325
      %v335 = vsel %vm330, %v298, %v326
      %v336 = vsel %vm330, %v300, %v327
      %v337 = vsel %vm330, %v302, %v328
      %v338 = vsel %vm330, %v304, %v329
      %347 = vst [vmem:[%s236] sm:$0xff] %v331
      %348 = vst [vmem:[%s236 + $0x8] sm:$0xff] %v332
      %349 = vst [vmem:[%s236 + $0x10] sm:$0xff] %v333
      %350 = vst [vmem:[%s236 + $0x18] sm:$0xff] %v334
      %351 = vst [vmem:[%s236 + $0x20] sm:$0xff] %v335
      %352 = vst [vmem:[%s236 + $0x28] sm:$0xff] %v336
      %353 = vst [vmem:[%s236 + $0x30] sm:$0xff] %v337
      %354 = vst [vmem:[%s236 + $0x38] sm:$0xff] %v338
      %v355 = vsub.f32 1.0, %v290
      %v356 = vsub.f32 1.0, %v291
      %v357 = vsub.f32 1.0, %v292
      %v358 = vsub.f32 1.0, %v293
      %v359 = vsub.f32 1.0, %v294
      %v360 = vsub.f32 1.0, %v295
      %v361 = vsub.f32 1.0, %v296
      %v362 = vsub.f32 1.0, %v297
      %v363 = vsub.f32 1.0, %v298
      %v364 = vsub.f32 1.0, %v299
      %v365 = vsub.f32 1.0, %v300
      %v366 = vsub.f32 1.0, %v301
      %v367 = vsub.f32 1.0, %v302
      %v368 = vsub.f32 1.0, %v303
      %v369 = vsub.f32 1.0, %v304
      %v370 = vsub.f32 1.0, %v305
      %v387 = vrot.slane %v356, 4
      %v388 = vrot.slane %v358, 4
      %v389 = vrot.slane %v360, 4
      %v390 = vrot.slane %v362, 4
      %v391 = vrot.slane %v364, 4
      %v392 = vrot.slane %v366, 4
      %v393 = vrot.slane %v368, 4
      %v394 = vrot.slane %v370, 4
      %v395 = vsel %vm330, %v355, %v387
      %v396 = vsel %vm330, %v357, %v388
      %v397 = vsel %vm330, %v359, %v389
      %v398 = vsel %vm330, %v361, %v390
      %v399 = vsel %vm330, %v363, %v391
      %v400 = vsel %vm330, %v365, %v392
      %v401 = vsel %vm330, %v367, %v393
      %v402 = vsel %vm330, %v369, %v394
      %411 = vst [vmem:[%s246] sm:$0xff] %v395
      %412 = vst [vmem:[%s246 + $0x8] sm:$0xff] %v396
      %413 = vst [vmem:[%s246 + $0x10] sm:$0xff] %v397
      %414 = vst [vmem:[%s246 + $0x18] sm:$0xff] %v398
      %415 = vst [vmem:[%s246 + $0x20] sm:$0xff] %v399
      %416 = vst [vmem:[%s246 + $0x28] sm:$0xff] %v400
      %417 = vst [vmem:[%s246 + $0x30] sm:$0xff] %v401
      %418 = vst [vmem:[%s246 + $0x38] sm:$0xff] %v402
      %s419 = smul.u32 16, %s20
      %p420 = scmp.lt.s32.totalorder %s19, 1
      %s421 = scalar_select %p420, %s19, 1
      %p422 = scmp.lt.s32.totalorder %s419, 31
      %s423 = scalar_select %p422, %s419, 31
      %s424 = smul.addr %s421, 32
      %s425 = sadd.s32 %s423, %s424
      %s426 = smul.addr %s425, 4
      %s427 = scalar_lea.vmem %s2, %s426
      %s428 = smul.u32 16, %s20
      %p429 = scmp.lt.s32.totalorder %s19, 1
      %s430 = scalar_select %p429, %s19, 1
      %p431 = scmp.lt.s32.totalorder %s428, 31
      %s432 = scalar_select %p431, %s428, 31
      %s433 = smul.addr %s430, 32
      %s434 = sadd.s32 %s432, %s433
      %s435 = smul.addr %s434, 4
      %s436 = scalar_lea.vmem %s3, %s435
      // Predicated region
      $region29: #{attention_forward.5} parent=27 // pred_check
        %p437 = pneg %p101
      $region30: #{attention_forward.5} parent=27 // pred_check_branch
        %439 = sbr.rel (%p437) target = $region32
      $region31: #{attention_forward.5} parent=27 // pred_region
        %s440 = smul.u32 16, %s20
      $region32: #{attention_forward.5} parent=27 // pred_fallthru
        _
      // Predicated region
      $region33: #{attention_forward.5} parent=27 // pred_check
        %p441 = pneg %p129
      $region34: #{attention_forward.5} parent=27 // pred_check_branch
        %443 = sbr.rel (%p441) target = $region36
      $region35: #{attention_forward.5} parent=27 // pred_region
        %s444 = smul.u32 16, %s20
      $region36: #{attention_forward.5} parent=27 // pred_fallthru
        _
    $region28: #{attention_forward.5} parent=5 // pred_fallthru
      _
    %p445 = scmp.le.s32.totalorder 2, %s10
    // Predicated region
    $region37: #{attention_forward.5} parent=5 // pred_check
      %p446 = pneg %p445
    $region38: #{attention_forward.5} parent=5 // pred_check_branch
      %448 = sbr.rel (%p446) target = $region40
    $region39: #{attention_forward.5} parent=5 // pred_region
      %s449 = ssub.s32 %s10, 2
      // Predicated region
      $region41: #{attention_forward.5} parent=39 // pred_check
        %p450 = pneg %p107
      $region42: #{attention_forward.5} parent=39 // pred_check_branch
        %452 = sbr.rel (%p450) target = $region44
      $region43: #{attention_forward.5} parent=39 // pred_region
        %s453 = smul.u32 16, %s22
        %p454 = scmp.lt.s32.totalorder %s21, 1
        %s455 = scalar_select %p454, %s21, 1
        %p456 = scmp.lt.s32.totalorder %s453, 31
        %s457 = scalar_select %p456, %s453, 31
        %s458 = smul.addr %s455, 32
        %s459 = sadd.s32 %s457, %s458
        %s460 = smul.addr %s459, 4
        %s461 = scalar_lea.vmem %s2, %s460
      $region44: #{attention_forward.5} parent=39 // pred_fallthru
        _
      // Predicated region
      $region45: #{attention_forward.5} parent=39 // pred_check
        %p462 = pneg %p135
      $region46: #{attention_forward.5} parent=39 // pred_check_branch
        %464 = sbr.rel (%p462) target = $region48
      $region47: #{attention_forward.5} parent=39 // pred_region
        %s465 = smul.u32 16, %s22
        %p466 = scmp.lt.s32.totalorder %s21, 1
        %s467 = scalar_select %p466, %s21, 1
        %p468 = scmp.lt.s32.totalorder %s465, 31
        %s469 = scalar_select %p468, %s465, 31
        %s470 = smul.addr %s467, 32
        %s471 = sadd.s32 %s469, %s470
        %s472 = smul.addr %s471, 4
        %s473 = scalar_lea.vmem %s3, %s472
      $region48: #{attention_forward.5} parent=39 // pred_fallthru
        _
    $region40: #{attention_forward.5} parent=5 // pred_fallthru
      _
  $region6: #{attention_forward.5} parent=0 // loop_footer
    %s14 = sadd.s32 1, %s10
  $region7: #{attention_forward.5} parent=0 // loop_footer_branch
    %9 = sbr.rel target = $region3
  $region8: #{attention_forward.5} parent=0 // loop_exit
    _

// kernel: attention_forward.4
$region0: #{attention_forward.4}
  #allocation0 [shape = 'u32[]', space=smem, size = 0x4, offset = 0x4, fixed_abs, tag = 'smem constant byte address 0x4 - core index']
  #allocation1 [shape = 'u32[72,128]{1,0:T(1,128)}', space=vmem, size = 0x9000, scoped, tag = 'internal scratch']
  #allocation2 [shape = 'f32[22,22,44]{2,1,0:T(8,128)}', space=vmem, size = 0x42000, scoped, tag = 'scratch operand']
  %s0 = inlined_call_operand.vmem [shape: f32[2,2,16,16,16], index: 0, kind: input, shape index: {}]
  %s1 = inlined_call_operand.vmem [shape: f32[49,44,64], index: 1, kind: input, shape index: {}]
  %s2 = inlined_call_operand.vmem [shape: f32[4], index: 2, kind: input, shape index: {}]
  %s3 = inlined_call_operand.vmem [shape: f32[2,256,16], index: 3, kind: output, shape index: {}]
  %s4 = sld [smem:[#allocation0]]
  $region49: #{attention_forward.4} parent=0
    _
  %s6 = ssub.s32 1, %s4
  %s7 = scalar_select 0, %s6, %s4
  $region1: #{attention_forward.4} parent=0
    #allocation3 [shape = 'u8[512]{0}', space=smem, size = 0x200, scoped, tag = 'input window, operand 2, single buffered']
    #allocation4 [shape = 's32[2]{0}', space=sflag, size = 0x8, scoped, tag = 'scoped memory for attention_forward.4']
    %8 = vsyncpa [#allocation4], 0
    loop: start=0, step=1, limit=6
    $region2: #{attention_forward.4} parent=1 // loop_pre_header
      _
    $region3: #{attention_forward.4} parent=1 // loop_header
      %s10 = sphi 0, %s14
      %p11 = scmp.ge.s32.totalorder %s10, 6
      %s17 = sphi 0, %s29
      %s18 = sphi 0, %s25
      %s19 = sphi 0, %s17
      %s20 = sphi 0, %s18
      %s21 = sphi 0, %s19
      %s22 = sphi 0, %s20
      %s32 = sphi 0, %s34
      %s35 = sphi 0, %s32
      %s36 = sphi 0, %s35
      %s52 = sphi 0, %s36
      %s56 = sphi 0, %s56
      %s58 = sphi 0, %s56
      %s59 = sphi 0, %s58
      %s73 = sphi 0, %s59
      %s77 = sphi 0, %s77
      %s79 = sphi 0, %s77
      %s80 = sphi 0, %s79
      %s94 = sphi 0, %s80
      %s102 = sphi 0, %s104
      %s105 = sphi 0, %s102
      %s106 = sphi 0, %s105
      %s122 = sphi 0, %s106
    $region4: #{attention_forward.4} parent=1 // loop_header_branch
      %13 = sbr.rel (%p11) target = $region8
    $region5: #{attention_forward.4} parent=1 // loop_body
      %s15 = ssub.s32 %s10, 1
      %s16 = ssub.s32 %s10, 2
      %s23 = sadd.s32 1, %s18
      %p24 = scmp.ge.s32.totalorder %s23, 2
      %s25 = scalar_select %p24, 0, %s23
      %s26 = sadd.s32 1, %s17
      %s27 = scalar_select %p24, %s26, %s17
      %p28 = scmp.ge.s32.totalorder %s27, 2
      %s29 = scalar_select %p28, 0, %s27
      %s30 = ssub.s32 %s17, %s29
      %p31 = scmp.eq.s32.totalorder %s30, 0
      %s33 = sadd.s32 %s32, 1
      %s34 = scalar_select %p31, %s32, %s33
      %p37 = pneg %p31
      %p38 = scmp.eq.s32.totalorder %s10, 3
      %p39 = por %p37, %p38
      %p40 = scmp.ne.s32.totalorder %s32, %s35
      %p41 = scmp.eq.s32.totalorder %s10, 0
      %p42 = por %p40, %p41
      %p43 = scmp.ne.s32.totalorder %s32, %s35
      %p44 = scmp.eq.s32.totalorder %s15, 3
      %p45 = por %p43, %p44
      %p46 = scmp.ne.s32.totalorder %s35, %s36
      %p47 = scmp.eq.s32.totalorder %s15, 0
      %p48 = por %p46, %p47
      %p49 = scmp.ne.s32.totalorder %s35, %s36
      %p50 = scmp.eq.s32.totalorder %s16, 3
      %p51 = por %p49, %p50
      %p53 = scmp.ne.s32.totalorder %s36, %s52
      %p54 = scmp.eq.s32.totalorder %s16, 0
      %p55 = por %p53, %p54
      %s57 = sadd.s32 %s56, 1
      %p60 = scmp.eq.s32.totalorder %s10, 3
      %p61 = scmp.ne.s32.totalorder %s56, %s58
      %p62 = scmp.eq.s32.totalorder %s10, 0
      %p63 = por %p61, %p62
      %p64 = scmp.ne.s32.totalorder %s56, %s58
      %p65 = scmp.eq.s32.totalorder %s15, 3
      %p66 = por %p64, %p65
      %p67 = scmp.ne.s32.totalorder %s58, %s59
      %p68 = scmp.eq.s32.totalorder %s15, 0
      %p69 = por %p67, %p68
      %p70 = scmp.ne.s32.totalorder %s58, %s59
      %p71 = scmp.eq.s32.totalorder %s16, 3
      %p72 = por %p70, %p71
      %p74 = scmp.ne.s32.totalorder %s59, %s73
      %p75 = scmp.eq.s32.totalorder %s16, 0
      %p76 = por %p74, %p75
      %s78 = sadd.s32 %s77, 1
      %p81 = scmp.eq.s32.totalorder %s10, 3
      %p82 = scmp.ne.s32.totalorder %s77, %s79
      %p83 = scmp.eq.s32.totalorder %s10, 0
      %p84 = por %p82, %p83
      %p85 = scmp.ne.s32.totalorder %s77, %s79
      %p86 = scmp.eq.s32.totalorder %s15, 3
      %p87 = por %p85, %p86
      %p88 = scmp.ne.s32.totalorder %s79, %s80
      %p89 = scmp.eq.s32.totalorder %s15, 0
      %p90 = por %p88, %p89
      %p91 = scmp.ne.s32.totalorder %s79, %s80
      %p92 = scmp.eq.s32.totalorder %s16, 3
      %p93 = por %p91, %p92
      %p95 = scmp.ne.s32.totalorder %s80, %s94
      %p96 = scmp.eq.s32.totalorder %s16, 0
      %p97 = por %p95, %p96
      %s98 = ssub.s32 %s17, %s29
      %s99 = ssub.s32 %s18, %s25
      %s100 = sor.u32 %s98, %s99
      %p101 = scmp.eq.s32.totalorder %s100, 0
      %s103 = sadd.s32 %s102, 1
      %s104 = scalar_select %p101, %s102, %s103
      %p107 = pneg %p101
      %p108 = scmp.eq.s32.totalorder %s10, 3
      %p109 = por %p107, %p108
      %p110 = scmp.ne.s32.totalorder %s102, %s105
      %p111 = scmp.eq.s32.totalorder %s10, 0
      %p112 = por %p110, %p111
      %p113 = scmp.ne.s32.totalorder %s102, %s105
      %p114 = scmp.eq.s32.totalorder %s15, 3
      %p115 = por %p113, %p114
      %p116 = scmp.ne.s32.totalorder %s105, %s106
      %p117 = scmp.eq.s32.totalorder %s15, 0
      %p118 = por %p116, %p117
      %p119 = scmp.ne.s32.totalorder %s105, %s106
      %p120 = scmp.eq.s32.totalorder %s16, 3
      %p121 = por %p119, %p120
      %p123 = scmp.ne.s32.totalorder %s106, %s122
      %p124 = scmp.eq.s32.totalorder %s16, 0
      %p125 = por %p123, %p124
      %p126 = scmp.le.s32.totalorder 1, %s10
      %p127 = scmp.lt.s32.totalorder %s10, 5
      %p128 = pnand %p126, %p127
      %p129 = pneg %p128
      // Predicated region
      $region9: #{attention_forward.4} parent=5 // pred_check
        _
      $region10: #{attention_forward.4} parent=5 // pred_check_branch
        %131 = sbr.rel (%p128) target = $region12
      $region11: #{attention_forward.4} parent=5 // pred_region
        %s132 = ssub.s32 %s10, 1
        // Predicated region
        $region13: #{attention_forward.4} parent=11 // pred_check
          %p133 = pneg %p69
        $region14: #{attention_forward.4} parent=11 // pred_check_branch
          %135 = sbr.rel (%p133) target = $region16
        $region15: #{attention_forward.4} parent=11 // pred_region
          _
        $region16: #{attention_forward.4} parent=11 // pred_fallthru
          _
        // Predicated region
        $region17: #{attention_forward.4} parent=11 // pred_check
          %p136 = pneg %p90
        $region18: #{attention_forward.4} parent=11 // pred_check_branch
          %138 = sbr.rel (%p136) target = $region20
        $region19: #{attention_forward.4} parent=11 // pred_region
          %140 = vsyncadd [#allocation4], 0
          %s142 = sshll.u32 %s2, 4
          %s143 = int_to_ptr.vmem [resolvable:$true] %s142
          %145 = dma.vmem_to_smem %s143, 16, [#allocation3], [#allocation4]
        $region20: #{attention_forward.4} parent=11 // pred_fallthru
          _
      $region12: #{attention_forward.4} parent=5 // pred_fallthru
        _
      %p146 = scmp.lt.s32.totalorder %s10, 4
      // Predicated region
      $region21: #{attention_forward.4} parent=5 // pred_check
        %p147 = pneg %p146
      $region22: #{attention_forward.4} parent=5 // pred_check_branch
        %149 = sbr.rel (%p147) target = $region24
      $region23: #{attention_forward.4} parent=5 // pred_region
        // Predicated region
        $region25: #{attention_forward.4} parent=23 // pred_check
          %p150 = pneg %p42
        $region26: #{attention_forward.4} parent=23 // pred_check_branch
          %152 = sbr.rel (%p150) target = $region28
        $region27: #{attention_forward.4} parent=23 // pred_region
          %p153 = scmp.lt.s32.totalorder %s17, 1
          %s154 = scalar_select %p153, %s17, 1
          %s155 = smul.addr %s154, 64
          %s156 = smul.addr %s155, 8
          %s157 = scalar_lea.vmem %s0, %s156
        $region28: #{attention_forward.4} parent=23 // pred_fallthru
          _
      $region24: #{attention_forward.4} parent=5 // pred_fallthru
        _
      %p158 = scmp.le.s32.totalorder 1, %s10
      %p159 = scmp.lt.s32.totalorder %s10, 5
      %p160 = pnand %p158, %p159
      %p161 = pneg %p160
      // Predicated region
      $region29: #{attention_forward.4} parent=5 // pred_check
        _
      $region30: #{attention_forward.4} parent=5 // pred_check_branch
        %163 = sbr.rel (%p160) target = $region32
      $region31: #{attention_forward.4} parent=5 // pred_region
        %s164 = ssub.s32 %s10, 1
        // Predicated region
        $region33: #{attention_forward.4} parent=31 // pred_check
          %p165 = pneg %p90
        $region34: #{attention_forward.4} parent=31 // pred_check_branch
          %167 = sbr.rel (%p165) target = $region36
        $region35: #{attention_forward.4} parent=31 // pred_region
          %169 = dma.done [#allocation4], 16
        $region36: #{attention_forward.4} parent=31 // pred_fallthru
          _
        %170 = sfence
        %p171 = scmp.lt.s32.totalorder %s19, 1
        %s172 = scalar_select %p171, %s19, 1
        %s173 = smul.addr %s172, 64
        %s174 = smul.addr %s173, 8
        %s175 = scalar_lea.vmem %s0, %s174
        %p176 = pneg %p48
        %p177 = pneg %p45
        %p178 = pneg %p69
        %p179 = pneg %p66
        %p180 = pneg %p90
        %p181 = pneg %p87
        %p182 = pneg %p118
        %p183 = pneg %p115
        %s184 = smul.u32 16, %s20
        %p185 = scmp.lt.s32.totalorder %s19, 1
        %s186 = scalar_select %p185, %s19, 1
        %p187 = scmp.lt.s32.totalorder %s184, 31
        %s188 = scalar_select %p187, %s184, 31
        %s189 = smul.addr %s186, 32
        %s190 = sadd.s32 %s188, %s189
        %s191 = smul.addr %s190, 8
        %s192 = scalar_lea.vmem %s3, %s191
        %p193 = scmp.lt.s32.totalorder %s19, 1
        %s194 = scalar_select %p193, %s19, 1
        %s195 = smul.addr %s194, 64
        %s196 = smul.addr %s195, 8
        %s197 = scalar_lea.vmem %s0, %s196
        %s198 = smul.u32 16, %s20
        %p199 = scmp.lt.s32.totalorder %s19, 1
        %s200 = scalar_select %p199, %s19, 1
        %p201 = scmp.lt.s32.totalorder %s198, 31
        %s202 = scalar_select %p201, %s198, 31
        %s203 = smul.addr %s200, 32
        %s204 = sadd.s32 %s202, %s203
        %s205 = smul.addr %s204, 8
        %s206 = scalar_lea.vmem %s3, %s205
        %s207 = smul.u32 16, %s20
        %s208 = smul.u32 %s20, 8
        %vm209 = vcmask 359424
        %210 = vst.msk [vmem:[#allocation2] sm:$0xff] %vm209, 0.0
        %211 = vst.msk [vmem:[#allocation2 + $0x8] sm:$0xff] %vm209, 0.0
        %vm212 = vcmask 357376
        %213 = vst.msk [vmem:[#allocation2 + $0x10] sm:$0x3f] %vm212, 0.0
        %214 = vst.msk [vmem:[#allocation2 + $0x18] sm:$0xff] %vm209, 0.0
        %215 = vst.msk [vmem:[#allocation2 + $0x20] sm:$0xff] %vm209, 0.0
        %216 = vst.msk [vmem:[#allocation2 + $0x28] sm:$0x3f] %vm212, 0.0
        %217 = vst.msk [vmem:[#allocation2 + $0x30] sm:$0xff] %vm209, 0.0
        %218 = vst.msk [vmem:[#allocation2 + $0x38] sm:$0xff] %vm209, 0.0
        %219 = vst.msk [vmem:[#allocation2 + $0x40] sm:$0x3f] %vm212, 0.0
        %220 = vst.msk [vmem:[#allocation2 + $0x48] sm:$0xff] %vm209, 0.0
        %221 = vst.msk [vmem:[#allocation2 + $0x50] sm:$0xff] %vm209, 0.0
        %222 = vst.msk [vmem:[#allocation2 + $0x58] sm:$0x3f] %vm212, 0.0
        %223 = vst.msk [vmem:[#allocation2 + $0x60] sm:$0xff] %vm209, 0.0
        %224 = vst.msk [vmem:[#allocation2 + $0x68] sm:$0xff] %vm209, 0.0
        %225 = vst.msk [vmem:[#allocation2 + $0x70] sm:$0x3f] %vm212, 0.0
        %226 = vst.msk [vmem:[#allocation2 + $0x78] sm:$0xff] %vm209, 0.0
        %227 = vst.msk [vmem:[#allocation2 + $0x80] sm:$0xff] %vm209, 0.0
        %228 = vst.msk [vmem:[#allocation2 + $0x88] sm:$0x3f] %vm212, 0.0
        %229 = vst.msk [vmem:[#allocation2 + $0x90] sm:$0xff] %vm209, 0.0
        %230 = vst.msk [vmem:[#allocation2 + $0x98] sm:$0xff] %vm209, 0.0
        %231 = vst.msk [vmem:[#allocation2 + $0xa0] sm:$0x3f] %vm212, 0.0
        %232 = vst.msk [vmem:[#allocation2 + $0xa8] sm:$0xff] %vm209, 0.0
        %233 = vst.msk [vmem:[#allocation2 + $0xb0] sm:$0xff] %vm209, 0.0
        %234 = vst.msk [vmem:[#allocation2 + $0xb8] sm:$0x3f] %vm212, 0.0
        %235 = vst.msk [vmem:[#allocation2 + $0xc0] sm:$0xff] %vm209, 0.0
        %236 = vst.msk [vmem:[#allocation2 + $0xc8] sm:$0xff] %vm209, 0.0
        %237 = vst.msk [vmem:[#allocation2 + $0xd0] sm:$0x3f] %vm212, 0.0
        %238 = vst.msk [vmem:[#allocation2 + $0xd8] sm:$0xff] %vm209, 0.0
        %239 = vst.msk [vmem:[#allocation2 + $0xe0] sm:$0xff] %vm209, 0.0
        %240 = vst.msk [vmem:[#allocation2 + $0xe8] sm:$0x3f] %vm212, 0.0
        %241 = vst.msk [vmem:[#allocation2 + $0xf0] sm:$0xff] %vm209, 0.0
        %242 = vst.msk [vmem:[#allocation2 + $0xf8] sm:$0xff] %vm209, 0.0
        %243 = vst.msk [vmem:[#allocation2 + $0x100] sm:$0x3f] %vm212, 0.0
        %244 = vst.msk [vmem:[#allocation2 + $0x108] sm:$0xff] %vm209, 0.0
        %245 = vst.msk [vmem:[#allocation2 + $0x110] sm:$0xff] %vm209, 0.0
        %246 = vst.msk [vmem:[#allocation2 + $0x118] sm:$0x3f] %vm212, 0.0
        %247 = vst.msk [vmem:[#allocation2 + $0x120] sm:$0xff] %vm209, 0.0
        %248 = vst.msk [vmem:[#allocation2 + $0x128] sm:$0xff] %vm209, 0.0
        %249 = vst.msk [vmem:[#allocation2 + $0x130] sm:$0x3f] %vm212, 0.0
        %250 = vst.msk [vmem:[#allocation2 + $0x138] sm:$0xff] %vm209, 0.0
        %251 = vst.msk [vmem:[#allocation2 + $0x140] sm:$0xff] %vm209, 0.0
        %252 = vst.msk [vmem:[#allocation2 + $0x148] sm:$0x3f] %vm212, 0.0
        %253 = vst.msk [vmem:[#allocation2 + $0x150] sm:$0xff] %vm209, 0.0
        %254 = vst.msk [vmem:[#allocation2 + $0x158] sm:$0xff] %vm209, 0.0
        %255 = vst.msk [vmem:[#allocation2 + $0x160] sm:$0x3f] %vm212, 0.0
        %256 = vst.msk [vmem:[#allocation2 + $0x168] sm:$0xff] %vm209, 0.0
        %257 = vst.msk [vmem:[#allocation2 + $0x170] sm:$0xff] %vm209, 0.0
        %258 = vst.msk [vmem:[#allocation2 + $0x178] sm:$0x3f] %vm212, 0.0
        %259 = vst.msk [vmem:[#allocation2 + $0x180] sm:$0xff] %vm209, 0.0
        %260 = vst.msk [vmem:[#allocation2 + $0x188] sm:$0xff] %vm209, 0.0
        %261 = vst.msk [vmem:[#allocation2 + $0x190] sm:$0x3f] %vm212, 0.0
        %262 = vst.msk [vmem:[#allocation2 + $0x198] sm:$0xff] %vm209, 0.0
        %263 = vst.msk [vmem:[#allocation2 + $0x1a0] sm:$0xff] %vm209, 0.0
        %264 = vst.msk [vmem:[#allocation2 + $0x1a8] sm:$0x3f] %vm212, 0.0
        %265 = vst.msk [vmem:[#allocation2 + $0x1b0] sm:$0xff] %vm209, 0.0
        %266 = vst.msk [vmem:[#allocation2 + $0x1b8] sm:$0xff] %vm209, 0.0
        %267 = vst.msk [vmem:[#allocation2 + $0x1c0] sm:$0x3f] %vm212, 0.0
        %268 = vst.msk [vmem:[#allocation2 + $0x1c8] sm:$0xff] %vm209, 0.0
        %269 = vst.msk [vmem:[#allocation2 + $0x1d0] sm:$0xff] %vm209, 0.0
        %270 = vst.msk [vmem:[#allocation2 + $0x1d8] sm:$0x3f] %vm212, 0.0
        %271 = vst.msk [vmem:[#allocation2 + $0x1e0] sm:$0xff] %vm209, 0.0
        %272 = vst.msk [vmem:[#allocation2 + $0x1e8] sm:$0xff] %vm209, 0.0
        %273 = vst.msk [vmem:[#allocation2 + $0x1f0] sm:$0x3f] %vm212, 0.0
        %274 = vst.msk [vmem:[#allocation2 + $0x1f8] sm:$0xff] %vm209, 0.0
        %275 = vst.msk [vmem:[#allocation2 + $0x200] sm:$0xff] %vm209, 0.0
        %276 = vst.msk [vmem:[#allocation2 + $0x208] sm:$0x3f] %vm212, 0.0
        %v277 = vld [vmem:[%s197] sm:$0xff]
        %v278 = vld [vmem:[%s197 + $0x8] sm:$0xff]
        %v279 = vld [vmem:[%s197 + $0x10] sm:$0xff]
        %v280 = vld [vmem:[%s197 + $0x18] sm:$0xff]
        %v281 = vld [vmem:[%s197 + $0x20] sm:$0xff]
        %v282 = vld [vmem:[%s197 + $0x28] sm:$0xff]
        %v283 = vld [vmem:[%s197 + $0x30] sm:$0xff]
        %v284 = vld [vmem:[%s197 + $0x38] sm:$0xff]
        %v285 = vld [vmem:[%s197 + $0x40] sm:$0xff]
        %v286 = vld [vmem:[%s197 + $0x48] sm:$0xff]
        %v287 = vld [vmem:[%s197 + $0x50] sm:$0xff]
        %v288 = vld [vmem:[%s197 + $0x58] sm:$0xff]
        %v289 = vld [vmem:[%s197 + $0x60] sm:$0xff]
        %v290 = vld [vmem:[%s197 + $0x68] sm:$0xff]
        %v291 = vld [vmem:[%s197 + $0x70] sm:$0xff]
        %v292 = vld [vmem:[%s197 + $0x78] sm:$0xff]
        %v293 = vld [vmem:[%s197 + $0x80] sm:$0xff]
        %v294 = vld [vmem:[%s197 + $0x88] sm:$0xff]
        %v295 = vld [vmem:[%s197 + $0x90] sm:$0xff]
        %v296 = vld [vmem:[%s197 + $0x98] sm:$0xff]
        %v297 = vld [vmem:[%s197 + $0xa0] sm:$0xff]
        %v298 = vld [vmem:[%s197 + $0xa8] sm:$0xff]
        %v299 = vld [vmem:[%s197 + $0xb0] sm:$0xff]
        %v300 = vld [vmem:[%s197 + $0xb8] sm:$0xff]
        %v301 = vld [vmem:[%s197 + $0xc0] sm:$0xff]
        %v302 = vld [vmem:[%s197 + $0xc8] sm:$0xff]
        %v303 = vld [vmem:[%s197 + $0xd0] sm:$0xff]
        %v304 = vld [vmem:[%s197 + $0xd8] sm:$0xff]
        %v305 = vld [vmem:[%s197 + $0xe0] sm:$0xff]
        %v306 = vld [vmem:[%s197 + $0xe8] sm:$0xff]
        %v307 = vld [vmem:[%s197 + $0xf0] sm:$0xff]
        %v308 = vld [vmem:[%s197 + $0xf8] sm:$0xff]
        %341 = vrot.lane.b32.xlu0 %v277, 3
        %v342 = vpop.permute.xlu0 %341
        %343 = vrot.lane.b32.xlu0 %v278, 3
        %v344 = vpop.permute.xlu0 %343
        %345 = vrot.lane.b32.xlu0 %v279, 3
        %v346 = vpop.permute.xlu0 %345
        %347 = vrot.lane.b32.xlu0 %v280, 3
        %v348 = vpop.permute.xlu0 %347
        %349 = vrot.lane.b32.xlu0 %v281, 3
        %v350 = vpop.permute.xlu0 %349
        %351 = vrot.lane.b32.xlu0 %v282, 3
        %v352 = vpop.permute.xlu0 %351
        %353 = vrot.lane.b32.xlu0 %v283, 3
        %v354 = vpop.permute.xlu0 %353
        %355 = vrot.lane.b32.xlu0 %v284, 3
        %v356 = vpop.permute.xlu0 %355
        %357 = vrot.lane.b32.xlu0 %v285, 3
        %v358 = vpop.permute.xlu0 %357
        %359 = vrot.lane.b32.xlu0 %v286, 3
        %v360 = vpop.permute.xlu0 %359
        %361 = vrot.lane.b32.xlu0 %v287, 3
        %v362 = vpop.permute.xlu0 %361
        %363 = vrot.lane.b32.xlu0 %v288, 3
        %v364 = vpop.permute.xlu0 %363
        %365 = vrot.lane.b32.xlu0 %v289, 3
        %v366 = vpop.permute.xlu0 %365
        %367 = vrot.lane.b32.xlu0 %v290, 3
        %v368 = vpop.permute.xlu0 %367
        %369 = vrot.lane.b32.xlu0 %v291, 3
        %v370 = vpop.permute.xlu0 %369
        %371 = vrot.lane.b32.xlu0 %v292, 3
        %v372 = vpop.permute.xlu0 %371
        %373 = vrot.lane.b32.xlu0 %v293, 3
        %v374 = vpop.permute.xlu0 %373
        %375 = vrot.lane.b32.xlu0 %v294, 3
        %v376 = vpop.permute.xlu0 %375
        %377 = vrot.lane.b32.xlu0 %v295, 3
        %v378 = vpop.permute.xlu0 %377
        %379 = vrot.lane.b32.xlu0 %v296, 3
        %v380 = vpop.permute.xlu0 %379
        %381 = vrot.lane.b32.xlu0 %v297, 3
        %v382 = vpop.permute.xlu0 %381
        %383 = vrot.lane.b32.xlu0 %v298, 3
        %v384 = vpop.permute.xlu0 %383
        %385 = vrot.lane.b32.xlu0 %v299, 3
        %v386 = vpop.permute.xlu0 %385
        %387 = vrot.lane.b32.xlu0 %v300, 3
        %v388 = vpop.permute.xlu0 %387
        %389 = vrot.lane.b32.xlu0 %v301, 3
        %v390 = vpop.permute.xlu0 %389
        %391 = vrot.lane.b32.xlu0 %v302, 3
        %v392 = vpop.permute.xlu0 %391
        %393 = vrot.lane.b32.xlu0 %v303, 3
        %v394 = vpop.permute.xlu0 %393
        %395 = vrot.lane.b32.xlu0 %v304, 3
        %v396 = vpop.permute.xlu0 %395
        %397 = vrot.lane.b32.xlu0 %v305, 3
        %v398 = vpop.permute.xlu0 %397
        %399 = vrot.lane.b32.xlu0 %v306, 3
        %v400 = vpop.permute.xlu0 %399
        %401 = vrot.lane.b32.xlu0 %v307, 3
        %v402 = vpop.permute.xlu0 %401
        %403 = vrot.lane.b32.xlu0 %v308, 3
        %v404 = vpop.permute.xlu0 %403
        %s437 = scalar_lea.vmem [#allocation2], 72
        %vm438 = vcmask 154648
        %439 = vst.msk [vmem:[%s437 + $0x3] sm:$0xff] %vm438, %v342
        %440 = vst.msk [vmem:[%s437 + $0xb] sm:$0xff] %vm438, %v344
        %441 = vst.msk [vmem:[%s437 + $0x1b] sm:$0xff] %vm438, %v346
        %442 = vst.msk [vmem:[%s437 + $0x23] sm:$0xff] %vm438, %v348
        %443 = vst.msk [vmem:[%s437 + $0x33] sm:$0xff] %vm438, %v350
        %444 = vst.msk [vmem:[%s437 + $0x3b] sm:$0xff] %vm438, %v352
        %445 = vst.msk [vmem:[%s437 + $0x4b] sm:$0xff] %vm438, %v354
        %446 = vst.msk [vmem:[%s437 + $0x53] sm:$0xff] %vm438, %v356
        %447 = vst.msk [vmem:[%s437 + $0x63] sm:$0xff] %vm438, %v358
        %448 = vst.msk [vmem:[%s437 + $0x6b] sm:$0xff] %vm438, %v360
        %449 = vst.msk [vmem:[%s437 + $0x7b] sm:$0xff] %vm438, %v362
        %450 = vst.msk [vmem:[%s437 + $0x83] sm:$0xff] %vm438, %v364
        %451 = vst.msk [vmem:[%s437 + $0x93] sm:$0xff] %vm438, %v366
        %452 = vst.msk [vmem:[%s437 + $0x9b] sm:$0xff] %vm438, %v368
        %453 = vst.msk [vmem:[%s437 + $0xab] sm:$0xff] %vm438, %v370
        %454 = vst.msk [vmem:[%s437 + $0xb3] sm:$0xff] %vm438, %v372
        %455 = vst.msk [vmem:[%s437 + $0xc3] sm:$0xff] %vm438, %v374
        %456 = vst.msk [vmem:[%s437 + $0xcb] sm:$0xff] %vm438, %v376
        %457 = vst.msk [vmem:[%s437 + $0xdb] sm:$0xff] %vm438, %v378
        %458 = vst.msk [vmem:[%s437 + $0xe3] sm:$0xff] %vm438, %v380
        %459 = vst.msk [vmem:[%s437 + $0xf3] sm:$0xff] %vm438, %v382
        %460 = vst.msk [vmem:[%s437 + $0xfb] sm:$0xff] %vm438, %v384
        %461 = vst.msk [vmem:[%s437 + $0x10b] sm:$0xff] %vm438, %v386
        %462 = vst.msk [vmem:[%s437 + $0x113] sm:$0xff] %vm438, %v388
        %463 = vst.msk [vmem:[%s437 + $0x123] sm:$0xff] %vm438, %v390
        %464 = vst.msk [vmem:[%s437 + $0x12b] sm:$0xff] %vm438, %v392
        %465 = vst.msk [vmem:[%s437 + $0x13b] sm:$0xff] %vm438, %v394
        %466 = vst.msk [vmem:[%s437 + $0x143] sm:$0xff] %vm438, %v396
        %467 = vst.msk [vmem:[%s437 + $0x153] sm:$0xff] %vm438, %v398
        %468 = vst.msk [vmem:[%s437 + $0x15b] sm:$0xff] %vm438, %v400
        %469 = vst.msk [vmem:[%s437 + $0x16b] sm:$0xff] %vm438, %v402
        %470 = vst.msk [vmem:[%s437 + $0x173] sm:$0xff] %vm438, %v404
        %s471 = scalar_lea.vmem %s197, 256
        %v472 = vld [vmem:[%s471] sm:$0xff]
        %v473 = vld [vmem:[%s471 + $0x8] sm:$0xff]
        %v474 = vld [vmem:[%s471 + $0x10] sm:$0xff]
        %v475 = vld [vmem:[%s471 + $0x18] sm:$0xff]
        %v476 = vld [vmem:[%s471 + $0x20] sm:$0xff]
        %v477 = vld [vmem:[%s471 + $0x28] sm:$0xff]
        %v478 = vld [vmem:[%s471 + $0x30] sm:$0xff]
        %v479 = vld [vmem:[%s471 + $0x38] sm:$0xff]
        %v480 = vld [vmem:[%s471 + $0x40] sm:$0xff]
        %v481 = vld [vmem:[%s471 + $0x48] sm:$0xff]
        %v482 = vld [vmem:[%s471 + $0x50] sm:$0xff]
        %v483 = vld [vmem:[%s471 + $0x58] sm:$0xff]
        %v484 = vld [vmem:[%s471 + $0x60] sm:$0xff]
        %v485 = vld [vmem:[%s471 + $0x68] sm:$0xff]
        %v486 = vld [vmem:[%s471 + $0x70] sm:$0xff]
        %v487 = vld [vmem:[%s471 + $0x78] sm:$0xff]
        %v488 = vld [vmem:[%s471 + $0x80] sm:$0xff]
        %v489 = vld [vmem:[%s471 + $0x88] sm:$0xff]
        %v490 = vld [vmem:[%s471 + $0x90] sm:$0xff]
        %v491 = vld [vmem:[%s471 + $0x98] sm:$0xff]
        %v492 = vld [vmem:[%s471 + $0xa0] sm:$0xff]
        %v493 = vld [vmem:[%s471 + $0xa8] sm:$0xff]
        %v494 = vld [vmem:[%s471 + $0xb0] sm:$0xff]
        %v495 = vld [vmem:[%s471 + $0xb8] sm:$0xff]
        %v496 = vld [vmem:[%s471 + $0xc0] sm:$0xff]
        %v497 = vld [vmem:[%s471 + $0xc8] sm:$0xff]
        %v498 = vld [vmem:[%s471 + $0xd0] sm:$0xff]
        %v499 = vld [vmem:[%s471 + $0xd8] sm:$0xff]
        %v500 = vld [vmem:[%s471 + $0xe0] sm:$0xff]
        %v501 = vld [vmem:[%s471 + $0xe8] sm:$0xff]
        %v502 = vld [vmem:[%s471 + $0xf0] sm:$0xff]
        %v503 = vld [vmem:[%s471 + $0xf8] sm:$0xff]
        %536 = vrot.lane.b32.xlu0 %v472, 25
        %v537 = vpop.permute.xlu0 %536
        %538 = vrot.lane.b32.xlu0 %v473, 25
        %v539 = vpop.permute.xlu0 %538
        %540 = vrot.lane.b32.xlu0 %v474, 25
        %v541 = vpop.permute.xlu0 %540
        %542 = vrot.lane.b32.xlu0 %v475, 25
        %v543 = vpop.permute.xlu0 %542
        %544 = vrot.lane.b32.xlu0 %v476, 25
        %v545 = vpop.permute.xlu0 %544
        %546 = vrot.lane.b32.xlu0 %v477, 25
        %v547 = vpop.permute.xlu0 %546
        %548 = vrot.lane.b32.xlu0 %v478, 25
        %v549 = vpop.permute.xlu0 %548
        %550 = vrot.lane.b32.xlu0 %v479, 25
        %v551 = vpop.permute.xlu0 %550
        %552 = vrot.lane.b32.xlu0 %v480, 25
        %v553 = vpop.permute.xlu0 %552
        %554 = vrot.lane.b32.xlu0 %v481, 25
        %v555 = vpop.permute.xlu0 %554
        %556 = vrot.lane.b32.xlu0 %v482, 25
        %v557 = vpop.permute.xlu0 %556
        %558 = vrot.lane.b32.xlu0 %v483, 25
        %v559 = vpop.permute.xlu0 %558
        %560 = vrot.lane.b32.xlu0 %v484, 25
        %v561 = vpop.permute.xlu0 %560
        %562 = vrot.lane.b32.xlu0 %v485, 25
        %v563 = vpop.permute.xlu0 %562
        %564 = vrot.lane.b32.xlu0 %v486, 25
        %v565 = vpop.permute.xlu0 %564
        %566 = vrot.lane.b32.xlu0 %v487, 25
        %v567 = vpop.permute.xlu0 %566
        %568 = vrot.lane.b32.xlu0 %v488, 25
        %v569 = vpop.permute.xlu0 %568
        %570 = vrot.lane.b32.xlu0 %v489, 25
        %v571 = vpop.permute.xlu0 %570
        %572 = vrot.lane.b32.xlu0 %v490, 25
        %v573 = vpop.permute.xlu0 %572
        %574 = vrot.lane.b32.xlu0 %v491, 25
        %v575 = vpop.permute.xlu0 %574
        %576 = vrot.lane.b32.xlu0 %v492, 25
        %v577 = vpop.permute.xlu0 %576
        %578 = vrot.lane.b32.xlu0 %v493, 25
        %v579 = vpop.permute.xlu0 %578
        %580 = vrot.lane.b32.xlu0 %v494, 25
        %v581 = vpop.permute.xlu0 %580
        %582 = vrot.lane.b32.xlu0 %v495, 25
        %v583 = vpop.permute.xlu0 %582
        %584 = vrot.lane.b32.xlu0 %v496, 25
        %v585 = vpop.permute.xlu0 %584
        %586 = vrot.lane.b32.xlu0 %v497, 25
        %v587 = vpop.permute.xlu0 %586
        %588 = vrot.lane.b32.xlu0 %v498, 25
        %v589 = vpop.permute.xlu0 %588
        %590 = vrot.lane.b32.xlu0 %v499, 25
        %v591 = vpop.permute.xlu0 %590
        %592 = vrot.lane.b32.xlu0 %v500, 25
        %v593 = vpop.permute.xlu0 %592
        %594 = vrot.lane.b32.xlu0 %v501, 25
        %v595 = vpop.permute.xlu0 %594
        %596 = vrot.lane.b32.xlu0 %v502, 25
        %v597 = vpop.permute.xlu0 %596
        %598 = vrot.lane.b32.xlu0 %v503, 25
        %v599 = vpop.permute.xlu0 %598
        %vm632 = vcmask 335048
        %633 = vst.msk [vmem:[%s437 + $0x3] sm:$0xff] %vm632, %v537
        %634 = vst.msk [vmem:[%s437 + $0xb] sm:$0xff] %vm632, %v539
        %635 = vst.msk [vmem:[%s437 + $0x1b] sm:$0xff] %vm632, %v541
        %636 = vst.msk [vmem:[%s437 + $0x23] sm:$0xff] %vm632, %v543
        %637 = vst.msk [vmem:[%s437 + $0x33] sm:$0xff] %vm632, %v545
        %638 = vst.msk [vmem:[%s437 + $0x3b] sm:$0xff] %vm632, %v547
        %639 = vst.msk [vmem:[%s437 + $0x4b] sm:$0xff] %vm632, %v549
        %640 = vst.msk [vmem:[%s437 + $0x53] sm:$0xff] %vm632, %v551
        %641 = vst.msk [vmem:[%s437 + $0x63] sm:$0xff] %vm632, %v553
        %642 = vst.msk [vmem:[%s437 + $0x6b] sm:$0xff] %vm632, %v555
        %643 = vst.msk [vmem:[%s437 + $0x7b] sm:$0xff] %vm632, %v557
        %644 = vst.msk [vmem:[%s437 + $0x83] sm:$0xff] %vm632, %v559
        %645 = vst.msk [vmem:[%s437 + $0x93] sm:$0xff] %vm632, %v561
        %646 = vst.msk [vmem:[%s437 + $0x9b] sm:$0xff] %vm632, %v563
        %647 = vst.msk [vmem:[%s437 + $0xab] sm:$0xff] %vm632, %v565
        %648 = vst.msk [vmem:[%s437 + $0xb3] sm:$0xff] %vm632, %v567
        %649 = vst.msk [vmem:[%s437 + $0xc3] sm:$0xff] %vm632, %v569
        %650 = vst.msk [vmem:[%s437 + $0xcb] sm:$0xff] %vm632, %v571
        %651 = vst.msk [vmem:[%s437 + $0xdb] sm:$0xff] %vm632, %v573
        %652 = vst.msk [vmem:[%s437 + $0xe3] sm:$0xff] %vm632, %v575
        %653 = vst.msk [vmem:[%s437 + $0xf3] sm:$0xff] %vm632, %v577
        %654 = vst.msk [vmem:[%s437 + $0xfb] sm:$0xff] %vm632, %v579
        %655 = vst.msk [vmem:[%s437 + $0x10b] sm:$0xff] %vm632, %v581
        %656 = vst.msk [vmem:[%s437 + $0x113] sm:$0xff] %vm632, %v583
        %657 = vst.msk [vmem:[%s437 + $0x123] sm:$0xff] %vm632, %v585
        %658 = vst.msk [vmem:[%s437 + $0x12b] sm:$0xff] %vm632, %v587
        %659 = vst.msk [vmem:[%s437 + $0x13b] sm:$0xff] %vm632, %v589
        %660 = vst.msk [vmem:[%s437 + $0x143] sm:$0xff] %vm632, %v591
        %661 = vst.msk [vmem:[%s437 + $0x153] sm:$0xff] %vm632, %v593
        %662 = vst.msk [vmem:[%s437 + $0x15b] sm:$0xff] %vm632, %v595
        %663 = vst.msk [vmem:[%s437 + $0x16b] sm:$0xff] %vm632, %v597
        %664 = vst.msk [vmem:[%s437 + $0x173] sm:$0xff] %vm632, %v599
        %s665 = smul.u32 %s208, 24
        %s666 = scalar_lea.vmem [#allocation2], %s665
        %v667 = vld [vmem:[%s666] sm:$0xff]
        %v668 = vld [vmem:[%s666 + $0x8] sm:$0xff]
        %v669 = vld [vmem:[%s666 + $0x18] sm:$0xff]
        %v670 = vld [vmem:[%s666 + $0x20] sm:$0xff]
        %v671 = vld [vmem:[%s666 + $0x30] sm:$0xff]
        %v672 = vld [vmem:[%s666 + $0x38] sm:$0xff]
        %v673 = vld [vmem:[%s666 + $0x48] sm:$0xff]
        %v674 = vld [vmem:[%s666 + $0x50] sm:$0xff]
        %v675 = vld [vmem:[%s666 + $0x60] sm:$0xff]
        %v676 = vld [vmem:[%s666 + $0x68] sm:$0xff]
        %v677 = vld [vmem:[%s666 + $0x78] sm:$0xff]
        %v678 = vld [vmem:[%s666 + $0x80] sm:$0xff]
        %v679 = vld [vmem:[%s666 + $0x90] sm:$0xff]
        %v680 = vld [vmem:[%s666 + $0x98] sm:$0xff]
        %v681 = vld [vmem:[%s666 + $0xa8] sm:$0xff]
        %v682 = vld [vmem:[%s666 + $0xb0] sm:$0xff]
        %v683 = vld [vmem:[%s1] sm:$0xff]
        %v684 = vld [vmem:[%s1 + $0x8] sm:$0xff]
        %v685 = vld [vmem:[%s1 + $0x10] sm:$0xff]
        %v686 = vld [vmem:[%s1 + $0x18] sm:$0xff]
        %v687 = vld [vmem:[%s1 + $0x20] sm:$0xff]
        %v688 = vld [vmem:[%s1 + $0x28] sm:$0xf]
        %v689 = vld [vmem:[%s666 + $0x1] sm:$0xff]
        %v690 = vld [vmem:[%s666 + $0x9] sm:$0xff]
        %v691 = vld [vmem:[%s666 + $0x19] sm:$0xff]
        %v692 = vld [vmem:[%s666 + $0x21] sm:$0xff]
        %v693 = vld [vmem:[%s666 + $0x31] sm:$0xff]
        %v694 = vld [vmem:[%s666 + $0x39] sm:$0xff]
        %v695 = vld [vmem:[%s666 + $0x49] sm:$0xff]
        %v696 = vld [vmem:[%s666 + $0x51] sm:$0xff]
        %v697 = vld [vmem:[%s666 + $0x61] sm:$0xff]
        %v698 = vld [vmem:[%s666 + $0x69] sm:$0xff]
        %v699 = vld [vmem:[%s666 + $0x79] sm:$0xff]
        %v700 = vld [vmem:[%s666 + $0x81] sm:$0xff]
        %v701 = vld [vmem:[%s666 + $0x91] sm:$0xff]
        %v702 = vld [vmem:[%s666 + $0x99] sm:$0xff]
        %v703 = vld [vmem:[%s666 + $0xa9] sm:$0xff]
        %v704 = vld [vmem:[%s666 + $0xb1] sm:$0xff]
        %s705 = scalar_lea.vmem %s1, 48
        %v706 = vld [vmem:[%s705] sm:$0xff]
        %v707 = vld [vmem:[%s705 + $0x8] sm:$0xff]
        %v708 = vld [vmem:[%s705 + $0x10] sm:$0xff]
        %v709 = vld [vmem:[%s705 + $0x18] sm:$0xff]
        %v710 = vld [vmem:[%s705 + $0x20] sm:$0xff]
        %v711 = vld [vmem:[%s705 + $0x28] sm:$0xf]
        %v713 = vsel %vm209, %v689, 0
        %v716 = vsel %vm209, %v690, 0
        %v719 = vsel %vm209, %v691, 0
        %v722 = vsel %vm209, %v692, 0
        %v725 = vsel %vm209, %v693, 0
        %v728 = vsel %vm209, %v694, 0
        %v731 = vsel %vm209, %v695, 0
        %v734 = vsel %vm209, %v696, 0
        %v737 = vsel %vm209, %v697, 0
        %v740 = vsel %vm209, %v698, 0
        %v743 = vsel %vm209, %v699, 0
        %v746 = vsel %vm209, %v700, 0
        %v749 = vsel %vm209, %v701, 0
        %v752 = vsel %vm209, %v702, 0
        %v755 = vsel %vm209, %v703, 0
        %v758 = vsel %vm209, %v704, 0
        %vm760 = vcmask 1043456
        %v762 = vsel %vm760, %v711, 0
        %764 = vmatpush.msra.mxu0 0.0
        %765 = vmatpush.msra.mxu0 0.0
        %766 = vmatpush.msra.mxu0 0.0
        %767 = vmatpush.msra.mxu0 0.0
        %768 = vmatpush.msra.mxu0 0.0
        %769 = vmatpush.msra.mxu0 0.0
        %770 = vmatpush.msra.mxu0 0.0
        %771 = vmatpush.msra.mxu0 0.0
        %772 = vmatpush.msra.mxu0 0.0
        %773 = vmatpush.msra.mxu0 0.0
        %774 = vmatpush.msra.mxu0 %v762
        %775 = vmatpush.msra.mxu0 %v710
        %776 = vmatpush.msra.mxu0 %v709
        %777 = vmatpush.msra.mxu0 %v708
        %778 = vmatpush.msra.mxu0 %v707
        %779 = vmatpush.msra.mxu0 %v706
        %780 = vmatmul.f32.gmra.mxu0 %v713
        %v781 = vpop.f32.mrf.mxu0
        %v782 = vadd.f32 0.0, %v781
        %783 = vmatmul.f32.gmra.mxu0 %v716
        %v784 = vpop.f32.mrf.mxu0
        %v785 = vadd.f32 0.0, %v784
        %786 = vmatmul.f32.gmra.mxu0 %v719
        %v787 = vpop.f32.mrf.mxu0
        %v788 = vadd.f32 0.0, %v787
        %789 = vmatmul.f32.gmra.mxu0 %v722
        %v790 = vpop.f32.mrf.mxu0
        %v791 = vadd.f32 0.0, %v790
        %792 = vmatmul.f32.gmra.mxu0 %v725
        %v793 = vpop.f32.mrf.mxu0
        %v794 = vadd.f32 0.0, %v793
        %795 = vmatmul.f32.gmra.mxu0 %v728
        %v796 = vpop.f32.mrf.mxu0
        %v797 = vadd.f32 0.0, %v796
        %798 = vmatmul.f32.gmra.mxu0 %v731
        %v799 = vpop.f32.mrf.mxu0
        %v800 = vadd.f32 0.0, %v799
        %801 = vmatmul.f32.gmra.mxu0 %v734
        %v802 = vpop.f32.mrf.mxu0
        %v803 = vadd.f32 0.0, %v802
        %804 = vmatmul.f32.gmra.mxu0 %v737
        %v805 = vpop.f32.mrf.mxu0
        %v806 = vadd.f32 0.0, %v805
        %807 = vmatmul.f32.gmra.mxu0 %v740
        %v808 = vpop.f32.mrf.mxu0
        %v809 = vadd.f32 0.0, %v808
        %810 = vmatmul.f32.gmra.mxu0 %v743
        %v811 = vpop.f32.mrf.mxu0
        %v812 = vadd.f32 0.0, %v811
        %813 = vmatmul.f32.gmra.mxu0 %v746
        %v814 = vpop.f32.mrf.mxu0
        %v815 = vadd.f32 0.0, %v814
        %816 = vmatmul.f32.gmra.mxu0 %v749
        %v817 = vpop.f32.mrf.mxu0
        %v818 = vadd.f32 0.0, %v817
        %819 = vmatmul.f32.gmra.mxu0 %v752
        %v820 = vpop.f32.mrf.mxu0
        %v821 = vadd.f32 0.0, %v820
        %822 = vmatmul.f32.gmra.mxu0 %v755
        %v823 = vpop.f32.mrf.mxu0
        %v824 = vadd.f32 0.0, %v823
        %825 = vmatmul.f32.gmra.mxu0 %v758
        %v826 = vpop.f32.mrf.mxu0
        %v827 = vadd.f32 0.0, %v826
        %828 = vdwg.mxu0
        %v830 = vsel %vm209, %v667, 0
        %v833 = vsel %vm209, %v668, 0
        %v836 = vsel %vm209, %v669, 0
        %v839 = vsel %vm209, %v670, 0
        %v842 = vsel %vm209, %v671, 0
        %v845 = vsel %vm209, %v672, 0
        %v848 = vsel %vm209, %v673, 0
        %v851 = vsel %vm209, %v674, 0
        %v854 = vsel %vm209, %v675, 0
        %v857 = vsel %vm209, %v676, 0
        %v860 = vsel %vm209, %v677, 0
        %v863 = vsel %vm209, %v678, 0
        %v866 = vsel %vm209, %v679, 0
        %v869 = vsel %vm209, %v680, 0
        %v872 = vsel %vm209, %v681, 0
        %v875 = vsel %vm209, %v682, 0
        %v878 = vsel %vm760, %v688, 0
        %880 = vmatpush.msra.mxu0 0.0
        %881 = vmatpush.msra.mxu0 0.0
        %882 = vmatpush.msra.mxu0 0.0
        %883 = vmatpush.msra.mxu0 0.0
        %884 = vmatpush.msra.mxu0 0.0
        %885 = vmatpush.msra.mxu0 0.0
        %886 = vmatpush.msra.mxu0 0.0
        %887 = vmatpush.msra.mxu0 0.0
        %888 = vmatpush.msra.mxu0 0.0
        %889 = vmatpush.msra.mxu0 0.0
        %890 = vmatpush.msra.mxu0 %v878
        %891 = vmatpush.msra.mxu0 %v687
        %892 = vmatpush.msra.mxu0 %v686
        %893 = vmatpush.msra.mxu0 %v685
        %894 = vmatpush.msra.mxu0 %v684
        %895 = vmatpush.msra.mxu0 %v683
        %896 = vmatmul.f32.gmra.mxu0 %v830
        %v897 = vpop.f32.mrf.mxu0
        %v898 = vadd.f32 %v782, %v897
        %899 = vmatmul.f32.gmra.mxu0 %v833
        %v900 = vpop.f32.mrf.mxu0
        %v901 = vadd.f32 %v785, %v900
        %902 = vmatmul.f32.gmra.mxu0 %v836
        %v903 = vpop.f32.mrf.mxu0
        %v904 = vadd.f32 %v788, %v903
        %905 = vmatmul.f32.gmra.mxu0 %v839
        %v906 = vpop.f32.mrf.mxu0
        %v907 = vadd.f32 %v791, %v906
        %908 = vmatmul.f32.gmra.mxu0 %v842
        %v909 = vpop.f32.mrf.mxu0
        %v910 = vadd.f32 %v794, %v909
        %911 = vmatmul.f32.gmra.mxu0 %v845
        %v912 = vpop.f32.mrf.mxu0
        %v913 = vadd.f32 %v797, %v912
        %914 = vmatmul.f32.gmra.mxu0 %v848
        %v915 = vpop.f32.mrf.mxu0
        %v916 = vadd.f32 %v800, %v915
        %917 = vmatmul.f32.gmra.mxu0 %v851
        %v918 = vpop.f32.mrf.mxu0
        %v919 = vadd.f32 %v803, %v918
        %920 = vmatmul.f32.gmra.mxu0 %v854
        %v921 = vpop.f32.mrf.mxu0
        %v922 = vadd.f32 %v806, %v921
        %923 = vmatmul.f32.gmra.mxu0 %v857
        %v924 = vpop.f32.mrf.mxu0
        %v925 = vadd.f32 %v809, %v924
        %926 = vmatmul.f32.gmra.mxu0 %v860
        %v927 = vpop.f32.mrf.mxu0
        %v928 = vadd.f32 %v812, %v927
        %929 = vmatmul.f32.gmra.mxu0 %v863
        %v930 = vpop.f32.mrf.mxu0
        %v931 = vadd.f32 %v815, %v930
        %932 = vmatmul.f32.gmra.mxu0 %v866
        %v933 = vpop.f32.mrf.mxu0
        %v934 = vadd.f32 %v818, %v933
        %935 = vmatmul.f32.gmra.mxu0 %v869
        %v936 = vpop.f32.mrf.mxu0
        %v937 = vadd.f32 %v821, %v936
        %938 = vmatmul.f32.gmra.mxu0 %v872
        %v939 = vpop.f32.mrf.mxu0
        %v940 = vadd.f32 %v824, %v939
        %941 = vmatmul.f32.gmra.mxu0 %v875
        %v942 = vpop.f32.mrf.mxu0
        %v943 = vadd.f32 %v827, %v942
        %944 = vdwg.mxu0
        %v945 = vld [vmem:[%s666 + $0x2] sm:$0xff]
        %v946 = vld [vmem:[%s666 + $0xa] sm:$0xff]
        %v947 = vld [vmem:[%s666 + $0x1a] sm:$0xff]
        %v948 = vld [vmem:[%s666 + $0x22] sm:$0xff]
        %v949 = vld [vmem:[%s666 + $0x32] sm:$0xff]
        %v950 = vld [vmem:[%s666 + $0x3a] sm:$0xff]
        %v951 = vld [vmem:[%s666 + $0x4a] sm:$0xff]
        %v952 = vld [vmem:[%s666 + $0x52] sm:$0xff]
        %v953 = vld [vmem:[%s666 + $0x62] sm:$0xff]
        %v954 = vld [vmem:[%s666 + $0x6a] sm:$0xff]
        %v955 = vld [vmem:[%s666 + $0x7a] sm:$0xff]
        %v956 = vld [vmem:[%s666 + $0x82] sm:$0xff]
        %v957 = vld [vmem:[%s666 + $0x92] sm:$0xff]
        %v958 = vld [vmem:[%s666 + $0x9a] sm:$0xff]
        %v959 = vld [vmem:[%s666 + $0xaa] sm:$0xff]
        %v960 = vld [vmem:[%s666 + $0xb2] sm:$0xff]
        %s961 = scalar_lea.vmem %s1, 96
        %v962 = vld [vmem:[%s961] sm:$0xff]
        %v963 = vld [vmem:[%s961 + $0x8] sm:$0xff]
        %v964 = vld [vmem:[%s961 + $0x10] sm:$0xff]
        %v965 = vld [vmem:[%s961 + $0x18] sm:$0xff]
        %v966 = vld [vmem:[%s961 + $0x20] sm:$0xff]
        %v967 = vld [vmem:[%s961 + $0x28] sm:$0xf]
        %v969 = vsel %vm209, %v945, 0
        %v972 = vsel %vm209, %v946, 0
        %v975 = vsel %vm209, %v947, 0
        %v978 = vsel %vm209, %v948, 0
        %v981 = vsel %vm209, %v949, 0
        %v984 = vsel %vm209, %v950, 0
        %v987 = vsel %vm209, %v951, 0
        %v990 = vsel %vm209, %v952, 0
        %v993 = vsel %vm209, %v953, 0
        %v996 = vsel %vm209, %v954, 0
        %v999 = vsel %vm209, %v955, 0
        %v1002 = vsel %vm209, %v956, 0
        %v1005 = vsel %vm209, %v957, 0
        %v1008 = vsel %vm209, %v958, 0
        %v1011 = vsel %vm209, %v959, 0
        %v1014 = vsel %vm209, %v960, 0
        %v1017 = vsel %vm760, %v967, 0
        %1019 = vmatpush.msra.mxu0 0.0
        %1020 = vmatpush.msra.mxu0 0.0
        %1021 = vmatpush.msra.mxu0 0.0
        %1022 = vmatpush.msra.mxu0 0.0
        %1023 = vmatpush.msra.mxu0 0.0
        %1024 = vmatpush.msra.mxu0 0.0
        %1025 = vmatpush.msra.mxu0 0.0
        %1026 = vmatpush.msra.mxu0 0.0
        %1027 = vmatpush.msra.mxu0 0.0
        %1028 = vmatpush.msra.mxu0 0.0
        %1029 = vmatpush.msra.mxu0 %v1017
        %1030 = vmatpush.msra.mxu0 %v966
        %1031 = vmatpush.msra.mxu0 %v965
        %1032 = vmatpush.msra.mxu0 %v964
        %1033 = vmatpush.msra.mxu0 %v963
        %1034 = vmatpush.msra.mxu0 %v962
        %1035 = vmatmul.f32.gmra.mxu0 %v969
        %v1036 = vpop.f32.mrf.mxu0
        %v1037 = vadd.f32 0.0, %v1036
        %1038 = vmatmul.f32.gmra.mxu0 %v972
        %v1039 = vpop.f32.mrf.mxu0
        %v1040 = vadd.f32 0.0, %v1039
        %1041 = vmatmul.f32.gmra.mxu0 %v975
        %v1042 = vpop.f32.mrf.mxu0
        %v1043 = vadd.f32 0.0, %v1042
        %1044 = vmatmul.f32.gmra.mxu0 %v978
        %v1045 = vpop.f32.mrf.mxu0
        %v1046 = vadd.f32 0.0, %v1045
        %1047 = vmatmul.f32.gmra.mxu0 %v981
        %v1048 = vpop.f32.mrf.mxu0
        %v1049 = vadd.f32 0.0, %v1048
        %1050 = vmatmul.f32.gmra.mxu0 %v984
        %v1051 = vpop.f32.mrf.mxu0
        %v1052 = vadd.f32 0.0, %v1051
        %1053 = vmatmul.f32.gmra.mxu0 %v987
        %v1054 = vpop.f32.mrf.mxu0
        %v1055 = vadd.f32 0.0, %v1054
        %1056 = vmatmul.f32.gmra.mxu0 %v990
        %v1057 = vpop.f32.mrf.mxu0
        %v1058 = vadd.f32 0.0, %v1057
        %1059 = vmatmul.f32.gmra.mxu0 %v993
        %v1060 = vpop.f32.mrf.mxu0
        %v1061 = vadd.f32 0.0, %v1060
        %1062 = vmatmul.f32.gmra.mxu0 %v996
        %v1063 = vpop.f32.mrf.mxu0
        %v1064 = vadd.f32 0.0, %v1063
        %1065 = vmatmul.f32.gmra.mxu0 %v999
        %v1066 = vpop.f32.mrf.mxu0
        %v1067 = vadd.f32 0.0, %v1066
        %1068 = vmatmul.f32.gmra.mxu0 %v1002
        %v1069 = vpop.f32.mrf.mxu0
        %v1070 = vadd.f32 0.0, %v1069
        %1071 = vmatmul.f32.gmra.mxu0 %v1005
        %v1072 = vpop.f32.mrf.mxu0
        %v1073 = vadd.f32 0.0, %v1072
        %1074 = vmatmul.f32.gmra.mxu0 %v1008
        %v1075 = vpop.f32.mrf.mxu0
        %v1076 = vadd.f32 0.0, %v1075
        %1077 = vmatmul.f32.gmra.mxu0 %v1011
        %v1078 = vpop.f32.mrf.mxu0
        %v1079 = vadd.f32 0.0, %v1078
        %1080 = vmatmul.f32.gmra.mxu0 %v1014
        %v1081 = vpop.f32.mrf.mxu0
        %v1082 = vadd.f32 0.0, %v1081
        %1083 = vdwg.mxu0
        %v1084 = vadd.f32 %v898, %v1037
        %v1085 = vadd.f32 %v901, %v1040
        %v1086 = vadd.f32 %v904, %v1043
        %v1087 = vadd.f32 %v907, %v1046
        %v1088 = vadd.f32 %v910, %v1049
        %v1089 = vadd.f32 %v913, %v1052
        %v1090 = vadd.f32 %v916, %v1055
        %v1091 = vadd.f32 %v919, %v1058
        %v1092 = vadd.f32 %v922, %v1061
        %v1093 = vadd.f32 %v925, %v1064
        %v1094 = vadd.f32 %v928, %v1067
        %v1095 = vadd.f32 %v931, %v1070
        %v1096 = vadd.f32 %v934, %v1073
        %v1097 = vadd.f32 %v937, %v1076
        %v1098 = vadd.f32 %v940, %v1079
        %v1099 = vadd.f32 %v943, %v1082
        %v1100 = vld [vmem:[%s666 + $0x3] sm:$0xff]
        %v1101 = vld [vmem:[%s666 + $0xb] sm:$0xff]
        %v1102 = vld [vmem:[%s666 + $0x1b] sm:$0xff]
        %v1103 = vld [vmem:[%s666 + $0x23] sm:$0xff]
        %v1104 = vld [vmem:[%s666 + $0x33] sm:$0xff]
        %v1105 = vld [vmem:[%s666 + $0x3b] sm:$0xff]
        %v1106 = vld [vmem:[%s666 + $0x4b] sm:$0xff]
        %v1107 = vld [vmem:[%s666 + $0x53] sm:$0xff]
        %v1108 = vld [vmem:[%s666 + $0x63] sm:$0xff]
        %v1109 = vld [vmem:[%s666 + $0x6b] sm:$0xff]
        %v1110 = vld [vmem:[%s666 + $0x7b] sm:$0xff]
        %v1111 = vld [vmem:[%s666 + $0x83] sm:$0xff]
        %v1112 = vld [vmem:[%s666 + $0x93] sm:$0xff]
        %v1113 = vld [vmem:[%s666 + $0x9b] sm:$0xff]
        %v1114 = vld [vmem:[%s666 + $0xab] sm:$0xff]
        %v1115 = vld [vmem:[%s666 + $0xb3] sm:$0xff]
        %s1116 = scalar_lea.vmem %s1, 144
        %v1117 = vld [vmem:[%s1116] sm:$0xff]
        %v1118 = vld [vmem:[%s1116 + $0x8] sm:$0xff]
        %v1119 = vld [vmem:[%s1116 + $0x10] sm:$0xff]
        %v1120 = vld [vmem:[%s1116 + $0x18] sm:$0xff]
        %v1121 = vld [vmem:[%s1116 + $0x20] sm:$0xff]
        %v1122 = vld [vmem:[%s1116 + $0x28] sm:$0xf]
        %v1124 = vsel %vm209, %v1100, 0
        %v1127 = vsel %vm209, %v1101, 0
        %v1130 = vsel %vm209, %v1102, 0
        %v1133 = vsel %vm209, %v1103, 0
        %v1136 = vsel %vm209, %v1104, 0
        %v1139 = vsel %vm209, %v1105, 0
        %v1142 = vsel %vm209, %v1106, 0
        %v1145 = vsel %vm209, %v1107, 0
        %v1148 = vsel %vm209, %v1108, 0
        %v1151 = vsel %vm209, %v1109, 0
        %v1154 = vsel %vm209, %v1110, 0
        %v1157 = vsel %vm209, %v1111, 0
        %v1160 = vsel %vm209, %v1112, 0
        %v1163 = vsel %vm209, %v1113, 0
        %v1166 = vsel %vm209, %v1114, 0
        %v1169 = vsel %vm209, %v1115, 0
        %v1172 = vsel %vm760, %v1122, 0
        %1174 = vmatpush.msra.mxu0 0.0
        %1175 = vmatpush.msra.mxu0 0.0
        %1176 = vmatpush.msra.mxu0 0.0
        %1177 = vmatpush.msra.mxu0 0.0
        %1178 = vmatpush.msra.mxu0 0.0
        %1179 = vmatpush.msra.mxu0 0.0
        %1180 = vmatpush.msra.mxu0 0.0
        %1181 = vmatpush.msra.mxu0 0.0
        %1182 = vmatpush.msra.mxu0 0.0
        %1183 = vmatpush.msra.mxu0 0.0
        %1184 = vmatpush.msra.mxu0 %v1172
        %1185 = vmatpush.msra.mxu0 %v1121
        %1186 = vmatpush.msra.mxu0 %v1120
        %1187 = vmatpush.msra.mxu0 %v1119
        %1188 = vmatpush.msra.mxu0 %v1118
        %1189 = vmatpush.msra.mxu0 %v1117
        %1190 = vmatmul.f32.gmra.mxu0 %v1124
        %v1191 = vpop.f32.mrf.mxu0
        %v1192 = vadd.f32 0.0, %v1191
        %1193 = vmatmul.f32.gmra.mxu0 %v1127
        %v1194 = vpop.f32.mrf.mxu0
        %v1195 = vadd.f32 0.0, %v1194
        %1196 = vmatmul.f32.gmra.mxu0 %v1130
        %v1197 = vpop.f32.mrf.mxu0
        %v1198 = vadd.f32 0.0, %v1197
        %1199 = vmatmul.f32.gmra.mxu0 %v1133
        %v1200 = vpop.f32.mrf.mxu0
        %v1201 = vadd.f32 0.0, %v1200
        %1202 = vmatmul.f32.gmra.mxu0 %v1136
        %v1203 = vpop.f32.mrf.mxu0
        %v1204 = vadd.f32 0.0, %v1203
        %1205 = vmatmul.f32.gmra.mxu0 %v1139
        %v1206 = vpop.f32.mrf.mxu0
        %v1207 = vadd.f32 0.0, %v1206
        %1208 = vmatmul.f32.gmra.mxu0 %v1142
        %v1209 = vpop.f32.mrf.mxu0
        %v1210 = vadd.f32 0.0, %v1209
        %1211 = vmatmul.f32.gmra.mxu0 %v1145
        %v1212 = vpop.f32.mrf.mxu0
        %v1213 = vadd.f32 0.0, %v1212
        %1214 = vmatmul.f32.gmra.mxu0 %v1148
        %v1215 = vpop.f32.mrf.mxu0
        %v1216 = vadd.f32 0.0, %v1215
        %1217 = vmatmul.f32.gmra.mxu0 %v1151
        %v1218 = vpop.f32.mrf.mxu0
        %v1219 = vadd.f32 0.0, %v1218
        %1220 = vmatmul.f32.gmra.mxu0 %v1154
        %v1221 = vpop.f32.mrf.mxu0
        %v1222 = vadd.f32 0.0, %v1221
        %1223 = vmatmul.f32.gmra.mxu0 %v1157
        %v1224 = vpop.f32.mrf.mxu0
        %v1225 = vadd.f32 0.0, %v1224
        %1226 = vmatmul.f32.gmra.mxu0 %v1160
        %v1227 = vpop.f32.mrf.mxu0
        %v1228 = vadd.f32 0.0, %v1227
        %1229 = vmatmul.f32.gmra.mxu0 %v1163
        %v1230 = vpop.f32.mrf.mxu0
        %v1231 = vadd.f32 0.0, %v1230
        %1232 = vmatmul.f32.gmra.mxu0 %v1166
        %v1233 = vpop.f32.mrf.mxu0
        %v1234 = vadd.f32 0.0, %v1233
        %1235 = vmatmul.f32.gmra.mxu0 %v1169
        %v1236 = vpop.f32.mrf.mxu0
        %v1237 = vadd.f32 0.0, %v1236
        %1238 = vdwg.mxu0
        %v1239 = vadd.f32 %v1084, %v1192
        %v1240 = vadd.f32 %v1085, %v1195
        %v1241 = vadd.f32 %v1086, %v1198
        %v1242 = vadd.f32 %v1087, %v1201
        %v1243 = vadd.f32 %v1088, %v1204
        %v1244 = vadd.f32 %v1089, %v1207
        %v1245 = vadd.f32 %v1090, %v1210
        %v1246 = vadd.f32 %v1091, %v1213
        %v1247 = vadd.f32 %v1092, %v1216
        %v1248 = vadd.f32 %v1093, %v1219
        %v1249 = vadd.f32 %v1094, %v1222
        %v1250 = vadd.f32 %v1095, %v1225
        %v1251 = vadd.f32 %v1096, %v1228
        %v1252 = vadd.f32 %v1097, %v1231
        %v1253 = vadd.f32 %v1098, %v1234
        %v1254 = vadd.f32 %v1099, %v1237
        %v1255 = vld [vmem:[%s666 + $0x4] sm:$0xff]
        %v1256 = vld [vmem:[%s666 + $0xc] sm:$0xff]
        %v1257 = vld [vmem:[%s666 + $0x1c] sm:$0xff]
        %v1258 = vld [vmem:[%s666 + $0x24] sm:$0xff]
        %v1259 = vld [vmem:[%s666 + $0x34] sm:$0xff]
        %v1260 = vld [vmem:[%s666 + $0x3c] sm:$0xff]
        %v1261 = vld [vmem:[%s666 + $0x4c] sm:$0xff]
        %v1262 = vld [vmem:[%s666 + $0x54] sm:$0xff]
        %v1263 = vld [vmem:[%s666 + $0x64] sm:$0xff]
        %v1264 = vld [vmem:[%s666 + $0x6c] sm:$0xff]
        %v1265 = vld [vmem:[%s666 + $0x7c] sm:$0xff]
        %v1266 = vld [vmem:[%s666 + $0x84] sm:$0xff]
        %v1267 = vld [vmem:[%s666 + $0x94] sm:$0xff]
        %v1268 = vld [vmem:[%s666 + $0x9c] sm:$0xff]
        %v1269 = vld [vmem:[%s666 + $0xac] sm:$0xff]
        %v1270 = vld [vmem:[%s666 + $0xb4] sm:$0xff]
        %s1271 = scalar_lea.vmem %s1, 192
        %v1272 = vld [vmem:[%s1271] sm:$0xff]
        %v1273 = vld [vmem:[%s1271 + $0x8] sm:$0xff]
        %v1274 = vld [vmem:[%s1271 + $0x10] sm:$0xff]
        %v1275 = vld [vmem:[%s1271 + $0x18] sm:$0xff]
        %v1276 = vld [vmem:[%s1271 + $0x20] sm:$0xff]
        %v1277 = vld [vmem:[%s1271 + $0x28] sm:$0xf]
        %v1279 = vsel %vm209, %v1255, 0
        %v1282 = vsel %vm209, %v1256, 0
        %v1285 = vsel %vm209, %v1257, 0
        %v1288 = vsel %vm209, %v1258, 0
        %v1291 = vsel %vm209, %v1259, 0
        %v1294 = vsel %vm209, %v1260, 0
        %v1297 = vsel %vm209, %v1261, 0
        %v1300 = vsel %vm209, %v1262, 0
        %v1303 = vsel %vm209, %v1263, 0
        %v1306 = vsel %vm209, %v1264, 0
        %v1309 = vsel %vm209, %v1265, 0
        %v1312 = vsel %vm209, %v1266, 0
        %v1315 = vsel %vm209, %v1267, 0
        %v1318 = vsel %vm209, %v1268, 0
        %v1321 = vsel %vm209, %v1269, 0
        %v1324 = vsel %vm209, %v1270, 0
        %v1327 = vsel %vm760, %v1277, 0
        %1329 = vmatpush.msra.mxu0 0.0
        %1330 = vmatpush.msra.mxu0 0.0
        %1331 = vmatpush.msra.mxu0 0.0
        %1332 = vmatpush.msra.mxu0 0.0
        %1333 = vmatpush.msra.mxu0 0.0
        %1334 = vmatpush.msra.mxu0 0.0
        %1335 = vmatpush.msra.mxu0 0.0
        %1336 = vmatpush.msra.mxu0 0.0
        %1337 = vmatpush.msra.mxu0 0.0
        %1338 = vmatpush.msra.mxu0 0.0
        %1339 = vmatpush.msra.mxu0 %v1327
        %1340 = vmatpush.msra.mxu0 %v1276
        %1341 = vmatpush.msra.mxu0 %v1275
        %1342 = vmatpush.msra.mxu0 %v1274
        %1343 = vmatpush.msra.mxu0 %v1273
        %1344 = vmatpush.msra.mxu0 %v1272
        %1345 = vmatmul.f32.gmra.mxu0 %v1279
        %v1346 = vpop.f32.mrf.mxu0
        %v1347 = vadd.f32 0.0, %v1346
        %1348 = vmatmul.f32.gmra.mxu0 %v1282
        %v1349 = vpop.f32.mrf.mxu0
        %v1350 = vadd.f32 0.0, %v1349
        %1351 = vmatmul.f32.gmra.mxu0 %v1285
        %v1352 = vpop.f32.mrf.mxu0
        %v1353 = vadd.f32 0.0, %v1352
        %1354 = vmatmul.f32.gmra.mxu0 %v1288
        %v1355 = vpop.f32.mrf.mxu0
        %v1356 = vadd.f32 0.0, %v1355
        %1357 = vmatmul.f32.gmra.mxu0 %v1291
        %v1358 = vpop.f32.mrf.mxu0
        %v1359 = vadd.f32 0.0, %v1358
        %1360 = vmatmul.f32.gmra.mxu0 %v1294
        %v1361 = vpop.f32.mrf.mxu0
        %v1362 = vadd.f32 0.0, %v1361
        %1363 = vmatmul.f32.gmra.mxu0 %v1297
        %v1364 = vpop.f32.mrf.mxu0
        %v1365 = vadd.f32 0.0, %v1364
        %1366 = vmatmul.f32.gmra.mxu0 %v1300
        %v1367 = vpop.f32.mrf.mxu0
        %v1368 = vadd.f32 0.0, %v1367
        %1369 = vmatmul.f32.gmra.mxu0 %v1303
        %v1370 = vpop.f32.mrf.mxu0
        %v1371 = vadd.f32 0.0, %v1370
        %1372 = vmatmul.f32.gmra.mxu0 %v1306
        %v1373 = vpop.f32.mrf.mxu0
        %v1374 = vadd.f32 0.0, %v1373
        %1375 = vmatmul.f32.gmra.mxu0 %v1309
        %v1376 = vpop.f32.mrf.mxu0
        %v1377 = vadd.f32 0.0, %v1376
        %1378 = vmatmul.f32.gmra.mxu0 %v1312
        %v1379 = vpop.f32.mrf.mxu0
        %v1380 = vadd.f32 0.0, %v1379
        %1381 = vmatmul.f32.gmra.mxu0 %v1315
        %v1382 = vpop.f32.mrf.mxu0
        %v1383 = vadd.f32 0.0, %v1382
        %1384 = vmatmul.f32.gmra.mxu0 %v1318
        %v1385 = vpop.f32.mrf.mxu0
        %v1386 = vadd.f32 0.0, %v1385
        %1387 = vmatmul.f32.gmra.mxu0 %v1321
        %v1388 = vpop.f32.mrf.mxu0
        %v1389 = vadd.f32 0.0, %v1388
        %1390 = vmatmul.f32.gmra.mxu0 %v1324
        %v1391 = vpop.f32.mrf.mxu0
        %v1392 = vadd.f32 0.0, %v1391
        %1393 = vdwg.mxu0
        %v1394 = vadd.f32 %v1239, %v1347
        %v1395 = vadd.f32 %v1240, %v1350
        %v1396 = vadd.f32 %v1241, %v1353
        %v1397 = vadd.f32 %v1242, %v1356
        %v1398 = vadd.f32 %v1243, %v1359
        %v1399 = vadd.f32 %v1244, %v1362
        %v1400 = vadd.f32 %v1245, %v1365
        %v1401 = vadd.f32 %v1246, %v1368
        %v1402 = vadd.f32 %v1247, %v1371
        %v1403 = vadd.f32 %v1248, %v1374
        %v1404 = vadd.f32 %v1249, %v1377
        %v1405 = vadd.f32 %v1250, %v1380
        %v1406 = vadd.f32 %v1251, %v1383
        %v1407 = vadd.f32 %v1252, %v1386
        %v1408 = vadd.f32 %v1253, %v1389
        %v1409 = vadd.f32 %v1254, %v1392
        %v1410 = vld [vmem:[%s666 + $0x5] sm:$0xff]
        %v1411 = vld [vmem:[%s666 + $0xd] sm:$0xff]
        %v1412 = vld [vmem:[%s666 + $0x1d] sm:$0xff]
        %v1413 = vld [vmem:[%s666 + $0x25] sm:$0xff]
        %v1414 = vld [vmem:[%s666 + $0x35] sm:$0xff]
        %v1415 = vld [vmem:[%s666 + $0x3d] sm:$0xff]
        %v1416 = vld [vmem:[%s666 + $0x4d] sm:$0xff]
        %v1417 = vld [vmem:[%s666 + $0x55] sm:$0xff]
        %v1418 = vld [vmem:[%s666 + $0x65] sm:$0xff]
        %v1419 = vld [vmem:[%s666 + $0x6d] sm:$0xff]
        %v1420 = vld [vmem:[%s666 + $0x7d] sm:$0xff]
        %v1421 = vld [vmem:[%s666 + $0x85] sm:$0xff]
        %v1422 = vld [vmem:[%s666 + $0x95] sm:$0xff]
        %v1423 = vld [vmem:[%s666 + $0x9d] sm:$0xff]
        %v1424 = vld [vmem:[%s666 + $0xad] sm:$0xff]
        %v1425 = vld [vmem:[%s666 + $0xb5] sm:$0xff]
        %s1426 = scalar_lea.vmem %s1, 240
        %v1427 = vld [vmem:[%s1426] sm:$0xff]
        %v1428 = vld [vmem:[%s1426 + $0x8] sm:$0xff]
        %v1429 = vld [vmem:[%s1426 + $0x10] sm:$0xff]
        %v1430 = vld [vmem:[%s1426 + $0x18] sm:$0xff]
        %v1431 = vld [vmem:[%s1426 + $0x20] sm:$0xff]
        %v1432 = vld [vmem:[%s1426 + $0x28] sm:$0xf]
        %v1434 = vsel %vm209, %v1410, 0
        %v1437 = vsel %vm209, %v1411, 0
        %v1440 = vsel %vm209, %v1412, 0
        %v1443 = vsel %vm209, %v1413, 0
        %v1446 = vsel %vm209, %v1414, 0
        %v1449 = vsel %vm209, %v1415, 0
        %v1452 = vsel %vm209, %v1416, 0
        %v1455 = vsel %vm209, %v1417, 0
        %v1458 = vsel %vm209, %v1418, 0
        %v1461 = vsel %vm209, %v1419, 0
        %v1464 = vsel %vm209, %v1420, 0
        %v1467 = vsel %vm209, %v1421, 0
        %v1470 = vsel %vm209, %v1422, 0
        %v1473 = vsel %vm209, %v1423, 0
        %v1476 = vsel %vm209, %v1424, 0
        %v1479 = vsel %vm209, %v1425, 0
        %v1482 = vsel %vm760, %v1432, 0
        %1484 = vmatpush.msra.mxu0 0.0
        %1485 = vmatpush.msra.mxu0 0.0
        %1486 = vmatpush.msra.mxu0 0.0
        %1487 = vmatpush.msra.mxu0 0.0
        %1488 = vmatpush.msra.mxu0 0.0
        %1489 = vmatpush.msra.mxu0 0.0
        %1490 = vmatpush.msra.mxu0 0.0
        %1491 = vmatpush.msra.mxu0 0.0
        %1492 = vmatpush.msra.mxu0 0.0
        %1493 = vmatpush.msra.mxu0 0.0
        %1494 = vmatpush.msra.mxu0 %v1482
        %1495 = vmatpush.msra.mxu0 %v1431
        %1496 = vmatpush.msra.mxu0 %v1430
        %1497 = vmatpush.msra.mxu0 %v1429
        %1498 = vmatpush.msra.mxu0 %v1428
        %1499 = vmatpush.msra.mxu0 %v1427
        %1500 = vmatmul.f32.gmra.mxu0 %v1434
        %v1501 = vpop.f32.mrf.mxu0
        %v1502 = vadd.f32 0.0, %v1501
        %1503 = vmatmul.f32.gmra.mxu0 %v1437
        %v1504 = vpop.f32.mrf.mxu0
        %v1505 = vadd.f32 0.0, %v1504
        %1506 = vmatmul.f32.gmra.mxu0 %v1440
        %v1507 = vpop.f32.mrf.mxu0
        %v1508 = vadd.f32 0.0, %v1507
        %1509 = vmatmul.f32.gmra.mxu0 %v1443
        %v1510 = vpop.f32.mrf.mxu0
        %v1511 = vadd.f32 0.0, %v1510
        %1512 = vmatmul.f32.gmra.mxu0 %v1446
        %v1513 = vpop.f32.mrf.mxu0
        %v1514 = vadd.f32 0.0, %v1513
        %1515 = vmatmul.f32.gmra.mxu0 %v1449
        %v1516 = vpop.f32.mrf.mxu0
        %v1517 = vadd.f32 0.0, %v1516
        %1518 = vmatmul.f32.gmra.mxu0 %v1452
        %v1519 = vpop.f32.mrf.mxu0
        %v1520 = vadd.f32 0.0, %v1519
        %1521 = vmatmul.f32.gmra.mxu0 %v1455
        %v1522 = vpop.f32.mrf.mxu0
        %v1523 = vadd.f32 0.0, %v1522
        %1524 = vmatmul.f32.gmra.mxu0 %v1458
        %v1525 = vpop.f32.mrf.mxu0
        %v1526 = vadd.f32 0.0, %v1525
        %1527 = vmatmul.f32.gmra.mxu0 %v1461
        %v1528 = vpop.f32.mrf.mxu0
        %v1529 = vadd.f32 0.0, %v1528
        %1530 = vmatmul.f32.gmra.mxu0 %v1464
        %v1531 = vpop.f32.mrf.mxu0
        %v1532 = vadd.f32 0.0, %v1531
        %1533 = vmatmul.f32.gmra.mxu0 %v1467
        %v1534 = vpop.f32.mrf.mxu0
        %v1535 = vadd.f32 0.0, %v1534
        %1536 = vmatmul.f32.gmra.mxu0 %v1470
        %v1537 = vpop.f32.mrf.mxu0
        %v1538 = vadd.f32 0.0, %v1537
        %1539 = vmatmul.f32.gmra.mxu0 %v1473
        %v1540 = vpop.f32.mrf.mxu0
        %v1541 = vadd.f32 0.0, %v1540
        %1542 = vmatmul.f32.gmra.mxu0 %v1476
        %v1543 = vpop.f32.mrf.mxu0
        %v1544 = vadd.f32 0.0, %v1543
        %1545 = vmatmul.f32.gmra.mxu0 %v1479
        %v1546 = vpop.f32.mrf.mxu0
        %v1547 = vadd.f32 0.0, %v1546
        %1548 = vdwg.mxu0
        %v1549 = vadd.f32 %v1394, %v1502
        %v1550 = vadd.f32 %v1395, %v1505
        %v1551 = vadd.f32 %v1396, %v1508
        %v1552 = vadd.f32 %v1397, %v1511
        %v1553 = vadd.f32 %v1398, %v1514
        %v1554 = vadd.f32 %v1399, %v1517
        %v1555 = vadd.f32 %v1400, %v1520
        %v1556 = vadd.f32 %v1401, %v1523
        %v1557 = vadd.f32 %v1402, %v1526
        %v1558 = vadd.f32 %v1403, %v1529
        %v1559 = vadd.f32 %v1404, %v1532
        %v1560 = vadd.f32 %v1405, %v1535
        %v1561 = vadd.f32 %v1406, %v1538
        %v1562 = vadd.f32 %v1407, %v1541
        %v1563 = vadd.f32 %v1408, %v1544
        %v1564 = vadd.f32 %v1409, %v1547
        %v1565 = vld [vmem:[%s666 + $0x6] sm:$0xff]
        %v1566 = vld [vmem:[%s666 + $0xe] sm:$0xff]
        %v1567 = vld [vmem:[%s666 + $0x1e] sm:$0xff]
        %v1568 = vld [vmem:[%s666 + $0x26] sm:$0xff]
        %v1569 = vld [vmem:[%s666 + $0x36] sm:$0xff]
        %v1570 = vld [vmem:[%s666 + $0x3e] sm:$0xff]
        %v1571 = vld [vmem:[%s666 + $0x4e] sm:$0xff]
        %v1572 = vld [vmem:[%s666 + $0x56] sm:$0xff]
        %v1573 = vld [vmem:[%s666 + $0x66] sm:$0xff]
        %v1574 = vld [vmem:[%s666 + $0x6e] sm:$0xff]
        %v1575 = vld [vmem:[%s666 + $0x7e] sm:$0xff]
        %v1576 = vld [vmem:[%s666 + $0x86] sm:$0xff]
        %v1577 = vld [vmem:[%s666 + $0x96] sm:$0xff]
        %v1578 = vld [vmem:[%s666 + $0x9e] sm:$0xff]
        %v1579 = vld [vmem:[%s666 + $0xae] sm:$0xff]
        %v1580 = vld [vmem:[%s666 + $0xb6] sm:$0xff]
        %s1581 = scalar_lea.vmem %s1, 288
        %v1582 = vld [vmem:[%s1581] sm:$0xff]
        %v1583 = vld [vmem:[%s1581 + $0x8] sm:$0xff]
        %v1584 = vld [vmem:[%s1581 + $0x10] sm:$0xff]
        %v1585 = vld [vmem:[%s1581 + $0x18] sm:$0xff]
        %v1586 = vld [vmem:[%s1581 + $0x20] sm:$0xff]
        %v1587 = vld [vmem:[%s1581 + $0x28] sm:$0xf]
        %v1589 = vsel %vm209, %v1565, 0
        %v1592 = vsel %vm209, %v1566, 0
        %v1595 = vsel %vm209, %v1567, 0
        %v1598 = vsel %vm209, %v1568, 0
        %v1601 = vsel %vm209, %v1569, 0
        %v1604 = vsel %vm209, %v1570, 0
        %v1607 = vsel %vm209, %v1571, 0
        %v1610 = vsel %vm209, %v1572, 0
        %v1613 = vsel %vm209, %v1573, 0
        %v1616 = vsel %vm209, %v1574, 0
        %v1619 = vsel %vm209, %v1575, 0
        %v1622 = vsel %vm209, %v1576, 0
        %v1625 = vsel %vm209, %v1577, 0
        %v1628 = vsel %vm209, %v1578, 0
        %v1631 = vsel %vm209, %v1579, 0
        %v1634 = vsel %vm209, %v1580, 0
        %v1637 = vsel %vm760, %v1587, 0
        %1639 = vmatpush.msra.mxu0 0.0
        %1640 = vmatpush.msra.mxu0 0.0
        %1641 = vmatpush.msra.mxu0 0.0
        %1642 = vmatpush.msra.mxu0 0.0
        %1643 = vmatpush.msra.mxu0 0.0
        %1644 = vmatpush.msra.mxu0 0.0
        %1645 = vmatpush.msra.mxu0 0.0
        %1646 = vmatpush.msra.mxu0 0.0
        %1647 = vmatpush.msra.mxu0 0.0
        %1648 = vmatpush.msra.mxu0 0.0
        %1649 = vmatpush.msra.mxu0 %v1637
        %1650 = vmatpush.msra.mxu0 %v1586
        %1651 = vmatpush.msra.mxu0 %v1585
        %1652 = vmatpush.msra.mxu0 %v1584
        %1653 = vmatpush.msra.mxu0 %v1583
        %1654 = vmatpush.msra.mxu0 %v1582
        %1655 = vmatmul.f32.gmra.mxu0 %v1589
        %v1656 = vpop.f32.mrf.mxu0
        %v1657 = vadd.f32 0.0, %v1656
        %1658 = vmatmul.f32.gmra.mxu0 %v1592
        %v1659 = vpop.f32.mrf.mxu0
        %v1660 = vadd.f32 0.0, %v1659
        %1661 = vmatmul.f32.gmra.mxu0 %v1595
        %v1662 = vpop.f32.mrf.mxu0
        %v1663 = vadd.f32 0.0, %v1662
        %1664 = vmatmul.f32.gmra.mxu0 %v1598
        %v1665 = vpop.f32.mrf.mxu0
        %v1666 = vadd.f32 0.0, %v1665
        %1667 = vmatmul.f32.gmra.mxu0 %v1601
        %v1668 = vpop.f32.mrf.mxu0
        %v1669 = vadd.f32 0.0, %v1668
        %1670 = vmatmul.f32.gmra.mxu0 %v1604
        %v1671 = vpop.f32.mrf.mxu0
        %v1672 = vadd.f32 0.0, %v1671
        %1673 = vmatmul.f32.gmra.mxu0 %v1607
        %v1674 = vpop.f32.mrf.mxu0
        %v1675 = vadd.f32 0.0, %v1674
        %1676 = vmatmul.f32.gmra.mxu0 %v1610
        %v1677 = vpop.f32.mrf.mxu0
        %v1678 = vadd.f32 0.0, %v1677
        %1679 = vmatmul.f32.gmra.mxu0 %v1613
        %v1680 = vpop.f32.mrf.mxu0
        %v1681 = vadd.f32 0.0, %v1680
        %1682 = vmatmul.f32.gmra.mxu0 %v1616
        %v1683 = vpop.f32.mrf.mxu0
        %v1684 = vadd.f32 0.0, %v1683
        %1685 = vmatmul.f32.gmra.mxu0 %v1619
        %v1686 = vpop.f32.mrf.mxu0
        %v1687 = vadd.f32 0.0, %v1686
        %1688 = vmatmul.f32.gmra.mxu0 %v1622
        %v1689 = vpop.f32.mrf.mxu0
        %v1690 = vadd.f32 0.0, %v1689
        %1691 = vmatmul.f32.gmra.mxu0 %v1625
        %v1692 = vpop.f32.mrf.mxu0
        %v1693 = vadd.f32 0.0, %v1692
        %1694 = vmatmul.f32.gmra.mxu0 %v1628
        %v1695 = vpop.f32.mrf.mxu0
        %v1696 = vadd.f32 0.0, %v1695
        %1697 = vmatmul.f32.gmra.mxu0 %v1631
        %v1698 = vpop.f32.mrf.mxu0
        %v1699 = vadd.f32 0.0, %v1698
        %1700 = vmatmul.f32.gmra.mxu0 %v1634
        %v1701 = vpop.f32.mrf.mxu0
        %v1702 = vadd.f32 0.0, %v1701
        %1703 = vdwg.mxu0
        %v1704 = vadd.f32 %v1549, %v1657
        %v1705 = vadd.f32 %v1550, %v1660
        %v1706 = vadd.f32 %v1551, %v1663
        %v1707 = vadd.f32 %v1552, %v1666
        %v1708 = vadd.f32 %v1553, %v1669
        %v1709 = vadd.f32 %v1554, %v1672
        %v1710 = vadd.f32 %v1555, %v1675
        %v1711 = vadd.f32 %v1556, %v1678
        %v1712 = vadd.f32 %v1557, %v1681
        %v1713 = vadd.f32 %v1558, %v1684
        %v1714 = vadd.f32 %v1559, %v1687
        %v1715 = vadd.f32 %v1560, %v1690
        %v1716 = vadd.f32 %v1561, %v1693
        %v1717 = vadd.f32 %v1562, %v1696
        %v1718 = vadd.f32 %v1563, %v1699
        %v1719 = vadd.f32 %v1564, %v1702
        %s1720 = sadd.s32 %s208, 1
        %s1721 = smul.u32 %s1720, 24
        %s1722 = scalar_lea.vmem [#allocation2], %s1721
        %v1723 = vld [vmem:[%s1722] sm:$0xff]
        %v1724 = vld [vmem:[%s1722 + $0x8] sm:$0xff]
        %v1725 = vld [vmem:[%s1722 + $0x18] sm:$0xff]
        %v1726 = vld [vmem:[%s1722 + $0x20] sm:$0xff]
        %v1727 = vld [vmem:[%s1722 + $0x30] sm:$0xff]
        %v1728 = vld [vmem:[%s1722 + $0x38] sm:$0xff]
        %v1729 = vld [vmem:[%s1722 + $0x48] sm:$0xff]
        %v1730 = vld [vmem:[%s1722 + $0x50] sm:$0xff]
        %v1731 = vld [vmem:[%s1722 + $0x60] sm:$0xff]
        %v1732 = vld [vmem:[%s1722 + $0x68] sm:$0xff]
        %v1733 = vld [vmem:[%s1722 + $0x78] sm:$0xff]
        %v1734 = vld [vmem:[%s1722 + $0x80] sm:$0xff]
        %v1735 = vld [vmem:[%s1722 + $0x90] sm:$0xff]
        %v1736 = vld [vmem:[%s1722 + $0x98] sm:$0xff]
        %v1737 = vld [vmem:[%s1722 + $0xa8] sm:$0xff]
        %v1738 = vld [vmem:[%s1722 + $0xb0] sm:$0xff]
        %s1739 = scalar_lea.vmem %s1, 336
        %v1740 = vld [vmem:[%s1739] sm:$0xff]
        %v1741 = vld [vmem:[%s1739 + $0x8] sm:$0xff]
        %v1742 = vld [vmem:[%s1739 + $0x10] sm:$0xff]
        %v1743 = vld [vmem:[%s1739 + $0x18] sm:$0xff]
        %v1744 = vld [vmem:[%s1739 + $0x20] sm:$0xff]
        %v1745 = vld [vmem:[%s1739 + $0x28] sm:$0xf]
        %v1747 = vsel %vm209, %v1723, 0
        %v1750 = vsel %vm209, %v1724, 0
        %v1753 = vsel %vm209, %v1725, 0
        %v1756 = vsel %vm209, %v1726, 0
        %v1759 = vsel %vm209, %v1727, 0
        %v1762 = vsel %vm209, %v1728, 0
        %v1765 = vsel %vm209, %v1729, 0
        %v1768 = vsel %vm209, %v1730, 0
        %v1771 = vsel %vm209, %v1731, 0
        %v1774 = vsel %vm209, %v1732, 0
        %v1777 = vsel %vm209, %v1733, 0
        %v1780 = vsel %vm209, %v1734, 0
        %v1783 = vsel %vm209, %v1735, 0
        %v1786 = vsel %vm209, %v1736, 0
        %v1789 = vsel %vm209, %v1737, 0
        %v1792 = vsel %vm209, %v1738, 0
        %v1795 = vsel %vm760, %v1745, 0
        %1797 = vmatpush.msra.mxu0 0.0
        %1798 = vmatpush.msra.mxu0 0.0
        %1799 = vmatpush.msra.mxu0 0.0
        %1800 = vmatpush.msra.mxu0 0.0
        %1801 = vmatpush.msra.mxu0 0.0
        %1802 = vmatpush.msra.mxu0 0.0
        %1803 = vmatpush.msra.mxu0 0.0
        %1804 = vmatpush.msra.mxu0 0.0
        %1805 = vmatpush.msra.mxu0 0.0
        %1806 = vmatpush.msra.mxu0 0.0
        %1807 = vmatpush.msra.mxu0 %v1795
        %1808 = vmatpush.msra.mxu0 %v1744
        %1809 = vmatpush.msra.mxu0 %v1743
        %1810 = vmatpush.msra.mxu0 %v1742
        %1811 = vmatpush.msra.mxu0 %v1741
        %1812 = vmatpush.msra.mxu0 %v1740
        %1813 = vmatmul.f32.gmra.mxu0 %v1747
        %v1814 = vpop.f32.mrf.mxu0
        %v1815 = vadd.f32 0.0, %v1814
        %1816 = vmatmul.f32.gmra.mxu0 %v1750
        %v1817 = vpop.f32.mrf.mxu0
        %v1818 = vadd.f32 0.0, %v1817
        %1819 = vmatmul.f32.gmra.mxu0 %v1753
        %v1820 = vpop.f32.mrf.mxu0
        %v1821 = vadd.f32 0.0, %v1820
        %1822 = vmatmul.f32.gmra.mxu0 %v1756
        %v1823 = vpop.f32.mrf.mxu0
        %v1824 = vadd.f32 0.0, %v1823
        %1825 = vmatmul.f32.gmra.mxu0 %v1759
        %v1826 = vpop.f32.mrf.mxu0
        %v1827 = vadd.f32 0.0, %v1826
        %1828 = vmatmul.f32.gmra.mxu0 %v1762
        %v1829 = vpop.f32.mrf.mxu0
        %v1830 = vadd.f32 0.0, %v1829
        %1831 = vmatmul.f32.gmra.mxu0 %v1765
        %v1832 = vpop.f32.mrf.mxu0
        %v1833 = vadd.f32 0.0, %v1832
        %1834 = vmatmul.f32.gmra.mxu0 %v1768
        %v1835 = vpop.f32.mrf.mxu0
        %v1836 = vadd.f32 0.0, %v1835
        %1837 = vmatmul.f32.gmra.mxu0 %v1771
        %v1838 = vpop.f32.mrf.mxu0
        %v1839 = vadd.f32 0.0, %v1838
        %1840 = vmatmul.f32.gmra.mxu0 %v1774
        %v1841 = vpop.f32.mrf.mxu0
        %v1842 = vadd.f32 0.0, %v1841
        %1843 = vmatmul.f32.gmra.mxu0 %v1777
        %v1844 = vpop.f32.mrf.mxu0
        %v1845 = vadd.f32 0.0, %v1844
        %1846 = vmatmul.f32.gmra.mxu0 %v1780
        %v1847 = vpop.f32.mrf.mxu0
        %v1848 = vadd.f32 0.0, %v1847
        %1849 = vmatmul.f32.gmra.mxu0 %v1783
        %v1850 = vpop.f32.mrf.mxu0
        %v1851 = vadd.f32 0.0, %v1850
        %1852 = vmatmul.f32.gmra.mxu0 %v1786
        %v1853 = vpop.f32.mrf.mxu0
        %v1854 = vadd.f32 0.0, %v1853
        %1855 = vmatmul.f32.gmra.mxu0 %v1789
        %v1856 = vpop.f32.mrf.mxu0
        %v1857 = vadd.f32 0.0, %v1856
        %1858 = vmatmul.f32.gmra.mxu0 %v1792
        %v1859 = vpop.f32.mrf.mxu0
        %v1860 = vadd.f32 0.0, %v1859
        %1861 = vdwg.mxu0
        %v1862 = vadd.f32 %v1704, %v1815
        %v1863 = vadd.f32 %v1705, %v1818
        %v1864 = vadd.f32 %v1706, %v1821
        %v1865 = vadd.f32 %v1707, %v1824
        %v1866 = vadd.f32 %v1708, %v1827
        %v1867 = vadd.f32 %v1709, %v1830
        %v1868 = vadd.f32 %v1710, %v1833
        %v1869 = vadd.f32 %v1711, %v1836
        %v1870 = vadd.f32 %v1712, %v1839
        %v1871 = vadd.f32 %v1713, %v1842
        %v1872 = vadd.f32 %v1714, %v1845
        %v1873 = vadd.f32 %v1715, %v1848
        %v1874 = vadd.f32 %v1716, %v1851
        %v1875 = vadd.f32 %v1717, %v1854
        %v1876 = vadd.f32 %v1718, %v1857
        %v1877 = vadd.f32 %v1719, %v1860
        %v1878 = vld [vmem:[%s1722 + $0x1] sm:$0xff]
        %v1879 = vld [vmem:[%s1722 + $0x9] sm:$0xff]
        %v1880 = vld [vmem:[%s1722 + $0x19] sm:$0xff]
        %v1881 = vld [vmem:[%s1722 + $0x21] sm:$0xff]
        %v1882 = vld [vmem:[%s1722 + $0x31] sm:$0xff]
        %v1883 = vld [vmem:[%s1722 + $0x39] sm:$0xff]
        %v1884 = vld [vmem:[%s1722 + $0x49] sm:$0xff]
        %v1885 = vld [vmem:[%s1722 + $0x51] sm:$0xff]
        %v1886 = vld [vmem:[%s1722 + $0x61] sm:$0xff]
        %v1887 = vld [vmem:[%s1722 + $0x69] sm:$0xff]
        %v1888 = vld [vmem:[%s1722 + $0x79] sm:$0xff]
        %v1889 = vld [vmem:[%s1722 + $0x81] sm:$0xff]
        %v1890 = vld [vmem:[%s1722 + $0x91] sm:$0xff]
        %v1891 = vld [vmem:[%s1722 + $0x99] sm:$0xff]
        %v1892 = vld [vmem:[%s1722 + $0xa9] sm:$0xff]
        %v1893 = vld [vmem:[%s1722 + $0xb1] sm:$0xff]
        %s1894 = scalar_lea.vmem %s1, 384
        %v1895 = vld [vmem:[%s1894] sm:$0xff]
        %v1896 = vld [vmem:[%s1894 + $0x8] sm:$0xff]
        %v1897 = vld [vmem:[%s1894 + $0x10] sm:$0xff]
        %v1898 = vld [vmem:[%s1894 + $0x18] sm:$0xff]
        %v1899 = vld [vmem:[%s1894 + $0x20] sm:$0xff]
        %v1900 = vld [vmem:[%s1894 + $0x28] sm:$0xf]
        %v1902 = vsel %vm209, %v1878, 0
        %v1905 = vsel %vm209, %v1879, 0
        %v1908 = vsel %vm209, %v1880, 0
        %v1911 = vsel %vm209, %v1881, 0
        %v1914 = vsel %vm209, %v1882, 0
        %v1917 = vsel %vm209, %v1883, 0
        %v1920 = vsel %vm209, %v1884, 0
        %v1923 = vsel %vm209, %v1885, 0
        %v1926 = vsel %vm209, %v1886, 0
        %v1929 = vsel %vm209, %v1887, 0
        %v1932 = vsel %vm209, %v1888, 0
        %v1935 = vsel %vm209, %v1889, 0
        %v1938 = vsel %vm209, %v1890, 0
        %v1941 = vsel %vm209, %v1891, 0
        %v1944 = vsel %vm209, %v1892, 0
        %v1947 = vsel %vm209, %v1893, 0
        %v1950 = vsel %vm760, %v1900, 0
        %1952 = vmatpush.msra.mxu0 0.0
        %1953 = vmatpush.msra.mxu0 0.0
        %1954 = vmatpush.msra.mxu0 0.0
        %1955 = vmatpush.msra.mxu0 0.0
        %1956 = vmatpush.msra.mxu0 0.0
        %1957 = vmatpush.msra.mxu0 0.0
        %1958 = vmatpush.msra.mxu0 0.0
        %1959 = vmatpush.msra.mxu0 0.0
        %1960 = vmatpush.msra.mxu0 0.0
        %1961 = vmatpush.msra.mxu0 0.0
        %1962 = vmatpush.msra.mxu0 %v1950
        %1963 = vmatpush.msra.mxu0 %v1899
        %1964 = vmatpush.msra.mxu0 %v1898
        %1965 = vmatpush.msra.mxu0 %v1897
        %1966 = vmatpush.msra.mxu0 %v1896
        %1967 = vmatpush.msra.mxu0 %v1895
        %1968 = vmatmul.f32.gmra.mxu0 %v1902
        %v1969 = vpop.f32.mrf.mxu0
        %v1970 = vadd.f32 0.0, %v1969
        %1971 = vmatmul.f32.gmra.mxu0 %v1905
        %v1972 = vpop.f32.mrf.mxu0
        %v1973 = vadd.f32 0.0, %v1972
        %1974 = vmatmul.f32.gmra.mxu0 %v1908
        %v1975 = vpop.f32.mrf.mxu0
        %v1976 = vadd.f32 0.0, %v1975
        %1977 = vmatmul.f32.gmra.mxu0 %v1911
        %v1978 = vpop.f32.mrf.mxu0
        %v1979 = vadd.f32 0.0, %v1978
        %1980 = vmatmul.f32.gmra.mxu0 %v1914
        %v1981 = vpop.f32.mrf.mxu0
        %v1982 = vadd.f32 0.0, %v1981
        %1983 = vmatmul.f32.gmra.mxu0 %v1917
        %v1984 = vpop.f32.mrf.mxu0
        %v1985 = vadd.f32 0.0, %v1984
        %1986 = vmatmul.f32.gmra.mxu0 %v1920
        %v1987 = vpop.f32.mrf.mxu0
        %v1988 = vadd.f32 0.0, %v1987
        %1989 = vmatmul.f32.gmra.mxu0 %v1923
        %v1990 = vpop.f32.mrf.mxu0
        %v1991 = vadd.f32 0.0, %v1990
        %1992 = vmatmul.f32.gmra.mxu0 %v1926
        %v1993 = vpop.f32.mrf.mxu0
        %v1994 = vadd.f32 0.0, %v1993
        %1995 = vmatmul.f32.gmra.mxu0 %v1929
        %v1996 = vpop.f32.mrf.mxu0
        %v1997 = vadd.f32 0.0, %v1996
        %1998 = vmatmul.f32.gmra.mxu0 %v1932
        %v1999 = vpop.f32.mrf.mxu0
        %v2000 = vadd.f32 0.0, %v1999
        %2001 = vmatmul.f32.gmra.mxu0 %v1935
        %v2002 = vpop.f32.mrf.mxu0
        %v2003 = vadd.f32 0.0, %v2002
        %2004 = vmatmul.f32.gmra.mxu0 %v1938
        %v2005 = vpop.f32.mrf.mxu0
        %v2006 = vadd.f32 0.0, %v2005
        %2007 = vmatmul.f32.gmra.mxu0 %v1941
        %v2008 = vpop.f32.mrf.mxu0
        %v2009 = vadd.f32 0.0, %v2008
        %2010 = vmatmul.f32.gmra.mxu0 %v1944
        %v2011 = vpop.f32.mrf.mxu0
        %v2012 = vadd.f32 0.0, %v2011
        %2013 = vmatmul.f32.gmra.mxu0 %v1947
        %v2014 = vpop.f32.mrf.mxu0
        %v2015 = vadd.f32 0.0, %v2014
        %2016 = vdwg.mxu0
        %v2017 = vadd.f32 %v1862, %v1970
        %v2018 = vadd.f32 %v1863, %v1973
        %v2019 = vadd.f32 %v1864, %v1976
        %v2020 = vadd.f32 %v1865, %v1979
        %v2021 = vadd.f32 %v1866, %v1982
        %v2022 = vadd.f32 %v1867, %v1985
        %v2023 = vadd.f32 %v1868, %v1988
        %v2024 = vadd.f32 %v1869, %v1991
        %v2025 = vadd.f32 %v1870, %v1994
        %v2026 = vadd.f32 %v1871, %v1997
        %v2027 = vadd.f32 %v1872, %v2000
        %v2028 = vadd.f32 %v1873, %v2003
        %v2029 = vadd.f32 %v1874, %v2006
        %v2030 = vadd.f32 %v1875, %v2009
        %v2031 = vadd.f32 %v1876, %v2012
        %v2032 = vadd.f32 %v1877, %v2015
        %v2033 = vld [vmem:[%s1722 + $0x2] sm:$0xff]
        %v2034 = vld [vmem:[%s1722 + $0xa] sm:$0xff]
        %v2035 = vld [vmem:[%s1722 + $0x1a] sm:$0xff]
        %v2036 = vld [vmem:[%s1722 + $0x22] sm:$0xff]
        %v2037 = vld [vmem:[%s1722 + $0x32] sm:$0xff]
        %v2038 = vld [vmem:[%s1722 + $0x3a] sm:$0xff]
        %v2039 = vld [vmem:[%s1722 + $0x4a] sm:$0xff]
        %v2040 = vld [vmem:[%s1722 + $0x52] sm:$0xff]
        %v2041 = vld [vmem:[%s1722 + $0x62] sm:$0xff]
        %v2042 = vld [vmem:[%s1722 + $0x6a] sm:$0xff]
        %v2043 = vld [vmem:[%s1722 + $0x7a] sm:$0xff]
        %v2044 = vld [vmem:[%s1722 + $0x82] sm:$0xff]
        %v2045 = vld [vmem:[%s1722 + $0x92] sm:$0xff]
        %v2046 = vld [vmem:[%s1722 + $0x9a] sm:$0xff]
        %v2047 = vld [vmem:[%s1722 + $0xaa] sm:$0xff]
        %v2048 = vld [vmem:[%s1722 + $0xb2] sm:$0xff]
        %s2049 = scalar_lea.vmem %s1, 432
        %v2050 = vld [vmem:[%s2049] sm:$0xff]
        %v2051 = vld [vmem:[%s2049 + $0x8] sm:$0xff]
        %v2052 = vld [vmem:[%s2049 + $0x10] sm:$0xff]
        %v2053 = vld [vmem:[%s2049 + $0x18] sm:$0xff]
        %v2054 = vld [vmem:[%s2049 + $0x20] sm:$0xff]
        %v2055 = vld [vmem:[%s2049 + $0x28] sm:$0xf]
        %v2057 = vsel %vm209, %v2033, 0
        %v2060 = vsel %vm209, %v2034, 0
        %v2063 = vsel %vm209, %v2035, 0
        %v2066 = vsel %vm209, %v2036, 0
        %v2069 = vsel %vm209, %v2037, 0
        %v2072 = vsel %vm209, %v2038, 0
        %v2075 = vsel %vm209, %v2039, 0
        %v2078 = vsel %vm209, %v2040, 0
        %v2081 = vsel %vm209, %v2041, 0
        %v2084 = vsel %vm209, %v2042, 0
        %v2087 = vsel %vm209, %v2043, 0
        %v2090 = vsel %vm209, %v2044, 0
        %v2093 = vsel %vm209, %v2045, 0
        %v2096 = vsel %vm209, %v2046, 0
        %v2099 = vsel %vm209, %v2047, 0
        %v2102 = vsel %vm209, %v2048, 0
        %v2105 = vsel %vm760, %v2055, 0
        %2107 = vmatpush.msra.mxu0 0.0
        %2108 = vmatpush.msra.mxu0 0.0
        %2109 = vmatpush.msra.mxu0 0.0
        %2110 = vmatpush.msra.mxu0 0.0
        %2111 = vmatpush.msra.mxu0 0.0
        %2112 = vmatpush.msra.mxu0 0.0
        %2113 = vmatpush.msra.mxu0 0.0
        %2114 = vmatpush.msra.mxu0 0.0
        %2115 = vmatpush.msra.mxu0 0.0
        %2116 = vmatpush.msra.mxu0 0.0
        %2117 = vmatpush.msra.mxu0 %v2105
        %2118 = vmatpush.msra.mxu0 %v2054
        %2119 = vmatpush.msra.mxu0 %v2053
        %2120 = vmatpush.msra.mxu0 %v2052
        %2121 = vmatpush.msra.mxu0 %v2051
        %2122 = vmatpush.msra.mxu0 %v2050
        %2123 = vmatmul.f32.gmra.mxu0 %v2057
        %v2124 = vpop.f32.mrf.mxu0
        %v2125 = vadd.f32 0.0, %v2124
        %2126 = vmatmul.f32.gmra.mxu0 %v2060
        %v2127 = vpop.f32.mrf.mxu0
        %v2128 = vadd.f32 0.0, %v2127
        %2129 = vmatmul.f32.gmra.mxu0 %v2063
        %v2130 = vpop.f32.mrf.mxu0
        %v2131 = vadd.f32 0.0, %v2130
        %2132 = vmatmul.f32.gmra.mxu0 %v2066
        %v2133 = vpop.f32.mrf.mxu0
        %v2134 = vadd.f32 0.0, %v2133
        %2135 = vmatmul.f32.gmra.mxu0 %v2069
        %v2136 = vpop.f32.mrf.mxu0
        %v2137 = vadd.f32 0.0, %v2136
        %2138 = vmatmul.f32.gmra.mxu0 %v2072
        %v2139 = vpop.f32.mrf.mxu0
        %v2140 = vadd.f32 0.0, %v2139
        %2141 = vmatmul.f32.gmra.mxu0 %v2075
        %v2142 = vpop.f32.mrf.mxu0
        %v2143 = vadd.f32 0.0, %v2142
        %2144 = vmatmul.f32.gmra.mxu0 %v2078
        %v2145 = vpop.f32.mrf.mxu0
        %v2146 = vadd.f32 0.0, %v2145
        %2147 = vmatmul.f32.gmra.mxu0 %v2081
        %v2148 = vpop.f32.mrf.mxu0
        %v2149 = vadd.f32 0.0, %v2148
        %2150 = vmatmul.f32.gmra.mxu0 %v2084
        %v2151 = vpop.f32.mrf.mxu0
        %v2152 = vadd.f32 0.0, %v2151
        %2153 = vmatmul.f32.gmra.mxu0 %v2087
        %v2154 = vpop.f32.mrf.mxu0
        %v2155 = vadd.f32 0.0, %v2154
        %2156 = vmatmul.f32.gmra.mxu0 %v2090
        %v2157 = vpop.f32.mrf.mxu0
        %v2158 = vadd.f32 0.0, %v2157
        %2159 = vmatmul.f32.gmra.mxu0 %v2093
        %v2160 = vpop.f32.mrf.mxu0
        %v2161 = vadd.f32 0.0, %v2160
        %2162 = vmatmul.f32.gmra.mxu0 %v2096
        %v2163 = vpop.f32.mrf.mxu0
        %v2164 = vadd.f32 0.0, %v2163
        %2165 = vmatmul.f32.gmra.mxu0 %v2099
        %v2166 = vpop.f32.mrf.mxu0
        %v2167 = vadd.f32 0.0, %v2166
        %2168 = vmatmul.f32.gmra.mxu0 %v2102
        %v2169 = vpop.f32.mrf.mxu0
        %v2170 = vadd.f32 0.0, %v2169
        %2171 = vdwg.mxu0
        %v2172 = vadd.f32 %v2017, %v2125
        %v2173 = vadd.f32 %v2018, %v2128
        %v2174 = vadd.f32 %v2019, %v2131
        %v2175 = vadd.f32 %v2020, %v2134
        %v2176 = vadd.f32 %v2021, %v2137
        %v2177 = vadd.f32 %v2022, %v2140
        %v2178 = vadd.f32 %v2023, %v2143
        %v2179 = vadd.f32 %v2024, %v2146
        %v2180 = vadd.f32 %v2025, %v2149
        %v2181 = vadd.f32 %v2026, %v2152
        %v2182 = vadd.f32 %v2027, %v2155
        %v2183 = vadd.f32 %v2028, %v2158
        %v2184 = vadd.f32 %v2029, %v2161
        %v2185 = vadd.f32 %v2030, %v2164
        %v2186 = vadd.f32 %v2031, %v2167
        %v2187 = vadd.f32 %v2032, %v2170
        %v2188 = vld [vmem:[%s1722 + $0x3] sm:$0xff]
        %v2189 = vld [vmem:[%s1722 + $0xb] sm:$0xff]
        %v2190 = vld [vmem:[%s1722 + $0x1b] sm:$0xff]
        %v2191 = vld [vmem:[%s1722 + $0x23] sm:$0xff]
        %v2192 = vld [vmem:[%s1722 + $0x33] sm:$0xff]
        %v2193 = vld [vmem:[%s1722 + $0x3b] sm:$0xff]
        %v2194 = vld [vmem:[%s1722 + $0x4b] sm:$0xff]
        %v2195 = vld [vmem:[%s1722 + $0x53] sm:$0xff]
        %v2196 = vld [vmem:[%s1722 + $0x63] sm:$0xff]
        %v2197 = vld [vmem:[%s1722 + $0x6b] sm:$0xff]
        %v2198 = vld [vmem:[%s1722 + $0x7b] sm:$0xff]
        %v2199 = vld [vmem:[%s1722 + $0x83] sm:$0xff]
        %v2200 = vld [vmem:[%s1722 + $0x93] sm:$0xff]
        %v2201 = vld [vmem:[%s1722 + $0x9b] sm:$0xff]
        %v2202 = vld [vmem:[%s1722 + $0xab] sm:$0xff]
        %v2203 = vld [vmem:[%s1722 + $0xb3] sm:$0xff]
        %s2204 = scalar_lea.vmem %s1, 480
        %v2205 = vld [vmem:[%s2204] sm:$0xff]
        %v2206 = vld [vmem:[%s2204 + $0x8] sm:$0xff]
        %v2207 = vld [vmem:[%s2204 + $0x10] sm:$0xff]
        %v2208 = vld [vmem:[%s2204 + $0x18] sm:$0xff]
        %v2209 = vld [vmem:[%s2204 + $0x20] sm:$0xff]
        %v2210 = vld [vmem:[%s2204 + $0x28] sm:$0xf]
        %v2212 = vsel %vm209, %v2188, 0
        %v2215 = vsel %vm209, %v2189, 0
        %v2218 = vsel %vm209, %v2190, 0
        %v2221 = vsel %vm209, %v2191, 0
        %v2224 = vsel %vm209, %v2192, 0
        %v2227 = vsel %vm209, %v2193, 0
        %v2230 = vsel %vm209, %v2194, 0
        %v2233 = vsel %vm209, %v2195, 0
        %v2236 = vsel %vm209, %v2196, 0
        %v2239 = vsel %vm209, %v2197, 0
        %v2242 = vsel %vm209, %v2198, 0
        %v2245 = vsel %vm209, %v2199, 0
        %v2248 = vsel %vm209, %v2200, 0
        %v2251 = vsel %vm209, %v2201, 0
        %v2254 = vsel %vm209, %v2202, 0
        %v2257 = vsel %vm209, %v2203, 0
        %v2260 = vsel %vm760, %v2210, 0
        %2262 = vmatpush.msra.mxu0 0.0
        %2263 = vmatpush.msra.mxu0 0.0
        %2264 = vmatpush.msra.mxu0 0.0
        %2265 = vmatpush.msra.mxu0 0.0
        %2266 = vmatpush.msra.mxu0 0.0
        %2267 = vmatpush.msra.mxu0 0.0
        %2268 = vmatpush.msra.mxu0 0.0
        %2269 = vmatpush.msra.mxu0 0.0
        %2270 = vmatpush.msra.mxu0 0.0
        %2271 = vmatpush.msra.mxu0 0.0
        %2272 = vmatpush.msra.mxu0 %v2260
        %2273 = vmatpush.msra.mxu0 %v2209
        %2274 = vmatpush.msra.mxu0 %v2208
        %2275 = vmatpush.msra.mxu0 %v2207
        %2276 = vmatpush.msra.mxu0 %v2206
        %2277 = vmatpush.msra.mxu0 %v2205
        %2278 = vmatmul.f32.gmra.mxu0 %v2212
        %v2279 = vpop.f32.mrf.mxu0
        %v2280 = vadd.f32 0.0, %v2279
        %2281 = vmatmul.f32.gmra.mxu0 %v2215
        %v2282 = vpop.f32.mrf.mxu0
        %v2283 = vadd.f32 0.0, %v2282
        %2284 = vmatmul.f32.gmra.mxu0 %v2218
        %v2285 = vpop.f32.mrf.mxu0
        %v2286 = vadd.f32 0.0, %v2285
        %2287 = vmatmul.f32.gmra.mxu0 %v2221
        %v2288 = vpop.f32.mrf.mxu0
        %v2289 = vadd.f32 0.0, %v2288
        %2290 = vmatmul.f32.gmra.mxu0 %v2224
        %v2291 = vpop.f32.mrf.mxu0
        %v2292 = vadd.f32 0.0, %v2291
        %2293 = vmatmul.f32.gmra.mxu0 %v2227
        %v2294 = vpop.f32.mrf.mxu0
        %v2295 = vadd.f32 0.0, %v2294
        %2296 = vmatmul.f32.gmra.mxu0 %v2230
        %v2297 = vpop.f32.mrf.mxu0
        %v2298 = vadd.f32 0.0, %v2297
        %2299 = vmatmul.f32.gmra.mxu0 %v2233
        %v2300 = vpop.f32.mrf.mxu0
        %v2301 = vadd.f32 0.0, %v2300
        %2302 = vmatmul.f32.gmra.mxu0 %v2236
        %v2303 = vpop.f32.mrf.mxu0
        %v2304 = vadd.f32 0.0, %v2303
        %2305 = vmatmul.f32.gmra.mxu0 %v2239
        %v2306 = vpop.f32.mrf.mxu0
        %v2307 = vadd.f32 0.0, %v2306
        %2308 = vmatmul.f32.gmra.mxu0 %v2242
        %v2309 = vpop.f32.mrf.mxu0
        %v2310 = vadd.f32 0.0, %v2309
        %2311 = vmatmul.f32.gmra.mxu0 %v2245
        %v2312 = vpop.f32.mrf.mxu0
        %v2313 = vadd.f32 0.0, %v2312
        %2314 = vmatmul.f32.gmra.mxu0 %v2248
        %v2315 = vpop.f32.mrf.mxu0
        %v2316 = vadd.f32 0.0, %v2315
        %2317 = vmatmul.f32.gmra.mxu0 %v2251
        %v2318 = vpop.f32.mrf.mxu0
        %v2319 = vadd.f32 0.0, %v2318
        %2320 = vmatmul.f32.gmra.mxu0 %v2254
        %v2321 = vpop.f32.mrf.mxu0
        %v2322 = vadd.f32 0.0, %v2321
        %2323 = vmatmul.f32.gmra.mxu0 %v2257
        %v2324 = vpop.f32.mrf.mxu0
        %v2325 = vadd.f32 0.0, %v2324
        %2326 = vdwg.mxu0
        %v2327 = vadd.f32 %v2172, %v2280
        %v2328 = vadd.f32 %v2173, %v2283
        %v2329 = vadd.f32 %v2174, %v2286
        %v2330 = vadd.f32 %v2175, %v2289
        %v2331 = vadd.f32 %v2176, %v2292
        %v2332 = vadd.f32 %v2177, %v2295
        %v2333 = vadd.f32 %v2178, %v2298
        %v2334 = vadd.f32 %v2179, %v2301
        %v2335 = vadd.f32 %v2180, %v2304
        %v2336 = vadd.f32 %v2181, %v2307
        %v2337 = vadd.f32 %v2182, %v2310
        %v2338 = vadd.f32 %v2183, %v2313
        %v2339 = vadd.f32 %v2184, %v2316
        %v2340 = vadd.f32 %v2185, %v2319
        %v2341 = vadd.f32 %v2186, %v2322
        %v2342 = vadd.f32 %v2187, %v2325
        %v2343 = vld [vmem:[%s1722 + $0x4] sm:$0xff]
        %v2344 = vld [vmem:[%s1722 + $0xc] sm:$0xff]
        %v2345 = vld [vmem:[%s1722 + $0x1c] sm:$0xff]
        %v2346 = vld [vmem:[%s1722 + $0x24] sm:$0xff]
        %v2347 = vld [vmem:[%s1722 + $0x34] sm:$0xff]
        %v2348 = vld [vmem:[%s1722 + $0x3c] sm:$0xff]
        %v2349 = vld [vmem:[%s1722 + $0x4c] sm:$0xff]
        %v2350 = vld [vmem:[%s1722 + $0x54] sm:$0xff]
        %v2351 = vld [vmem:[%s1722 + $0x64] sm:$0xff]
        %v2352 = vld [vmem:[%s1722 + $0x6c] sm:$0xff]
        %v2353 = vld [vmem:[%s1722 + $0x7c] sm:$0xff]
        %v2354 = vld [vmem:[%s1722 + $0x84] sm:$0xff]
        %v2355 = vld [vmem:[%s1722 + $0x94] sm:$0xff]
        %v2356 = vld [vmem:[%s1722 + $0x9c] sm:$0xff]
        %v2357 = vld [vmem:[%s1722 + $0xac] sm:$0xff]
        %v2358 = vld [vmem:[%s1722 + $0xb4] sm:$0xff]
        %s2359 = scalar_lea.vmem %s1, 528
        %v2360 = vld [vmem:[%s2359] sm:$0xff]
        %v2361 = vld [vmem:[%s2359 + $0x8] sm:$0xff]
        %v2362 = vld [vmem:[%s2359 + $0x10] sm:$0xff]
        %v2363 = vld [vmem:[%s2359 + $0x18] sm:$0xff]
        %v2364 = vld [vmem:[%s2359 + $0x20] sm:$0xff]
        %v2365 = vld [vmem:[%s2359 + $0x28] sm:$0xf]
        %v2367 = vsel %vm209, %v2343, 0
        %v2370 = vsel %vm209, %v2344, 0
        %v2373 = vsel %vm209, %v2345, 0
        %v2376 = vsel %vm209, %v2346, 0
        %v2379 = vsel %vm209, %v2347, 0
        %v2382 = vsel %vm209, %v2348, 0
        %v2385 = vsel %vm209, %v2349, 0
        %v2388 = vsel %vm209, %v2350, 0
        %v2391 = vsel %vm209, %v2351, 0
        %v2394 = vsel %vm209, %v2352, 0
        %v2397 = vsel %vm209, %v2353, 0
        %v2400 = vsel %vm209, %v2354, 0
        %v2403 = vsel %vm209, %v2355, 0
        %v2406 = vsel %vm209, %v2356, 0
        %v2409 = vsel %vm209, %v2357, 0
        %v2412 = vsel %vm209, %v2358, 0
        %v2415 = vsel %vm760, %v2365, 0
        %2417 = vmatpush.msra.mxu0 0.0
        %2418 = vmatpush.msra.mxu0 0.0
        %2419 = vmatpush.msra.mxu0 0.0
        %2420 = vmatpush.msra.mxu0 0.0
        %2421 = vmatpush.msra.mxu0 0.0
        %2422 = vmatpush.msra.mxu0 0.0
        %2423 = vmatpush.msra.mxu0 0.0
        %2424 = vmatpush.msra.mxu0 0.0
        %2425 = vmatpush.msra.mxu0 0.0
        %2426 = vmatpush.msra.mxu0 0.0
        %2427 = vmatpush.msra.mxu0 %v2415
        %2428 = vmatpush.msra.mxu0 %v2364
        %2429 = vmatpush.msra.mxu0 %v2363
        %2430 = vmatpush.msra.mxu0 %v2362
        %2431 = vmatpush.msra.mxu0 %v2361
        %2432 = vmatpush.msra.mxu0 %v2360
        %2433 = vmatmul.f32.gmra.mxu0 %v2367
        %v2434 = vpop.f32.mrf.mxu0
        %v2435 = vadd.f32 0.0, %v2434
        %2436 = vmatmul.f32.gmra.mxu0 %v2370
        %v2437 = vpop.f32.mrf.mxu0
        %v2438 = vadd.f32 0.0, %v2437
        %2439 = vmatmul.f32.gmra.mxu0 %v2373
        %v2440 = vpop.f32.mrf.mxu0
        %v2441 = vadd.f32 0.0, %v2440
        %2442 = vmatmul.f32.gmra.mxu0 %v2376
        %v2443 = vpop.f32.mrf.mxu0
        %v2444 = vadd.f32 0.0, %v2443
        %2445 = vmatmul.f32.gmra.mxu0 %v2379
        %v2446 = vpop.f32.mrf.mxu0
        %v2447 = vadd.f32 0.0, %v2446
        %2448 = vmatmul.f32.gmra.mxu0 %v2382
        %v2449 = vpop.f32.mrf.mxu0
        %v2450 = vadd.f32 0.0, %v2449
        %2451 = vmatmul.f32.gmra.mxu0 %v2385
        %v2452 = vpop.f32.mrf.mxu0
        %v2453 = vadd.f32 0.0, %v2452
        %2454 = vmatmul.f32.gmra.mxu0 %v2388
        %v2455 = vpop.f32.mrf.mxu0
        %v2456 = vadd.f32 0.0, %v2455
        %2457 = vmatmul.f32.gmra.mxu0 %v2391
        %v2458 = vpop.f32.mrf.mxu0
        %v2459 = vadd.f32 0.0, %v2458
        %2460 = vmatmul.f32.gmra.mxu0 %v2394
        %v2461 = vpop.f32.mrf.mxu0
        %v2462 = vadd.f32 0.0, %v2461
        %2463 = vmatmul.f32.gmra.mxu0 %v2397
        %v2464 = vpop.f32.mrf.mxu0
        %v2465 = vadd.f32 0.0, %v2464
        %2466 = vmatmul.f32.gmra.mxu0 %v2400
        %v2467 = vpop.f32.mrf.mxu0
        %v2468 = vadd.f32 0.0, %v2467
        %2469 = vmatmul.f32.gmra.mxu0 %v2403
        %v2470 = vpop.f32.mrf.mxu0
        %v2471 = vadd.f32 0.0, %v2470
        %2472 = vmatmul.f32.gmra.mxu0 %v2406
        %v2473 = vpop.f32.mrf.mxu0
        %v2474 = vadd.f32 0.0, %v2473
        %2475 = vmatmul.f32.gmra.mxu0 %v2409
        %v2476 = vpop.f32.mrf.mxu0
        %v2477 = vadd.f32 0.0, %v2476
        %2478 = vmatmul.f32.gmra.mxu0 %v2412
        %v2479 = vpop.f32.mrf.mxu0
        %v2480 = vadd.f32 0.0, %v2479
        %2481 = vdwg.mxu0
        %v2482 = vadd.f32 %v2327, %v2435
        %v2483 = vadd.f32 %v2328, %v2438
        %v2484 = vadd.f32 %v2329, %v2441
        %v2485 = vadd.f32 %v2330, %v2444
        %v2486 = vadd.f32 %v2331, %v2447
        %v2487 = vadd.f32 %v2332, %v2450
        %v2488 = vadd.f32 %v2333, %v2453
        %v2489 = vadd.f32 %v2334, %v2456
        %v2490 = vadd.f32 %v2335, %v2459
        %v2491 = vadd.f32 %v2336, %v2462
        %v2492 = vadd.f32 %v2337, %v2465
        %v2493 = vadd.f32 %v2338, %v2468
        %v2494 = vadd.f32 %v2339, %v2471
        %v2495 = vadd.f32 %v2340, %v2474
        %v2496 = vadd.f32 %v2341, %v2477
        %v2497 = vadd.f32 %v2342, %v2480
        %v2498 = vld [vmem:[%s1722 + $0x5] sm:$0xff]
        %v2499 = vld [vmem:[%s1722 + $0xd] sm:$0xff]
        %v2500 = vld [vmem:[%s1722 + $0x1d] sm:$0xff]
        %v2501 = vld [vmem:[%s1722 + $0x25] sm:$0xff]
        %v2502 = vld [vmem:[%s1722 + $0x35] sm:$0xff]
        %v2503 = vld [vmem:[%s1722 + $0x3d] sm:$0xff]
        %v2504 = vld [vmem:[%s1722 + $0x4d] sm:$0xff]
        %v2505 = vld [vmem:[%s1722 + $0x55] sm:$0xff]
        %v2506 = vld [vmem:[%s1722 + $0x65] sm:$0xff]
        %v2507 = vld [vmem:[%s1722 + $0x6d] sm:$0xff]
        %v2508 = vld [vmem:[%s1722 + $0x7d] sm:$0xff]
        %v2509 = vld [vmem:[%s1722 + $0x85] sm:$0xff]
        %v2510 = vld [vmem:[%s1722 + $0x95] sm:$0xff]
        %v2511 = vld [vmem:[%s1722 + $0x9d] sm:$0xff]
        %v2512 = vld [vmem:[%s1722 + $0xad] sm:$0xff]
        %v2513 = vld [vmem:[%s1722 + $0xb5] sm:$0xff]
        %s2514 = scalar_lea.vmem %s1, 576
        %v2515 = vld [vmem:[%s2514] sm:$0xff]
        %v2516 = vld [vmem:[%s2514 + $0x8] sm:$0xff]
        %v2517 = vld [vmem:[%s2514 + $0x10] sm:$0xff]
        %v2518 = vld [vmem:[%s2514 + $0x18] sm:$0xff]
        %v2519 = vld [vmem:[%s2514 + $0x20] sm:$0xff]
        %v2520 = vld [vmem:[%s2514 + $0x28] sm:$0xf]
        %v2522 = vsel %vm209, %v2498, 0
        %v2525 = vsel %vm209, %v2499, 0
        %v2528 = vsel %vm209, %v2500, 0
        %v2531 = vsel %vm209, %v2501, 0
        %v2534 = vsel %vm209, %v2502, 0
        %v2537 = vsel %vm209, %v2503, 0
        %v2540 = vsel %vm209, %v2504, 0
        %v2543 = vsel %vm209, %v2505, 0
        %v2546 = vsel %vm209, %v2506, 0
        %v2549 = vsel %vm209, %v2507, 0
        %v2552 = vsel %vm209, %v2508, 0
        %v2555 = vsel %vm209, %v2509, 0
        %v2558 = vsel %vm209, %v2510, 0
        %v2561 = vsel %vm209, %v2511, 0
        %v2564 = vsel %vm209, %v2512, 0
        %v2567 = vsel %vm209, %v2513, 0
        %v2570 = vsel %vm760, %v2520, 0
        %2572 = vmatpush.msra.mxu0 0.0
        %2573 = vmatpush.msra.mxu0 0.0
        %2574 = vmatpush.msra.mxu0 0.0
        %2575 = vmatpush.msra.mxu0 0.0
        %2576 = vmatpush.msra.mxu0 0.0
        %2577 = vmatpush.msra.mxu0 0.0
        %2578 = vmatpush.msra.mxu0 0.0
        %2579 = vmatpush.msra.mxu0 0.0
        %2580 = vmatpush.msra.mxu0 0.0
        %2581 = vmatpush.msra.mxu0 0.0
        %2582 = vmatpush.msra.mxu0 %v2570
        %2583 = vmatpush.msra.mxu0 %v2519
        %2584 = vmatpush.msra.mxu0 %v2518
        %2585 = vmatpush.msra.mxu0 %v2517
        %2586 = vmatpush.msra.mxu0 %v2516
        %2587 = vmatpush.msra.mxu0 %v2515
        %2588 = vmatmul.f32.gmra.mxu0 %v2522
        %v2589 = vpop.f32.mrf.mxu0
        %v2590 = vadd.f32 0.0, %v2589
        %2591 = vmatmul.f32.gmra.mxu0 %v2525
        %v2592 = vpop.f32.mrf.mxu0
        %v2593 = vadd.f32 0.0, %v2592
        %2594 = vmatmul.f32.gmra.mxu0 %v2528
        %v2595 = vpop.f32.mrf.mxu0
        %v2596 = vadd.f32 0.0, %v2595
        %2597 = vmatmul.f32.gmra.mxu0 %v2531
        %v2598 = vpop.f32.mrf.mxu0
        %v2599 = vadd.f32 0.0, %v2598
        %2600 = vmatmul.f32.gmra.mxu0 %v2534
        %v2601 = vpop.f32.mrf.mxu0
        %v2602 = vadd.f32 0.0, %v2601
        %2603 = vmatmul.f32.gmra.mxu0 %v2537
        %v2604 = vpop.f32.mrf.mxu0
        %v2605 = vadd.f32 0.0, %v2604
        %2606 = vmatmul.f32.gmra.mxu0 %v2540
        %v2607 = vpop.f32.mrf.mxu0
        %v2608 = vadd.f32 0.0, %v2607
        %2609 = vmatmul.f32.gmra.mxu0 %v2543
        %v2610 = vpop.f32.mrf.mxu0
        %v2611 = vadd.f32 0.0, %v2610
        %2612 = vmatmul.f32.gmra.mxu0 %v2546
        %v2613 = vpop.f32.mrf.mxu0
        %v2614 = vadd.f32 0.0, %v2613
        %2615 = vmatmul.f32.gmra.mxu0 %v2549
        %v2616 = vpop.f32.mrf.mxu0
        %v2617 = vadd.f32 0.0, %v2616
        %2618 = vmatmul.f32.gmra.mxu0 %v2552
        %v2619 = vpop.f32.mrf.mxu0
        %v2620 = vadd.f32 0.0, %v2619
        %2621 = vmatmul.f32.gmra.mxu0 %v2555
        %v2622 = vpop.f32.mrf.mxu0
        %v2623 = vadd.f32 0.0, %v2622
        %2624 = vmatmul.f32.gmra.mxu0 %v2558
        %v2625 = vpop.f32.mrf.mxu0
        %v2626 = vadd.f32 0.0, %v2625
        %2627 = vmatmul.f32.gmra.mxu0 %v2561
        %v2628 = vpop.f32.mrf.mxu0
        %v2629 = vadd.f32 0.0, %v2628
        %2630 = vmatmul.f32.gmra.mxu0 %v2564
        %v2631 = vpop.f32.mrf.mxu0
        %v2632 = vadd.f32 0.0, %v2631
        %2633 = vmatmul.f32.gmra.mxu0 %v2567
        %v2634 = vpop.f32.mrf.mxu0
        %v2635 = vadd.f32 0.0, %v2634
        %2636 = vdwg.mxu0
        %v2637 = vadd.f32 %v2482, %v2590
        %v2638 = vadd.f32 %v2483, %v2593
        %v2639 = vadd.f32 %v2484, %v2596
        %v2640 = vadd.f32 %v2485, %v2599
        %v2641 = vadd.f32 %v2486, %v2602
        %v2642 = vadd.f32 %v2487, %v2605
        %v2643 = vadd.f32 %v2488, %v2608
        %v2644 = vadd.f32 %v2489, %v2611
        %v2645 = vadd.f32 %v2490, %v2614
        %v2646 = vadd.f32 %v2491, %v2617
        %v2647 = vadd.f32 %v2492, %v2620
        %v2648 = vadd.f32 %v2493, %v2623
        %v2649 = vadd.f32 %v2494, %v2626
        %v2650 = vadd.f32 %v2495, %v2629
        %v2651 = vadd.f32 %v2496, %v2632
        %v2652 = vadd.f32 %v2497, %v2635
        %v2653 = vld [vmem:[%s1722 + $0x6] sm:$0xff]
        %v2654 = vld [vmem:[%s1722 + $0xe] sm:$0xff]
        %v2655 = vld [vmem:[%s1722 + $0x1e] sm:$0xff]
        %v2656 = vld [vmem:[%s1722 + $0x26] sm:$0xff]
        %v2657 = vld [vmem:[%s1722 + $0x36] sm:$0xff]
        %v2658 = vld [vmem:[%s1722 + $0x3e] sm:$0xff]
        %v2659 = vld [vmem:[%s1722 + $0x4e] sm:$0xff]
        %v2660 = vld [vmem:[%s1722 + $0x56] sm:$0xff]
        %v2661 = vld [vmem:[%s1722 + $0x66] sm:$0xff]
        %v2662 = vld [vmem:[%s1722 + $0x6e] sm:$0xff]
        %v2663 = vld [vmem:[%s1722 + $0x7e] sm:$0xff]
        %v2664 = vld [vmem:[%s1722 + $0x86] sm:$0xff]
        %v2665 = vld [vmem:[%s1722 + $0x96] sm:$0xff]
        %v2666 = vld [vmem:[%s1722 + $0x9e] sm:$0xff]
        %v2667 = vld [vmem:[%s1722 + $0xae] sm:$0xff]
        %v2668 = vld [vmem:[%s1722 + $0xb6] sm:$0xff]
        %s2669 = scalar_lea.vmem %s1, 624
        %v2670 = vld [vmem:[%s2669] sm:$0xff]
        %v2671 = vld [vmem:[%s2669 + $0x8] sm:$0xff]
        %v2672 = vld [vmem:[%s2669 + $0x10] sm:$0xff]
        %v2673 = vld [vmem:[%s2669 + $0x18] sm:$0xff]
        %v2674 = vld [vmem:[%s2669 + $0x20] sm:$0xff]
        %v2675 = vld [vmem:[%s2669 + $0x28] sm:$0xf]
        %v2677 = vsel %vm209, %v2653, 0
        %v2680 = vsel %vm209, %v2654, 0
        %v2683 = vsel %vm209, %v2655, 0
        %v2686 = vsel %vm209, %v2656, 0
        %v2689 = vsel %vm209, %v2657, 0
        %v2692 = vsel %vm209, %v2658, 0
        %v2695 = vsel %vm209, %v2659, 0
        %v2698 = vsel %vm209, %v2660, 0
        %v2701 = vsel %vm209, %v2661, 0
        %v2704 = vsel %vm209, %v2662, 0
        %v2707 = vsel %vm209, %v2663, 0
        %v2710 = vsel %vm209, %v2664, 0
        %v2713 = vsel %vm209, %v2665, 0
        %v2716 = vsel %vm209, %v2666, 0
        %v2719 = vsel %vm209, %v2667, 0
        %v2722 = vsel %vm209, %v2668, 0
        %v2725 = vsel %vm760, %v2675, 0
        %2727 = vmatpush.msra.mxu0 0.0
        %2728 = vmatpush.msra.mxu0 0.0
        %2729 = vmatpush.msra.mxu0 0.0
        %2730 = vmatpush.msra.mxu0 0.0
        %2731 = vmatpush.msra.mxu0 0.0
        %2732 = vmatpush.msra.mxu0 0.0
        %2733 = vmatpush.msra.mxu0 0.0
        %2734 = vmatpush.msra.mxu0 0.0
        %2735 = vmatpush.msra.mxu0 0.0
        %2736 = vmatpush.msra.mxu0 0.0
        %2737 = vmatpush.msra.mxu0 %v2725
        %2738 = vmatpush.msra.mxu0 %v2674
        %2739 = vmatpush.msra.mxu0 %v2673
        %2740 = vmatpush.msra.mxu0 %v2672
        %2741 = vmatpush.msra.mxu0 %v2671
        %2742 = vmatpush.msra.mxu0 %v2670
        %2743 = vmatmul.f32.gmra.mxu0 %v2677
        %v2744 = vpop.f32.mrf.mxu0
        %v2745 = vadd.f32 0.0, %v2744
        %2746 = vmatmul.f32.gmra.mxu0 %v2680
        %v2747 = vpop.f32.mrf.mxu0
        %v2748 = vadd.f32 0.0, %v2747
        %2749 = vmatmul.f32.gmra.mxu0 %v2683
        %v2750 = vpop.f32.mrf.mxu0
        %v2751 = vadd.f32 0.0, %v2750
        %2752 = vmatmul.f32.gmra.mxu0 %v2686
        %v2753 = vpop.f32.mrf.mxu0
        %v2754 = vadd.f32 0.0, %v2753
        %2755 = vmatmul.f32.gmra.mxu0 %v2689
        %v2756 = vpop.f32.mrf.mxu0
        %v2757 = vadd.f32 0.0, %v2756
        %2758 = vmatmul.f32.gmra.mxu0 %v2692
        %v2759 = vpop.f32.mrf.mxu0
        %v2760 = vadd.f32 0.0, %v2759
        %2761 = vmatmul.f32.gmra.mxu0 %v2695
        %v2762 = vpop.f32.mrf.mxu0
        %v2763 = vadd.f32 0.0, %v2762
        %2764 = vmatmul.f32.gmra.mxu0 %v2698
        %v2765 = vpop.f32.mrf.mxu0
        %v2766 = vadd.f32 0.0, %v2765
        %2767 = vmatmul.f32.gmra.mxu0 %v2701
        %v2768 = vpop.f32.mrf.mxu0
        %v2769 = vadd.f32 0.0, %v2768
        %2770 = vmatmul.f32.gmra.mxu0 %v2704
        %v2771 = vpop.f32.mrf.mxu0
        %v2772 = vadd.f32 0.0, %v2771
        %2773 = vmatmul.f32.gmra.mxu0 %v2707
        %v2774 = vpop.f32.mrf.mxu0
        %v2775 = vadd.f32 0.0, %v2774
        %2776 = vmatmul.f32.gmra.mxu0 %v2710
        %v2777 = vpop.f32.mrf.mxu0
        %v2778 = vadd.f32 0.0, %v2777
        %2779 = vmatmul.f32.gmra.mxu0 %v2713
        %v2780 = vpop.f32.mrf.mxu0
        %v2781 = vadd.f32 0.0, %v2780
        %2782 = vmatmul.f32.gmra.mxu0 %v2716
        %v2783 = vpop.f32.mrf.mxu0
        %v2784 = vadd.f32 0.0, %v2783
        %2785 = vmatmul.f32.gmra.mxu0 %v2719
        %v2786 = vpop.f32.mrf.mxu0
        %v2787 = vadd.f32 0.0, %v2786
        %2788 = vmatmul.f32.gmra.mxu0 %v2722
        %v2789 = vpop.f32.mrf.mxu0
        %v2790 = vadd.f32 0.0, %v2789
        %2791 = vdwg.mxu0
        %v2792 = vadd.f32 %v2637, %v2745
        %v2793 = vadd.f32 %v2638, %v2748
        %v2794 = vadd.f32 %v2639, %v2751
        %v2795 = vadd.f32 %v2640, %v2754
        %v2796 = vadd.f32 %v2641, %v2757
        %v2797 = vadd.f32 %v2642, %v2760
        %v2798 = vadd.f32 %v2643, %v2763
        %v2799 = vadd.f32 %v2644, %v2766
        %v2800 = vadd.f32 %v2645, %v2769
        %v2801 = vadd.f32 %v2646, %v2772
        %v2802 = vadd.f32 %v2647, %v2775
        %v2803 = vadd.f32 %v2648, %v2778
        %v2804 = vadd.f32 %v2649, %v2781
        %v2805 = vadd.f32 %v2650, %v2784
        %v2806 = vadd.f32 %v2651, %v2787
        %v2807 = vadd.f32 %v2652, %v2790
        %s2808 = sadd.s32 %s208, 2
        %s2809 = smul.u32 %s2808, 24
        %s2810 = scalar_lea.vmem [#allocation2], %s2809
        %v2811 = vld [vmem:[%s2810] sm:$0xff]
        %v2812 = vld [vmem:[%s2810 + $0x8] sm:$0xff]
        %v2813 = vld [vmem:[%s2810 + $0x18] sm:$0xff]
        %v2814 = vld [vmem:[%s2810 + $0x20] sm:$0xff]
        %v2815 = vld [vmem:[%s2810 + $0x30] sm:$0xff]
        %v2816 = vld [vmem:[%s2810 + $0x38] sm:$0xff]
        %v2817 = vld [vmem:[%s2810 + $0x48] sm:$0xff]
        %v2818 = vld [vmem:[%s2810 + $0x50] sm:$0xff]
        %v2819 = vld [vmem:[%s2810 + $0x60] sm:$0xff]
        %v2820 = vld [vmem:[%s2810 + $0x68] sm:$0xff]
        %v2821 = vld [vmem:[%s2810 + $0x78] sm:$0xff]
        %v2822 = vld [vmem:[%s2810 + $0x80] sm:$0xff]
        %v2823 = vld [vmem:[%s2810 + $0x90] sm:$0xff]
        %v2824 = vld [vmem:[%s2810 + $0x98] sm:$0xff]
        %v2825 = vld [vmem:[%s2810 + $0xa8] sm:$0xff]
        %v2826 = vld [vmem:[%s2810 + $0xb0] sm:$0xff]
        %s2827 = scalar_lea.vmem %s1, 672
        %v2828 = vld [vmem:[%s2827] sm:$0xff]
        %v2829 = vld [vmem:[%s2827 + $0x8] sm:$0xff]
        %v2830 = vld [vmem:[%s2827 + $0x10] sm:$0xff]
        %v2831 = vld [vmem:[%s2827 + $0x18] sm:$0xff]
        %v2832 = vld [vmem:[%s2827 + $0x20] sm:$0xff]
        %v2833 = vld [vmem:[%s2827 + $0x28] sm:$0xf]
        %v2835 = vsel %vm209, %v2811, 0
        %v2838 = vsel %vm209, %v2812, 0
        %v2841 = vsel %vm209, %v2813, 0
        %v2844 = vsel %vm209, %v2814, 0
        %v2847 = vsel %vm209, %v2815, 0
        %v2850 = vsel %vm209, %v2816, 0
        %v2853 = vsel %vm209, %v2817, 0
        %v2856 = vsel %vm209, %v2818, 0
        %v2859 = vsel %vm209, %v2819, 0
        %v2862 = vsel %vm209, %v2820, 0
        %v2865 = vsel %vm209, %v2821, 0
        %v2868 = vsel %vm209, %v2822, 0
        %v2871 = vsel %vm209, %v2823, 0
        %v2874 = vsel %vm209, %v2824, 0
        %v2877 = vsel %vm209, %v2825, 0
        %v2880 = vsel %vm209, %v2826, 0
        %v2883 = vsel %vm760, %v2833, 0
        %2885 = vmatpush.msra.mxu0 0.0
        %2886 = vmatpush.msra.mxu0 0.0
        %2887 = vmatpush.msra.mxu0 0.0
        %2888 = vmatpush.msra.mxu0 0.0
        %2889 = vmatpush.msra.mxu0 0.0
        %2890 = vmatpush.msra.mxu0 0.0
        %2891 = vmatpush.msra.mxu0 0.0
        %2892 = vmatpush.msra.mxu0 0.0
        %2893 = vmatpush.msra.mxu0 0.0
        %2894 = vmatpush.msra.mxu0 0.0
        %2895 = vmatpush.msra.mxu0 %v2883
        %2896 = vmatpush.msra.mxu0 %v2832
        %2897 = vmatpush.msra.mxu0 %v2831
        %2898 = vmatpush.msra.mxu0 %v2830
        %2899 = vmatpush.msra.mxu0 %v2829
        %2900 = vmatpush.msra.mxu0 %v2828
        %2901 = vmatmul.f32.gmra.mxu0 %v2835
        %v2902 = vpop.f32.mrf.mxu0
        %v2903 = vadd.f32 0.0, %v2902
        %2904 = vmatmul.f32.gmra.mxu0 %v2838
        %v2905 = vpop.f32.mrf.mxu0
        %v2906 = vadd.f32 0.0, %v2905
        %2907 = vmatmul.f32.gmra.mxu0 %v2841
        %v2908 = vpop.f32.mrf.mxu0
        %v2909 = vadd.f32 0.0, %v2908
        %2910 = vmatmul.f32.gmra.mxu0 %v2844
        %v2911 = vpop.f32.mrf.mxu0
        %v2912 = vadd.f32 0.0, %v2911
        %2913 = vmatmul.f32.gmra.mxu0 %v2847
        %v2914 = vpop.f32.mrf.mxu0
        %v2915 = vadd.f32 0.0, %v2914
        %2916 = vmatmul.f32.gmra.mxu0 %v2850
        %v2917 = vpop.f32.mrf.mxu0
        %v2918 = vadd.f32 0.0, %v2917
        %2919 = vmatmul.f32.gmra.mxu0 %v2853
        %v2920 = vpop.f32.mrf.mxu0
        %v2921 = vadd.f32 0.0, %v2920
        %2922 = vmatmul.f32.gmra.mxu0 %v2856
        %v2923 = vpop.f32.mrf.mxu0
        %v2924 = vadd.f32 0.0, %v2923
        %2925 = vmatmul.f32.gmra.mxu0 %v2859
        %v2926 = vpop.f32.mrf.mxu0
        %v2927 = vadd.f32 0.0, %v2926
        %2928 = vmatmul.f32.gmra.mxu0 %v2862
        %v2929 = vpop.f32.mrf.mxu0
        %v2930 = vadd.f32 0.0, %v2929
        %2931 = vmatmul.f32.gmra.mxu0 %v2865
        %v2932 = vpop.f32.mrf.mxu0
        %v2933 = vadd.f32 0.0, %v2932
        %2934 = vmatmul.f32.gmra.mxu0 %v2868
        %v2935 = vpop.f32.mrf.mxu0
        %v2936 = vadd.f32 0.0, %v2935
        %2937 = vmatmul.f32.gmra.mxu0 %v2871
        %v2938 = vpop.f32.mrf.mxu0
        %v2939 = vadd.f32 0.0, %v2938
        %2940 = vmatmul.f32.gmra.mxu0 %v2874
        %v2941 = vpop.f32.mrf.mxu0
        %v2942 = vadd.f32 0.0, %v2941
        %2943 = vmatmul.f32.gmra.mxu0 %v2877
        %v2944 = vpop.f32.mrf.mxu0
        %v2945 = vadd.f32 0.0, %v2944
        %2946 = vmatmul.f32.gmra.mxu0 %v2880
        %v2947 = vpop.f32.mrf.mxu0
        %v2948 = vadd.f32 0.0, %v2947
        %2949 = vdwg.mxu0
        %v2950 = vadd.f32 %v2792, %v2903
        %v2951 = vadd.f32 %v2793, %v2906
        %v2952 = vadd.f32 %v2794, %v2909
        %v2953 = vadd.f32 %v2795, %v2912
        %v2954 = vadd.f32 %v2796, %v2915
        %v2955 = vadd.f32 %v2797, %v2918
        %v2956 = vadd.f32 %v2798, %v2921
        %v2957 = vadd.f32 %v2799, %v2924
        %v2958 = vadd.f32 %v2800, %v2927
        %v2959 = vadd.f32 %v2801, %v2930
        %v2960 = vadd.f32 %v2802, %v2933
        %v2961 = vadd.f32 %v2803, %v2936
        %v2962 = vadd.f32 %v2804, %v2939
        %v2963 = vadd.f32 %v2805, %v2942
        %v2964 = vadd.f32 %v2806, %v2945
        %v2965 = vadd.f32 %v2807, %v2948
        %v2966 = vld [vmem:[%s2810 + $0x1] sm:$0xff]
        %v2967 = vld [vmem:[%s2810 + $0x9] sm:$0xff]
        %v2968 = vld [vmem:[%s2810 + $0x19] sm:$0xff]
        %v2969 = vld [vmem:[%s2810 + $0x21] sm:$0xff]
        %v2970 = vld [vmem:[%s2810 + $0x31] sm:$0xff]
        %v2971 = vld [vmem:[%s2810 + $0x39] sm:$0xff]
        %v2972 = vld [vmem:[%s2810 + $0x49] sm:$0xff]
        %v2973 = vld [vmem:[%s2810 + $0x51] sm:$0xff]
        %v2974 = vld [vmem:[%s2810 + $0x61] sm:$0xff]
        %v2975 = vld [vmem:[%s2810 + $0x69] sm:$0xff]
        %v2976 = vld [vmem:[%s2810 + $0x79] sm:$0xff]
        %v2977 = vld [vmem:[%s2810 + $0x81] sm:$0xff]
        %v2978 = vld [vmem:[%s2810 + $0x91] sm:$0xff]
        %v2979 = vld [vmem:[%s2810 + $0x99] sm:$0xff]
        %v2980 = vld [vmem:[%s2810 + $0xa9] sm:$0xff]
        %v2981 = vld [vmem:[%s2810 + $0xb1] sm:$0xff]
        %s2982 = scalar_lea.vmem %s1, 720
        %v2983 = vld [vmem:[%s2982] sm:$0xff]
        %v2984 = vld [vmem:[%s2982 + $0x8] sm:$0xff]
        %v2985 = vld [vmem:[%s2982 + $0x10] sm:$0xff]
        %v2986 = vld [vmem:[%s2982 + $0x18] sm:$0xff]
        %v2987 = vld [vmem:[%s2982 + $0x20] sm:$0xff]
        %v2988 = vld [vmem:[%s2982 + $0x28] sm:$0xf]
        %v2990 = vsel %vm209, %v2966, 0
        %v2993 = vsel %vm209, %v2967, 0
        %v2996 = vsel %vm209, %v2968, 0
        %v2999 = vsel %vm209, %v2969, 0
        %v3002 = vsel %vm209, %v2970, 0
        %v3005 = vsel %vm209, %v2971, 0
        %v3008 = vsel %vm209, %v2972, 0
        %v3011 = vsel %vm209, %v2973, 0
        %v3014 = vsel %vm209, %v2974, 0
        %v3017 = vsel %vm209, %v2975, 0
        %v3020 = vsel %vm209, %v2976, 0
        %v3023 = vsel %vm209, %v2977, 0
        %v3026 = vsel %vm209, %v2978, 0
        %v3029 = vsel %vm209, %v2979, 0
        %v3032 = vsel %vm209, %v2980, 0
        %v3035 = vsel %vm209, %v2981, 0
        %v3038 = vsel %vm760, %v2988, 0
        %3040 = vmatpush.msra.mxu0 0.0
        %3041 = vmatpush.msra.mxu0 0.0
        %3042 = vmatpush.msra.mxu0 0.0
        %3043 = vmatpush.msra.mxu0 0.0
        %3044 = vmatpush.msra.mxu0 0.0
        %3045 = vmatpush.msra.mxu0 0.0
        %3046 = vmatpush.msra.mxu0 0.0
        %3047 = vmatpush.msra.mxu0 0.0
        %3048 = vmatpush.msra.mxu0 0.0
        %3049 = vmatpush.msra.mxu0 0.0
        %3050 = vmatpush.msra.mxu0 %v3038
        %3051 = vmatpush.msra.mxu0 %v2987
        %3052 = vmatpush.msra.mxu0 %v2986
        %3053 = vmatpush.msra.mxu0 %v2985
        %3054 = vmatpush.msra.mxu0 %v2984
        %3055 = vmatpush.msra.mxu0 %v2983
        %3056 = vmatmul.f32.gmra.mxu0 %v2990
        %v3057 = vpop.f32.mrf.mxu0
        %v3058 = vadd.f32 0.0, %v3057
        %3059 = vmatmul.f32.gmra.mxu0 %v2993
        %v3060 = vpop.f32.mrf.mxu0
        %v3061 = vadd.f32 0.0, %v3060
        %3062 = vmatmul.f32.gmra.mxu0 %v2996
        %v3063 = vpop.f32.mrf.mxu0
        %v3064 = vadd.f32 0.0, %v3063
        %3065 = vmatmul.f32.gmra.mxu0 %v2999
        %v3066 = vpop.f32.mrf.mxu0
        %v3067 = vadd.f32 0.0, %v3066
        %3068 = vmatmul.f32.gmra.mxu0 %v3002
        %v3069 = vpop.f32.mrf.mxu0
        %v3070 = vadd.f32 0.0, %v3069
        %3071 = vmatmul.f32.gmra.mxu0 %v3005
        %v3072 = vpop.f32.mrf.mxu0
        %v3073 = vadd.f32 0.0, %v3072
        %3074 = vmatmul.f32.gmra.mxu0 %v3008
        %v3075 = vpop.f32.mrf.mxu0
        %v3076 = vadd.f32 0.0, %v3075
        %3077 = vmatmul.f32.gmra.mxu0 %v3011
        %v3078 = vpop.f32.mrf.mxu0
        %v3079 = vadd.f32 0.0, %v3078
        %3080 = vmatmul.f32.gmra.mxu0 %v3014
        %v3081 = vpop.f32.mrf.mxu0
        %v3082 = vadd.f32 0.0, %v3081
        %3083 = vmatmul.f32.gmra.mxu0 %v3017
        %v3084 = vpop.f32.mrf.mxu0
        %v3085 = vadd.f32 0.0, %v3084
        %3086 = vmatmul.f32.gmra.mxu0 %v3020
        %v3087 = vpop.f32.mrf.mxu0
        %v3088 = vadd.f32 0.0, %v3087
        %3089 = vmatmul.f32.gmra.mxu0 %v3023
        %v3090 = vpop.f32.mrf.mxu0
        %v3091 = vadd.f32 0.0, %v3090
        %3092 = vmatmul.f32.gmra.mxu0 %v3026
        %v3093 = vpop.f32.mrf.mxu0
        %v3094 = vadd.f32 0.0, %v3093
        %3095 = vmatmul.f32.gmra.mxu0 %v3029
        %v3096 = vpop.f32.mrf.mxu0
        %v3097 = vadd.f32 0.0, %v3096
        %3098 = vmatmul.f32.gmra.mxu0 %v3032
        %v3099 = vpop.f32.mrf.mxu0
        %v3100 = vadd.f32 0.0, %v3099
        %3101 = vmatmul.f32.gmra.mxu0 %v3035
        %v3102 = vpop.f32.mrf.mxu0
        %v3103 = vadd.f32 0.0, %v3102
        %3104 = vdwg.mxu0
        %v3105 = vadd.f32 %v2950, %v3058
        %v3106 = vadd.f32 %v2951, %v3061
        %v3107 = vadd.f32 %v2952, %v3064
        %v3108 = vadd.f32 %v2953, %v3067
        %v3109 = vadd.f32 %v2954, %v3070
        %v3110 = vadd.f32 %v2955, %v3073
        %v3111 = vadd.f32 %v2956, %v3076
        %v3112 = vadd.f32 %v2957, %v3079
        %v3113 = vadd.f32 %v2958, %v3082
        %v3114 = vadd.f32 %v2959, %v3085
        %v3115 = vadd.f32 %v2960, %v3088
        %v3116 = vadd.f32 %v2961, %v3091
        %v3117 = vadd.f32 %v2962, %v3094
        %v3118 = vadd.f32 %v2963, %v3097
        %v3119 = vadd.f32 %v2964, %v3100
        %v3120 = vadd.f32 %v2965, %v3103
        %v3121 = vld [vmem:[%s2810 + $0x2] sm:$0xff]
        %v3122 = vld [vmem:[%s2810 + $0xa] sm:$0xff]
        %v3123 = vld [vmem:[%s2810 + $0x1a] sm:$0xff]
        %v3124 = vld [vmem:[%s2810 + $0x22] sm:$0xff]
        %v3125 = vld [vmem:[%s2810 + $0x32] sm:$0xff]
        %v3126 = vld [vmem:[%s2810 + $0x3a] sm:$0xff]
        %v3127 = vld [vmem:[%s2810 + $0x4a] sm:$0xff]
        %v3128 = vld [vmem:[%s2810 + $0x52] sm:$0xff]
        %v3129 = vld [vmem:[%s2810 + $0x62] sm:$0xff]
        %v3130 = vld [vmem:[%s2810 + $0x6a] sm:$0xff]
        %v3131 = vld [vmem:[%s2810 + $0x7a] sm:$0xff]
        %v3132 = vld [vmem:[%s2810 + $0x82] sm:$0xff]
        %v3133 = vld [vmem:[%s2810 + $0x92] sm:$0xff]
        %v3134 = vld [vmem:[%s2810 + $0x9a] sm:$0xff]
        %v3135 = vld [vmem:[%s2810 + $0xaa] sm:$0xff]
        %v3136 = vld [vmem:[%s2810 + $0xb2] sm:$0xff]
        %s3137 = scalar_lea.vmem %s1, 768
        %v3138 = vld [vmem:[%s3137] sm:$0xff]
        %v3139 = vld [vmem:[%s3137 + $0x8] sm:$0xff]
        %v3140 = vld [vmem:[%s3137 + $0x10] sm:$0xff]
        %v3141 = vld [vmem:[%s3137 + $0x18] sm:$0xff]
        %v3142 = vld [vmem:[%s3137 + $0x20] sm:$0xff]
        %v3143 = vld [vmem:[%s3137 + $0x28] sm:$0xf]
        %v3145 = vsel %vm209, %v3121, 0
        %v3148 = vsel %vm209, %v3122, 0
        %v3151 = vsel %vm209, %v3123, 0
        %v3154 = vsel %vm209, %v3124, 0
        %v3157 = vsel %vm209, %v3125, 0
        %v3160 = vsel %vm209, %v3126, 0
        %v3163 = vsel %vm209, %v3127, 0
        %v3166 = vsel %vm209, %v3128, 0
        %v3169 = vsel %vm209, %v3129, 0
        %v3172 = vsel %vm209, %v3130, 0
        %v3175 = vsel %vm209, %v3131, 0
        %v3178 = vsel %vm209, %v3132, 0
        %v3181 = vsel %vm209, %v3133, 0
        %v3184 = vsel %vm209, %v3134, 0
        %v3187 = vsel %vm209, %v3135, 0
        %v3190 = vsel %vm209, %v3136, 0
        %v3193 = vsel %vm760, %v3143, 0
        %3195 = vmatpush.msra.mxu0 0.0
        %3196 = vmatpush.msra.mxu0 0.0
        %3197 = vmatpush.msra.mxu0 0.0
        %3198 = vmatpush.msra.mxu0 0.0
        %3199 = vmatpush.msra.mxu0 0.0
        %3200 = vmatpush.msra.mxu0 0.0
        %3201 = vmatpush.msra.mxu0 0.0
        %3202 = vmatpush.msra.mxu0 0.0
        %3203 = vmatpush.msra.mxu0 0.0
        %3204 = vmatpush.msra.mxu0 0.0
        %3205 = vmatpush.msra.mxu0 %v3193
        %3206 = vmatpush.msra.mxu0 %v3142
        %3207 = vmatpush.msra.mxu0 %v3141
        %3208 = vmatpush.msra.mxu0 %v3140
        %3209 = vmatpush.msra.mxu0 %v3139
        %3210 = vmatpush.msra.mxu0 %v3138
        %3211 = vmatmul.f32.gmra.mxu0 %v3145
        %v3212 = vpop.f32.mrf.mxu0
        %v3213 = vadd.f32 0.0, %v3212
        %3214 = vmatmul.f32.gmra.mxu0 %v3148
        %v3215 = vpop.f32.mrf.mxu0
        %v3216 = vadd.f32 0.0, %v3215
        %3217 = vmatmul.f32.gmra.mxu0 %v3151
        %v3218 = vpop.f32.mrf.mxu0
        %v3219 = vadd.f32 0.0, %v3218
        %3220 = vmatmul.f32.gmra.mxu0 %v3154
        %v3221 = vpop.f32.mrf.mxu0
        %v3222 = vadd.f32 0.0, %v3221
        %3223 = vmatmul.f32.gmra.mxu0 %v3157
        %v3224 = vpop.f32.mrf.mxu0
        %v3225 = vadd.f32 0.0, %v3224
        %3226 = vmatmul.f32.gmra.mxu0 %v3160
        %v3227 = vpop.f32.mrf.mxu0
        %v3228 = vadd.f32 0.0, %v3227
        %3229 = vmatmul.f32.gmra.mxu0 %v3163
        %v3230 = vpop.f32.mrf.mxu0
        %v3231 = vadd.f32 0.0, %v3230
        %3232 = vmatmul.f32.gmra.mxu0 %v3166
        %v3233 = vpop.f32.mrf.mxu0
        %v3234 = vadd.f32 0.0, %v3233
        %3235 = vmatmul.f32.gmra.mxu0 %v3169
        %v3236 = vpop.f32.mrf.mxu0
        %v3237 = vadd.f32 0.0, %v3236
        %3238 = vmatmul.f32.gmra.mxu0 %v3172
        %v3239 = vpop.f32.mrf.mxu0
        %v3240 = vadd.f32 0.0, %v3239
        %3241 = vmatmul.f32.gmra.mxu0 %v3175
        %v3242 = vpop.f32.mrf.mxu0
        %v3243 = vadd.f32 0.0, %v3242
        %3244 = vmatmul.f32.gmra.mxu0 %v3178
        %v3245 = vpop.f32.mrf.mxu0
        %v3246 = vadd.f32 0.0, %v3245
        %3247 = vmatmul.f32.gmra.mxu0 %v3181
        %v3248 = vpop.f32.mrf.mxu0
        %v3249 = vadd.f32 0.0, %v3248
        %3250 = vmatmul.f32.gmra.mxu0 %v3184
        %v3251 = vpop.f32.mrf.mxu0
        %v3252 = vadd.f32 0.0, %v3251
        %3253 = vmatmul.f32.gmra.mxu0 %v3187
        %v3254 = vpop.f32.mrf.mxu0
        %v3255 = vadd.f32 0.0, %v3254
        %3256 = vmatmul.f32.gmra.mxu0 %v3190
        %v3257 = vpop.f32.mrf.mxu0
        %v3258 = vadd.f32 0.0, %v3257
        %3259 = vdwg.mxu0
        %v3260 = vadd.f32 %v3105, %v3213
        %v3261 = vadd.f32 %v3106, %v3216
        %v3262 = vadd.f32 %v3107, %v3219
        %v3263 = vadd.f32 %v3108, %v3222
        %v3264 = vadd.f32 %v3109, %v3225
        %v3265 = vadd.f32 %v3110, %v3228
        %v3266 = vadd.f32 %v3111, %v3231
        %v3267 = vadd.f32 %v3112, %v3234
        %v3268 = vadd.f32 %v3113, %v3237
        %v3269 = vadd.f32 %v3114, %v3240
        %v3270 = vadd.f32 %v3115, %v3243
        %v3271 = vadd.f32 %v3116, %v3246
        %v3272 = vadd.f32 %v3117, %v3249
        %v3273 = vadd.f32 %v3118, %v3252
        %v3274 = vadd.f32 %v3119, %v3255
        %v3275 = vadd.f32 %v3120, %v3258
        %v3276 = vld [vmem:[%s2810 + $0x3] sm:$0xff]
        %v3277 = vld [vmem:[%s2810 + $0xb] sm:$0xff]
        %v3278 = vld [vmem:[%s2810 + $0x1b] sm:$0xff]
        %v3279 = vld [vmem:[%s2810 + $0x23] sm:$0xff]
        %v3280 = vld [vmem:[%s2810 + $0x33] sm:$0xff]
        %v3281 = vld [vmem:[%s2810 + $0x3b] sm:$0xff]
        %v3282 = vld [vmem:[%s2810 + $0x4b] sm:$0xff]
        %v3283 = vld [vmem:[%s2810 + $0x53] sm:$0xff]
        %v3284 = vld [vmem:[%s2810 + $0x63] sm:$0xff]
        %v3285 = vld [vmem:[%s2810 + $0x6b] sm:$0xff]
        %v3286 = vld [vmem:[%s2810 + $0x7b] sm:$0xff]
        %v3287 = vld [vmem:[%s2810 + $0x83] sm:$0xff]
        %v3288 = vld [vmem:[%s2810 + $0x93] sm:$0xff]
        %v3289 = vld [vmem:[%s2810 + $0x9b] sm:$0xff]
        %v3290 = vld [vmem:[%s2810 + $0xab] sm:$0xff]
        %v3291 = vld [vmem:[%s2810 + $0xb3] sm:$0xff]
        %s3292 = scalar_lea.vmem %s1, 816
        %v3293 = vld [vmem:[%s3292] sm:$0xff]
        %v3294 = vld [vmem:[%s3292 + $0x8] sm:$0xff]
        %v3295 = vld [vmem:[%s3292 + $0x10] sm:$0xff]
        %v3296 = vld [vmem:[%s3292 + $0x18] sm:$0xff]
        %v3297 = vld [vmem:[%s3292 + $0x20] sm:$0xff]
        %v3298 = vld [vmem:[%s3292 + $0x28] sm:$0xf]
        %v3300 = vsel %vm209, %v3276, 0
        %v3303 = vsel %vm209, %v3277, 0
        %v3306 = vsel %vm209, %v3278, 0
        %v3309 = vsel %vm209, %v3279, 0
        %v3312 = vsel %vm209, %v3280, 0
        %v3315 = vsel %vm209, %v3281, 0
        %v3318 = vsel %vm209, %v3282, 0
        %v3321 = vsel %vm209, %v3283, 0
        %v3324 = vsel %vm209, %v3284, 0
        %v3327 = vsel %vm209, %v3285, 0
        %v3330 = vsel %vm209, %v3286, 0
        %v3333 = vsel %vm209, %v3287, 0
        %v3336 = vsel %vm209, %v3288, 0
        %v3339 = vsel %vm209, %v3289, 0
        %v3342 = vsel %vm209, %v3290, 0
        %v3345 = vsel %vm209, %v3291, 0
        %v3348 = vsel %vm760, %v3298, 0
        %3350 = vmatpush.msra.mxu0 0.0
        %3351 = vmatpush.msra.mxu0 0.0
        %3352 = vmatpush.msra.mxu0 0.0
        %3353 = vmatpush.msra.mxu0 0.0
        %3354 = vmatpush.msra.mxu0 0.0
        %3355 = vmatpush.msra.mxu0 0.0
        %3356 = vmatpush.msra.mxu0 0.0
        %3357 = vmatpush.msra.mxu0 0.0
        %3358 = vmatpush.msra.mxu0 0.0
        %3359 = vmatpush.msra.mxu0 0.0
        %3360 = vmatpush.msra.mxu0 %v3348
        %3361 = vmatpush.msra.mxu0 %v3297
        %3362 = vmatpush.msra.mxu0 %v3296
        %3363 = vmatpush.msra.mxu0 %v3295
        %3364 = vmatpush.msra.mxu0 %v3294
        %3365 = vmatpush.msra.mxu0 %v3293
        %3366 = vmatmul.f32.gmra.mxu0 %v3300
        %v3367 = vpop.f32.mrf.mxu0
        %v3368 = vadd.f32 0.0, %v3367
        %3369 = vmatmul.f32.gmra.mxu0 %v3303
        %v3370 = vpop.f32.mrf.mxu0
        %v3371 = vadd.f32 0.0, %v3370
        %3372 = vmatmul.f32.gmra.mxu0 %v3306
        %v3373 = vpop.f32.mrf.mxu0
        %v3374 = vadd.f32 0.0, %v3373
        %3375 = vmatmul.f32.gmra.mxu0 %v3309
        %v3376 = vpop.f32.mrf.mxu0
        %v3377 = vadd.f32 0.0, %v3376
        %3378 = vmatmul.f32.gmra.mxu0 %v3312
        %v3379 = vpop.f32.mrf.mxu0
        %v3380 = vadd.f32 0.0, %v3379
        %3381 = vmatmul.f32.gmra.mxu0 %v3315
        %v3382 = vpop.f32.mrf.mxu0
        %v3383 = vadd.f32 0.0, %v3382
        %3384 = vmatmul.f32.gmra.mxu0 %v3318
        %v3385 = vpop.f32.mrf.mxu0
        %v3386 = vadd.f32 0.0, %v3385
        %3387 = vmatmul.f32.gmra.mxu0 %v3321
        %v3388 = vpop.f32.mrf.mxu0
        %v3389 = vadd.f32 0.0, %v3388
        %3390 = vmatmul.f32.gmra.mxu0 %v3324
        %v3391 = vpop.f32.mrf.mxu0
        %v3392 = vadd.f32 0.0, %v3391
        %3393 = vmatmul.f32.gmra.mxu0 %v3327
        %v3394 = vpop.f32.mrf.mxu0
        %v3395 = vadd.f32 0.0, %v3394
        %3396 = vmatmul.f32.gmra.mxu0 %v3330
        %v3397 = vpop.f32.mrf.mxu0
        %v3398 = vadd.f32 0.0, %v3397
        %3399 = vmatmul.f32.gmra.mxu0 %v3333
        %v3400 = vpop.f32.mrf.mxu0
        %v3401 = vadd.f32 0.0, %v3400
        %3402 = vmatmul.f32.gmra.mxu0 %v3336
        %v3403 = vpop.f32.mrf.mxu0
        %v3404 = vadd.f32 0.0, %v3403
        %3405 = vmatmul.f32.gmra.mxu0 %v3339
        %v3406 = vpop.f32.mrf.mxu0
        %v3407 = vadd.f32 0.0, %v3406
        %3408 = vmatmul.f32.gmra.mxu0 %v3342
        %v3409 = vpop.f32.mrf.mxu0
        %v3410 = vadd.f32 0.0, %v3409
        %3411 = vmatmul.f32.gmra.mxu0 %v3345
        %v3412 = vpop.f32.mrf.mxu0
        %v3413 = vadd.f32 0.0, %v3412
        %3414 = vdwg.mxu0
        %v3415 = vadd.f32 %v3260, %v3368
        %v3416 = vadd.f32 %v3261, %v3371
        %v3417 = vadd.f32 %v3262, %v3374
        %v3418 = vadd.f32 %v3263, %v3377
        %v3419 = vadd.f32 %v3264, %v3380
        %v3420 = vadd.f32 %v3265, %v3383
        %v3421 = vadd.f32 %v3266, %v3386
        %v3422 = vadd.f32 %v3267, %v3389
        %v3423 = vadd.f32 %v3268, %v3392
        %v3424 = vadd.f32 %v3269, %v3395
        %v3425 = vadd.f32 %v3270, %v3398
        %v3426 = vadd.f32 %v3271, %v3401
        %v3427 = vadd.f32 %v3272, %v3404
        %v3428 = vadd.f32 %v3273, %v3407
        %v3429 = vadd.f32 %v3274, %v3410
        %v3430 = vadd.f32 %v3275, %v3413
        %v3431 = vld [vmem:[%s2810 + $0x4] sm:$0xff]
        %v3432 = vld [vmem:[%s2810 + $0xc] sm:$0xff]
        %v3433 = vld [vmem:[%s2810 + $0x1c] sm:$0xff]
        %v3434 = vld [vmem:[%s2810 + $0x24] sm:$0xff]
        %v3435 = vld [vmem:[%s2810 + $0x34] sm:$0xff]
        %v3436 = vld [vmem:[%s2810 + $0x3c] sm:$0xff]
        %v3437 = vld [vmem:[%s2810 + $0x4c] sm:$0xff]
        %v3438 = vld [vmem:[%s2810 + $0x54] sm:$0xff]
        %v3439 = vld [vmem:[%s2810 + $0x64] sm:$0xff]
        %v3440 = vld [vmem:[%s2810 + $0x6c] sm:$0xff]
        %v3441 = vld [vmem:[%s2810 + $0x7c] sm:$0xff]
        %v3442 = vld [vmem:[%s2810 + $0x84] sm:$0xff]
        %v3443 = vld [vmem:[%s2810 + $0x94] sm:$0xff]
        %v3444 = vld [vmem:[%s2810 + $0x9c] sm:$0xff]
        %v3445 = vld [vmem:[%s2810 + $0xac] sm:$0xff]
        %v3446 = vld [vmem:[%s2810 + $0xb4] sm:$0xff]
        %s3447 = scalar_lea.vmem %s1, 864
        %v3448 = vld [vmem:[%s3447] sm:$0xff]
        %v3449 = vld [vmem:[%s3447 + $0x8] sm:$0xff]
        %v3450 = vld [vmem:[%s3447 + $0x10] sm:$0xff]
        %v3451 = vld [vmem:[%s3447 + $0x18] sm:$0xff]
        %v3452 = vld [vmem:[%s3447 + $0x20] sm:$0xff]
        %v3453 = vld [vmem:[%s3447 + $0x28] sm:$0xf]
        %v3455 = vsel %vm209, %v3431, 0
        %v3458 = vsel %vm209, %v3432, 0
        %v3461 = vsel %vm209, %v3433, 0
        %v3464 = vsel %vm209, %v3434, 0
        %v3467 = vsel %vm209, %v3435, 0
        %v3470 = vsel %vm209, %v3436, 0
        %v3473 = vsel %vm209, %v3437, 0
        %v3476 = vsel %vm209, %v3438, 0
        %v3479 = vsel %vm209, %v3439, 0
        %v3482 = vsel %vm209, %v3440, 0
        %v3485 = vsel %vm209, %v3441, 0
        %v3488 = vsel %vm209, %v3442, 0
        %v3491 = vsel %vm209, %v3443, 0
        %v3494 = vsel %vm209, %v3444, 0
        %v3497 = vsel %vm209, %v3445, 0
        %v3500 = vsel %vm209, %v3446, 0
        %v3503 = vsel %vm760, %v3453, 0
        %3505 = vmatpush.msra.mxu0 0.0
        %3506 = vmatpush.msra.mxu0 0.0
        %3507 = vmatpush.msra.mxu0 0.0
        %3508 = vmatpush.msra.mxu0 0.0
        %3509 = vmatpush.msra.mxu0 0.0
        %3510 = vmatpush.msra.mxu0 0.0
        %3511 = vmatpush.msra.mxu0 0.0
        %3512 = vmatpush.msra.mxu0 0.0
        %3513 = vmatpush.msra.mxu0 0.0
        %3514 = vmatpush.msra.mxu0 0.0
        %3515 = vmatpush.msra.mxu0 %v3503
        %3516 = vmatpush.msra.mxu0 %v3452
        %3517 = vmatpush.msra.mxu0 %v3451
        %3518 = vmatpush.msra.mxu0 %v3450
        %3519 = vmatpush.msra.mxu0 %v3449
        %3520 = vmatpush.msra.mxu0 %v3448
        %3521 = vmatmul.f32.gmra.mxu0 %v3455
        %v3522 = vpop.f32.mrf.mxu0
        %v3523 = vadd.f32 0.0, %v3522
        %3524 = vmatmul.f32.gmra.mxu0 %v3458
        %v3525 = vpop.f32.mrf.mxu0
        %v3526 = vadd.f32 0.0, %v3525
        %3527 = vmatmul.f32.gmra.mxu0 %v3461
        %v3528 = vpop.f32.mrf.mxu0
        %v3529 = vadd.f32 0.0, %v3528
        %3530 = vmatmul.f32.gmra.mxu0 %v3464
        %v3531 = vpop.f32.mrf.mxu0
        %v3532 = vadd.f32 0.0, %v3531
        %3533 = vmatmul.f32.gmra.mxu0 %v3467
        %v3534 = vpop.f32.mrf.mxu0
        %v3535 = vadd.f32 0.0, %v3534
        %3536 = vmatmul.f32.gmra.mxu0 %v3470
        %v3537 = vpop.f32.mrf.mxu0
        %v3538 = vadd.f32 0.0, %v3537
        %3539 = vmatmul.f32.gmra.mxu0 %v3473
        %v3540 = vpop.f32.mrf.mxu0
        %v3541 = vadd.f32 0.0, %v3540
        %3542 = vmatmul.f32.gmra.mxu0 %v3476
        %v3543 = vpop.f32.mrf.mxu0
        %v3544 = vadd.f32 0.0, %v3543
        %3545 = vmatmul.f32.gmra.mxu0 %v3479
        %v3546 = vpop.f32.mrf.mxu0
        %v3547 = vadd.f32 0.0, %v3546
        %3548 = vmatmul.f32.gmra.mxu0 %v3482
        %v3549 = vpop.f32.mrf.mxu0
        %v3550 = vadd.f32 0.0, %v3549
        %3551 = vmatmul.f32.gmra.mxu0 %v3485
        %v3552 = vpop.f32.mrf.mxu0
        %v3553 = vadd.f32 0.0, %v3552
        %3554 = vmatmul.f32.gmra.mxu0 %v3488
        %v3555 = vpop.f32.mrf.mxu0
        %v3556 = vadd.f32 0.0, %v3555
        %3557 = vmatmul.f32.gmra.mxu0 %v3491
        %v3558 = vpop.f32.mrf.mxu0
        %v3559 = vadd.f32 0.0, %v3558
        %3560 = vmatmul.f32.gmra.mxu0 %v3494
        %v3561 = vpop.f32.mrf.mxu0
        %v3562 = vadd.f32 0.0, %v3561
        %3563 = vmatmul.f32.gmra.mxu0 %v3497
        %v3564 = vpop.f32.mrf.mxu0
        %v3565 = vadd.f32 0.0, %v3564
        %3566 = vmatmul.f32.gmra.mxu0 %v3500
        %v3567 = vpop.f32.mrf.mxu0
        %v3568 = vadd.f32 0.0, %v3567
        %3569 = vdwg.mxu0
        %v3570 = vadd.f32 %v3415, %v3523
        %v3571 = vadd.f32 %v3416, %v3526
        %v3572 = vadd.f32 %v3417, %v3529
        %v3573 = vadd.f32 %v3418, %v3532
        %v3574 = vadd.f32 %v3419, %v3535
        %v3575 = vadd.f32 %v3420, %v3538
        %v3576 = vadd.f32 %v3421, %v3541
        %v3577 = vadd.f32 %v3422, %v3544
        %v3578 = vadd.f32 %v3423, %v3547
        %v3579 = vadd.f32 %v3424, %v3550
        %v3580 = vadd.f32 %v3425, %v3553
        %v3581 = vadd.f32 %v3426, %v3556
        %v3582 = vadd.f32 %v3427, %v3559
        %v3583 = vadd.f32 %v3428, %v3562
        %v3584 = vadd.f32 %v3429, %v3565
        %v3585 = vadd.f32 %v3430, %v3568
        %v3586 = vld [vmem:[%s2810 + $0x5] sm:$0xff]
        %v3587 = vld [vmem:[%s2810 + $0xd] sm:$0xff]
        %v3588 = vld [vmem:[%s2810 + $0x1d] sm:$0xff]
        %v3589 = vld [vmem:[%s2810 + $0x25] sm:$0xff]
        %v3590 = vld [vmem:[%s2810 + $0x35] sm:$0xff]
        %v3591 = vld [vmem:[%s2810 + $0x3d] sm:$0xff]
        %v3592 = vld [vmem:[%s2810 + $0x4d] sm:$0xff]
        %v3593 = vld [vmem:[%s2810 + $0x55] sm:$0xff]
        %v3594 = vld [vmem:[%s2810 + $0x65] sm:$0xff]
        %v3595 = vld [vmem:[%s2810 + $0x6d] sm:$0xff]
        %v3596 = vld [vmem:[%s2810 + $0x7d] sm:$0xff]
        %v3597 = vld [vmem:[%s2810 + $0x85] sm:$0xff]
        %v3598 = vld [vmem:[%s2810 + $0x95] sm:$0xff]
        %v3599 = vld [vmem:[%s2810 + $0x9d] sm:$0xff]
        %v3600 = vld [vmem:[%s2810 + $0xad] sm:$0xff]
        %v3601 = vld [vmem:[%s2810 + $0xb5] sm:$0xff]
        %s3602 = scalar_lea.vmem %s1, 912
        %v3603 = vld [vmem:[%s3602] sm:$0xff]
        %v3604 = vld [vmem:[%s3602 + $0x8] sm:$0xff]
        %v3605 = vld [vmem:[%s3602 + $0x10] sm:$0xff]
        %v3606 = vld [vmem:[%s3602 + $0x18] sm:$0xff]
        %v3607 = vld [vmem:[%s3602 + $0x20] sm:$0xff]
        %v3608 = vld [vmem:[%s3602 + $0x28] sm:$0xf]
        %v3610 = vsel %vm209, %v3586, 0
        %v3613 = vsel %vm209, %v3587, 0
        %v3616 = vsel %vm209, %v3588, 0
        %v3619 = vsel %vm209, %v3589, 0
        %v3622 = vsel %vm209, %v3590, 0
        %v3625 = vsel %vm209, %v3591, 0
        %v3628 = vsel %vm209, %v3592, 0
        %v3631 = vsel %vm209, %v3593, 0
        %v3634 = vsel %vm209, %v3594, 0
        %v3637 = vsel %vm209, %v3595, 0
        %v3640 = vsel %vm209, %v3596, 0
        %v3643 = vsel %vm209, %v3597, 0
        %v3646 = vsel %vm209, %v3598, 0
        %v3649 = vsel %vm209, %v3599, 0
        %v3652 = vsel %vm209, %v3600, 0
        %v3655 = vsel %vm209, %v3601, 0
        %v3658 = vsel %vm760, %v3608, 0
        %3660 = vmatpush.msra.mxu0 0.0
        %3661 = vmatpush.msra.mxu0 0.0
        %3662 = vmatpush.msra.mxu0 0.0
        %3663 = vmatpush.msra.mxu0 0.0
        %3664 = vmatpush.msra.mxu0 0.0
        %3665 = vmatpush.msra.mxu0 0.0
        %3666 = vmatpush.msra.mxu0 0.0
        %3667 = vmatpush.msra.mxu0 0.0
        %3668 = vmatpush.msra.mxu0 0.0
        %3669 = vmatpush.msra.mxu0 0.0
        %3670 = vmatpush.msra.mxu0 %v3658
        %3671 = vmatpush.msra.mxu0 %v3607
        %3672 = vmatpush.msra.mxu0 %v3606
        %3673 = vmatpush.msra.mxu0 %v3605
        %3674 = vmatpush.msra.mxu0 %v3604
        %3675 = vmatpush.msra.mxu0 %v3603
        %3676 = vmatmul.f32.gmra.mxu0 %v3610
        %v3677 = vpop.f32.mrf.mxu0
        %v3678 = vadd.f32 0.0, %v3677
        %3679 = vmatmul.f32.gmra.mxu0 %v3613
        %v3680 = vpop.f32.mrf.mxu0
        %v3681 = vadd.f32 0.0, %v3680
        %3682 = vmatmul.f32.gmra.mxu0 %v3616
        %v3683 = vpop.f32.mrf.mxu0
        %v3684 = vadd.f32 0.0, %v3683
        %3685 = vmatmul.f32.gmra.mxu0 %v3619
        %v3686 = vpop.f32.mrf.mxu0
        %v3687 = vadd.f32 0.0, %v3686
        %3688 = vmatmul.f32.gmra.mxu0 %v3622
        %v3689 = vpop.f32.mrf.mxu0
        %v3690 = vadd.f32 0.0, %v3689
        %3691 = vmatmul.f32.gmra.mxu0 %v3625
        %v3692 = vpop.f32.mrf.mxu0
        %v3693 = vadd.f32 0.0, %v3692
        %3694 = vmatmul.f32.gmra.mxu0 %v3628
        %v3695 = vpop.f32.mrf.mxu0
        %v3696 = vadd.f32 0.0, %v3695
        %3697 = vmatmul.f32.gmra.mxu0 %v3631
        %v3698 = vpop.f32.mrf.mxu0
        %v3699 = vadd.f32 0.0, %v3698
        %3700 = vmatmul.f32.gmra.mxu0 %v3634
        %v3701 = vpop.f32.mrf.mxu0
        %v3702 = vadd.f32 0.0, %v3701
        %3703 = vmatmul.f32.gmra.mxu0 %v3637
        %v3704 = vpop.f32.mrf.mxu0
        %v3705 = vadd.f32 0.0, %v3704
        %3706 = vmatmul.f32.gmra.mxu0 %v3640
        %v3707 = vpop.f32.mrf.mxu0
        %v3708 = vadd.f32 0.0, %v3707
        %3709 = vmatmul.f32.gmra.mxu0 %v3643
        %v3710 = vpop.f32.mrf.mxu0
        %v3711 = vadd.f32 0.0, %v3710
        %3712 = vmatmul.f32.gmra.mxu0 %v3646
        %v3713 = vpop.f32.mrf.mxu0
        %v3714 = vadd.f32 0.0, %v3713
        %3715 = vmatmul.f32.gmra.mxu0 %v3649
        %v3716 = vpop.f32.mrf.mxu0
        %v3717 = vadd.f32 0.0, %v3716
        %3718 = vmatmul.f32.gmra.mxu0 %v3652
        %v3719 = vpop.f32.mrf.mxu0
        %v3720 = vadd.f32 0.0, %v3719
        %3721 = vmatmul.f32.gmra.mxu0 %v3655
        %v3722 = vpop.f32.mrf.mxu0
        %v3723 = vadd.f32 0.0, %v3722
        %3724 = vdwg.mxu0
        %v3725 = vadd.f32 %v3570, %v3678
        %v3726 = vadd.f32 %v3571, %v3681
        %v3727 = vadd.f32 %v3572, %v3684
        %v3728 = vadd.f32 %v3573, %v3687
        %v3729 = vadd.f32 %v3574, %v3690
        %v3730 = vadd.f32 %v3575, %v3693
        %v3731 = vadd.f32 %v3576, %v3696
        %v3732 = vadd.f32 %v3577, %v3699
        %v3733 = vadd.f32 %v3578, %v3702
        %v3734 = vadd.f32 %v3579, %v3705
        %v3735 = vadd.f32 %v3580, %v3708
        %v3736 = vadd.f32 %v3581, %v3711
        %v3737 = vadd.f32 %v3582, %v3714
        %v3738 = vadd.f32 %v3583, %v3717
        %v3739 = vadd.f32 %v3584, %v3720
        %v3740 = vadd.f32 %v3585, %v3723
        %v3741 = vld [vmem:[%s2810 + $0x6] sm:$0xff]
        %v3742 = vld [vmem:[%s2810 + $0xe] sm:$0xff]
        %v3743 = vld [vmem:[%s2810 + $0x1e] sm:$0xff]
        %v3744 = vld [vmem:[%s2810 + $0x26] sm:$0xff]
        %v3745 = vld [vmem:[%s2810 + $0x36] sm:$0xff]
        %v3746 = vld [vmem:[%s2810 + $0x3e] sm:$0xff]
        %v3747 = vld [vmem:[%s2810 + $0x4e] sm:$0xff]
        %v3748 = vld [vmem:[%s2810 + $0x56] sm:$0xff]
        %v3749 = vld [vmem:[%s2810 + $0x66] sm:$0xff]
        %v3750 = vld [vmem:[%s2810 + $0x6e] sm:$0xff]
        %v3751 = vld [vmem:[%s2810 + $0x7e] sm:$0xff]
        %v3752 = vld [vmem:[%s2810 + $0x86] sm:$0xff]
        %v3753 = vld [vmem:[%s2810 + $0x96] sm:$0xff]
        %v3754 = vld [vmem:[%s2810 + $0x9e] sm:$0xff]
        %v3755 = vld [vmem:[%s2810 + $0xae] sm:$0xff]
        %v3756 = vld [vmem:[%s2810 + $0xb6] sm:$0xff]
        %s3757 = scalar_lea.vmem %s1, 960
        %v3758 = vld [vmem:[%s3757] sm:$0xff]
        %v3759 = vld [vmem:[%s3757 + $0x8] sm:$0xff]
        %v3760 = vld [vmem:[%s3757 + $0x10] sm:$0xff]
        %v3761 = vld [vmem:[%s3757 + $0x18] sm:$0xff]
        %v3762 = vld [vmem:[%s3757 + $0x20] sm:$0xff]
        %v3763 = vld [vmem:[%s3757 + $0x28] sm:$0xf]
        %v3765 = vsel %vm209, %v3741, 0
        %v3768 = vsel %vm209, %v3742, 0
        %v3771 = vsel %vm209, %v3743, 0
        %v3774 = vsel %vm209, %v3744, 0
        %v3777 = vsel %vm209, %v3745, 0
        %v3780 = vsel %vm209, %v3746, 0
        %v3783 = vsel %vm209, %v3747, 0
        %v3786 = vsel %vm209, %v3748, 0
        %v3789 = vsel %vm209, %v3749, 0
        %v3792 = vsel %vm209, %v3750, 0
        %v3795 = vsel %vm209, %v3751, 0
        %v3798 = vsel %vm209, %v3752, 0
        %v3801 = vsel %vm209, %v3753, 0
        %v3804 = vsel %vm209, %v3754, 0
        %v3807 = vsel %vm209, %v3755, 0
        %v3810 = vsel %vm209, %v3756, 0
        %v3813 = vsel %vm760, %v3763, 0
        %3815 = vmatpush.msra.mxu0 0.0
        %3816 = vmatpush.msra.mxu0 0.0
        %3817 = vmatpush.msra.mxu0 0.0
        %3818 = vmatpush.msra.mxu0 0.0
        %3819 = vmatpush.msra.mxu0 0.0
        %3820 = vmatpush.msra.mxu0 0.0
        %3821 = vmatpush.msra.mxu0 0.0
        %3822 = vmatpush.msra.mxu0 0.0
        %3823 = vmatpush.msra.mxu0 0.0
        %3824 = vmatpush.msra.mxu0 0.0
        %3825 = vmatpush.msra.mxu0 %v3813
        %3826 = vmatpush.msra.mxu0 %v3762
        %3827 = vmatpush.msra.mxu0 %v3761
        %3828 = vmatpush.msra.mxu0 %v3760
        %3829 = vmatpush.msra.mxu0 %v3759
        %3830 = vmatpush.msra.mxu0 %v3758
        %3831 = vmatmul.f32.gmra.mxu0 %v3765
        %v3832 = vpop.f32.mrf.mxu0
        %v3833 = vadd.f32 0.0, %v3832
        %3834 = vmatmul.f32.gmra.mxu0 %v3768
        %v3835 = vpop.f32.mrf.mxu0
        %v3836 = vadd.f32 0.0, %v3835
        %3837 = vmatmul.f32.gmra.mxu0 %v3771
        %v3838 = vpop.f32.mrf.mxu0
        %v3839 = vadd.f32 0.0, %v3838
        %3840 = vmatmul.f32.gmra.mxu0 %v3774
        %v3841 = vpop.f32.mrf.mxu0
        %v3842 = vadd.f32 0.0, %v3841
        %3843 = vmatmul.f32.gmra.mxu0 %v3777
        %v3844 = vpop.f32.mrf.mxu0
        %v3845 = vadd.f32 0.0, %v3844
        %3846 = vmatmul.f32.gmra.mxu0 %v3780
        %v3847 = vpop.f32.mrf.mxu0
        %v3848 = vadd.f32 0.0, %v3847
        %3849 = vmatmul.f32.gmra.mxu0 %v3783
        %v3850 = vpop.f32.mrf.mxu0
        %v3851 = vadd.f32 0.0, %v3850
        %3852 = vmatmul.f32.gmra.mxu0 %v3786
        %v3853 = vpop.f32.mrf.mxu0
        %v3854 = vadd.f32 0.0, %v3853
        %3855 = vmatmul.f32.gmra.mxu0 %v3789
        %v3856 = vpop.f32.mrf.mxu0
        %v3857 = vadd.f32 0.0, %v3856
        %3858 = vmatmul.f32.gmra.mxu0 %v3792
        %v3859 = vpop.f32.mrf.mxu0
        %v3860 = vadd.f32 0.0, %v3859
        %3861 = vmatmul.f32.gmra.mxu0 %v3795
        %v3862 = vpop.f32.mrf.mxu0
        %v3863 = vadd.f32 0.0, %v3862
        %3864 = vmatmul.f32.gmra.mxu0 %v3798
        %v3865 = vpop.f32.mrf.mxu0
        %v3866 = vadd.f32 0.0, %v3865
        %3867 = vmatmul.f32.gmra.mxu0 %v3801
        %v3868 = vpop.f32.mrf.mxu0
        %v3869 = vadd.f32 0.0, %v3868
        %3870 = vmatmul.f32.gmra.mxu0 %v3804
        %v3871 = vpop.f32.mrf.mxu0
        %v3872 = vadd.f32 0.0, %v3871
        %3873 = vmatmul.f32.gmra.mxu0 %v3807
        %v3874 = vpop.f32.mrf.mxu0
        %v3875 = vadd.f32 0.0, %v3874
        %3876 = vmatmul.f32.gmra.mxu0 %v3810
        %v3877 = vpop.f32.mrf.mxu0
        %v3878 = vadd.f32 0.0, %v3877
        %3879 = vdwg.mxu0
        %v3880 = vadd.f32 %v3725, %v3833
        %v3881 = vadd.f32 %v3726, %v3836
        %v3882 = vadd.f32 %v3727, %v3839
        %v3883 = vadd.f32 %v3728, %v3842
        %v3884 = vadd.f32 %v3729, %v3845
        %v3885 = vadd.f32 %v3730, %v3848
        %v3886 = vadd.f32 %v3731, %v3851
        %v3887 = vadd.f32 %v3732, %v3854
        %v3888 = vadd.f32 %v3733, %v3857
        %v3889 = vadd.f32 %v3734, %v3860
        %v3890 = vadd.f32 %v3735, %v3863
        %v3891 = vadd.f32 %v3736, %v3866
        %v3892 = vadd.f32 %v3737, %v3869
        %v3893 = vadd.f32 %v3738, %v3872
        %v3894 = vadd.f32 %v3739, %v3875
        %v3895 = vadd.f32 %v3740, %v3878
        %s3896 = sadd.s32 %s208, 3
        %s3897 = smul.u32 %s3896, 24
        %s3898 = scalar_lea.vmem [#allocation2], %s3897
        %v3899 = vld [vmem:[%s3898] sm:$0xff]
        %v3900 = vld [vmem:[%s3898 + $0x8] sm:$0xff]
        %v3901 = vld [vmem:[%s3898 + $0x18] sm:$0xff]
        %v3902 = vld [vmem:[%s3898 + $0x20] sm:$0xff]
        %v3903 = vld [vmem:[%s3898 + $0x30] sm:$0xff]
        %v3904 = vld [vmem:[%s3898 + $0x38] sm:$0xff]
        %v3905 = vld [vmem:[%s3898 + $0x48] sm:$0xff]
        %v3906 = vld [vmem:[%s3898 + $0x50] sm:$0xff]
        %v3907 = vld [vmem:[%s3898 + $0x60] sm:$0xff]
        %v3908 = vld [vmem:[%s3898 + $0x68] sm:$0xff]
        %v3909 = vld [vmem:[%s3898 + $0x78] sm:$0xff]
        %v3910 = vld [vmem:[%s3898 + $0x80] sm:$0xff]
        %v3911 = vld [vmem:[%s3898 + $0x90] sm:$0xff]
        %v3912 = vld [vmem:[%s3898 + $0x98] sm:$0xff]
        %v3913 = vld [vmem:[%s3898 + $0xa8] sm:$0xff]
        %v3914 = vld [vmem:[%s3898 + $0xb0] sm:$0xff]
        %s3915 = scalar_lea.vmem %s1, 1008
        %v3916 = vld [vmem:[%s3915] sm:$0xff]
        %v3917 = vld [vmem:[%s3915 + $0x8] sm:$0xff]
        %v3918 = vld [vmem:[%s3915 + $0x10] sm:$0xff]
        %v3919 = vld [vmem:[%s3915 + $0x18] sm:$0xff]
        %v3920 = vld [vmem:[%s3915 + $0x20] sm:$0xff]
        %v3921 = vld [vmem:[%s3915 + $0x28] sm:$0xf]
        %v3923 = vsel %vm209, %v3899, 0
        %v3926 = vsel %vm209, %v3900, 0
        %v3929 = vsel %vm209, %v3901, 0
        %v3932 = vsel %vm209, %v3902, 0
        %v3935 = vsel %vm209, %v3903, 0
        %v3938 = vsel %vm209, %v3904, 0
        %v3941 = vsel %vm209, %v3905, 0
        %v3944 = vsel %vm209, %v3906, 0
        %v3947 = vsel %vm209, %v3907, 0
        %v3950 = vsel %vm209, %v3908, 0
        %v3953 = vsel %vm209, %v3909, 0
        %v3956 = vsel %vm209, %v3910, 0
        %v3959 = vsel %vm209, %v3911, 0
        %v3962 = vsel %vm209, %v3912, 0
        %v3965 = vsel %vm209, %v3913, 0
        %v3968 = vsel %vm209, %v3914, 0
        %v3971 = vsel %vm760, %v3921, 0
        %3973 = vmatpush.msra.mxu0 0.0
        %3974 = vmatpush.msra.mxu0 0.0
        %3975 = vmatpush.msra.mxu0 0.0
        %3976 = vmatpush.msra.mxu0 0.0
        %3977 = vmatpush.msra.mxu0 0.0
        %3978 = vmatpush.msra.mxu0 0.0
        %3979 = vmatpush.msra.mxu0 0.0
        %3980 = vmatpush.msra.mxu0 0.0
        %3981 = vmatpush.msra.mxu0 0.0
        %3982 = vmatpush.msra.mxu0 0.0
        %3983 = vmatpush.msra.mxu0 %v3971
        %3984 = vmatpush.msra.mxu0 %v3920
        %3985 = vmatpush.msra.mxu0 %v3919
        %3986 = vmatpush.msra.mxu0 %v3918
        %3987 = vmatpush.msra.mxu0 %v3917
        %3988 = vmatpush.msra.mxu0 %v3916
        %3989 = vmatmul.f32.gmra.mxu0 %v3923
        %v3990 = vpop.f32.mrf.mxu0
        %v3991 = vadd.f32 0.0, %v3990
        %3992 = vmatmul.f32.gmra.mxu0 %v3926
        %v3993 = vpop.f32.mrf.mxu0
        %v3994 = vadd.f32 0.0, %v3993
        %3995 = vmatmul.f32.gmra.mxu0 %v3929
        %v3996 = vpop.f32.mrf.mxu0
        %v3997 = vadd.f32 0.0, %v3996
        %3998 = vmatmul.f32.gmra.mxu0 %v3932
        %v3999 = vpop.f32.mrf.mxu0
        %v4000 = vadd.f32 0.0, %v3999
        %4001 = vmatmul.f32.gmra.mxu0 %v3935
        %v4002 = vpop.f32.mrf.mxu0
        %v4003 = vadd.f32 0.0, %v4002
        %4004 = vmatmul.f32.gmra.mxu0 %v3938
        %v4005 = vpop.f32.mrf.mxu0
        %v4006 = vadd.f32 0.0, %v4005
        %4007 = vmatmul.f32.gmra.mxu0 %v3941
        %v4008 = vpop.f32.mrf.mxu0
        %v4009 = vadd.f32 0.0, %v4008
        %4010 = vmatmul.f32.gmra.mxu0 %v3944
        %v4011 = vpop.f32.mrf.mxu0
        %v4012 = vadd.f32 0.0, %v4011
        %4013 = vmatmul.f32.gmra.mxu0 %v3947
        %v4014 = vpop.f32.mrf.mxu0
        %v4015 = vadd.f32 0.0, %v4014
        %4016 = vmatmul.f32.gmra.mxu0 %v3950
        %v4017 = vpop.f32.mrf.mxu0
        %v4018 = vadd.f32 0.0, %v4017
        %4019 = vmatmul.f32.gmra.mxu0 %v3953
        %v4020 = vpop.f32.mrf.mxu0
        %v4021 = vadd.f32 0.0, %v4020
        %4022 = vmatmul.f32.gmra.mxu0 %v3956
        %v4023 = vpop.f32.mrf.mxu0
        %v4024 = vadd.f32 0.0, %v4023
        %4025 = vmatmul.f32.gmra.mxu0 %v3959
        %v4026 = vpop.f32.mrf.mxu0
        %v4027 = vadd.f32 0.0, %v4026
        %4028 = vmatmul.f32.gmra.mxu0 %v3962
        %v4029 = vpop.f32.mrf.mxu0
        %v4030 = vadd.f32 0.0, %v4029
        %4031 = vmatmul.f32.gmra.mxu0 %v3965
        %v4032 = vpop.f32.mrf.mxu0
        %v4033 = vadd.f32 0.0, %v4032
        %4034 = vmatmul.f32.gmra.mxu0 %v3968
        %v4035 = vpop.f32.mrf.mxu0
        %v4036 = vadd.f32 0.0, %v4035
        %4037 = vdwg.mxu0
        %v4038 = vadd.f32 %v3880, %v3991
        %v4039 = vadd.f32 %v3881, %v3994
        %v4040 = vadd.f32 %v3882, %v3997
        %v4041 = vadd.f32 %v3883, %v4000
        %v4042 = vadd.f32 %v3884, %v4003
        %v4043 = vadd.f32 %v3885, %v4006
        %v4044 = vadd.f32 %v3886, %v4009
        %v4045 = vadd.f32 %v3887, %v4012
        %v4046 = vadd.f32 %v3888, %v4015
        %v4047 = vadd.f32 %v3889, %v4018
        %v4048 = vadd.f32 %v3890, %v4021
        %v4049 = vadd.f32 %v3891, %v4024
        %v4050 = vadd.f32 %v3892, %v4027
        %v4051 = vadd.f32 %v3893, %v4030
        %v4052 = vadd.f32 %v3894, %v4033
        %v4053 = vadd.f32 %v3895, %v4036
        %v4054 = vld [vmem:[%s3898 + $0x1] sm:$0xff]
        %v4055 = vld [vmem:[%s3898 + $0x9] sm:$0xff]
        %v4056 = vld [vmem:[%s3898 + $0x19] sm:$0xff]
        %v4057 = vld [vmem:[%s3898 + $0x21] sm:$0xff]
        %v4058 = vld [vmem:[%s3898 + $0x31] sm:$0xff]
        %v4059 = vld [vmem:[%s3898 + $0x39] sm:$0xff]
        %v4060 = vld [vmem:[%s3898 + $0x49] sm:$0xff]
        %v4061 = vld [vmem:[%s3898 + $0x51] sm:$0xff]
        %v4062 = vld [vmem:[%s3898 + $0x61] sm:$0xff]
        %v4063 = vld [vmem:[%s3898 + $0x69] sm:$0xff]
        %v4064 = vld [vmem:[%s3898 + $0x79] sm:$0xff]
        %v4065 = vld [vmem:[%s3898 + $0x81] sm:$0xff]
        %v4066 = vld [vmem:[%s3898 + $0x91] sm:$0xff]
        %v4067 = vld [vmem:[%s3898 + $0x99] sm:$0xff]
        %v4068 = vld [vmem:[%s3898 + $0xa9] sm:$0xff]
        %v4069 = vld [vmem:[%s3898 + $0xb1] sm:$0xff]
        %s4070 = scalar_lea.vmem %s1, 1056
        %v4071 = vld [vmem:[%s4070] sm:$0xff]
        %v4072 = vld [vmem:[%s4070 + $0x8] sm:$0xff]
        %v4073 = vld [vmem:[%s4070 + $0x10] sm:$0xff]
        %v4074 = vld [vmem:[%s4070 + $0x18] sm:$0xff]
        %v4075 = vld [vmem:[%s4070 + $0x20] sm:$0xff]
        %v4076 = vld [vmem:[%s4070 + $0x28] sm:$0xf]
        %v4078 = vsel %vm209, %v4054, 0
        %v4081 = vsel %vm209, %v4055, 0
        %v4084 = vsel %vm209, %v4056, 0
        %v4087 = vsel %vm209, %v4057, 0
        %v4090 = vsel %vm209, %v4058, 0
        %v4093 = vsel %vm209, %v4059, 0
        %v4096 = vsel %vm209, %v4060, 0
        %v4099 = vsel %vm209, %v4061, 0
        %v4102 = vsel %vm209, %v4062, 0
        %v4105 = vsel %vm209, %v4063, 0
        %v4108 = vsel %vm209, %v4064, 0
        %v4111 = vsel %vm209, %v4065, 0
        %v4114 = vsel %vm209, %v4066, 0
        %v4117 = vsel %vm209, %v4067, 0
        %v4120 = vsel %vm209, %v4068, 0
        %v4123 = vsel %vm209, %v4069, 0
        %v4126 = vsel %vm760, %v4076, 0
        %4128 = vmatpush.msra.mxu0 0.0
        %4129 = vmatpush.msra.mxu0 0.0
        %4130 = vmatpush.msra.mxu0 0.0
        %4131 = vmatpush.msra.mxu0 0.0
        %4132 = vmatpush.msra.mxu0 0.0
        %4133 = vmatpush.msra.mxu0 0.0
        %4134 = vmatpush.msra.mxu0 0.0
        %4135 = vmatpush.msra.mxu0 0.0
        %4136 = vmatpush.msra.mxu0 0.0
        %4137 = vmatpush.msra.mxu0 0.0
        %4138 = vmatpush.msra.mxu0 %v4126
        %4139 = vmatpush.msra.mxu0 %v4075
        %4140 = vmatpush.msra.mxu0 %v4074
        %4141 = vmatpush.msra.mxu0 %v4073
        %4142 = vmatpush.msra.mxu0 %v4072
        %4143 = vmatpush.msra.mxu0 %v4071
        %4144 = vmatmul.f32.gmra.mxu0 %v4078
        %v4145 = vpop.f32.mrf.mxu0
        %v4146 = vadd.f32 0.0, %v4145
        %4147 = vmatmul.f32.gmra.mxu0 %v4081
        %v4148 = vpop.f32.mrf.mxu0
        %v4149 = vadd.f32 0.0, %v4148
        %4150 = vmatmul.f32.gmra.mxu0 %v4084
        %v4151 = vpop.f32.mrf.mxu0
        %v4152 = vadd.f32 0.0, %v4151
        %4153 = vmatmul.f32.gmra.mxu0 %v4087
        %v4154 = vpop.f32.mrf.mxu0
        %v4155 = vadd.f32 0.0, %v4154
        %4156 = vmatmul.f32.gmra.mxu0 %v4090
        %v4157 = vpop.f32.mrf.mxu0
        %v4158 = vadd.f32 0.0, %v4157
        %4159 = vmatmul.f32.gmra.mxu0 %v4093
        %v4160 = vpop.f32.mrf.mxu0
        %v4161 = vadd.f32 0.0, %v4160
        %4162 = vmatmul.f32.gmra.mxu0 %v4096
        %v4163 = vpop.f32.mrf.mxu0
        %v4164 = vadd.f32 0.0, %v4163
        %4165 = vmatmul.f32.gmra.mxu0 %v4099
        %v4166 = vpop.f32.mrf.mxu0
        %v4167 = vadd.f32 0.0, %v4166
        %4168 = vmatmul.f32.gmra.mxu0 %v4102
        %v4169 = vpop.f32.mrf.mxu0
        %v4170 = vadd.f32 0.0, %v4169
        %4171 = vmatmul.f32.gmra.mxu0 %v4105
        %v4172 = vpop.f32.mrf.mxu0
        %v4173 = vadd.f32 0.0, %v4172
        %4174 = vmatmul.f32.gmra.mxu0 %v4108
        %v4175 = vpop.f32.mrf.mxu0
        %v4176 = vadd.f32 0.0, %v4175
        %4177 = vmatmul.f32.gmra.mxu0 %v4111
        %v4178 = vpop.f32.mrf.mxu0
        %v4179 = vadd.f32 0.0, %v4178
        %4180 = vmatmul.f32.gmra.mxu0 %v4114
        %v4181 = vpop.f32.mrf.mxu0
        %v4182 = vadd.f32 0.0, %v4181
        %4183 = vmatmul.f32.gmra.mxu0 %v4117
        %v4184 = vpop.f32.mrf.mxu0
        %v4185 = vadd.f32 0.0, %v4184
        %4186 = vmatmul.f32.gmra.mxu0 %v4120
        %v4187 = vpop.f32.mrf.mxu0
        %v4188 = vadd.f32 0.0, %v4187
        %4189 = vmatmul.f32.gmra.mxu0 %v4123
        %v4190 = vpop.f32.mrf.mxu0
        %v4191 = vadd.f32 0.0, %v4190
        %4192 = vdwg.mxu0
        %v4193 = vadd.f32 %v4038, %v4146
        %v4194 = vadd.f32 %v4039, %v4149
        %v4195 = vadd.f32 %v4040, %v4152
        %v4196 = vadd.f32 %v4041, %v4155
        %v4197 = vadd.f32 %v4042, %v4158
        %v4198 = vadd.f32 %v4043, %v4161
        %v4199 = vadd.f32 %v4044, %v4164
        %v4200 = vadd.f32 %v4045, %v4167
        %v4201 = vadd.f32 %v4046, %v4170
        %v4202 = vadd.f32 %v4047, %v4173
        %v4203 = vadd.f32 %v4048, %v4176
        %v4204 = vadd.f32 %v4049, %v4179
        %v4205 = vadd.f32 %v4050, %v4182
        %v4206 = vadd.f32 %v4051, %v4185
        %v4207 = vadd.f32 %v4052, %v4188
        %v4208 = vadd.f32 %v4053, %v4191
        %v4209 = vld [vmem:[%s3898 + $0x2] sm:$0xff]
        %v4210 = vld [vmem:[%s3898 + $0xa] sm:$0xff]
        %v4211 = vld [vmem:[%s3898 + $0x1a] sm:$0xff]
        %v4212 = vld [vmem:[%s3898 + $0x22] sm:$0xff]
        %v4213 = vld [vmem:[%s3898 + $0x32] sm:$0xff]
        %v4214 = vld [vmem:[%s3898 + $0x3a] sm:$0xff]
        %v4215 = vld [vmem:[%s3898 + $0x4a] sm:$0xff]
        %v4216 = vld [vmem:[%s3898 + $0x52] sm:$0xff]
        %v4217 = vld [vmem:[%s3898 + $0x62] sm:$0xff]
        %v4218 = vld [vmem:[%s3898 + $0x6a] sm:$0xff]
        %v4219 = vld [vmem:[%s3898 + $0x7a] sm:$0xff]
        %v4220 = vld [vmem:[%s3898 + $0x82] sm:$0xff]
        %v4221 = vld [vmem:[%s3898 + $0x92] sm:$0xff]
        %v4222 = vld [vmem:[%s3898 + $0x9a] sm:$0xff]
        %v4223 = vld [vmem:[%s3898 + $0xaa] sm:$0xff]
        %v4224 = vld [vmem:[%s3898 + $0xb2] sm:$0xff]
        %s4225 = scalar_lea.vmem %s1, 1104
        %v4226 = vld [vmem:[%s4225] sm:$0xff]
        %v4227 = vld [vmem:[%s4225 + $0x8] sm:$0xff]
        %v4228 = vld [vmem:[%s4225 + $0x10] sm:$0xff]
        %v4229 = vld [vmem:[%s4225 + $0x18] sm:$0xff]
        %v4230 = vld [vmem:[%s4225 + $0x20] sm:$0xff]
        %v4231 = vld [vmem:[%s4225 + $0x28] sm:$0xf]
        %v4233 = vsel %vm209, %v4209, 0
        %v4236 = vsel %vm209, %v4210, 0
        %v4239 = vsel %vm209, %v4211, 0
        %v4242 = vsel %vm209, %v4212, 0
        %v4245 = vsel %vm209, %v4213, 0
        %v4248 = vsel %vm209, %v4214, 0
        %v4251 = vsel %vm209, %v4215, 0
        %v4254 = vsel %vm209, %v4216, 0
        %v4257 = vsel %vm209, %v4217, 0
        %v4260 = vsel %vm209, %v4218, 0
        %v4263 = vsel %vm209, %v4219, 0
        %v4266 = vsel %vm209, %v4220, 0
        %v4269 = vsel %vm209, %v4221, 0
        %v4272 = vsel %vm209, %v4222, 0
        %v4275 = vsel %vm209, %v4223, 0
        %v4278 = vsel %vm209, %v4224, 0
        %v4281 = vsel %vm760, %v4231, 0
        %4283 = vmatpush.msra.mxu0 0.0
        %4284 = vmatpush.msra.mxu0 0.0
        %4285 = vmatpush.msra.mxu0 0.0
        %4286 = vmatpush.msra.mxu0 0.0
        %4287 = vmatpush.msra.mxu0 0.0
        %4288 = vmatpush.msra.mxu0 0.0
        %4289 = vmatpush.msra.mxu0 0.0
        %4290 = vmatpush.msra.mxu0 0.0
        %4291 = vmatpush.msra.mxu0 0.0
        %4292 = vmatpush.msra.mxu0 0.0
        %4293 = vmatpush.msra.mxu0 %v4281
        %4294 = vmatpush.msra.mxu0 %v4230
        %4295 = vmatpush.msra.mxu0 %v4229
        %4296 = vmatpush.msra.mxu0 %v4228
        %4297 = vmatpush.msra.mxu0 %v4227
        %4298 = vmatpush.msra.mxu0 %v4226
        %4299 = vmatmul.f32.gmra.mxu0 %v4233
        %v4300 = vpop.f32.mrf.mxu0
        %v4301 = vadd.f32 0.0, %v4300
        %4302 = vmatmul.f32.gmra.mxu0 %v4236
        %v4303 = vpop.f32.mrf.mxu0
        %v4304 = vadd.f32 0.0, %v4303
        %4305 = vmatmul.f32.gmra.mxu0 %v4239
        %v4306 = vpop.f32.mrf.mxu0
        %v4307 = vadd.f32 0.0, %v4306
        %4308 = vmatmul.f32.gmra.mxu0 %v4242
        %v4309 = vpop.f32.mrf.mxu0
        %v4310 = vadd.f32 0.0, %v4309
        %4311 = vmatmul.f32.gmra.mxu0 %v4245
        %v4312 = vpop.f32.mrf.mxu0
        %v4313 = vadd.f32 0.0, %v4312
        %4314 = vmatmul.f32.gmra.mxu0 %v4248
        %v4315 = vpop.f32.mrf.mxu0
        %v4316 = vadd.f32 0.0, %v4315
        %4317 = vmatmul.f32.gmra.mxu0 %v4251
        %v4318 = vpop.f32.mrf.mxu0
        %v4319 = vadd.f32 0.0, %v4318
        %4320 = vmatmul.f32.gmra.mxu0 %v4254
        %v4321 = vpop.f32.mrf.mxu0
        %v4322 = vadd.f32 0.0, %v4321
        %4323 = vmatmul.f32.gmra.mxu0 %v4257
        %v4324 = vpop.f32.mrf.mxu0
        %v4325 = vadd.f32 0.0, %v4324
        %4326 = vmatmul.f32.gmra.mxu0 %v4260
        %v4327 = vpop.f32.mrf.mxu0
        %v4328 = vadd.f32 0.0, %v4327
        %4329 = vmatmul.f32.gmra.mxu0 %v4263
        %v4330 = vpop.f32.mrf.mxu0
        %v4331 = vadd.f32 0.0, %v4330
        %4332 = vmatmul.f32.gmra.mxu0 %v4266
        %v4333 = vpop.f32.mrf.mxu0
        %v4334 = vadd.f32 0.0, %v4333
        %4335 = vmatmul.f32.gmra.mxu0 %v4269
        %v4336 = vpop.f32.mrf.mxu0
        %v4337 = vadd.f32 0.0, %v4336
        %4338 = vmatmul.f32.gmra.mxu0 %v4272
        %v4339 = vpop.f32.mrf.mxu0
        %v4340 = vadd.f32 0.0, %v4339
        %4341 = vmatmul.f32.gmra.mxu0 %v4275
        %v4342 = vpop.f32.mrf.mxu0
        %v4343 = vadd.f32 0.0, %v4342
        %4344 = vmatmul.f32.gmra.mxu0 %v4278
        %v4345 = vpop.f32.mrf.mxu0
        %v4346 = vadd.f32 0.0, %v4345
        %4347 = vdwg.mxu0
        %v4348 = vadd.f32 %v4193, %v4301
        %v4349 = vadd.f32 %v4194, %v4304
        %v4350 = vadd.f32 %v4195, %v4307
        %v4351 = vadd.f32 %v4196, %v4310
        %v4352 = vadd.f32 %v4197, %v4313
        %v4353 = vadd.f32 %v4198, %v4316
        %v4354 = vadd.f32 %v4199, %v4319
        %v4355 = vadd.f32 %v4200, %v4322
        %v4356 = vadd.f32 %v4201, %v4325
        %v4357 = vadd.f32 %v4202, %v4328
        %v4358 = vadd.f32 %v4203, %v4331
        %v4359 = vadd.f32 %v4204, %v4334
        %v4360 = vadd.f32 %v4205, %v4337
        %v4361 = vadd.f32 %v4206, %v4340
        %v4362 = vadd.f32 %v4207, %v4343
        %v4363 = vadd.f32 %v4208, %v4346
        %v4364 = vld [vmem:[%s3898 + $0x3] sm:$0xff]
        %v4365 = vld [vmem:[%s3898 + $0xb] sm:$0xff]
        %v4366 = vld [vmem:[%s3898 + $0x1b] sm:$0xff]
        %v4367 = vld [vmem:[%s3898 + $0x23] sm:$0xff]
        %v4368 = vld [vmem:[%s3898 + $0x33] sm:$0xff]
        %v4369 = vld [vmem:[%s3898 + $0x3b] sm:$0xff]
        %v4370 = vld [vmem:[%s3898 + $0x4b] sm:$0xff]
        %v4371 = vld [vmem:[%s3898 + $0x53] sm:$0xff]
        %v4372 = vld [vmem:[%s3898 + $0x63] sm:$0xff]
        %v4373 = vld [vmem:[%s3898 + $0x6b] sm:$0xff]
        %v4374 = vld [vmem:[%s3898 + $0x7b] sm:$0xff]
        %v4375 = vld [vmem:[%s3898 + $0x83] sm:$0xff]
        %v4376 = vld [vmem:[%s3898 + $0x93] sm:$0xff]
        %v4377 = vld [vmem:[%s3898 + $0x9b] sm:$0xff]
        %v4378 = vld [vmem:[%s3898 + $0xab] sm:$0xff]
        %v4379 = vld [vmem:[%s3898 + $0xb3] sm:$0xff]
        %s4380 = scalar_lea.vmem %s1, 1152
        %v4381 = vld [vmem:[%s4380] sm:$0xff]
        %v4382 = vld [vmem:[%s4380 + $0x8] sm:$0xff]
        %v4383 = vld [vmem:[%s4380 + $0x10] sm:$0xff]
        %v4384 = vld [vmem:[%s4380 + $0x18] sm:$0xff]
        %v4385 = vld [vmem:[%s4380 + $0x20] sm:$0xff]
        %v4386 = vld [vmem:[%s4380 + $0x28] sm:$0xf]
        %v4388 = vsel %vm209, %v4364, 0
        %v4391 = vsel %vm209, %v4365, 0
        %v4394 = vsel %vm209, %v4366, 0
        %v4397 = vsel %vm209, %v4367, 0
        %v4400 = vsel %vm209, %v4368, 0
        %v4403 = vsel %vm209, %v4369, 0
        %v4406 = vsel %vm209, %v4370, 0
        %v4409 = vsel %vm209, %v4371, 0
        %v4412 = vsel %vm209, %v4372, 0
        %v4415 = vsel %vm209, %v4373, 0
        %v4418 = vsel %vm209, %v4374, 0
        %v4421 = vsel %vm209, %v4375, 0
        %v4424 = vsel %vm209, %v4376, 0
        %v4427 = vsel %vm209, %v4377, 0
        %v4430 = vsel %vm209, %v4378, 0
        %v4433 = vsel %vm209, %v4379, 0
        %v4436 = vsel %vm760, %v4386, 0
        %4438 = vmatpush.msra.mxu0 0.0
        %4439 = vmatpush.msra.mxu0 0.0
        %4440 = vmatpush.msra.mxu0 0.0
        %4441 = vmatpush.msra.mxu0 0.0
        %4442 = vmatpush.msra.mxu0 0.0
        %4443 = vmatpush.msra.mxu0 0.0
        %4444 = vmatpush.msra.mxu0 0.0
        %4445 = vmatpush.msra.mxu0 0.0
        %4446 = vmatpush.msra.mxu0 0.0
        %4447 = vmatpush.msra.mxu0 0.0
        %4448 = vmatpush.msra.mxu0 %v4436
        %4449 = vmatpush.msra.mxu0 %v4385
        %4450 = vmatpush.msra.mxu0 %v4384
        %4451 = vmatpush.msra.mxu0 %v4383
        %4452 = vmatpush.msra.mxu0 %v4382
        %4453 = vmatpush.msra.mxu0 %v4381
        %4454 = vmatmul.f32.gmra.mxu0 %v4388
        %v4455 = vpop.f32.mrf.mxu0
        %v4456 = vadd.f32 0.0, %v4455
        %4457 = vmatmul.f32.gmra.mxu0 %v4391
        %v4458 = vpop.f32.mrf.mxu0
        %v4459 = vadd.f32 0.0, %v4458
        %4460 = vmatmul.f32.gmra.mxu0 %v4394
        %v4461 = vpop.f32.mrf.mxu0
        %v4462 = vadd.f32 0.0, %v4461
        %4463 = vmatmul.f32.gmra.mxu0 %v4397
        %v4464 = vpop.f32.mrf.mxu0
        %v4465 = vadd.f32 0.0, %v4464
        %4466 = vmatmul.f32.gmra.mxu0 %v4400
        %v4467 = vpop.f32.mrf.mxu0
        %v4468 = vadd.f32 0.0, %v4467
        %4469 = vmatmul.f32.gmra.mxu0 %v4403
        %v4470 = vpop.f32.mrf.mxu0
        %v4471 = vadd.f32 0.0, %v4470
        %4472 = vmatmul.f32.gmra.mxu0 %v4406
        %v4473 = vpop.f32.mrf.mxu0
        %v4474 = vadd.f32 0.0, %v4473
        %4475 = vmatmul.f32.gmra.mxu0 %v4409
        %v4476 = vpop.f32.mrf.mxu0
        %v4477 = vadd.f32 0.0, %v4476
        %4478 = vmatmul.f32.gmra.mxu0 %v4412
        %v4479 = vpop.f32.mrf.mxu0
        %v4480 = vadd.f32 0.0, %v4479
        %4481 = vmatmul.f32.gmra.mxu0 %v4415
        %v4482 = vpop.f32.mrf.mxu0
        %v4483 = vadd.f32 0.0, %v4482
        %4484 = vmatmul.f32.gmra.mxu0 %v4418
        %v4485 = vpop.f32.mrf.mxu0
        %v4486 = vadd.f32 0.0, %v4485
        %4487 = vmatmul.f32.gmra.mxu0 %v4421
        %v4488 = vpop.f32.mrf.mxu0
        %v4489 = vadd.f32 0.0, %v4488
        %4490 = vmatmul.f32.gmra.mxu0 %v4424
        %v4491 = vpop.f32.mrf.mxu0
        %v4492 = vadd.f32 0.0, %v4491
        %4493 = vmatmul.f32.gmra.mxu0 %v4427
        %v4494 = vpop.f32.mrf.mxu0
        %v4495 = vadd.f32 0.0, %v4494
        %4496 = vmatmul.f32.gmra.mxu0 %v4430
        %v4497 = vpop.f32.mrf.mxu0
        %v4498 = vadd.f32 0.0, %v4497
        %4499 = vmatmul.f32.gmra.mxu0 %v4433
        %v4500 = vpop.f32.mrf.mxu0
        %v4501 = vadd.f32 0.0, %v4500
        %4502 = vdwg.mxu0
        %v4503 = vadd.f32 %v4348, %v4456
        %v4504 = vadd.f32 %v4349, %v4459
        %v4505 = vadd.f32 %v4350, %v4462
        %v4506 = vadd.f32 %v4351, %v4465
        %v4507 = vadd.f32 %v4352, %v4468
        %v4508 = vadd.f32 %v4353, %v4471
        %v4509 = vadd.f32 %v4354, %v4474
        %v4510 = vadd.f32 %v4355, %v4477
        %v4511 = vadd.f32 %v4356, %v4480
        %v4512 = vadd.f32 %v4357, %v4483
        %v4513 = vadd.f32 %v4358, %v4486
        %v4514 = vadd.f32 %v4359, %v4489
        %v4515 = vadd.f32 %v4360, %v4492
        %v4516 = vadd.f32 %v4361, %v4495
        %v4517 = vadd.f32 %v4362, %v4498
        %v4518 = vadd.f32 %v4363, %v4501
        %v4519 = vld [vmem:[%s3898 + $0x4] sm:$0xff]
        %v4520 = vld [vmem:[%s3898 + $0xc] sm:$0xff]
        %v4521 = vld [vmem:[%s3898 + $0x1c] sm:$0xff]
        %v4522 = vld [vmem:[%s3898 + $0x24] sm:$0xff]
        %v4523 = vld [vmem:[%s3898 + $0x34] sm:$0xff]
        %v4524 = vld [vmem:[%s3898 + $0x3c] sm:$0xff]
        %v4525 = vld [vmem:[%s3898 + $0x4c] sm:$0xff]
        %v4526 = vld [vmem:[%s3898 + $0x54] sm:$0xff]
        %v4527 = vld [vmem:[%s3898 + $0x64] sm:$0xff]
        %v4528 = vld [vmem:[%s3898 + $0x6c] sm:$0xff]
        %v4529 = vld [vmem:[%s3898 + $0x7c] sm:$0xff]
        %v4530 = vld [vmem:[%s3898 + $0x84] sm:$0xff]
        %v4531 = vld [vmem:[%s3898 + $0x94] sm:$0xff]
        %v4532 = vld [vmem:[%s3898 + $0x9c] sm:$0xff]
        %v4533 = vld [vmem:[%s3898 + $0xac] sm:$0xff]
        %v4534 = vld [vmem:[%s3898 + $0xb4] sm:$0xff]
        %s4535 = scalar_lea.vmem %s1, 1200
        %v4536 = vld [vmem:[%s4535] sm:$0xff]
        %v4537 = vld [vmem:[%s4535 + $0x8] sm:$0xff]
        %v4538 = vld [vmem:[%s4535 + $0x10] sm:$0xff]
        %v4539 = vld [vmem:[%s4535 + $0x18] sm:$0xff]
        %v4540 = vld [vmem:[%s4535 + $0x20] sm:$0xff]
        %v4541 = vld [vmem:[%s4535 + $0x28] sm:$0xf]
        %v4543 = vsel %vm209, %v4519, 0
        %v4546 = vsel %vm209, %v4520, 0
        %v4549 = vsel %vm209, %v4521, 0
        %v4552 = vsel %vm209, %v4522, 0
        %v4555 = vsel %vm209, %v4523, 0
        %v4558 = vsel %vm209, %v4524, 0
        %v4561 = vsel %vm209, %v4525, 0
        %v4564 = vsel %vm209, %v4526, 0
        %v4567 = vsel %vm209, %v4527, 0
        %v4570 = vsel %vm209, %v4528, 0
        %v4573 = vsel %vm209, %v4529, 0
        %v4576 = vsel %vm209, %v4530, 0
        %v4579 = vsel %vm209, %v4531, 0
        %v4582 = vsel %vm209, %v4532, 0
        %v4585 = vsel %vm209, %v4533, 0
        %v4588 = vsel %vm209, %v4534, 0
        %v4591 = vsel %vm760, %v4541, 0
        %4593 = vmatpush.msra.mxu0 0.0
        %4594 = vmatpush.msra.mxu0 0.0
        %4595 = vmatpush.msra.mxu0 0.0
        %4596 = vmatpush.msra.mxu0 0.0
        %4597 = vmatpush.msra.mxu0 0.0
        %4598 = vmatpush.msra.mxu0 0.0
        %4599 = vmatpush.msra.mxu0 0.0
        %4600 = vmatpush.msra.mxu0 0.0
        %4601 = vmatpush.msra.mxu0 0.0
        %4602 = vmatpush.msra.mxu0 0.0
        %4603 = vmatpush.msra.mxu0 %v4591
        %4604 = vmatpush.msra.mxu0 %v4540
        %4605 = vmatpush.msra.mxu0 %v4539
        %4606 = vmatpush.msra.mxu0 %v4538
        %4607 = vmatpush.msra.mxu0 %v4537
        %4608 = vmatpush.msra.mxu0 %v4536
        %4609 = vmatmul.f32.gmra.mxu0 %v4543
        %v4610 = vpop.f32.mrf.mxu0
        %v4611 = vadd.f32 0.0, %v4610
        %4612 = vmatmul.f32.gmra.mxu0 %v4546
        %v4613 = vpop.f32.mrf.mxu0
        %v4614 = vadd.f32 0.0, %v4613
        %4615 = vmatmul.f32.gmra.mxu0 %v4549
        %v4616 = vpop.f32.mrf.mxu0
        %v4617 = vadd.f32 0.0, %v4616
        %4618 = vmatmul.f32.gmra.mxu0 %v4552
        %v4619 = vpop.f32.mrf.mxu0
        %v4620 = vadd.f32 0.0, %v4619
        %4621 = vmatmul.f32.gmra.mxu0 %v4555
        %v4622 = vpop.f32.mrf.mxu0
        %v4623 = vadd.f32 0.0, %v4622
        %4624 = vmatmul.f32.gmra.mxu0 %v4558
        %v4625 = vpop.f32.mrf.mxu0
        %v4626 = vadd.f32 0.0, %v4625
        %4627 = vmatmul.f32.gmra.mxu0 %v4561
        %v4628 = vpop.f32.mrf.mxu0
        %v4629 = vadd.f32 0.0, %v4628
        %4630 = vmatmul.f32.gmra.mxu0 %v4564
        %v4631 = vpop.f32.mrf.mxu0
        %v4632 = vadd.f32 0.0, %v4631
        %4633 = vmatmul.f32.gmra.mxu0 %v4567
        %v4634 = vpop.f32.mrf.mxu0
        %v4635 = vadd.f32 0.0, %v4634
        %4636 = vmatmul.f32.gmra.mxu0 %v4570
        %v4637 = vpop.f32.mrf.mxu0
        %v4638 = vadd.f32 0.0, %v4637
        %4639 = vmatmul.f32.gmra.mxu0 %v4573
        %v4640 = vpop.f32.mrf.mxu0
        %v4641 = vadd.f32 0.0, %v4640
        %4642 = vmatmul.f32.gmra.mxu0 %v4576
        %v4643 = vpop.f32.mrf.mxu0
        %v4644 = vadd.f32 0.0, %v4643
        %4645 = vmatmul.f32.gmra.mxu0 %v4579
        %v4646 = vpop.f32.mrf.mxu0
        %v4647 = vadd.f32 0.0, %v4646
        %4648 = vmatmul.f32.gmra.mxu0 %v4582
        %v4649 = vpop.f32.mrf.mxu0
        %v4650 = vadd.f32 0.0, %v4649
        %4651 = vmatmul.f32.gmra.mxu0 %v4585
        %v4652 = vpop.f32.mrf.mxu0
        %v4653 = vadd.f32 0.0, %v4652
        %4654 = vmatmul.f32.gmra.mxu0 %v4588
        %v4655 = vpop.f32.mrf.mxu0
        %v4656 = vadd.f32 0.0, %v4655
        %4657 = vdwg.mxu0
        %v4658 = vadd.f32 %v4503, %v4611
        %v4659 = vadd.f32 %v4504, %v4614
        %v4660 = vadd.f32 %v4505, %v4617
        %v4661 = vadd.f32 %v4506, %v4620
        %v4662 = vadd.f32 %v4507, %v4623
        %v4663 = vadd.f32 %v4508, %v4626
        %v4664 = vadd.f32 %v4509, %v4629
        %v4665 = vadd.f32 %v4510, %v4632
        %v4666 = vadd.f32 %v4511, %v4635
        %v4667 = vadd.f32 %v4512, %v4638
        %v4668 = vadd.f32 %v4513, %v4641
        %v4669 = vadd.f32 %v4514, %v4644
        %v4670 = vadd.f32 %v4515, %v4647
        %v4671 = vadd.f32 %v4516, %v4650
        %v4672 = vadd.f32 %v4517, %v4653
        %v4673 = vadd.f32 %v4518, %v4656
        %v4674 = vld [vmem:[%s3898 + $0x5] sm:$0xff]
        %v4675 = vld [vmem:[%s3898 + $0xd] sm:$0xff]
        %v4676 = vld [vmem:[%s3898 + $0x1d] sm:$0xff]
        %v4677 = vld [vmem:[%s3898 + $0x25] sm:$0xff]
        %v4678 = vld [vmem:[%s3898 + $0x35] sm:$0xff]
        %v4679 = vld [vmem:[%s3898 + $0x3d] sm:$0xff]
        %v4680 = vld [vmem:[%s3898 + $0x4d] sm:$0xff]
        %v4681 = vld [vmem:[%s3898 + $0x55] sm:$0xff]
        %v4682 = vld [vmem:[%s3898 + $0x65] sm:$0xff]
        %v4683 = vld [vmem:[%s3898 + $0x6d] sm:$0xff]
        %v4684 = vld [vmem:[%s3898 + $0x7d] sm:$0xff]
        %v4685 = vld [vmem:[%s3898 + $0x85] sm:$0xff]
        %v4686 = vld [vmem:[%s3898 + $0x95] sm:$0xff]
        %v4687 = vld [vmem:[%s3898 + $0x9d] sm:$0xff]
        %v4688 = vld [vmem:[%s3898 + $0xad] sm:$0xff]
        %v4689 = vld [vmem:[%s3898 + $0xb5] sm:$0xff]
        %s4690 = scalar_lea.vmem %s1, 1248
        %v4691 = vld [vmem:[%s4690] sm:$0xff]
        %v4692 = vld [vmem:[%s4690 + $0x8] sm:$0xff]
        %v4693 = vld [vmem:[%s4690 + $0x10] sm:$0xff]
        %v4694 = vld [vmem:[%s4690 + $0x18] sm:$0xff]
        %v4695 = vld [vmem:[%s4690 + $0x20] sm:$0xff]
        %v4696 = vld [vmem:[%s4690 + $0x28] sm:$0xf]
        %v4698 = vsel %vm209, %v4674, 0
        %v4701 = vsel %vm209, %v4675, 0
        %v4704 = vsel %vm209, %v4676, 0
        %v4707 = vsel %vm209, %v4677, 0
        %v4710 = vsel %vm209, %v4678, 0
        %v4713 = vsel %vm209, %v4679, 0
        %v4716 = vsel %vm209, %v4680, 0
        %v4719 = vsel %vm209, %v4681, 0
        %v4722 = vsel %vm209, %v4682, 0
        %v4725 = vsel %vm209, %v4683, 0
        %v4728 = vsel %vm209, %v4684, 0
        %v4731 = vsel %vm209, %v4685, 0
        %v4734 = vsel %vm209, %v4686, 0
        %v4737 = vsel %vm209, %v4687, 0
        %v4740 = vsel %vm209, %v4688, 0
        %v4743 = vsel %vm209, %v4689, 0
        %v4746 = vsel %vm760, %v4696, 0
        %4748 = vmatpush.msra.mxu0 0.0
        %4749 = vmatpush.msra.mxu0 0.0
        %4750 = vmatpush.msra.mxu0 0.0
        %4751 = vmatpush.msra.mxu0 0.0
        %4752 = vmatpush.msra.mxu0 0.0
        %4753 = vmatpush.msra.mxu0 0.0
        %4754 = vmatpush.msra.mxu0 0.0
        %4755 = vmatpush.msra.mxu0 0.0
        %4756 = vmatpush.msra.mxu0 0.0
        %4757 = vmatpush.msra.mxu0 0.0
        %4758 = vmatpush.msra.mxu0 %v4746
        %4759 = vmatpush.msra.mxu0 %v4695
        %4760 = vmatpush.msra.mxu0 %v4694
        %4761 = vmatpush.msra.mxu0 %v4693
        %4762 = vmatpush.msra.mxu0 %v4692
        %4763 = vmatpush.msra.mxu0 %v4691
        %4764 = vmatmul.f32.gmra.mxu0 %v4698
        %v4765 = vpop.f32.mrf.mxu0
        %v4766 = vadd.f32 0.0, %v4765
        %4767 = vmatmul.f32.gmra.mxu0 %v4701
        %v4768 = vpop.f32.mrf.mxu0
        %v4769 = vadd.f32 0.0, %v4768
        %4770 = vmatmul.f32.gmra.mxu0 %v4704
        %v4771 = vpop.f32.mrf.mxu0
        %v4772 = vadd.f32 0.0, %v4771
        %4773 = vmatmul.f32.gmra.mxu0 %v4707
        %v4774 = vpop.f32.mrf.mxu0
        %v4775 = vadd.f32 0.0, %v4774
        %4776 = vmatmul.f32.gmra.mxu0 %v4710
        %v4777 = vpop.f32.mrf.mxu0
        %v4778 = vadd.f32 0.0, %v4777
        %4779 = vmatmul.f32.gmra.mxu0 %v4713
        %v4780 = vpop.f32.mrf.mxu0
        %v4781 = vadd.f32 0.0, %v4780
        %4782 = vmatmul.f32.gmra.mxu0 %v4716
        %v4783 = vpop.f32.mrf.mxu0
        %v4784 = vadd.f32 0.0, %v4783
        %4785 = vmatmul.f32.gmra.mxu0 %v4719
        %v4786 = vpop.f32.mrf.mxu0
        %v4787 = vadd.f32 0.0, %v4786
        %4788 = vmatmul.f32.gmra.mxu0 %v4722
        %v4789 = vpop.f32.mrf.mxu0
        %v4790 = vadd.f32 0.0, %v4789
        %4791 = vmatmul.f32.gmra.mxu0 %v4725
        %v4792 = vpop.f32.mrf.mxu0
        %v4793 = vadd.f32 0.0, %v4792
        %4794 = vmatmul.f32.gmra.mxu0 %v4728
        %v4795 = vpop.f32.mrf.mxu0
        %v4796 = vadd.f32 0.0, %v4795
        %4797 = vmatmul.f32.gmra.mxu0 %v4731
        %v4798 = vpop.f32.mrf.mxu0
        %v4799 = vadd.f32 0.0, %v4798
        %4800 = vmatmul.f32.gmra.mxu0 %v4734
        %v4801 = vpop.f32.mrf.mxu0
        %v4802 = vadd.f32 0.0, %v4801
        %4803 = vmatmul.f32.gmra.mxu0 %v4737
        %v4804 = vpop.f32.mrf.mxu0
        %v4805 = vadd.f32 0.0, %v4804
        %4806 = vmatmul.f32.gmra.mxu0 %v4740
        %v4807 = vpop.f32.mrf.mxu0
        %v4808 = vadd.f32 0.0, %v4807
        %4809 = vmatmul.f32.gmra.mxu0 %v4743
        %v4810 = vpop.f32.mrf.mxu0
        %v4811 = vadd.f32 0.0, %v4810
        %4812 = vdwg.mxu0
        %v4813 = vadd.f32 %v4658, %v4766
        %v4814 = vadd.f32 %v4659, %v4769
        %v4815 = vadd.f32 %v4660, %v4772
        %v4816 = vadd.f32 %v4661, %v4775
        %v4817 = vadd.f32 %v4662, %v4778
        %v4818 = vadd.f32 %v4663, %v4781
        %v4819 = vadd.f32 %v4664, %v4784
        %v4820 = vadd.f32 %v4665, %v4787
        %v4821 = vadd.f32 %v4666, %v4790
        %v4822 = vadd.f32 %v4667, %v4793
        %v4823 = vadd.f32 %v4668, %v4796
        %v4824 = vadd.f32 %v4669, %v4799
        %v4825 = vadd.f32 %v4670, %v4802
        %v4826 = vadd.f32 %v4671, %v4805
        %v4827 = vadd.f32 %v4672, %v4808
        %v4828 = vadd.f32 %v4673, %v4811
        %v4829 = vld [vmem:[%s3898 + $0x6] sm:$0xff]
        %v4830 = vld [vmem:[%s3898 + $0xe] sm:$0xff]
        %v4831 = vld [vmem:[%s3898 + $0x1e] sm:$0xff]
        %v4832 = vld [vmem:[%s3898 + $0x26] sm:$0xff]
        %v4833 = vld [vmem:[%s3898 + $0x36] sm:$0xff]
        %v4834 = vld [vmem:[%s3898 + $0x3e] sm:$0xff]
        %v4835 = vld [vmem:[%s3898 + $0x4e] sm:$0xff]
        %v4836 = vld [vmem:[%s3898 + $0x56] sm:$0xff]
        %v4837 = vld [vmem:[%s3898 + $0x66] sm:$0xff]
        %v4838 = vld [vmem:[%s3898 + $0x6e] sm:$0xff]
        %v4839 = vld [vmem:[%s3898 + $0x7e] sm:$0xff]
        %v4840 = vld [vmem:[%s3898 + $0x86] sm:$0xff]
        %v4841 = vld [vmem:[%s3898 + $0x96] sm:$0xff]
        %v4842 = vld [vmem:[%s3898 + $0x9e] sm:$0xff]
        %v4843 = vld [vmem:[%s3898 + $0xae] sm:$0xff]
        %v4844 = vld [vmem:[%s3898 + $0xb6] sm:$0xff]
        %s4845 = scalar_lea.vmem %s1, 1296
        %v4846 = vld [vmem:[%s4845] sm:$0xff]
        %v4847 = vld [vmem:[%s4845 + $0x8] sm:$0xff]
        %v4848 = vld [vmem:[%s4845 + $0x10] sm:$0xff]
        %v4849 = vld [vmem:[%s4845 + $0x18] sm:$0xff]
        %v4850 = vld [vmem:[%s4845 + $0x20] sm:$0xff]
        %v4851 = vld [vmem:[%s4845 + $0x28] sm:$0xf]
        %v4853 = vsel %vm209, %v4829, 0
        %v4856 = vsel %vm209, %v4830, 0
        %v4859 = vsel %vm209, %v4831, 0
        %v4862 = vsel %vm209, %v4832, 0
        %v4865 = vsel %vm209, %v4833, 0
        %v4868 = vsel %vm209, %v4834, 0
        %v4871 = vsel %vm209, %v4835, 0
        %v4874 = vsel %vm209, %v4836, 0
        %v4877 = vsel %vm209, %v4837, 0
        %v4880 = vsel %vm209, %v4838, 0
        %v4883 = vsel %vm209, %v4839, 0
        %v4886 = vsel %vm209, %v4840, 0
        %v4889 = vsel %vm209, %v4841, 0
        %v4892 = vsel %vm209, %v4842, 0
        %v4895 = vsel %vm209, %v4843, 0
        %v4898 = vsel %vm209, %v4844, 0
        %v4901 = vsel %vm760, %v4851, 0
        %4903 = vmatpush.msra.mxu0 0.0
        %4904 = vmatpush.msra.mxu0 0.0
        %4905 = vmatpush.msra.mxu0 0.0
        %4906 = vmatpush.msra.mxu0 0.0
        %4907 = vmatpush.msra.mxu0 0.0
        %4908 = vmatpush.msra.mxu0 0.0
        %4909 = vmatpush.msra.mxu0 0.0
        %4910 = vmatpush.msra.mxu0 0.0
        %4911 = vmatpush.msra.mxu0 0.0
        %4912 = vmatpush.msra.mxu0 0.0
        %4913 = vmatpush.msra.mxu0 %v4901
        %4914 = vmatpush.msra.mxu0 %v4850
        %4915 = vmatpush.msra.mxu0 %v4849
        %4916 = vmatpush.msra.mxu0 %v4848
        %4917 = vmatpush.msra.mxu0 %v4847
        %4918 = vmatpush.msra.mxu0 %v4846
        %4919 = vmatmul.f32.gmra.mxu0 %v4853
        %v4920 = vpop.f32.mrf.mxu0
        %v4921 = vadd.f32 0.0, %v4920
        %4922 = vmatmul.f32.gmra.mxu0 %v4856
        %v4923 = vpop.f32.mrf.mxu0
        %v4924 = vadd.f32 0.0, %v4923
        %4925 = vmatmul.f32.gmra.mxu0 %v4859
        %v4926 = vpop.f32.mrf.mxu0
        %v4927 = vadd.f32 0.0, %v4926
        %4928 = vmatmul.f32.gmra.mxu0 %v4862
        %v4929 = vpop.f32.mrf.mxu0
        %v4930 = vadd.f32 0.0, %v4929
        %4931 = vmatmul.f32.gmra.mxu0 %v4865
        %v4932 = vpop.f32.mrf.mxu0
        %v4933 = vadd.f32 0.0, %v4932
        %4934 = vmatmul.f32.gmra.mxu0 %v4868
        %v4935 = vpop.f32.mrf.mxu0
        %v4936 = vadd.f32 0.0, %v4935
        %4937 = vmatmul.f32.gmra.mxu0 %v4871
        %v4938 = vpop.f32.mrf.mxu0
        %v4939 = vadd.f32 0.0, %v4938
        %4940 = vmatmul.f32.gmra.mxu0 %v4874
        %v4941 = vpop.f32.mrf.mxu0
        %v4942 = vadd.f32 0.0, %v4941
        %4943 = vmatmul.f32.gmra.mxu0 %v4877
        %v4944 = vpop.f32.mrf.mxu0
        %v4945 = vadd.f32 0.0, %v4944
        %4946 = vmatmul.f32.gmra.mxu0 %v4880
        %v4947 = vpop.f32.mrf.mxu0
        %v4948 = vadd.f32 0.0, %v4947
        %4949 = vmatmul.f32.gmra.mxu0 %v4883
        %v4950 = vpop.f32.mrf.mxu0
        %v4951 = vadd.f32 0.0, %v4950
        %4952 = vmatmul.f32.gmra.mxu0 %v4886
        %v4953 = vpop.f32.mrf.mxu0
        %v4954 = vadd.f32 0.0, %v4953
        %4955 = vmatmul.f32.gmra.mxu0 %v4889
        %v4956 = vpop.f32.mrf.mxu0
        %v4957 = vadd.f32 0.0, %v4956
        %4958 = vmatmul.f32.gmra.mxu0 %v4892
        %v4959 = vpop.f32.mrf.mxu0
        %v4960 = vadd.f32 0.0, %v4959
        %4961 = vmatmul.f32.gmra.mxu0 %v4895
        %v4962 = vpop.f32.mrf.mxu0
        %v4963 = vadd.f32 0.0, %v4962
        %4964 = vmatmul.f32.gmra.mxu0 %v4898
        %v4965 = vpop.f32.mrf.mxu0
        %v4966 = vadd.f32 0.0, %v4965
        %4967 = vdwg.mxu0
        %v4968 = vadd.f32 %v4813, %v4921
        %v4969 = vadd.f32 %v4814, %v4924
        %v4970 = vadd.f32 %v4815, %v4927
        %v4971 = vadd.f32 %v4816, %v4930
        %v4972 = vadd.f32 %v4817, %v4933
        %v4973 = vadd.f32 %v4818, %v4936
        %v4974 = vadd.f32 %v4819, %v4939
        %v4975 = vadd.f32 %v4820, %v4942
        %v4976 = vadd.f32 %v4821, %v4945
        %v4977 = vadd.f32 %v4822, %v4948
        %v4978 = vadd.f32 %v4823, %v4951
        %v4979 = vadd.f32 %v4824, %v4954
        %v4980 = vadd.f32 %v4825, %v4957
        %v4981 = vadd.f32 %v4826, %v4960
        %v4982 = vadd.f32 %v4827, %v4963
        %v4983 = vadd.f32 %v4828, %v4966
        %s4984 = sadd.s32 %s208, 4
        %s4985 = smul.u32 %s4984, 24
        %s4986 = scalar_lea.vmem [#allocation2], %s4985
        %v4987 = vld [vmem:[%s4986] sm:$0xff]
        %v4988 = vld [vmem:[%s4986 + $0x8] sm:$0xff]
        %v4989 = vld [vmem:[%s4986 + $0x18] sm:$0xff]
        %v4990 = vld [vmem:[%s4986 + $0x20] sm:$0xff]
        %v4991 = vld [vmem:[%s4986 + $0x30] sm:$0xff]
        %v4992 = vld [vmem:[%s4986 + $0x38] sm:$0xff]
        %v4993 = vld [vmem:[%s4986 + $0x48] sm:$0xff]
        %v4994 = vld [vmem:[%s4986 + $0x50] sm:$0xff]
        %v4995 = vld [vmem:[%s4986 + $0x60] sm:$0xff]
        %v4996 = vld [vmem:[%s4986 + $0x68] sm:$0xff]
        %v4997 = vld [vmem:[%s4986 + $0x78] sm:$0xff]
        %v4998 = vld [vmem:[%s4986 + $0x80] sm:$0xff]
        %v4999 = vld [vmem:[%s4986 + $0x90] sm:$0xff]
        %v5000 = vld [vmem:[%s4986 + $0x98] sm:$0xff]
        %v5001 = vld [vmem:[%s4986 + $0xa8] sm:$0xff]
        %v5002 = vld [vmem:[%s4986 + $0xb0] sm:$0xff]
        %s5003 = scalar_lea.vmem %s1, 1344
        %v5004 = vld [vmem:[%s5003] sm:$0xff]
        %v5005 = vld [vmem:[%s5003 + $0x8] sm:$0xff]
        %v5006 = vld [vmem:[%s5003 + $0x10] sm:$0xff]
        %v5007 = vld [vmem:[%s5003 + $0x18] sm:$0xff]
        %v5008 = vld [vmem:[%s5003 + $0x20] sm:$0xff]
        %v5009 = vld [vmem:[%s5003 + $0x28] sm:$0xf]
        %v5011 = vsel %vm209, %v4987, 0
        %v5014 = vsel %vm209, %v4988, 0
        %v5017 = vsel %vm209, %v4989, 0
        %v5020 = vsel %vm209, %v4990, 0
        %v5023 = vsel %vm209, %v4991, 0
        %v5026 = vsel %vm209, %v4992, 0
        %v5029 = vsel %vm209, %v4993, 0
        %v5032 = vsel %vm209, %v4994, 0
        %v5035 = vsel %vm209, %v4995, 0
        %v5038 = vsel %vm209, %v4996, 0
        %v5041 = vsel %vm209, %v4997, 0
        %v5044 = vsel %vm209, %v4998, 0
        %v5047 = vsel %vm209, %v4999, 0
        %v5050 = vsel %vm209, %v5000, 0
        %v5053 = vsel %vm209, %v5001, 0
        %v5056 = vsel %vm209, %v5002, 0
        %v5059 = vsel %vm760, %v5009, 0
        %5061 = vmatpush.msra.mxu0 0.0
        %5062 = vmatpush.msra.mxu0 0.0
        %5063 = vmatpush.msra.mxu0 0.0
        %5064 = vmatpush.msra.mxu0 0.0
        %5065 = vmatpush.msra.mxu0 0.0
        %5066 = vmatpush.msra.mxu0 0.0
        %5067 = vmatpush.msra.mxu0 0.0
        %5068 = vmatpush.msra.mxu0 0.0
        %5069 = vmatpush.msra.mxu0 0.0
        %5070 = vmatpush.msra.mxu0 0.0
        %5071 = vmatpush.msra.mxu0 %v5059
        %5072 = vmatpush.msra.mxu0 %v5008
        %5073 = vmatpush.msra.mxu0 %v5007
        %5074 = vmatpush.msra.mxu0 %v5006
        %5075 = vmatpush.msra.mxu0 %v5005
        %5076 = vmatpush.msra.mxu0 %v5004
        %5077 = vmatmul.f32.gmra.mxu0 %v5011
        %v5078 = vpop.f32.mrf.mxu0
        %v5079 = vadd.f32 0.0, %v5078
        %5080 = vmatmul.f32.gmra.mxu0 %v5014
        %v5081 = vpop.f32.mrf.mxu0
        %v5082 = vadd.f32 0.0, %v5081
        %5083 = vmatmul.f32.gmra.mxu0 %v5017
        %v5084 = vpop.f32.mrf.mxu0
        %v5085 = vadd.f32 0.0, %v5084
        %5086 = vmatmul.f32.gmra.mxu0 %v5020
        %v5087 = vpop.f32.mrf.mxu0
        %v5088 = vadd.f32 0.0, %v5087
        %5089 = vmatmul.f32.gmra.mxu0 %v5023
        %v5090 = vpop.f32.mrf.mxu0
        %v5091 = vadd.f32 0.0, %v5090
        %5092 = vmatmul.f32.gmra.mxu0 %v5026
        %v5093 = vpop.f32.mrf.mxu0
        %v5094 = vadd.f32 0.0, %v5093
        %5095 = vmatmul.f32.gmra.mxu0 %v5029
        %v5096 = vpop.f32.mrf.mxu0
        %v5097 = vadd.f32 0.0, %v5096
        %5098 = vmatmul.f32.gmra.mxu0 %v5032
        %v5099 = vpop.f32.mrf.mxu0
        %v5100 = vadd.f32 0.0, %v5099
        %5101 = vmatmul.f32.gmra.mxu0 %v5035
        %v5102 = vpop.f32.mrf.mxu0
        %v5103 = vadd.f32 0.0, %v5102
        %5104 = vmatmul.f32.gmra.mxu0 %v5038
        %v5105 = vpop.f32.mrf.mxu0
        %v5106 = vadd.f32 0.0, %v5105
        %5107 = vmatmul.f32.gmra.mxu0 %v5041
        %v5108 = vpop.f32.mrf.mxu0
        %v5109 = vadd.f32 0.0, %v5108
        %5110 = vmatmul.f32.gmra.mxu0 %v5044
        %v5111 = vpop.f32.mrf.mxu0
        %v5112 = vadd.f32 0.0, %v5111
        %5113 = vmatmul.f32.gmra.mxu0 %v5047
        %v5114 = vpop.f32.mrf.mxu0
        %v5115 = vadd.f32 0.0, %v5114
        %5116 = vmatmul.f32.gmra.mxu0 %v5050
        %v5117 = vpop.f32.mrf.mxu0
        %v5118 = vadd.f32 0.0, %v5117
        %5119 = vmatmul.f32.gmra.mxu0 %v5053
        %v5120 = vpop.f32.mrf.mxu0
        %v5121 = vadd.f32 0.0, %v5120
        %5122 = vmatmul.f32.gmra.mxu0 %v5056
        %v5123 = vpop.f32.mrf.mxu0
        %v5124 = vadd.f32 0.0, %v5123
        %5125 = vdwg.mxu0
        %v5126 = vadd.f32 %v4968, %v5079
        %v5127 = vadd.f32 %v4969, %v5082
        %v5128 = vadd.f32 %v4970, %v5085
        %v5129 = vadd.f32 %v4971, %v5088
        %v5130 = vadd.f32 %v4972, %v5091
        %v5131 = vadd.f32 %v4973, %v5094
        %v5132 = vadd.f32 %v4974, %v5097
        %v5133 = vadd.f32 %v4975, %v5100
        %v5134 = vadd.f32 %v4976, %v5103
        %v5135 = vadd.f32 %v4977, %v5106
        %v5136 = vadd.f32 %v4978, %v5109
        %v5137 = vadd.f32 %v4979, %v5112
        %v5138 = vadd.f32 %v4980, %v5115
        %v5139 = vadd.f32 %v4981, %v5118
        %v5140 = vadd.f32 %v4982, %v5121
        %v5141 = vadd.f32 %v4983, %v5124
        %v5142 = vld [vmem:[%s4986 + $0x1] sm:$0xff]
        %v5143 = vld [vmem:[%s4986 + $0x9] sm:$0xff]
        %v5144 = vld [vmem:[%s4986 + $0x19] sm:$0xff]
        %v5145 = vld [vmem:[%s4986 + $0x21] sm:$0xff]
        %v5146 = vld [vmem:[%s4986 + $0x31] sm:$0xff]
        %v5147 = vld [vmem:[%s4986 + $0x39] sm:$0xff]
        %v5148 = vld [vmem:[%s4986 + $0x49] sm:$0xff]
        %v5149 = vld [vmem:[%s4986 + $0x51] sm:$0xff]
        %v5150 = vld [vmem:[%s4986 + $0x61] sm:$0xff]
        %v5151 = vld [vmem:[%s4986 + $0x69] sm:$0xff]
        %v5152 = vld [vmem:[%s4986 + $0x79] sm:$0xff]
        %v5153 = vld [vmem:[%s4986 + $0x81] sm:$0xff]
        %v5154 = vld [vmem:[%s4986 + $0x91] sm:$0xff]
        %v5155 = vld [vmem:[%s4986 + $0x99] sm:$0xff]
        %v5156 = vld [vmem:[%s4986 + $0xa9] sm:$0xff]
        %v5157 = vld [vmem:[%s4986 + $0xb1] sm:$0xff]
        %s5158 = scalar_lea.vmem %s1, 1392
        %v5159 = vld [vmem:[%s5158] sm:$0xff]
        %v5160 = vld [vmem:[%s5158 + $0x8] sm:$0xff]
        %v5161 = vld [vmem:[%s5158 + $0x10] sm:$0xff]
        %v5162 = vld [vmem:[%s5158 + $0x18] sm:$0xff]
        %v5163 = vld [vmem:[%s5158 + $0x20] sm:$0xff]
        %v5164 = vld [vmem:[%s5158 + $0x28] sm:$0xf]
        %v5166 = vsel %vm209, %v5142, 0
        %v5169 = vsel %vm209, %v5143, 0
        %v5172 = vsel %vm209, %v5144, 0
        %v5175 = vsel %vm209, %v5145, 0
        %v5178 = vsel %vm209, %v5146, 0
        %v5181 = vsel %vm209, %v5147, 0
        %v5184 = vsel %vm209, %v5148, 0
        %v5187 = vsel %vm209, %v5149, 0
        %v5190 = vsel %vm209, %v5150, 0
        %v5193 = vsel %vm209, %v5151, 0
        %v5196 = vsel %vm209, %v5152, 0
        %v5199 = vsel %vm209, %v5153, 0
        %v5202 = vsel %vm209, %v5154, 0
        %v5205 = vsel %vm209, %v5155, 0
        %v5208 = vsel %vm209, %v5156, 0
        %v5211 = vsel %vm209, %v5157, 0
        %v5214 = vsel %vm760, %v5164, 0
        %5216 = vmatpush.msra.mxu0 0.0
        %5217 = vmatpush.msra.mxu0 0.0
        %5218 = vmatpush.msra.mxu0 0.0
        %5219 = vmatpush.msra.mxu0 0.0
        %5220 = vmatpush.msra.mxu0 0.0
        %5221 = vmatpush.msra.mxu0 0.0
        %5222 = vmatpush.msra.mxu0 0.0
        %5223 = vmatpush.msra.mxu0 0.0
        %5224 = vmatpush.msra.mxu0 0.0
        %5225 = vmatpush.msra.mxu0 0.0
        %5226 = vmatpush.msra.mxu0 %v5214
        %5227 = vmatpush.msra.mxu0 %v5163
        %5228 = vmatpush.msra.mxu0 %v5162
        %5229 = vmatpush.msra.mxu0 %v5161
        %5230 = vmatpush.msra.mxu0 %v5160
        %5231 = vmatpush.msra.mxu0 %v5159
        %5232 = vmatmul.f32.gmra.mxu0 %v5166
        %v5233 = vpop.f32.mrf.mxu0
        %v5234 = vadd.f32 0.0, %v5233
        %5235 = vmatmul.f32.gmra.mxu0 %v5169
        %v5236 = vpop.f32.mrf.mxu0
        %v5237 = vadd.f32 0.0, %v5236
        %5238 = vmatmul.f32.gmra.mxu0 %v5172
        %v5239 = vpop.f32.mrf.mxu0
        %v5240 = vadd.f32 0.0, %v5239
        %5241 = vmatmul.f32.gmra.mxu0 %v5175
        %v5242 = vpop.f32.mrf.mxu0
        %v5243 = vadd.f32 0.0, %v5242
        %5244 = vmatmul.f32.gmra.mxu0 %v5178
        %v5245 = vpop.f32.mrf.mxu0
        %v5246 = vadd.f32 0.0, %v5245
        %5247 = vmatmul.f32.gmra.mxu0 %v5181
        %v5248 = vpop.f32.mrf.mxu0
        %v5249 = vadd.f32 0.0, %v5248
        %5250 = vmatmul.f32.gmra.mxu0 %v5184
        %v5251 = vpop.f32.mrf.mxu0
        %v5252 = vadd.f32 0.0, %v5251
        %5253 = vmatmul.f32.gmra.mxu0 %v5187
        %v5254 = vpop.f32.mrf.mxu0
        %v5255 = vadd.f32 0.0, %v5254
        %5256 = vmatmul.f32.gmra.mxu0 %v5190
        %v5257 = vpop.f32.mrf.mxu0
        %v5258 = vadd.f32 0.0, %v5257
        %5259 = vmatmul.f32.gmra.mxu0 %v5193
        %v5260 = vpop.f32.mrf.mxu0
        %v5261 = vadd.f32 0.0, %v5260
        %5262 = vmatmul.f32.gmra.mxu0 %v5196
        %v5263 = vpop.f32.mrf.mxu0
        %v5264 = vadd.f32 0.0, %v5263
        %5265 = vmatmul.f32.gmra.mxu0 %v5199
        %v5266 = vpop.f32.mrf.mxu0
        %v5267 = vadd.f32 0.0, %v5266
        %5268 = vmatmul.f32.gmra.mxu0 %v5202
        %v5269 = vpop.f32.mrf.mxu0
        %v5270 = vadd.f32 0.0, %v5269
        %5271 = vmatmul.f32.gmra.mxu0 %v5205
        %v5272 = vpop.f32.mrf.mxu0
        %v5273 = vadd.f32 0.0, %v5272
        %5274 = vmatmul.f32.gmra.mxu0 %v5208
        %v5275 = vpop.f32.mrf.mxu0
        %v5276 = vadd.f32 0.0, %v5275
        %5277 = vmatmul.f32.gmra.mxu0 %v5211
        %v5278 = vpop.f32.mrf.mxu0
        %v5279 = vadd.f32 0.0, %v5278
        %5280 = vdwg.mxu0
        %v5281 = vadd.f32 %v5126, %v5234
        %v5282 = vadd.f32 %v5127, %v5237
        %v5283 = vadd.f32 %v5128, %v5240
        %v5284 = vadd.f32 %v5129, %v5243
        %v5285 = vadd.f32 %v5130, %v5246
        %v5286 = vadd.f32 %v5131, %v5249
        %v5287 = vadd.f32 %v5132, %v5252
        %v5288 = vadd.f32 %v5133, %v5255
        %v5289 = vadd.f32 %v5134, %v5258
        %v5290 = vadd.f32 %v5135, %v5261
        %v5291 = vadd.f32 %v5136, %v5264
        %v5292 = vadd.f32 %v5137, %v5267
        %v5293 = vadd.f32 %v5138, %v5270
        %v5294 = vadd.f32 %v5139, %v5273
        %v5295 = vadd.f32 %v5140, %v5276
        %v5296 = vadd.f32 %v5141, %v5279
        %v5297 = vld [vmem:[%s4986 + $0x2] sm:$0xff]
        %v5298 = vld [vmem:[%s4986 + $0xa] sm:$0xff]
        %v5299 = vld [vmem:[%s4986 + $0x1a] sm:$0xff]
        %v5300 = vld [vmem:[%s4986 + $0x22] sm:$0xff]
        %v5301 = vld [vmem:[%s4986 + $0x32] sm:$0xff]
        %v5302 = vld [vmem:[%s4986 + $0x3a] sm:$0xff]
        %v5303 = vld [vmem:[%s4986 + $0x4a] sm:$0xff]
        %v5304 = vld [vmem:[%s4986 + $0x52] sm:$0xff]
        %v5305 = vld [vmem:[%s4986 + $0x62] sm:$0xff]
        %v5306 = vld [vmem:[%s4986 + $0x6a] sm:$0xff]
        %v5307 = vld [vmem:[%s4986 + $0x7a] sm:$0xff]
        %v5308 = vld [vmem:[%s4986 + $0x82] sm:$0xff]
        %v5309 = vld [vmem:[%s4986 + $0x92] sm:$0xff]
        %v5310 = vld [vmem:[%s4986 + $0x9a] sm:$0xff]
        %v5311 = vld [vmem:[%s4986 + $0xaa] sm:$0xff]
        %v5312 = vld [vmem:[%s4986 + $0xb2] sm:$0xff]
        %s5313 = scalar_lea.vmem %s1, 1440
        %v5314 = vld [vmem:[%s5313] sm:$0xff]
        %v5315 = vld [vmem:[%s5313 + $0x8] sm:$0xff]
        %v5316 = vld [vmem:[%s5313 + $0x10] sm:$0xff]
        %v5317 = vld [vmem:[%s5313 + $0x18] sm:$0xff]
        %v5318 = vld [vmem:[%s5313 + $0x20] sm:$0xff]
        %v5319 = vld [vmem:[%s5313 + $0x28] sm:$0xf]
        %v5321 = vsel %vm209, %v5297, 0
        %v5324 = vsel %vm209, %v5298, 0
        %v5327 = vsel %vm209, %v5299, 0
        %v5330 = vsel %vm209, %v5300, 0
        %v5333 = vsel %vm209, %v5301, 0
        %v5336 = vsel %vm209, %v5302, 0
        %v5339 = vsel %vm209, %v5303, 0
        %v5342 = vsel %vm209, %v5304, 0
        %v5345 = vsel %vm209, %v5305, 0
        %v5348 = vsel %vm209, %v5306, 0
        %v5351 = vsel %vm209, %v5307, 0
        %v5354 = vsel %vm209, %v5308, 0
        %v5357 = vsel %vm209, %v5309, 0
        %v5360 = vsel %vm209, %v5310, 0
        %v5363 = vsel %vm209, %v5311, 0
        %v5366 = vsel %vm209, %v5312, 0
        %v5369 = vsel %vm760, %v5319, 0
        %5371 = vmatpush.msra.mxu0 0.0
        %5372 = vmatpush.msra.mxu0 0.0
        %5373 = vmatpush.msra.mxu0 0.0
        %5374 = vmatpush.msra.mxu0 0.0
        %5375 = vmatpush.msra.mxu0 0.0
        %5376 = vmatpush.msra.mxu0 0.0
        %5377 = vmatpush.msra.mxu0 0.0
        %5378 = vmatpush.msra.mxu0 0.0
        %5379 = vmatpush.msra.mxu0 0.0
        %5380 = vmatpush.msra.mxu0 0.0
        %5381 = vmatpush.msra.mxu0 %v5369
        %5382 = vmatpush.msra.mxu0 %v5318
        %5383 = vmatpush.msra.mxu0 %v5317
        %5384 = vmatpush.msra.mxu0 %v5316
        %5385 = vmatpush.msra.mxu0 %v5315
        %5386 = vmatpush.msra.mxu0 %v5314
        %5387 = vmatmul.f32.gmra.mxu0 %v5321
        %v5388 = vpop.f32.mrf.mxu0
        %v5389 = vadd.f32 0.0, %v5388
        %5390 = vmatmul.f32.gmra.mxu0 %v5324
        %v5391 = vpop.f32.mrf.mxu0
        %v5392 = vadd.f32 0.0, %v5391
        %5393 = vmatmul.f32.gmra.mxu0 %v5327
        %v5394 = vpop.f32.mrf.mxu0
        %v5395 = vadd.f32 0.0, %v5394
        %5396 = vmatmul.f32.gmra.mxu0 %v5330
        %v5397 = vpop.f32.mrf.mxu0
        %v5398 = vadd.f32 0.0, %v5397
        %5399 = vmatmul.f32.gmra.mxu0 %v5333
        %v5400 = vpop.f32.mrf.mxu0
        %v5401 = vadd.f32 0.0, %v5400
        %5402 = vmatmul.f32.gmra.mxu0 %v5336
        %v5403 = vpop.f32.mrf.mxu0
        %v5404 = vadd.f32 0.0, %v5403
        %5405 = vmatmul.f32.gmra.mxu0 %v5339
        %v5406 = vpop.f32.mrf.mxu0
        %v5407 = vadd.f32 0.0, %v5406
        %5408 = vmatmul.f32.gmra.mxu0 %v5342
        %v5409 = vpop.f32.mrf.mxu0
        %v5410 = vadd.f32 0.0, %v5409
        %5411 = vmatmul.f32.gmra.mxu0 %v5345
        %v5412 = vpop.f32.mrf.mxu0
        %v5413 = vadd.f32 0.0, %v5412
        %5414 = vmatmul.f32.gmra.mxu0 %v5348
        %v5415 = vpop.f32.mrf.mxu0
        %v5416 = vadd.f32 0.0, %v5415
        %5417 = vmatmul.f32.gmra.mxu0 %v5351
        %v5418 = vpop.f32.mrf.mxu0
        %v5419 = vadd.f32 0.0, %v5418
        %5420 = vmatmul.f32.gmra.mxu0 %v5354
        %v5421 = vpop.f32.mrf.mxu0
        %v5422 = vadd.f32 0.0, %v5421
        %5423 = vmatmul.f32.gmra.mxu0 %v5357
        %v5424 = vpop.f32.mrf.mxu0
        %v5425 = vadd.f32 0.0, %v5424
        %5426 = vmatmul.f32.gmra.mxu0 %v5360
        %v5427 = vpop.f32.mrf.mxu0
        %v5428 = vadd.f32 0.0, %v5427
        %5429 = vmatmul.f32.gmra.mxu0 %v5363
        %v5430 = vpop.f32.mrf.mxu0
        %v5431 = vadd.f32 0.0, %v5430
        %5432 = vmatmul.f32.gmra.mxu0 %v5366
        %v5433 = vpop.f32.mrf.mxu0
        %v5434 = vadd.f32 0.0, %v5433
        %5435 = vdwg.mxu0
        %v5436 = vadd.f32 %v5281, %v5389
        %v5437 = vadd.f32 %v5282, %v5392
        %v5438 = vadd.f32 %v5283, %v5395
        %v5439 = vadd.f32 %v5284, %v5398
        %v5440 = vadd.f32 %v5285, %v5401
        %v5441 = vadd.f32 %v5286, %v5404
        %v5442 = vadd.f32 %v5287, %v5407
        %v5443 = vadd.f32 %v5288, %v5410
        %v5444 = vadd.f32 %v5289, %v5413
        %v5445 = vadd.f32 %v5290, %v5416
        %v5446 = vadd.f32 %v5291, %v5419
        %v5447 = vadd.f32 %v5292, %v5422
        %v5448 = vadd.f32 %v5293, %v5425
        %v5449 = vadd.f32 %v5294, %v5428
        %v5450 = vadd.f32 %v5295, %v5431
        %v5451 = vadd.f32 %v5296, %v5434
        %v5452 = vld [vmem:[%s4986 + $0x3] sm:$0xff]
        %v5453 = vld [vmem:[%s4986 + $0xb] sm:$0xff]
        %v5454 = vld [vmem:[%s4986 + $0x1b] sm:$0xff]
        %v5455 = vld [vmem:[%s4986 + $0x23] sm:$0xff]
        %v5456 = vld [vmem:[%s4986 + $0x33] sm:$0xff]
        %v5457 = vld [vmem:[%s4986 + $0x3b] sm:$0xff]
        %v5458 = vld [vmem:[%s4986 + $0x4b] sm:$0xff]
        %v5459 = vld [vmem:[%s4986 + $0x53] sm:$0xff]
        %v5460 = vld [vmem:[%s4986 + $0x63] sm:$0xff]
        %v5461 = vld [vmem:[%s4986 + $0x6b] sm:$0xff]
        %v5462 = vld [vmem:[%s4986 + $0x7b] sm:$0xff]
        %v5463 = vld [vmem:[%s4986 + $0x83] sm:$0xff]
        %v5464 = vld [vmem:[%s4986 + $0x93] sm:$0xff]
        %v5465 = vld [vmem:[%s4986 + $0x9b] sm:$0xff]
        %v5466 = vld [vmem:[%s4986 + $0xab] sm:$0xff]
        %v5467 = vld [vmem:[%s4986 + $0xb3] sm:$0xff]
        %s5468 = scalar_lea.vmem %s1, 1488
        %v5469 = vld [vmem:[%s5468] sm:$0xff]
        %v5470 = vld [vmem:[%s5468 + $0x8] sm:$0xff]
        %v5471 = vld [vmem:[%s5468 + $0x10] sm:$0xff]
        %v5472 = vld [vmem:[%s5468 + $0x18] sm:$0xff]
        %v5473 = vld [vmem:[%s5468 + $0x20] sm:$0xff]
        %v5474 = vld [vmem:[%s5468 + $0x28] sm:$0xf]
        %v5476 = vsel %vm209, %v5452, 0
        %v5479 = vsel %vm209, %v5453, 0
        %v5482 = vsel %vm209, %v5454, 0
        %v5485 = vsel %vm209, %v5455, 0
        %v5488 = vsel %vm209, %v5456, 0
        %v5491 = vsel %vm209, %v5457, 0
        %v5494 = vsel %vm209, %v5458, 0
        %v5497 = vsel %vm209, %v5459, 0
        %v5500 = vsel %vm209, %v5460, 0
        %v5503 = vsel %vm209, %v5461, 0
        %v5506 = vsel %vm209, %v5462, 0
        %v5509 = vsel %vm209, %v5463, 0
        %v5512 = vsel %vm209, %v5464, 0
        %v5515 = vsel %vm209, %v5465, 0
        %v5518 = vsel %vm209, %v5466, 0
        %v5521 = vsel %vm209, %v5467, 0
        %v5524 = vsel %vm760, %v5474, 0
        %5526 = vmatpush.msra.mxu0 0.0
        %5527 = vmatpush.msra.mxu0 0.0
        %5528 = vmatpush.msra.mxu0 0.0
        %5529 = vmatpush.msra.mxu0 0.0
        %5530 = vmatpush.msra.mxu0 0.0
        %5531 = vmatpush.msra.mxu0 0.0
        %5532 = vmatpush.msra.mxu0 0.0
        %5533 = vmatpush.msra.mxu0 0.0
        %5534 = vmatpush.msra.mxu0 0.0
        %5535 = vmatpush.msra.mxu0 0.0
        %5536 = vmatpush.msra.mxu0 %v5524
        %5537 = vmatpush.msra.mxu0 %v5473
        %5538 = vmatpush.msra.mxu0 %v5472
        %5539 = vmatpush.msra.mxu0 %v5471
        %5540 = vmatpush.msra.mxu0 %v5470
        %5541 = vmatpush.msra.mxu0 %v5469
        %5542 = vmatmul.f32.gmra.mxu0 %v5476
        %v5543 = vpop.f32.mrf.mxu0
        %v5544 = vadd.f32 0.0, %v5543
        %5545 = vmatmul.f32.gmra.mxu0 %v5479
        %v5546 = vpop.f32.mrf.mxu0
        %v5547 = vadd.f32 0.0, %v5546
        %5548 = vmatmul.f32.gmra.mxu0 %v5482
        %v5549 = vpop.f32.mrf.mxu0
        %v5550 = vadd.f32 0.0, %v5549
        %5551 = vmatmul.f32.gmra.mxu0 %v5485
        %v5552 = vpop.f32.mrf.mxu0
        %v5553 = vadd.f32 0.0, %v5552
        %5554 = vmatmul.f32.gmra.mxu0 %v5488
        %v5555 = vpop.f32.mrf.mxu0
        %v5556 = vadd.f32 0.0, %v5555
        %5557 = vmatmul.f32.gmra.mxu0 %v5491
        %v5558 = vpop.f32.mrf.mxu0
        %v5559 = vadd.f32 0.0, %v5558
        %5560 = vmatmul.f32.gmra.mxu0 %v5494
        %v5561 = vpop.f32.mrf.mxu0
        %v5562 = vadd.f32 0.0, %v5561
        %5563 = vmatmul.f32.gmra.mxu0 %v5497
        %v5564 = vpop.f32.mrf.mxu0
        %v5565 = vadd.f32 0.0, %v5564
        %5566 = vmatmul.f32.gmra.mxu0 %v5500
        %v5567 = vpop.f32.mrf.mxu0
        %v5568 = vadd.f32 0.0, %v5567
        %5569 = vmatmul.f32.gmra.mxu0 %v5503
        %v5570 = vpop.f32.mrf.mxu0
        %v5571 = vadd.f32 0.0, %v5570
        %5572 = vmatmul.f32.gmra.mxu0 %v5506
        %v5573 = vpop.f32.mrf.mxu0
        %v5574 = vadd.f32 0.0, %v5573
        %5575 = vmatmul.f32.gmra.mxu0 %v5509
        %v5576 = vpop.f32.mrf.mxu0
        %v5577 = vadd.f32 0.0, %v5576
        %5578 = vmatmul.f32.gmra.mxu0 %v5512
        %v5579 = vpop.f32.mrf.mxu0
        %v5580 = vadd.f32 0.0, %v5579
        %5581 = vmatmul.f32.gmra.mxu0 %v5515
        %v5582 = vpop.f32.mrf.mxu0
        %v5583 = vadd.f32 0.0, %v5582
        %5584 = vmatmul.f32.gmra.mxu0 %v5518
        %v5585 = vpop.f32.mrf.mxu0
        %v5586 = vadd.f32 0.0, %v5585
        %5587 = vmatmul.f32.gmra.mxu0 %v5521
        %v5588 = vpop.f32.mrf.mxu0
        %v5589 = vadd.f32 0.0, %v5588
        %5590 = vdwg.mxu0
        %v5591 = vadd.f32 %v5436, %v5544
        %v5592 = vadd.f32 %v5437, %v5547
        %v5593 = vadd.f32 %v5438, %v5550
        %v5594 = vadd.f32 %v5439, %v5553
        %v5595 = vadd.f32 %v5440, %v5556
        %v5596 = vadd.f32 %v5441, %v5559
        %v5597 = vadd.f32 %v5442, %v5562
        %v5598 = vadd.f32 %v5443, %v5565
        %v5599 = vadd.f32 %v5444, %v5568
        %v5600 = vadd.f32 %v5445, %v5571
        %v5601 = vadd.f32 %v5446, %v5574
        %v5602 = vadd.f32 %v5447, %v5577
        %v5603 = vadd.f32 %v5448, %v5580
        %v5604 = vadd.f32 %v5449, %v5583
        %v5605 = vadd.f32 %v5450, %v5586
        %v5606 = vadd.f32 %v5451, %v5589
        %v5607 = vld [vmem:[%s4986 + $0x4] sm:$0xff]
        %v5608 = vld [vmem:[%s4986 + $0xc] sm:$0xff]
        %v5609 = vld [vmem:[%s4986 + $0x1c] sm:$0xff]
        %v5610 = vld [vmem:[%s4986 + $0x24] sm:$0xff]
        %v5611 = vld [vmem:[%s4986 + $0x34] sm:$0xff]
        %v5612 = vld [vmem:[%s4986 + $0x3c] sm:$0xff]
        %v5613 = vld [vmem:[%s4986 + $0x4c] sm:$0xff]
        %v5614 = vld [vmem:[%s4986 + $0x54] sm:$0xff]
        %v5615 = vld [vmem:[%s4986 + $0x64] sm:$0xff]
        %v5616 = vld [vmem:[%s4986 + $0x6c] sm:$0xff]
        %v5617 = vld [vmem:[%s4986 + $0x7c] sm:$0xff]
        %v5618 = vld [vmem:[%s4986 + $0x84] sm:$0xff]
        %v5619 = vld [vmem:[%s4986 + $0x94] sm:$0xff]
        %v5620 = vld [vmem:[%s4986 + $0x9c] sm:$0xff]
        %v5621 = vld [vmem:[%s4986 + $0xac] sm:$0xff]
        %v5622 = vld [vmem:[%s4986 + $0xb4] sm:$0xff]
        %s5623 = scalar_lea.vmem %s1, 1536
        %v5624 = vld [vmem:[%s5623] sm:$0xff]
        %v5625 = vld [vmem:[%s5623 + $0x8] sm:$0xff]
        %v5626 = vld [vmem:[%s5623 + $0x10] sm:$0xff]
        %v5627 = vld [vmem:[%s5623 + $0x18] sm:$0xff]
        %v5628 = vld [vmem:[%s5623 + $0x20] sm:$0xff]
        %v5629 = vld [vmem:[%s5623 + $0x28] sm:$0xf]
        %v5631 = vsel %vm209, %v5607, 0
        %v5634 = vsel %vm209, %v5608, 0
        %v5637 = vsel %vm209, %v5609, 0
        %v5640 = vsel %vm209, %v5610, 0
        %v5643 = vsel %vm209, %v5611, 0
        %v5646 = vsel %vm209, %v5612, 0
        %v5649 = vsel %vm209, %v5613, 0
        %v5652 = vsel %vm209, %v5614, 0
        %v5655 = vsel %vm209, %v5615, 0
        %v5658 = vsel %vm209, %v5616, 0
        %v5661 = vsel %vm209, %v5617, 0
        %v5664 = vsel %vm209, %v5618, 0
        %v5667 = vsel %vm209, %v5619, 0
        %v5670 = vsel %vm209, %v5620, 0
        %v5673 = vsel %vm209, %v5621, 0
        %v5676 = vsel %vm209, %v5622, 0
        %v5679 = vsel %vm760, %v5629, 0
        %5681 = vmatpush.msra.mxu0 0.0
        %5682 = vmatpush.msra.mxu0 0.0
        %5683 = vmatpush.msra.mxu0 0.0
        %5684 = vmatpush.msra.mxu0 0.0
        %5685 = vmatpush.msra.mxu0 0.0
        %5686 = vmatpush.msra.mxu0 0.0
        %5687 = vmatpush.msra.mxu0 0.0
        %5688 = vmatpush.msra.mxu0 0.0
        %5689 = vmatpush.msra.mxu0 0.0
        %5690 = vmatpush.msra.mxu0 0.0
        %5691 = vmatpush.msra.mxu0 %v5679
        %5692 = vmatpush.msra.mxu0 %v5628
        %5693 = vmatpush.msra.mxu0 %v5627
        %5694 = vmatpush.msra.mxu0 %v5626
        %5695 = vmatpush.msra.mxu0 %v5625
        %5696 = vmatpush.msra.mxu0 %v5624
        %5697 = vmatmul.f32.gmra.mxu0 %v5631
        %v5698 = vpop.f32.mrf.mxu0
        %v5699 = vadd.f32 0.0, %v5698
        %5700 = vmatmul.f32.gmra.mxu0 %v5634
        %v5701 = vpop.f32.mrf.mxu0
        %v5702 = vadd.f32 0.0, %v5701
        %5703 = vmatmul.f32.gmra.mxu0 %v5637
        %v5704 = vpop.f32.mrf.mxu0
        %v5705 = vadd.f32 0.0, %v5704
        %5706 = vmatmul.f32.gmra.mxu0 %v5640
        %v5707 = vpop.f32.mrf.mxu0
        %v5708 = vadd.f32 0.0, %v5707
        %5709 = vmatmul.f32.gmra.mxu0 %v5643
        %v5710 = vpop.f32.mrf.mxu0
        %v5711 = vadd.f32 0.0, %v5710
        %5712 = vmatmul.f32.gmra.mxu0 %v5646
        %v5713 = vpop.f32.mrf.mxu0
        %v5714 = vadd.f32 0.0, %v5713
        %5715 = vmatmul.f32.gmra.mxu0 %v5649
        %v5716 = vpop.f32.mrf.mxu0
        %v5717 = vadd.f32 0.0, %v5716
        %5718 = vmatmul.f32.gmra.mxu0 %v5652
        %v5719 = vpop.f32.mrf.mxu0
        %v5720 = vadd.f32 0.0, %v5719
        %5721 = vmatmul.f32.gmra.mxu0 %v5655
        %v5722 = vpop.f32.mrf.mxu0
        %v5723 = vadd.f32 0.0, %v5722
        %5724 = vmatmul.f32.gmra.mxu0 %v5658
        %v5725 = vpop.f32.mrf.mxu0
        %v5726 = vadd.f32 0.0, %v5725
        %5727 = vmatmul.f32.gmra.mxu0 %v5661
        %v5728 = vpop.f32.mrf.mxu0
        %v5729 = vadd.f32 0.0, %v5728
        %5730 = vmatmul.f32.gmra.mxu0 %v5664
        %v5731 = vpop.f32.mrf.mxu0
        %v5732 = vadd.f32 0.0, %v5731
        %5733 = vmatmul.f32.gmra.mxu0 %v5667
        %v5734 = vpop.f32.mrf.mxu0
        %v5735 = vadd.f32 0.0, %v5734
        %5736 = vmatmul.f32.gmra.mxu0 %v5670
        %v5737 = vpop.f32.mrf.mxu0
        %v5738 = vadd.f32 0.0, %v5737
        %5739 = vmatmul.f32.gmra.mxu0 %v5673
        %v5740 = vpop.f32.mrf.mxu0
        %v5741 = vadd.f32 0.0, %v5740
        %5742 = vmatmul.f32.gmra.mxu0 %v5676
        %v5743 = vpop.f32.mrf.mxu0
        %v5744 = vadd.f32 0.0, %v5743
        %5745 = vdwg.mxu0
        %v5746 = vadd.f32 %v5591, %v5699
        %v5747 = vadd.f32 %v5592, %v5702
        %v5748 = vadd.f32 %v5593, %v5705
        %v5749 = vadd.f32 %v5594, %v5708
        %v5750 = vadd.f32 %v5595, %v5711
        %v5751 = vadd.f32 %v5596, %v5714
        %v5752 = vadd.f32 %v5597, %v5717
        %v5753 = vadd.f32 %v5598, %v5720
        %v5754 = vadd.f32 %v5599, %v5723
        %v5755 = vadd.f32 %v5600, %v5726
        %v5756 = vadd.f32 %v5601, %v5729
        %v5757 = vadd.f32 %v5602, %v5732
        %v5758 = vadd.f32 %v5603, %v5735
        %v5759 = vadd.f32 %v5604, %v5738
        %v5760 = vadd.f32 %v5605, %v5741
        %v5761 = vadd.f32 %v5606, %v5744
        %v5762 = vld [vmem:[%s4986 + $0x5] sm:$0xff]
        %v5763 = vld [vmem:[%s4986 + $0xd] sm:$0xff]
        %v5764 = vld [vmem:[%s4986 + $0x1d] sm:$0xff]
        %v5765 = vld [vmem:[%s4986 + $0x25] sm:$0xff]
        %v5766 = vld [vmem:[%s4986 + $0x35] sm:$0xff]
        %v5767 = vld [vmem:[%s4986 + $0x3d] sm:$0xff]
        %v5768 = vld [vmem:[%s4986 + $0x4d] sm:$0xff]
        %v5769 = vld [vmem:[%s4986 + $0x55] sm:$0xff]
        %v5770 = vld [vmem:[%s4986 + $0x65] sm:$0xff]
        %v5771 = vld [vmem:[%s4986 + $0x6d] sm:$0xff]
        %v5772 = vld [vmem:[%s4986 + $0x7d] sm:$0xff]
        %v5773 = vld [vmem:[%s4986 + $0x85] sm:$0xff]
        %v5774 = vld [vmem:[%s4986 + $0x95] sm:$0xff]
        %v5775 = vld [vmem:[%s4986 + $0x9d] sm:$0xff]
        %v5776 = vld [vmem:[%s4986 + $0xad] sm:$0xff]
        %v5777 = vld [vmem:[%s4986 + $0xb5] sm:$0xff]
        %s5778 = scalar_lea.vmem %s1, 1584
        %v5779 = vld [vmem:[%s5778] sm:$0xff]
        %v5780 = vld [vmem:[%s5778 + $0x8] sm:$0xff]
        %v5781 = vld [vmem:[%s5778 + $0x10] sm:$0xff]
        %v5782 = vld [vmem:[%s5778 + $0x18] sm:$0xff]
        %v5783 = vld [vmem:[%s5778 + $0x20] sm:$0xff]
        %v5784 = vld [vmem:[%s5778 + $0x28] sm:$0xf]
        %v5786 = vsel %vm209, %v5762, 0
        %v5789 = vsel %vm209, %v5763, 0
        %v5792 = vsel %vm209, %v5764, 0
        %v5795 = vsel %vm209, %v5765, 0
        %v5798 = vsel %vm209, %v5766, 0
        %v5801 = vsel %vm209, %v5767, 0
        %v5804 = vsel %vm209, %v5768, 0
        %v5807 = vsel %vm209, %v5769, 0
        %v5810 = vsel %vm209, %v5770, 0
        %v5813 = vsel %vm209, %v5771, 0
        %v5816 = vsel %vm209, %v5772, 0
        %v5819 = vsel %vm209, %v5773, 0
        %v5822 = vsel %vm209, %v5774, 0
        %v5825 = vsel %vm209, %v5775, 0
        %v5828 = vsel %vm209, %v5776, 0
        %v5831 = vsel %vm209, %v5777, 0
        %v5834 = vsel %vm760, %v5784, 0
        %5836 = vmatpush.msra.mxu0 0.0
        %5837 = vmatpush.msra.mxu0 0.0
        %5838 = vmatpush.msra.mxu0 0.0
        %5839 = vmatpush.msra.mxu0 0.0
        %5840 = vmatpush.msra.mxu0 0.0
        %5841 = vmatpush.msra.mxu0 0.0
        %5842 = vmatpush.msra.mxu0 0.0
        %5843 = vmatpush.msra.mxu0 0.0
        %5844 = vmatpush.msra.mxu0 0.0
        %5845 = vmatpush.msra.mxu0 0.0
        %5846 = vmatpush.msra.mxu0 %v5834
        %5847 = vmatpush.msra.mxu0 %v5783
        %5848 = vmatpush.msra.mxu0 %v5782
        %5849 = vmatpush.msra.mxu0 %v5781
        %5850 = vmatpush.msra.mxu0 %v5780
        %5851 = vmatpush.msra.mxu0 %v5779
        %5852 = vmatmul.f32.gmra.mxu0 %v5786
        %v5853 = vpop.f32.mrf.mxu0
        %v5854 = vadd.f32 0.0, %v5853
        %5855 = vmatmul.f32.gmra.mxu0 %v5789
        %v5856 = vpop.f32.mrf.mxu0
        %v5857 = vadd.f32 0.0, %v5856
        %5858 = vmatmul.f32.gmra.mxu0 %v5792
        %v5859 = vpop.f32.mrf.mxu0
        %v5860 = vadd.f32 0.0, %v5859
        %5861 = vmatmul.f32.gmra.mxu0 %v5795
        %v5862 = vpop.f32.mrf.mxu0
        %v5863 = vadd.f32 0.0, %v5862
        %5864 = vmatmul.f32.gmra.mxu0 %v5798
        %v5865 = vpop.f32.mrf.mxu0
        %v5866 = vadd.f32 0.0, %v5865
        %5867 = vmatmul.f32.gmra.mxu0 %v5801
        %v5868 = vpop.f32.mrf.mxu0
        %v5869 = vadd.f32 0.0, %v5868
        %5870 = vmatmul.f32.gmra.mxu0 %v5804
        %v5871 = vpop.f32.mrf.mxu0
        %v5872 = vadd.f32 0.0, %v5871
        %5873 = vmatmul.f32.gmra.mxu0 %v5807
        %v5874 = vpop.f32.mrf.mxu0
        %v5875 = vadd.f32 0.0, %v5874
        %5876 = vmatmul.f32.gmra.mxu0 %v5810
        %v5877 = vpop.f32.mrf.mxu0
        %v5878 = vadd.f32 0.0, %v5877
        %5879 = vmatmul.f32.gmra.mxu0 %v5813
        %v5880 = vpop.f32.mrf.mxu0
        %v5881 = vadd.f32 0.0, %v5880
        %5882 = vmatmul.f32.gmra.mxu0 %v5816
        %v5883 = vpop.f32.mrf.mxu0
        %v5884 = vadd.f32 0.0, %v5883
        %5885 = vmatmul.f32.gmra.mxu0 %v5819
        %v5886 = vpop.f32.mrf.mxu0
        %v5887 = vadd.f32 0.0, %v5886
        %5888 = vmatmul.f32.gmra.mxu0 %v5822
        %v5889 = vpop.f32.mrf.mxu0
        %v5890 = vadd.f32 0.0, %v5889
        %5891 = vmatmul.f32.gmra.mxu0 %v5825
        %v5892 = vpop.f32.mrf.mxu0
        %v5893 = vadd.f32 0.0, %v5892
        %5894 = vmatmul.f32.gmra.mxu0 %v5828
        %v5895 = vpop.f32.mrf.mxu0
        %v5896 = vadd.f32 0.0, %v5895
        %5897 = vmatmul.f32.gmra.mxu0 %v5831
        %v5898 = vpop.f32.mrf.mxu0
        %v5899 = vadd.f32 0.0, %v5898
        %5900 = vdwg.mxu0
        %v5901 = vadd.f32 %v5746, %v5854
        %v5902 = vadd.f32 %v5747, %v5857
        %v5903 = vadd.f32 %v5748, %v5860
        %v5904 = vadd.f32 %v5749, %v5863
        %v5905 = vadd.f32 %v5750, %v5866
        %v5906 = vadd.f32 %v5751, %v5869
        %v5907 = vadd.f32 %v5752, %v5872
        %v5908 = vadd.f32 %v5753, %v5875
        %v5909 = vadd.f32 %v5754, %v5878
        %v5910 = vadd.f32 %v5755, %v5881
        %v5911 = vadd.f32 %v5756, %v5884
        %v5912 = vadd.f32 %v5757, %v5887
        %v5913 = vadd.f32 %v5758, %v5890
        %v5914 = vadd.f32 %v5759, %v5893
        %v5915 = vadd.f32 %v5760, %v5896
        %v5916 = vadd.f32 %v5761, %v5899
        %v5917 = vld [vmem:[%s4986 + $0x6] sm:$0xff]
        %v5918 = vld [vmem:[%s4986 + $0xe] sm:$0xff]
        %v5919 = vld [vmem:[%s4986 + $0x1e] sm:$0xff]
        %v5920 = vld [vmem:[%s4986 + $0x26] sm:$0xff]
        %v5921 = vld [vmem:[%s4986 + $0x36] sm:$0xff]
        %v5922 = vld [vmem:[%s4986 + $0x3e] sm:$0xff]
        %v5923 = vld [vmem:[%s4986 + $0x4e] sm:$0xff]
        %v5924 = vld [vmem:[%s4986 + $0x56] sm:$0xff]
        %v5925 = vld [vmem:[%s4986 + $0x66] sm:$0xff]
        %v5926 = vld [vmem:[%s4986 + $0x6e] sm:$0xff]
        %v5927 = vld [vmem:[%s4986 + $0x7e] sm:$0xff]
        %v5928 = vld [vmem:[%s4986 + $0x86] sm:$0xff]
        %v5929 = vld [vmem:[%s4986 + $0x96] sm:$0xff]
        %v5930 = vld [vmem:[%s4986 + $0x9e] sm:$0xff]
        %v5931 = vld [vmem:[%s4986 + $0xae] sm:$0xff]
        %v5932 = vld [vmem:[%s4986 + $0xb6] sm:$0xff]
        %s5933 = scalar_lea.vmem %s1, 1632
        %v5934 = vld [vmem:[%s5933] sm:$0xff]
        %v5935 = vld [vmem:[%s5933 + $0x8] sm:$0xff]
        %v5936 = vld [vmem:[%s5933 + $0x10] sm:$0xff]
        %v5937 = vld [vmem:[%s5933 + $0x18] sm:$0xff]
        %v5938 = vld [vmem:[%s5933 + $0x20] sm:$0xff]
        %v5939 = vld [vmem:[%s5933 + $0x28] sm:$0xf]
        %v5941 = vsel %vm209, %v5917, 0
        %v5944 = vsel %vm209, %v5918, 0
        %v5947 = vsel %vm209, %v5919, 0
        %v5950 = vsel %vm209, %v5920, 0
        %v5953 = vsel %vm209, %v5921, 0
        %v5956 = vsel %vm209, %v5922, 0
        %v5959 = vsel %vm209, %v5923, 0
        %v5962 = vsel %vm209, %v5924, 0
        %v5965 = vsel %vm209, %v5925, 0
        %v5968 = vsel %vm209, %v5926, 0
        %v5971 = vsel %vm209, %v5927, 0
        %v5974 = vsel %vm209, %v5928, 0
        %v5977 = vsel %vm209, %v5929, 0
        %v5980 = vsel %vm209, %v5930, 0
        %v5983 = vsel %vm209, %v5931, 0
        %v5986 = vsel %vm209, %v5932, 0
        %v5989 = vsel %vm760, %v5939, 0
        %5991 = vmatpush.msra.mxu0 0.0
        %5992 = vmatpush.msra.mxu0 0.0
        %5993 = vmatpush.msra.mxu0 0.0
        %5994 = vmatpush.msra.mxu0 0.0
        %5995 = vmatpush.msra.mxu0 0.0
        %5996 = vmatpush.msra.mxu0 0.0
        %5997 = vmatpush.msra.mxu0 0.0
        %5998 = vmatpush.msra.mxu0 0.0
        %5999 = vmatpush.msra.mxu0 0.0
        %6000 = vmatpush.msra.mxu0 0.0
        %6001 = vmatpush.msra.mxu0 %v5989
        %6002 = vmatpush.msra.mxu0 %v5938
        %6003 = vmatpush.msra.mxu0 %v5937
        %6004 = vmatpush.msra.mxu0 %v5936
        %6005 = vmatpush.msra.mxu0 %v5935
        %6006 = vmatpush.msra.mxu0 %v5934
        %6007 = vmatmul.f32.gmra.mxu0 %v5941
        %v6008 = vpop.f32.mrf.mxu0
        %v6009 = vadd.f32 0.0, %v6008
        %6010 = vmatmul.f32.gmra.mxu0 %v5944
        %v6011 = vpop.f32.mrf.mxu0
        %v6012 = vadd.f32 0.0, %v6011
        %6013 = vmatmul.f32.gmra.mxu0 %v5947
        %v6014 = vpop.f32.mrf.mxu0
        %v6015 = vadd.f32 0.0, %v6014
        %6016 = vmatmul.f32.gmra.mxu0 %v5950
        %v6017 = vpop.f32.mrf.mxu0
        %v6018 = vadd.f32 0.0, %v6017
        %6019 = vmatmul.f32.gmra.mxu0 %v5953
        %v6020 = vpop.f32.mrf.mxu0
        %v6021 = vadd.f32 0.0, %v6020
        %6022 = vmatmul.f32.gmra.mxu0 %v5956
        %v6023 = vpop.f32.mrf.mxu0
        %v6024 = vadd.f32 0.0, %v6023
        %6025 = vmatmul.f32.gmra.mxu0 %v5959
        %v6026 = vpop.f32.mrf.mxu0
        %v6027 = vadd.f32 0.0, %v6026
        %6028 = vmatmul.f32.gmra.mxu0 %v5962
        %v6029 = vpop.f32.mrf.mxu0
        %v6030 = vadd.f32 0.0, %v6029
        %6031 = vmatmul.f32.gmra.mxu0 %v5965
        %v6032 = vpop.f32.mrf.mxu0
        %v6033 = vadd.f32 0.0, %v6032
        %6034 = vmatmul.f32.gmra.mxu0 %v5968
        %v6035 = vpop.f32.mrf.mxu0
        %v6036 = vadd.f32 0.0, %v6035
        %6037 = vmatmul.f32.gmra.mxu0 %v5971
        %v6038 = vpop.f32.mrf.mxu0
        %v6039 = vadd.f32 0.0, %v6038
        %6040 = vmatmul.f32.gmra.mxu0 %v5974
        %v6041 = vpop.f32.mrf.mxu0
        %v6042 = vadd.f32 0.0, %v6041
        %6043 = vmatmul.f32.gmra.mxu0 %v5977
        %v6044 = vpop.f32.mrf.mxu0
        %v6045 = vadd.f32 0.0, %v6044
        %6046 = vmatmul.f32.gmra.mxu0 %v5980
        %v6047 = vpop.f32.mrf.mxu0
        %v6048 = vadd.f32 0.0, %v6047
        %6049 = vmatmul.f32.gmra.mxu0 %v5983
        %v6050 = vpop.f32.mrf.mxu0
        %v6051 = vadd.f32 0.0, %v6050
        %6052 = vmatmul.f32.gmra.mxu0 %v5986
        %v6053 = vpop.f32.mrf.mxu0
        %v6054 = vadd.f32 0.0, %v6053
        %6055 = vdwg.mxu0
        %v6056 = vadd.f32 %v5901, %v6009
        %v6057 = vadd.f32 %v5902, %v6012
        %v6058 = vadd.f32 %v5903, %v6015
        %v6059 = vadd.f32 %v5904, %v6018
        %v6060 = vadd.f32 %v5905, %v6021
        %v6061 = vadd.f32 %v5906, %v6024
        %v6062 = vadd.f32 %v5907, %v6027
        %v6063 = vadd.f32 %v5908, %v6030
        %v6064 = vadd.f32 %v5909, %v6033
        %v6065 = vadd.f32 %v5910, %v6036
        %v6066 = vadd.f32 %v5911, %v6039
        %v6067 = vadd.f32 %v5912, %v6042
        %v6068 = vadd.f32 %v5913, %v6045
        %v6069 = vadd.f32 %v5914, %v6048
        %v6070 = vadd.f32 %v5915, %v6051
        %v6071 = vadd.f32 %v5916, %v6054
        %s6072 = sadd.s32 %s208, 5
        %s6073 = smul.u32 %s6072, 24
        %s6074 = scalar_lea.vmem [#allocation2], %s6073
        %v6075 = vld [vmem:[%s6074] sm:$0xff]
        %v6076 = vld [vmem:[%s6074 + $0x8] sm:$0xff]
        %v6077 = vld [vmem:[%s6074 + $0x18] sm:$0xff]
        %v6078 = vld [vmem:[%s6074 + $0x20] sm:$0xff]
        %v6079 = vld [vmem:[%s6074 + $0x30] sm:$0xff]
        %v6080 = vld [vmem:[%s6074 + $0x38] sm:$0xff]
        %v6081 = vld [vmem:[%s6074 + $0x48] sm:$0xff]
        %v6082 = vld [vmem:[%s6074 + $0x50] sm:$0xff]
        %v6083 = vld [vmem:[%s6074 + $0x60] sm:$0xff]
        %v6084 = vld [vmem:[%s6074 + $0x68] sm:$0xff]
        %v6085 = vld [vmem:[%s6074 + $0x78] sm:$0xff]
        %v6086 = vld [vmem:[%s6074 + $0x80] sm:$0xff]
        %v6087 = vld [vmem:[%s6074 + $0x90] sm:$0xff]
        %v6088 = vld [vmem:[%s6074 + $0x98] sm:$0xff]
        %v6089 = vld [vmem:[%s6074 + $0xa8] sm:$0xff]
        %v6090 = vld [vmem:[%s6074 + $0xb0] sm:$0xff]
        %s6091 = scalar_lea.vmem %s1, 1680
        %v6092 = vld [vmem:[%s6091] sm:$0xff]
        %v6093 = vld [vmem:[%s6091 + $0x8] sm:$0xff]
        %v6094 = vld [vmem:[%s6091 + $0x10] sm:$0xff]
        %v6095 = vld [vmem:[%s6091 + $0x18] sm:$0xff]
        %v6096 = vld [vmem:[%s6091 + $0x20] sm:$0xff]
        %v6097 = vld [vmem:[%s6091 + $0x28] sm:$0xf]
        %v6099 = vsel %vm209, %v6075, 0
        %v6102 = vsel %vm209, %v6076, 0
        %v6105 = vsel %vm209, %v6077, 0
        %v6108 = vsel %vm209, %v6078, 0
        %v6111 = vsel %vm209, %v6079, 0
        %v6114 = vsel %vm209, %v6080, 0
        %v6117 = vsel %vm209, %v6081, 0
        %v6120 = vsel %vm209, %v6082, 0
        %v6123 = vsel %vm209, %v6083, 0
        %v6126 = vsel %vm209, %v6084, 0
        %v6129 = vsel %vm209, %v6085, 0
        %v6132 = vsel %vm209, %v6086, 0
        %v6135 = vsel %vm209, %v6087, 0
        %v6138 = vsel %vm209, %v6088, 0
        %v6141 = vsel %vm209, %v6089, 0
        %v6144 = vsel %vm209, %v6090, 0
        %v6147 = vsel %vm760, %v6097, 0
        %6149 = vmatpush.msra.mxu0 0.0
        %6150 = vmatpush.msra.mxu0 0.0
        %6151 = vmatpush.msra.mxu0 0.0
        %6152 = vmatpush.msra.mxu0 0.0
        %6153 = vmatpush.msra.mxu0 0.0
        %6154 = vmatpush.msra.mxu0 0.0
        %6155 = vmatpush.msra.mxu0 0.0
        %6156 = vmatpush.msra.mxu0 0.0
        %6157 = vmatpush.msra.mxu0 0.0
        %6158 = vmatpush.msra.mxu0 0.0
        %6159 = vmatpush.msra.mxu0 %v6147
        %6160 = vmatpush.msra.mxu0 %v6096
        %6161 = vmatpush.msra.mxu0 %v6095
        %6162 = vmatpush.msra.mxu0 %v6094
        %6163 = vmatpush.msra.mxu0 %v6093
        %6164 = vmatpush.msra.mxu0 %v6092
        %6165 = vmatmul.f32.gmra.mxu0 %v6099
        %v6166 = vpop.f32.mrf.mxu0
        %v6167 = vadd.f32 0.0, %v6166
        %6168 = vmatmul.f32.gmra.mxu0 %v6102
        %v6169 = vpop.f32.mrf.mxu0
        %v6170 = vadd.f32 0.0, %v6169
        %6171 = vmatmul.f32.gmra.mxu0 %v6105
        %v6172 = vpop.f32.mrf.mxu0
        %v6173 = vadd.f32 0.0, %v6172
        %6174 = vmatmul.f32.gmra.mxu0 %v6108
        %v6175 = vpop.f32.mrf.mxu0
        %v6176 = vadd.f32 0.0, %v6175
        %6177 = vmatmul.f32.gmra.mxu0 %v6111
        %v6178 = vpop.f32.mrf.mxu0
        %v6179 = vadd.f32 0.0, %v6178
        %6180 = vmatmul.f32.gmra.mxu0 %v6114
        %v6181 = vpop.f32.mrf.mxu0
        %v6182 = vadd.f32 0.0, %v6181
        %6183 = vmatmul.f32.gmra.mxu0 %v6117
        %v6184 = vpop.f32.mrf.mxu0
        %v6185 = vadd.f32 0.0, %v6184
        %6186 = vmatmul.f32.gmra.mxu0 %v6120
        %v6187 = vpop.f32.mrf.mxu0
        %v6188 = vadd.f32 0.0, %v6187
        %6189 = vmatmul.f32.gmra.mxu0 %v6123
        %v6190 = vpop.f32.mrf.mxu0
        %v6191 = vadd.f32 0.0, %v6190
        %6192 = vmatmul.f32.gmra.mxu0 %v6126
        %v6193 = vpop.f32.mrf.mxu0
        %v6194 = vadd.f32 0.0, %v6193
        %6195 = vmatmul.f32.gmra.mxu0 %v6129
        %v6196 = vpop.f32.mrf.mxu0
        %v6197 = vadd.f32 0.0, %v6196
        %6198 = vmatmul.f32.gmra.mxu0 %v6132
        %v6199 = vpop.f32.mrf.mxu0
        %v6200 = vadd.f32 0.0, %v6199
        %6201 = vmatmul.f32.gmra.mxu0 %v6135
        %v6202 = vpop.f32.mrf.mxu0
        %v6203 = vadd.f32 0.0, %v6202
        %6204 = vmatmul.f32.gmra.mxu0 %v6138
        %v6205 = vpop.f32.mrf.mxu0
        %v6206 = vadd.f32 0.0, %v6205
        %6207 = vmatmul.f32.gmra.mxu0 %v6141
        %v6208 = vpop.f32.mrf.mxu0
        %v6209 = vadd.f32 0.0, %v6208
        %6210 = vmatmul.f32.gmra.mxu0 %v6144
        %v6211 = vpop.f32.mrf.mxu0
        %v6212 = vadd.f32 0.0, %v6211
        %6213 = vdwg.mxu0
        %v6214 = vadd.f32 %v6056, %v6167
        %v6215 = vadd.f32 %v6057, %v6170
        %v6216 = vadd.f32 %v6058, %v6173
        %v6217 = vadd.f32 %v6059, %v6176
        %v6218 = vadd.f32 %v6060, %v6179
        %v6219 = vadd.f32 %v6061, %v6182
        %v6220 = vadd.f32 %v6062, %v6185
        %v6221 = vadd.f32 %v6063, %v6188
        %v6222 = vadd.f32 %v6064, %v6191
        %v6223 = vadd.f32 %v6065, %v6194
        %v6224 = vadd.f32 %v6066, %v6197
        %v6225 = vadd.f32 %v6067, %v6200
        %v6226 = vadd.f32 %v6068, %v6203
        %v6227 = vadd.f32 %v6069, %v6206
        %v6228 = vadd.f32 %v6070, %v6209
        %v6229 = vadd.f32 %v6071, %v6212
        %v6230 = vld [vmem:[%s6074 + $0x1] sm:$0xff]
        %v6231 = vld [vmem:[%s6074 + $0x9] sm:$0xff]
        %v6232 = vld [vmem:[%s6074 + $0x19] sm:$0xff]
        %v6233 = vld [vmem:[%s6074 + $0x21] sm:$0xff]
        %v6234 = vld [vmem:[%s6074 + $0x31] sm:$0xff]
        %v6235 = vld [vmem:[%s6074 + $0x39] sm:$0xff]
        %v6236 = vld [vmem:[%s6074 + $0x49] sm:$0xff]
        %v6237 = vld [vmem:[%s6074 + $0x51] sm:$0xff]
        %v6238 = vld [vmem:[%s6074 + $0x61] sm:$0xff]
        %v6239 = vld [vmem:[%s6074 + $0x69] sm:$0xff]
        %v6240 = vld [vmem:[%s6074 + $0x79] sm:$0xff]
        %v6241 = vld [vmem:[%s6074 + $0x81] sm:$0xff]
        %v6242 = vld [vmem:[%s6074 + $0x91] sm:$0xff]
        %v6243 = vld [vmem:[%s6074 + $0x99] sm:$0xff]
        %v6244 = vld [vmem:[%s6074 + $0xa9] sm:$0xff]
        %v6245 = vld [vmem:[%s6074 + $0xb1] sm:$0xff]
        %s6246 = scalar_lea.vmem %s1, 1728
        %v6247 = vld [vmem:[%s6246] sm:$0xff]
        %v6248 = vld [vmem:[%s6246 + $0x8] sm:$0xff]
        %v6249 = vld [vmem:[%s6246 + $0x10] sm:$0xff]
        %v6250 = vld [vmem:[%s6246 + $0x18] sm:$0xff]
        %v6251 = vld [vmem:[%s6246 + $0x20] sm:$0xff]
        %v6252 = vld [vmem:[%s6246 + $0x28] sm:$0xf]
        %v6254 = vsel %vm209, %v6230, 0
        %v6257 = vsel %vm209, %v6231, 0
        %v6260 = vsel %vm209, %v6232, 0
        %v6263 = vsel %vm209, %v6233, 0
        %v6266 = vsel %vm209, %v6234, 0
        %v6269 = vsel %vm209, %v6235, 0
        %v6272 = vsel %vm209, %v6236, 0
        %v6275 = vsel %vm209, %v6237, 0
        %v6278 = vsel %vm209, %v6238, 0
        %v6281 = vsel %vm209, %v6239, 0
        %v6284 = vsel %vm209, %v6240, 0
        %v6287 = vsel %vm209, %v6241, 0
        %v6290 = vsel %vm209, %v6242, 0
        %v6293 = vsel %vm209, %v6243, 0
        %v6296 = vsel %vm209, %v6244, 0
        %v6299 = vsel %vm209, %v6245, 0
        %v6302 = vsel %vm760, %v6252, 0
        %6304 = vmatpush.msra.mxu0 0.0
        %6305 = vmatpush.msra.mxu0 0.0
        %6306 = vmatpush.msra.mxu0 0.0
        %6307 = vmatpush.msra.mxu0 0.0
        %6308 = vmatpush.msra.mxu0 0.0
        %6309 = vmatpush.msra.mxu0 0.0
        %6310 = vmatpush.msra.mxu0 0.0
        %6311 = vmatpush.msra.mxu0 0.0
        %6312 = vmatpush.msra.mxu0 0.0
        %6313 = vmatpush.msra.mxu0 0.0
        %6314 = vmatpush.msra.mxu0 %v6302
        %6315 = vmatpush.msra.mxu0 %v6251
        %6316 = vmatpush.msra.mxu0 %v6250
        %6317 = vmatpush.msra.mxu0 %v6249
        %6318 = vmatpush.msra.mxu0 %v6248
        %6319 = vmatpush.msra.mxu0 %v6247
        %6320 = vmatmul.f32.gmra.mxu0 %v6254
        %v6321 = vpop.f32.mrf.mxu0
        %v6322 = vadd.f32 0.0, %v6321
        %6323 = vmatmul.f32.gmra.mxu0 %v6257
        %v6324 = vpop.f32.mrf.mxu0
        %v6325 = vadd.f32 0.0, %v6324
        %6326 = vmatmul.f32.gmra.mxu0 %v6260
        %v6327 = vpop.f32.mrf.mxu0
        %v6328 = vadd.f32 0.0, %v6327
        %6329 = vmatmul.f32.gmra.mxu0 %v6263
        %v6330 = vpop.f32.mrf.mxu0
        %v6331 = vadd.f32 0.0, %v6330
        %6332 = vmatmul.f32.gmra.mxu0 %v6266
        %v6333 = vpop.f32.mrf.mxu0
        %v6334 = vadd.f32 0.0, %v6333
        %6335 = vmatmul.f32.gmra.mxu0 %v6269
        %v6336 = vpop.f32.mrf.mxu0
        %v6337 = vadd.f32 0.0, %v6336
        %6338 = vmatmul.f32.gmra.mxu0 %v6272
        %v6339 = vpop.f32.mrf.mxu0
        %v6340 = vadd.f32 0.0, %v6339
        %6341 = vmatmul.f32.gmra.mxu0 %v6275
        %v6342 = vpop.f32.mrf.mxu0
        %v6343 = vadd.f32 0.0, %v6342
        %6344 = vmatmul.f32.gmra.mxu0 %v6278
        %v6345 = vpop.f32.mrf.mxu0
        %v6346 = vadd.f32 0.0, %v6345
        %6347 = vmatmul.f32.gmra.mxu0 %v6281
        %v6348 = vpop.f32.mrf.mxu0
        %v6349 = vadd.f32 0.0, %v6348
        %6350 = vmatmul.f32.gmra.mxu0 %v6284
        %v6351 = vpop.f32.mrf.mxu0
        %v6352 = vadd.f32 0.0, %v6351
        %6353 = vmatmul.f32.gmra.mxu0 %v6287
        %v6354 = vpop.f32.mrf.mxu0
        %v6355 = vadd.f32 0.0, %v6354
        %6356 = vmatmul.f32.gmra.mxu0 %v6290
        %v6357 = vpop.f32.mrf.mxu0
        %v6358 = vadd.f32 0.0, %v6357
        %6359 = vmatmul.f32.gmra.mxu0 %v6293
        %v6360 = vpop.f32.mrf.mxu0
        %v6361 = vadd.f32 0.0, %v6360
        %6362 = vmatmul.f32.gmra.mxu0 %v6296
        %v6363 = vpop.f32.mrf.mxu0
        %v6364 = vadd.f32 0.0, %v6363
        %6365 = vmatmul.f32.gmra.mxu0 %v6299
        %v6366 = vpop.f32.mrf.mxu0
        %v6367 = vadd.f32 0.0, %v6366
        %6368 = vdwg.mxu0
        %v6369 = vadd.f32 %v6214, %v6322
        %v6370 = vadd.f32 %v6215, %v6325
        %v6371 = vadd.f32 %v6216, %v6328
        %v6372 = vadd.f32 %v6217, %v6331
        %v6373 = vadd.f32 %v6218, %v6334
        %v6374 = vadd.f32 %v6219, %v6337
        %v6375 = vadd.f32 %v6220, %v6340
        %v6376 = vadd.f32 %v6221, %v6343
        %v6377 = vadd.f32 %v6222, %v6346
        %v6378 = vadd.f32 %v6223, %v6349
        %v6379 = vadd.f32 %v6224, %v6352
        %v6380 = vadd.f32 %v6225, %v6355
        %v6381 = vadd.f32 %v6226, %v6358
        %v6382 = vadd.f32 %v6227, %v6361
        %v6383 = vadd.f32 %v6228, %v6364
        %v6384 = vadd.f32 %v6229, %v6367
        %v6385 = vld [vmem:[%s6074 + $0x2] sm:$0xff]
        %v6386 = vld [vmem:[%s6074 + $0xa] sm:$0xff]
        %v6387 = vld [vmem:[%s6074 + $0x1a] sm:$0xff]
        %v6388 = vld [vmem:[%s6074 + $0x22] sm:$0xff]
        %v6389 = vld [vmem:[%s6074 + $0x32] sm:$0xff]
        %v6390 = vld [vmem:[%s6074 + $0x3a] sm:$0xff]
        %v6391 = vld [vmem:[%s6074 + $0x4a] sm:$0xff]
        %v6392 = vld [vmem:[%s6074 + $0x52] sm:$0xff]
        %v6393 = vld [vmem:[%s6074 + $0x62] sm:$0xff]
        %v6394 = vld [vmem:[%s6074 + $0x6a] sm:$0xff]
        %v6395 = vld [vmem:[%s6074 + $0x7a] sm:$0xff]
        %v6396 = vld [vmem:[%s6074 + $0x82] sm:$0xff]
        %v6397 = vld [vmem:[%s6074 + $0x92] sm:$0xff]
        %v6398 = vld [vmem:[%s6074 + $0x9a] sm:$0xff]
        %v6399 = vld [vmem:[%s6074 + $0xaa] sm:$0xff]
        %v6400 = vld [vmem:[%s6074 + $0xb2] sm:$0xff]
        %s6401 = scalar_lea.vmem %s1, 1776
        %v6402 = vld [vmem:[%s6401] sm:$0xff]
        %v6403 = vld [vmem:[%s6401 + $0x8] sm:$0xff]
        %v6404 = vld [vmem:[%s6401 + $0x10] sm:$0xff]
        %v6405 = vld [vmem:[%s6401 + $0x18] sm:$0xff]
        %v6406 = vld [vmem:[%s6401 + $0x20] sm:$0xff]
        %v6407 = vld [vmem:[%s6401 + $0x28] sm:$0xf]
        %v6409 = vsel %vm209, %v6385, 0
        %v6412 = vsel %vm209, %v6386, 0
        %v6415 = vsel %vm209, %v6387, 0
        %v6418 = vsel %vm209, %v6388, 0
        %v6421 = vsel %vm209, %v6389, 0
        %v6424 = vsel %vm209, %v6390, 0
        %v6427 = vsel %vm209, %v6391, 0
        %v6430 = vsel %vm209, %v6392, 0
        %v6433 = vsel %vm209, %v6393, 0
        %v6436 = vsel %vm209, %v6394, 0
        %v6439 = vsel %vm209, %v6395, 0
        %v6442 = vsel %vm209, %v6396, 0
        %v6445 = vsel %vm209, %v6397, 0
        %v6448 = vsel %vm209, %v6398, 0
        %v6451 = vsel %vm209, %v6399, 0
        %v6454 = vsel %vm209, %v6400, 0
        %v6457 = vsel %vm760, %v6407, 0
        %6459 = vmatpush.msra.mxu0 0.0
        %6460 = vmatpush.msra.mxu0 0.0
        %6461 = vmatpush.msra.mxu0 0.0
        %6462 = vmatpush.msra.mxu0 0.0
        %6463 = vmatpush.msra.mxu0 0.0
        %6464 = vmatpush.msra.mxu0 0.0
        %6465 = vmatpush.msra.mxu0 0.0
        %6466 = vmatpush.msra.mxu0 0.0
        %6467 = vmatpush.msra.mxu0 0.0
        %6468 = vmatpush.msra.mxu0 0.0
        %6469 = vmatpush.msra.mxu0 %v6457
        %6470 = vmatpush.msra.mxu0 %v6406
        %6471 = vmatpush.msra.mxu0 %v6405
        %6472 = vmatpush.msra.mxu0 %v6404
        %6473 = vmatpush.msra.mxu0 %v6403
        %6474 = vmatpush.msra.mxu0 %v6402
        %6475 = vmatmul.f32.gmra.mxu0 %v6409
        %v6476 = vpop.f32.mrf.mxu0
        %v6477 = vadd.f32 0.0, %v6476
        %6478 = vmatmul.f32.gmra.mxu0 %v6412
        %v6479 = vpop.f32.mrf.mxu0
        %v6480 = vadd.f32 0.0, %v6479
        %6481 = vmatmul.f32.gmra.mxu0 %v6415
        %v6482 = vpop.f32.mrf.mxu0
        %v6483 = vadd.f32 0.0, %v6482
        %6484 = vmatmul.f32.gmra.mxu0 %v6418
        %v6485 = vpop.f32.mrf.mxu0
        %v6486 = vadd.f32 0.0, %v6485
        %6487 = vmatmul.f32.gmra.mxu0 %v6421
        %v6488 = vpop.f32.mrf.mxu0
        %v6489 = vadd.f32 0.0, %v6488
        %6490 = vmatmul.f32.gmra.mxu0 %v6424
        %v6491 = vpop.f32.mrf.mxu0
        %v6492 = vadd.f32 0.0, %v6491
        %6493 = vmatmul.f32.gmra.mxu0 %v6427
        %v6494 = vpop.f32.mrf.mxu0
        %v6495 = vadd.f32 0.0, %v6494
        %6496 = vmatmul.f32.gmra.mxu0 %v6430
        %v6497 = vpop.f32.mrf.mxu0
        %v6498 = vadd.f32 0.0, %v6497
        %6499 = vmatmul.f32.gmra.mxu0 %v6433
        %v6500 = vpop.f32.mrf.mxu0
        %v6501 = vadd.f32 0.0, %v6500
        %6502 = vmatmul.f32.gmra.mxu0 %v6436
        %v6503 = vpop.f32.mrf.mxu0
        %v6504 = vadd.f32 0.0, %v6503
        %6505 = vmatmul.f32.gmra.mxu0 %v6439
        %v6506 = vpop.f32.mrf.mxu0
        %v6507 = vadd.f32 0.0, %v6506
        %6508 = vmatmul.f32.gmra.mxu0 %v6442
        %v6509 = vpop.f32.mrf.mxu0
        %v6510 = vadd.f32 0.0, %v6509
        %6511 = vmatmul.f32.gmra.mxu0 %v6445
        %v6512 = vpop.f32.mrf.mxu0
        %v6513 = vadd.f32 0.0, %v6512
        %6514 = vmatmul.f32.gmra.mxu0 %v6448
        %v6515 = vpop.f32.mrf.mxu0
        %v6516 = vadd.f32 0.0, %v6515
        %6517 = vmatmul.f32.gmra.mxu0 %v6451
        %v6518 = vpop.f32.mrf.mxu0
        %v6519 = vadd.f32 0.0, %v6518
        %6520 = vmatmul.f32.gmra.mxu0 %v6454
        %v6521 = vpop.f32.mrf.mxu0
        %v6522 = vadd.f32 0.0, %v6521
        %6523 = vdwg.mxu0
        %v6524 = vadd.f32 %v6369, %v6477
        %v6525 = vadd.f32 %v6370, %v6480
        %v6526 = vadd.f32 %v6371, %v6483
        %v6527 = vadd.f32 %v6372, %v6486
        %v6528 = vadd.f32 %v6373, %v6489
        %v6529 = vadd.f32 %v6374, %v6492
        %v6530 = vadd.f32 %v6375, %v6495
        %v6531 = vadd.f32 %v6376, %v6498
        %v6532 = vadd.f32 %v6377, %v6501
        %v6533 = vadd.f32 %v6378, %v6504
        %v6534 = vadd.f32 %v6379, %v6507
        %v6535 = vadd.f32 %v6380, %v6510
        %v6536 = vadd.f32 %v6381, %v6513
        %v6537 = vadd.f32 %v6382, %v6516
        %v6538 = vadd.f32 %v6383, %v6519
        %v6539 = vadd.f32 %v6384, %v6522
        %v6540 = vld [vmem:[%s6074 + $0x3] sm:$0xff]
        %v6541 = vld [vmem:[%s6074 + $0xb] sm:$0xff]
        %v6542 = vld [vmem:[%s6074 + $0x1b] sm:$0xff]
        %v6543 = vld [vmem:[%s6074 + $0x23] sm:$0xff]
        %v6544 = vld [vmem:[%s6074 + $0x33] sm:$0xff]
        %v6545 = vld [vmem:[%s6074 + $0x3b] sm:$0xff]
        %v6546 = vld [vmem:[%s6074 + $0x4b] sm:$0xff]
        %v6547 = vld [vmem:[%s6074 + $0x53] sm:$0xff]
        %v6548 = vld [vmem:[%s6074 + $0x63] sm:$0xff]
        %v6549 = vld [vmem:[%s6074 + $0x6b] sm:$0xff]
        %v6550 = vld [vmem:[%s6074 + $0x7b] sm:$0xff]
        %v6551 = vld [vmem:[%s6074 + $0x83] sm:$0xff]
        %v6552 = vld [vmem:[%s6074 + $0x93] sm:$0xff]
        %v6553 = vld [vmem:[%s6074 + $0x9b] sm:$0xff]
        %v6554 = vld [vmem:[%s6074 + $0xab] sm:$0xff]
        %v6555 = vld [vmem:[%s6074 + $0xb3] sm:$0xff]
        %s6556 = scalar_lea.vmem %s1, 1824
        %v6557 = vld [vmem:[%s6556] sm:$0xff]
        %v6558 = vld [vmem:[%s6556 + $0x8] sm:$0xff]
        %v6559 = vld [vmem:[%s6556 + $0x10] sm:$0xff]
        %v6560 = vld [vmem:[%s6556 + $0x18] sm:$0xff]
        %v6561 = vld [vmem:[%s6556 + $0x20] sm:$0xff]
        %v6562 = vld [vmem:[%s6556 + $0x28] sm:$0xf]
        %v6564 = vsel %vm209, %v6540, 0
        %v6567 = vsel %vm209, %v6541, 0
        %v6570 = vsel %vm209, %v6542, 0
        %v6573 = vsel %vm209, %v6543, 0
        %v6576 = vsel %vm209, %v6544, 0
        %v6579 = vsel %vm209, %v6545, 0
        %v6582 = vsel %vm209, %v6546, 0
        %v6585 = vsel %vm209, %v6547, 0
        %v6588 = vsel %vm209, %v6548, 0
        %v6591 = vsel %vm209, %v6549, 0
        %v6594 = vsel %vm209, %v6550, 0
        %v6597 = vsel %vm209, %v6551, 0
        %v6600 = vsel %vm209, %v6552, 0
        %v6603 = vsel %vm209, %v6553, 0
        %v6606 = vsel %vm209, %v6554, 0
        %v6609 = vsel %vm209, %v6555, 0
        %v6612 = vsel %vm760, %v6562, 0
        %6614 = vmatpush.msra.mxu0 0.0
        %6615 = vmatpush.msra.mxu0 0.0
        %6616 = vmatpush.msra.mxu0 0.0
        %6617 = vmatpush.msra.mxu0 0.0
        %6618 = vmatpush.msra.mxu0 0.0
        %6619 = vmatpush.msra.mxu0 0.0
        %6620 = vmatpush.msra.mxu0 0.0
        %6621 = vmatpush.msra.mxu0 0.0
        %6622 = vmatpush.msra.mxu0 0.0
        %6623 = vmatpush.msra.mxu0 0.0
        %6624 = vmatpush.msra.mxu0 %v6612
        %6625 = vmatpush.msra.mxu0 %v6561
        %6626 = vmatpush.msra.mxu0 %v6560
        %6627 = vmatpush.msra.mxu0 %v6559
        %6628 = vmatpush.msra.mxu0 %v6558
        %6629 = vmatpush.msra.mxu0 %v6557
        %6630 = vmatmul.f32.gmra.mxu0 %v6564
        %v6631 = vpop.f32.mrf.mxu0
        %v6632 = vadd.f32 0.0, %v6631
        %6633 = vmatmul.f32.gmra.mxu0 %v6567
        %v6634 = vpop.f32.mrf.mxu0
        %v6635 = vadd.f32 0.0, %v6634
        %6636 = vmatmul.f32.gmra.mxu0 %v6570
        %v6637 = vpop.f32.mrf.mxu0
        %v6638 = vadd.f32 0.0, %v6637
        %6639 = vmatmul.f32.gmra.mxu0 %v6573
        %v6640 = vpop.f32.mrf.mxu0
        %v6641 = vadd.f32 0.0, %v6640
        %6642 = vmatmul.f32.gmra.mxu0 %v6576
        %v6643 = vpop.f32.mrf.mxu0
        %v6644 = vadd.f32 0.0, %v6643
        %6645 = vmatmul.f32.gmra.mxu0 %v6579
        %v6646 = vpop.f32.mrf.mxu0
        %v6647 = vadd.f32 0.0, %v6646
        %6648 = vmatmul.f32.gmra.mxu0 %v6582
        %v6649 = vpop.f32.mrf.mxu0
        %v6650 = vadd.f32 0.0, %v6649
        %6651 = vmatmul.f32.gmra.mxu0 %v6585
        %v6652 = vpop.f32.mrf.mxu0
        %v6653 = vadd.f32 0.0, %v6652
        %6654 = vmatmul.f32.gmra.mxu0 %v6588
        %v6655 = vpop.f32.mrf.mxu0
        %v6656 = vadd.f32 0.0, %v6655
        %6657 = vmatmul.f32.gmra.mxu0 %v6591
        %v6658 = vpop.f32.mrf.mxu0
        %v6659 = vadd.f32 0.0, %v6658
        %6660 = vmatmul.f32.gmra.mxu0 %v6594
        %v6661 = vpop.f32.mrf.mxu0
        %v6662 = vadd.f32 0.0, %v6661
        %6663 = vmatmul.f32.gmra.mxu0 %v6597
        %v6664 = vpop.f32.mrf.mxu0
        %v6665 = vadd.f32 0.0, %v6664
        %6666 = vmatmul.f32.gmra.mxu0 %v6600
        %v6667 = vpop.f32.mrf.mxu0
        %v6668 = vadd.f32 0.0, %v6667
        %6669 = vmatmul.f32.gmra.mxu0 %v6603
        %v6670 = vpop.f32.mrf.mxu0
        %v6671 = vadd.f32 0.0, %v6670
        %6672 = vmatmul.f32.gmra.mxu0 %v6606
        %v6673 = vpop.f32.mrf.mxu0
        %v6674 = vadd.f32 0.0, %v6673
        %6675 = vmatmul.f32.gmra.mxu0 %v6609
        %v6676 = vpop.f32.mrf.mxu0
        %v6677 = vadd.f32 0.0, %v6676
        %6678 = vdwg.mxu0
        %v6679 = vadd.f32 %v6524, %v6632
        %v6680 = vadd.f32 %v6525, %v6635
        %v6681 = vadd.f32 %v6526, %v6638
        %v6682 = vadd.f32 %v6527, %v6641
        %v6683 = vadd.f32 %v6528, %v6644
        %v6684 = vadd.f32 %v6529, %v6647
        %v6685 = vadd.f32 %v6530, %v6650
        %v6686 = vadd.f32 %v6531, %v6653
        %v6687 = vadd.f32 %v6532, %v6656
        %v6688 = vadd.f32 %v6533, %v6659
        %v6689 = vadd.f32 %v6534, %v6662
        %v6690 = vadd.f32 %v6535, %v6665
        %v6691 = vadd.f32 %v6536, %v6668
        %v6692 = vadd.f32 %v6537, %v6671
        %v6693 = vadd.f32 %v6538, %v6674
        %v6694 = vadd.f32 %v6539, %v6677
        %v6695 = vld [vmem:[%s6074 + $0x4] sm:$0xff]
        %v6696 = vld [vmem:[%s6074 + $0xc] sm:$0xff]
        %v6697 = vld [vmem:[%s6074 + $0x1c] sm:$0xff]
        %v6698 = vld [vmem:[%s6074 + $0x24] sm:$0xff]
        %v6699 = vld [vmem:[%s6074 + $0x34] sm:$0xff]
        %v6700 = vld [vmem:[%s6074 + $0x3c] sm:$0xff]
        %v6701 = vld [vmem:[%s6074 + $0x4c] sm:$0xff]
        %v6702 = vld [vmem:[%s6074 + $0x54] sm:$0xff]
        %v6703 = vld [vmem:[%s6074 + $0x64] sm:$0xff]
        %v6704 = vld [vmem:[%s6074 + $0x6c] sm:$0xff]
        %v6705 = vld [vmem:[%s6074 + $0x7c] sm:$0xff]
        %v6706 = vld [vmem:[%s6074 + $0x84] sm:$0xff]
        %v6707 = vld [vmem:[%s6074 + $0x94] sm:$0xff]
        %v6708 = vld [vmem:[%s6074 + $0x9c] sm:$0xff]
        %v6709 = vld [vmem:[%s6074 + $0xac] sm:$0xff]
        %v6710 = vld [vmem:[%s6074 + $0xb4] sm:$0xff]
        %s6711 = scalar_lea.vmem %s1, 1872
        %v6712 = vld [vmem:[%s6711] sm:$0xff]
        %v6713 = vld [vmem:[%s6711 + $0x8] sm:$0xff]
        %v6714 = vld [vmem:[%s6711 + $0x10] sm:$0xff]
        %v6715 = vld [vmem:[%s6711 + $0x18] sm:$0xff]
        %v6716 = vld [vmem:[%s6711 + $0x20] sm:$0xff]
        %v6717 = vld [vmem:[%s6711 + $0x28] sm:$0xf]
        %v6719 = vsel %vm209, %v6695, 0
        %v6722 = vsel %vm209, %v6696, 0
        %v6725 = vsel %vm209, %v6697, 0
        %v6728 = vsel %vm209, %v6698, 0
        %v6731 = vsel %vm209, %v6699, 0
        %v6734 = vsel %vm209, %v6700, 0
        %v6737 = vsel %vm209, %v6701, 0
        %v6740 = vsel %vm209, %v6702, 0
        %v6743 = vsel %vm209, %v6703, 0
        %v6746 = vsel %vm209, %v6704, 0
        %v6749 = vsel %vm209, %v6705, 0
        %v6752 = vsel %vm209, %v6706, 0
        %v6755 = vsel %vm209, %v6707, 0
        %v6758 = vsel %vm209, %v6708, 0
        %v6761 = vsel %vm209, %v6709, 0
        %v6764 = vsel %vm209, %v6710, 0
        %v6767 = vsel %vm760, %v6717, 0
        %6769 = vmatpush.msra.mxu0 0.0
        %6770 = vmatpush.msra.mxu0 0.0
        %6771 = vmatpush.msra.mxu0 0.0
        %6772 = vmatpush.msra.mxu0 0.0
        %6773 = vmatpush.msra.mxu0 0.0
        %6774 = vmatpush.msra.mxu0 0.0
        %6775 = vmatpush.msra.mxu0 0.0
        %6776 = vmatpush.msra.mxu0 0.0
        %6777 = vmatpush.msra.mxu0 0.0
        %6778 = vmatpush.msra.mxu0 0.0
        %6779 = vmatpush.msra.mxu0 %v6767
        %6780 = vmatpush.msra.mxu0 %v6716
        %6781 = vmatpush.msra.mxu0 %v6715
        %6782 = vmatpush.msra.mxu0 %v6714
        %6783 = vmatpush.msra.mxu0 %v6713
        %6784 = vmatpush.msra.mxu0 %v6712
        %6785 = vmatmul.f32.gmra.mxu0 %v6719
        %v6786 = vpop.f32.mrf.mxu0
        %v6787 = vadd.f32 0.0, %v6786
        %6788 = vmatmul.f32.gmra.mxu0 %v6722
        %v6789 = vpop.f32.mrf.mxu0
        %v6790 = vadd.f32 0.0, %v6789
        %6791 = vmatmul.f32.gmra.mxu0 %v6725
        %v6792 = vpop.f32.mrf.mxu0
        %v6793 = vadd.f32 0.0, %v6792
        %6794 = vmatmul.f32.gmra.mxu0 %v6728
        %v6795 = vpop.f32.mrf.mxu0
        %v6796 = vadd.f32 0.0, %v6795
        %6797 = vmatmul.f32.gmra.mxu0 %v6731
        %v6798 = vpop.f32.mrf.mxu0
        %v6799 = vadd.f32 0.0, %v6798
        %6800 = vmatmul.f32.gmra.mxu0 %v6734
        %v6801 = vpop.f32.mrf.mxu0
        %v6802 = vadd.f32 0.0, %v6801
        %6803 = vmatmul.f32.gmra.mxu0 %v6737
        %v6804 = vpop.f32.mrf.mxu0
        %v6805 = vadd.f32 0.0, %v6804
        %6806 = vmatmul.f32.gmra.mxu0 %v6740
        %v6807 = vpop.f32.mrf.mxu0
        %v6808 = vadd.f32 0.0, %v6807
        %6809 = vmatmul.f32.gmra.mxu0 %v6743
        %v6810 = vpop.f32.mrf.mxu0
        %v6811 = vadd.f32 0.0, %v6810
        %6812 = vmatmul.f32.gmra.mxu0 %v6746
        %v6813 = vpop.f32.mrf.mxu0
        %v6814 = vadd.f32 0.0, %v6813
        %6815 = vmatmul.f32.gmra.mxu0 %v6749
        %v6816 = vpop.f32.mrf.mxu0
        %v6817 = vadd.f32 0.0, %v6816
        %6818 = vmatmul.f32.gmra.mxu0 %v6752
        %v6819 = vpop.f32.mrf.mxu0
        %v6820 = vadd.f32 0.0, %v6819
        %6821 = vmatmul.f32.gmra.mxu0 %v6755
        %v6822 = vpop.f32.mrf.mxu0
        %v6823 = vadd.f32 0.0, %v6822
        %6824 = vmatmul.f32.gmra.mxu0 %v6758
        %v6825 = vpop.f32.mrf.mxu0
        %v6826 = vadd.f32 0.0, %v6825
        %6827 = vmatmul.f32.gmra.mxu0 %v6761
        %v6828 = vpop.f32.mrf.mxu0
        %v6829 = vadd.f32 0.0, %v6828
        %6830 = vmatmul.f32.gmra.mxu0 %v6764
        %v6831 = vpop.f32.mrf.mxu0
        %v6832 = vadd.f32 0.0, %v6831
        %6833 = vdwg.mxu0
        %v6834 = vadd.f32 %v6679, %v6787
        %v6835 = vadd.f32 %v6680, %v6790
        %v6836 = vadd.f32 %v6681, %v6793
        %v6837 = vadd.f32 %v6682, %v6796
        %v6838 = vadd.f32 %v6683, %v6799
        %v6839 = vadd.f32 %v6684, %v6802
        %v6840 = vadd.f32 %v6685, %v6805
        %v6841 = vadd.f32 %v6686, %v6808
        %v6842 = vadd.f32 %v6687, %v6811
        %v6843 = vadd.f32 %v6688, %v6814
        %v6844 = vadd.f32 %v6689, %v6817
        %v6845 = vadd.f32 %v6690, %v6820
        %v6846 = vadd.f32 %v6691, %v6823
        %v6847 = vadd.f32 %v6692, %v6826
        %v6848 = vadd.f32 %v6693, %v6829
        %v6849 = vadd.f32 %v6694, %v6832
        %v6850 = vld [vmem:[%s6074 + $0x5] sm:$0xff]
        %v6851 = vld [vmem:[%s6074 + $0xd] sm:$0xff]
        %v6852 = vld [vmem:[%s6074 + $0x1d] sm:$0xff]
        %v6853 = vld [vmem:[%s6074 + $0x25] sm:$0xff]
        %v6854 = vld [vmem:[%s6074 + $0x35] sm:$0xff]
        %v6855 = vld [vmem:[%s6074 + $0x3d] sm:$0xff]
        %v6856 = vld [vmem:[%s6074 + $0x4d] sm:$0xff]
        %v6857 = vld [vmem:[%s6074 + $0x55] sm:$0xff]
        %v6858 = vld [vmem:[%s6074 + $0x65] sm:$0xff]
        %v6859 = vld [vmem:[%s6074 + $0x6d] sm:$0xff]
        %v6860 = vld [vmem:[%s6074 + $0x7d] sm:$0xff]
        %v6861 = vld [vmem:[%s6074 + $0x85] sm:$0xff]
        %v6862 = vld [vmem:[%s6074 + $0x95] sm:$0xff]
        %v6863 = vld [vmem:[%s6074 + $0x9d] sm:$0xff]
        %v6864 = vld [vmem:[%s6074 + $0xad] sm:$0xff]
        %v6865 = vld [vmem:[%s6074 + $0xb5] sm:$0xff]
        %s6866 = scalar_lea.vmem %s1, 1920
        %v6867 = vld [vmem:[%s6866] sm:$0xff]
        %v6868 = vld [vmem:[%s6866 + $0x8] sm:$0xff]
        %v6869 = vld [vmem:[%s6866 + $0x10] sm:$0xff]
        %v6870 = vld [vmem:[%s6866 + $0x18] sm:$0xff]
        %v6871 = vld [vmem:[%s6866 + $0x20] sm:$0xff]
        %v6872 = vld [vmem:[%s6866 + $0x28] sm:$0xf]
        %v6874 = vsel %vm209, %v6850, 0
        %v6877 = vsel %vm209, %v6851, 0
        %v6880 = vsel %vm209, %v6852, 0
        %v6883 = vsel %vm209, %v6853, 0
        %v6886 = vsel %vm209, %v6854, 0
        %v6889 = vsel %vm209, %v6855, 0
        %v6892 = vsel %vm209, %v6856, 0
        %v6895 = vsel %vm209, %v6857, 0
        %v6898 = vsel %vm209, %v6858, 0
        %v6901 = vsel %vm209, %v6859, 0
        %v6904 = vsel %vm209, %v6860, 0
        %v6907 = vsel %vm209, %v6861, 0
        %v6910 = vsel %vm209, %v6862, 0
        %v6913 = vsel %vm209, %v6863, 0
        %v6916 = vsel %vm209, %v6864, 0
        %v6919 = vsel %vm209, %v6865, 0
        %v6922 = vsel %vm760, %v6872, 0
        %6924 = vmatpush.msra.mxu0 0.0
        %6925 = vmatpush.msra.mxu0 0.0
        %6926 = vmatpush.msra.mxu0 0.0
        %6927 = vmatpush.msra.mxu0 0.0
        %6928 = vmatpush.msra.mxu0 0.0
        %6929 = vmatpush.msra.mxu0 0.0
        %6930 = vmatpush.msra.mxu0 0.0
        %6931 = vmatpush.msra.mxu0 0.0
        %6932 = vmatpush.msra.mxu0 0.0
        %6933 = vmatpush.msra.mxu0 0.0
        %6934 = vmatpush.msra.mxu0 %v6922
        %6935 = vmatpush.msra.mxu0 %v6871
        %6936 = vmatpush.msra.mxu0 %v6870
        %6937 = vmatpush.msra.mxu0 %v6869
        %6938 = vmatpush.msra.mxu0 %v6868
        %6939 = vmatpush.msra.mxu0 %v6867
        %6940 = vmatmul.f32.gmra.mxu0 %v6874
        %v6941 = vpop.f32.mrf.mxu0
        %v6942 = vadd.f32 0.0, %v6941
        %6943 = vmatmul.f32.gmra.mxu0 %v6877
        %v6944 = vpop.f32.mrf.mxu0
        %v6945 = vadd.f32 0.0, %v6944
        %6946 = vmatmul.f32.gmra.mxu0 %v6880
        %v6947 = vpop.f32.mrf.mxu0
        %v6948 = vadd.f32 0.0, %v6947
        %6949 = vmatmul.f32.gmra.mxu0 %v6883
        %v6950 = vpop.f32.mrf.mxu0
        %v6951 = vadd.f32 0.0, %v6950
        %6952 = vmatmul.f32.gmra.mxu0 %v6886
        %v6953 = vpop.f32.mrf.mxu0
        %v6954 = vadd.f32 0.0, %v6953
        %6955 = vmatmul.f32.gmra.mxu0 %v6889
        %v6956 = vpop.f32.mrf.mxu0
        %v6957 = vadd.f32 0.0, %v6956
        %6958 = vmatmul.f32.gmra.mxu0 %v6892
        %v6959 = vpop.f32.mrf.mxu0
        %v6960 = vadd.f32 0.0, %v6959
        %6961 = vmatmul.f32.gmra.mxu0 %v6895
        %v6962 = vpop.f32.mrf.mxu0
        %v6963 = vadd.f32 0.0, %v6962
        %6964 = vmatmul.f32.gmra.mxu0 %v6898
        %v6965 = vpop.f32.mrf.mxu0
        %v6966 = vadd.f32 0.0, %v6965
        %6967 = vmatmul.f32.gmra.mxu0 %v6901
        %v6968 = vpop.f32.mrf.mxu0
        %v6969 = vadd.f32 0.0, %v6968
        %6970 = vmatmul.f32.gmra.mxu0 %v6904
        %v6971 = vpop.f32.mrf.mxu0
        %v6972 = vadd.f32 0.0, %v6971
        %6973 = vmatmul.f32.gmra.mxu0 %v6907
        %v6974 = vpop.f32.mrf.mxu0
        %v6975 = vadd.f32 0.0, %v6974
        %6976 = vmatmul.f32.gmra.mxu0 %v6910
        %v6977 = vpop.f32.mrf.mxu0
        %v6978 = vadd.f32 0.0, %v6977
        %6979 = vmatmul.f32.gmra.mxu0 %v6913
        %v6980 = vpop.f32.mrf.mxu0
        %v6981 = vadd.f32 0.0, %v6980
        %6982 = vmatmul.f32.gmra.mxu0 %v6916
        %v6983 = vpop.f32.mrf.mxu0
        %v6984 = vadd.f32 0.0, %v6983
        %6985 = vmatmul.f32.gmra.mxu0 %v6919
        %v6986 = vpop.f32.mrf.mxu0
        %v6987 = vadd.f32 0.0, %v6986
        %6988 = vdwg.mxu0
        %v6989 = vadd.f32 %v6834, %v6942
        %v6990 = vadd.f32 %v6835, %v6945
        %v6991 = vadd.f32 %v6836, %v6948
        %v6992 = vadd.f32 %v6837, %v6951
        %v6993 = vadd.f32 %v6838, %v6954
        %v6994 = vadd.f32 %v6839, %v6957
        %v6995 = vadd.f32 %v6840, %v6960
        %v6996 = vadd.f32 %v6841, %v6963
        %v6997 = vadd.f32 %v6842, %v6966
        %v6998 = vadd.f32 %v6843, %v6969
        %v6999 = vadd.f32 %v6844, %v6972
        %v7000 = vadd.f32 %v6845, %v6975
        %v7001 = vadd.f32 %v6846, %v6978
        %v7002 = vadd.f32 %v6847, %v6981
        %v7003 = vadd.f32 %v6848, %v6984
        %v7004 = vadd.f32 %v6849, %v6987
        %v7005 = vld [vmem:[%s6074 + $0x6] sm:$0xff]
        %v7006 = vld [vmem:[%s6074 + $0xe] sm:$0xff]
        %v7007 = vld [vmem:[%s6074 + $0x1e] sm:$0xff]
        %v7008 = vld [vmem:[%s6074 + $0x26] sm:$0xff]
        %v7009 = vld [vmem:[%s6074 + $0x36] sm:$0xff]
        %v7010 = vld [vmem:[%s6074 + $0x3e] sm:$0xff]
        %v7011 = vld [vmem:[%s6074 + $0x4e] sm:$0xff]
        %v7012 = vld [vmem:[%s6074 + $0x56] sm:$0xff]
        %v7013 = vld [vmem:[%s6074 + $0x66] sm:$0xff]
        %v7014 = vld [vmem:[%s6074 + $0x6e] sm:$0xff]
        %v7015 = vld [vmem:[%s6074 + $0x7e] sm:$0xff]
        %v7016 = vld [vmem:[%s6074 + $0x86] sm:$0xff]
        %v7017 = vld [vmem:[%s6074 + $0x96] sm:$0xff]
        %v7018 = vld [vmem:[%s6074 + $0x9e] sm:$0xff]
        %v7019 = vld [vmem:[%s6074 + $0xae] sm:$0xff]
        %v7020 = vld [vmem:[%s6074 + $0xb6] sm:$0xff]
        %s7021 = scalar_lea.vmem %s1, 1968
        %v7022 = vld [vmem:[%s7021] sm:$0xff]
        %v7023 = vld [vmem:[%s7021 + $0x8] sm:$0xff]
        %v7024 = vld [vmem:[%s7021 + $0x10] sm:$0xff]
        %v7025 = vld [vmem:[%s7021 + $0x18] sm:$0xff]
        %v7026 = vld [vmem:[%s7021 + $0x20] sm:$0xff]
        %v7027 = vld [vmem:[%s7021 + $0x28] sm:$0xf]
        %v7029 = vsel %vm209, %v7005, 0
        %v7032 = vsel %vm209, %v7006, 0
        %v7035 = vsel %vm209, %v7007, 0
        %v7038 = vsel %vm209, %v7008, 0
        %v7041 = vsel %vm209, %v7009, 0
        %v7044 = vsel %vm209, %v7010, 0
        %v7047 = vsel %vm209, %v7011, 0
        %v7050 = vsel %vm209, %v7012, 0
        %v7053 = vsel %vm209, %v7013, 0
        %v7056 = vsel %vm209, %v7014, 0
        %v7059 = vsel %vm209, %v7015, 0
        %v7062 = vsel %vm209, %v7016, 0
        %v7065 = vsel %vm209, %v7017, 0
        %v7068 = vsel %vm209, %v7018, 0
        %v7071 = vsel %vm209, %v7019, 0
        %v7074 = vsel %vm209, %v7020, 0
        %v7077 = vsel %vm760, %v7027, 0
        %7079 = vmatpush.msra.mxu0 0.0
        %7080 = vmatpush.msra.mxu0 0.0
        %7081 = vmatpush.msra.mxu0 0.0
        %7082 = vmatpush.msra.mxu0 0.0
        %7083 = vmatpush.msra.mxu0 0.0
        %7084 = vmatpush.msra.mxu0 0.0
        %7085 = vmatpush.msra.mxu0 0.0
        %7086 = vmatpush.msra.mxu0 0.0
        %7087 = vmatpush.msra.mxu0 0.0
        %7088 = vmatpush.msra.mxu0 0.0
        %7089 = vmatpush.msra.mxu0 %v7077
        %7090 = vmatpush.msra.mxu0 %v7026
        %7091 = vmatpush.msra.mxu0 %v7025
        %7092 = vmatpush.msra.mxu0 %v7024
        %7093 = vmatpush.msra.mxu0 %v7023
        %7094 = vmatpush.msra.mxu0 %v7022
        %7095 = vmatmul.f32.gmra.mxu0 %v7029
        %v7096 = vpop.f32.mrf.mxu0
        %v7097 = vadd.f32 0.0, %v7096
        %7098 = vmatmul.f32.gmra.mxu0 %v7032
        %v7099 = vpop.f32.mrf.mxu0
        %v7100 = vadd.f32 0.0, %v7099
        %7101 = vmatmul.f32.gmra.mxu0 %v7035
        %v7102 = vpop.f32.mrf.mxu0
        %v7103 = vadd.f32 0.0, %v7102
        %7104 = vmatmul.f32.gmra.mxu0 %v7038
        %v7105 = vpop.f32.mrf.mxu0
        %v7106 = vadd.f32 0.0, %v7105
        %7107 = vmatmul.f32.gmra.mxu0 %v7041
        %v7108 = vpop.f32.mrf.mxu0
        %v7109 = vadd.f32 0.0, %v7108
        %7110 = vmatmul.f32.gmra.mxu0 %v7044
        %v7111 = vpop.f32.mrf.mxu0
        %v7112 = vadd.f32 0.0, %v7111
        %7113 = vmatmul.f32.gmra.mxu0 %v7047
        %v7114 = vpop.f32.mrf.mxu0
        %v7115 = vadd.f32 0.0, %v7114
        %7116 = vmatmul.f32.gmra.mxu0 %v7050
        %v7117 = vpop.f32.mrf.mxu0
        %v7118 = vadd.f32 0.0, %v7117
        %7119 = vmatmul.f32.gmra.mxu0 %v7053
        %v7120 = vpop.f32.mrf.mxu0
        %v7121 = vadd.f32 0.0, %v7120
        %7122 = vmatmul.f32.gmra.mxu0 %v7056
        %v7123 = vpop.f32.mrf.mxu0
        %v7124 = vadd.f32 0.0, %v7123
        %7125 = vmatmul.f32.gmra.mxu0 %v7059
        %v7126 = vpop.f32.mrf.mxu0
        %v7127 = vadd.f32 0.0, %v7126
        %7128 = vmatmul.f32.gmra.mxu0 %v7062
        %v7129 = vpop.f32.mrf.mxu0
        %v7130 = vadd.f32 0.0, %v7129
        %7131 = vmatmul.f32.gmra.mxu0 %v7065
        %v7132 = vpop.f32.mrf.mxu0
        %v7133 = vadd.f32 0.0, %v7132
        %7134 = vmatmul.f32.gmra.mxu0 %v7068
        %v7135 = vpop.f32.mrf.mxu0
        %v7136 = vadd.f32 0.0, %v7135
        %7137 = vmatmul.f32.gmra.mxu0 %v7071
        %v7138 = vpop.f32.mrf.mxu0
        %v7139 = vadd.f32 0.0, %v7138
        %7140 = vmatmul.f32.gmra.mxu0 %v7074
        %v7141 = vpop.f32.mrf.mxu0
        %v7142 = vadd.f32 0.0, %v7141
        %7143 = vdwg.mxu0
        %v7144 = vadd.f32 %v6989, %v7097
        %v7145 = vadd.f32 %v6990, %v7100
        %v7146 = vadd.f32 %v6991, %v7103
        %v7147 = vadd.f32 %v6992, %v7106
        %v7148 = vadd.f32 %v6993, %v7109
        %v7149 = vadd.f32 %v6994, %v7112
        %v7150 = vadd.f32 %v6995, %v7115
        %v7151 = vadd.f32 %v6996, %v7118
        %v7152 = vadd.f32 %v6997, %v7121
        %v7153 = vadd.f32 %v6998, %v7124
        %v7154 = vadd.f32 %v6999, %v7127
        %v7155 = vadd.f32 %v7000, %v7130
        %v7156 = vadd.f32 %v7001, %v7133
        %v7157 = vadd.f32 %v7002, %v7136
        %v7158 = vadd.f32 %v7003, %v7139
        %v7159 = vadd.f32 %v7004, %v7142
        %s7160 = sadd.s32 %s208, 6
        %s7161 = smul.u32 %s7160, 24
        %s7162 = scalar_lea.vmem [#allocation2], %s7161
        %v7163 = vld [vmem:[%s7162] sm:$0xff]
        %v7164 = vld [vmem:[%s7162 + $0x8] sm:$0xff]
        %v7165 = vld [vmem:[%s7162 + $0x18] sm:$0xff]
        %v7166 = vld [vmem:[%s7162 + $0x20] sm:$0xff]
        %v7167 = vld [vmem:[%s7162 + $0x30] sm:$0xff]
        %v7168 = vld [vmem:[%s7162 + $0x38] sm:$0xff]
        %v7169 = vld [vmem:[%s7162 + $0x48] sm:$0xff]
        %v7170 = vld [vmem:[%s7162 + $0x50] sm:$0xff]
        %v7171 = vld [vmem:[%s7162 + $0x60] sm:$0xff]
        %v7172 = vld [vmem:[%s7162 + $0x68] sm:$0xff]
        %v7173 = vld [vmem:[%s7162 + $0x78] sm:$0xff]
        %v7174 = vld [vmem:[%s7162 + $0x80] sm:$0xff]
        %v7175 = vld [vmem:[%s7162 + $0x90] sm:$0xff]
        %v7176 = vld [vmem:[%s7162 + $0x98] sm:$0xff]
        %v7177 = vld [vmem:[%s7162 + $0xa8] sm:$0xff]
        %v7178 = vld [vmem:[%s7162 + $0xb0] sm:$0xff]
        %s7179 = scalar_lea.vmem %s1, 2016
        %v7180 = vld [vmem:[%s7179] sm:$0xff]
        %v7181 = vld [vmem:[%s7179 + $0x8] sm:$0xff]
        %v7182 = vld [vmem:[%s7179 + $0x10] sm:$0xff]
        %v7183 = vld [vmem:[%s7179 + $0x18] sm:$0xff]
        %v7184 = vld [vmem:[%s7179 + $0x20] sm:$0xff]
        %v7185 = vld [vmem:[%s7179 + $0x28] sm:$0xf]
        %v7187 = vsel %vm209, %v7163, 0
        %v7190 = vsel %vm209, %v7164, 0
        %v7193 = vsel %vm209, %v7165, 0
        %v7196 = vsel %vm209, %v7166, 0
        %v7199 = vsel %vm209, %v7167, 0
        %v7202 = vsel %vm209, %v7168, 0
        %v7205 = vsel %vm209, %v7169, 0
        %v7208 = vsel %vm209, %v7170, 0
        %v7211 = vsel %vm209, %v7171, 0
        %v7214 = vsel %vm209, %v7172, 0
        %v7217 = vsel %vm209, %v7173, 0
        %v7220 = vsel %vm209, %v7174, 0
        %v7223 = vsel %vm209, %v7175, 0
        %v7226 = vsel %vm209, %v7176, 0
        %v7229 = vsel %vm209, %v7177, 0
        %v7232 = vsel %vm209, %v7178, 0
        %v7235 = vsel %vm760, %v7185, 0
        %7237 = vmatpush.msra.mxu0 0.0
        %7238 = vmatpush.msra.mxu0 0.0
        %7239 = vmatpush.msra.mxu0 0.0
        %7240 = vmatpush.msra.mxu0 0.0
        %7241 = vmatpush.msra.mxu0 0.0
        %7242 = vmatpush.msra.mxu0 0.0
        %7243 = vmatpush.msra.mxu0 0.0
        %7244 = vmatpush.msra.mxu0 0.0
        %7245 = vmatpush.msra.mxu0 0.0
        %7246 = vmatpush.msra.mxu0 0.0
        %7247 = vmatpush.msra.mxu0 %v7235
        %7248 = vmatpush.msra.mxu0 %v7184
        %7249 = vmatpush.msra.mxu0 %v7183
        %7250 = vmatpush.msra.mxu0 %v7182
        %7251 = vmatpush.msra.mxu0 %v7181
        %7252 = vmatpush.msra.mxu0 %v7180
        %7253 = vmatmul.f32.gmra.mxu0 %v7187
        %v7254 = vpop.f32.mrf.mxu0
        %v7255 = vadd.f32 0.0, %v7254
        %7256 = vmatmul.f32.gmra.mxu0 %v7190
        %v7257 = vpop.f32.mrf.mxu0
        %v7258 = vadd.f32 0.0, %v7257
        %7259 = vmatmul.f32.gmra.mxu0 %v7193
        %v7260 = vpop.f32.mrf.mxu0
        %v7261 = vadd.f32 0.0, %v7260
        %7262 = vmatmul.f32.gmra.mxu0 %v7196
        %v7263 = vpop.f32.mrf.mxu0
        %v7264 = vadd.f32 0.0, %v7263
        %7265 = vmatmul.f32.gmra.mxu0 %v7199
        %v7266 = vpop.f32.mrf.mxu0
        %v7267 = vadd.f32 0.0, %v7266
        %7268 = vmatmul.f32.gmra.mxu0 %v7202
        %v7269 = vpop.f32.mrf.mxu0
        %v7270 = vadd.f32 0.0, %v7269
        %7271 = vmatmul.f32.gmra.mxu0 %v7205
        %v7272 = vpop.f32.mrf.mxu0
        %v7273 = vadd.f32 0.0, %v7272
        %7274 = vmatmul.f32.gmra.mxu0 %v7208
        %v7275 = vpop.f32.mrf.mxu0
        %v7276 = vadd.f32 0.0, %v7275
        %7277 = vmatmul.f32.gmra.mxu0 %v7211
        %v7278 = vpop.f32.mrf.mxu0
        %v7279 = vadd.f32 0.0, %v7278
        %7280 = vmatmul.f32.gmra.mxu0 %v7214
        %v7281 = vpop.f32.mrf.mxu0
        %v7282 = vadd.f32 0.0, %v7281
        %7283 = vmatmul.f32.gmra.mxu0 %v7217
        %v7284 = vpop.f32.mrf.mxu0
        %v7285 = vadd.f32 0.0, %v7284
        %7286 = vmatmul.f32.gmra.mxu0 %v7220
        %v7287 = vpop.f32.mrf.mxu0
        %v7288 = vadd.f32 0.0, %v7287
        %7289 = vmatmul.f32.gmra.mxu0 %v7223
        %v7290 = vpop.f32.mrf.mxu0
        %v7291 = vadd.f32 0.0, %v7290
        %7292 = vmatmul.f32.gmra.mxu0 %v7226
        %v7293 = vpop.f32.mrf.mxu0
        %v7294 = vadd.f32 0.0, %v7293
        %7295 = vmatmul.f32.gmra.mxu0 %v7229
        %v7296 = vpop.f32.mrf.mxu0
        %v7297 = vadd.f32 0.0, %v7296
        %7298 = vmatmul.f32.gmra.mxu0 %v7232
        %v7299 = vpop.f32.mrf.mxu0
        %v7300 = vadd.f32 0.0, %v7299
        %7301 = vdwg.mxu0
        %v7302 = vadd.f32 %v7144, %v7255
        %v7303 = vadd.f32 %v7145, %v7258
        %v7304 = vadd.f32 %v7146, %v7261
        %v7305 = vadd.f32 %v7147, %v7264
        %v7306 = vadd.f32 %v7148, %v7267
        %v7307 = vadd.f32 %v7149, %v7270
        %v7308 = vadd.f32 %v7150, %v7273
        %v7309 = vadd.f32 %v7151, %v7276
        %v7310 = vadd.f32 %v7152, %v7279
        %v7311 = vadd.f32 %v7153, %v7282
        %v7312 = vadd.f32 %v7154, %v7285
        %v7313 = vadd.f32 %v7155, %v7288
        %v7314 = vadd.f32 %v7156, %v7291
        %v7315 = vadd.f32 %v7157, %v7294
        %v7316 = vadd.f32 %v7158, %v7297
        %v7317 = vadd.f32 %v7159, %v7300
        %v7318 = vld [vmem:[%s7162 + $0x1] sm:$0xff]
        %v7319 = vld [vmem:[%s7162 + $0x9] sm:$0xff]
        %v7320 = vld [vmem:[%s7162 + $0x19] sm:$0xff]
        %v7321 = vld [vmem:[%s7162 + $0x21] sm:$0xff]
        %v7322 = vld [vmem:[%s7162 + $0x31] sm:$0xff]
        %v7323 = vld [vmem:[%s7162 + $0x39] sm:$0xff]
        %v7324 = vld [vmem:[%s7162 + $0x49] sm:$0xff]
        %v7325 = vld [vmem:[%s7162 + $0x51] sm:$0xff]
        %v7326 = vld [vmem:[%s7162 + $0x61] sm:$0xff]
        %v7327 = vld [vmem:[%s7162 + $0x69] sm:$0xff]
        %v7328 = vld [vmem:[%s7162 + $0x79] sm:$0xff]
        %v7329 = vld [vmem:[%s7162 + $0x81] sm:$0xff]
        %v7330 = vld [vmem:[%s7162 + $0x91] sm:$0xff]
        %v7331 = vld [vmem:[%s7162 + $0x99] sm:$0xff]
        %v7332 = vld [vmem:[%s7162 + $0xa9] sm:$0xff]
        %v7333 = vld [vmem:[%s7162 + $0xb1] sm:$0xff]
        %s7334 = scalar_lea.vmem %s1, 2064
        %v7335 = vld [vmem:[%s7334] sm:$0xff]
        %v7336 = vld [vmem:[%s7334 + $0x8] sm:$0xff]
        %v7337 = vld [vmem:[%s7334 + $0x10] sm:$0xff]
        %v7338 = vld [vmem:[%s7334 + $0x18] sm:$0xff]
        %v7339 = vld [vmem:[%s7334 + $0x20] sm:$0xff]
        %v7340 = vld [vmem:[%s7334 + $0x28] sm:$0xf]
        %v7342 = vsel %vm209, %v7318, 0
        %v7345 = vsel %vm209, %v7319, 0
        %v7348 = vsel %vm209, %v7320, 0
        %v7351 = vsel %vm209, %v7321, 0
        %v7354 = vsel %vm209, %v7322, 0
        %v7357 = vsel %vm209, %v7323, 0
        %v7360 = vsel %vm209, %v7324, 0
        %v7363 = vsel %vm209, %v7325, 0
        %v7366 = vsel %vm209, %v7326, 0
        %v7369 = vsel %vm209, %v7327, 0
        %v7372 = vsel %vm209, %v7328, 0
        %v7375 = vsel %vm209, %v7329, 0
        %v7378 = vsel %vm209, %v7330, 0
        %v7381 = vsel %vm209, %v7331, 0
        %v7384 = vsel %vm209, %v7332, 0
        %v7387 = vsel %vm209, %v7333, 0
        %v7390 = vsel %vm760, %v7340, 0
        %7392 = vmatpush.msra.mxu0 0.0
        %7393 = vmatpush.msra.mxu0 0.0
        %7394 = vmatpush.msra.mxu0 0.0
        %7395 = vmatpush.msra.mxu0 0.0
        %7396 = vmatpush.msra.mxu0 0.0
        %7397 = vmatpush.msra.mxu0 0.0
        %7398 = vmatpush.msra.mxu0 0.0
        %7399 = vmatpush.msra.mxu0 0.0
        %7400 = vmatpush.msra.mxu0 0.0
        %7401 = vmatpush.msra.mxu0 0.0
        %7402 = vmatpush.msra.mxu0 %v7390
        %7403 = vmatpush.msra.mxu0 %v7339
        %7404 = vmatpush.msra.mxu0 %v7338
        %7405 = vmatpush.msra.mxu0 %v7337
        %7406 = vmatpush.msra.mxu0 %v7336
        %7407 = vmatpush.msra.mxu0 %v7335
        %7408 = vmatmul.f32.gmra.mxu0 %v7342
        %v7409 = vpop.f32.mrf.mxu0
        %v7410 = vadd.f32 0.0, %v7409
        %7411 = vmatmul.f32.gmra.mxu0 %v7345
        %v7412 = vpop.f32.mrf.mxu0
        %v7413 = vadd.f32 0.0, %v7412
        %7414 = vmatmul.f32.gmra.mxu0 %v7348
        %v7415 = vpop.f32.mrf.mxu0
        %v7416 = vadd.f32 0.0, %v7415
        %7417 = vmatmul.f32.gmra.mxu0 %v7351
        %v7418 = vpop.f32.mrf.mxu0
        %v7419 = vadd.f32 0.0, %v7418
        %7420 = vmatmul.f32.gmra.mxu0 %v7354
        %v7421 = vpop.f32.mrf.mxu0
        %v7422 = vadd.f32 0.0, %v7421
        %7423 = vmatmul.f32.gmra.mxu0 %v7357
        %v7424 = vpop.f32.mrf.mxu0
        %v7425 = vadd.f32 0.0, %v7424
        %7426 = vmatmul.f32.gmra.mxu0 %v7360
        %v7427 = vpop.f32.mrf.mxu0
        %v7428 = vadd.f32 0.0, %v7427
        %7429 = vmatmul.f32.gmra.mxu0 %v7363
        %v7430 = vpop.f32.mrf.mxu0
        %v7431 = vadd.f32 0.0, %v7430
        %7432 = vmatmul.f32.gmra.mxu0 %v7366
        %v7433 = vpop.f32.mrf.mxu0
        %v7434 = vadd.f32 0.0, %v7433
        %7435 = vmatmul.f32.gmra.mxu0 %v7369
        %v7436 = vpop.f32.mrf.mxu0
        %v7437 = vadd.f32 0.0, %v7436
        %7438 = vmatmul.f32.gmra.mxu0 %v7372
        %v7439 = vpop.f32.mrf.mxu0
        %v7440 = vadd.f32 0.0, %v7439
        %7441 = vmatmul.f32.gmra.mxu0 %v7375
        %v7442 = vpop.f32.mrf.mxu0
        %v7443 = vadd.f32 0.0, %v7442
        %7444 = vmatmul.f32.gmra.mxu0 %v7378
        %v7445 = vpop.f32.mrf.mxu0
        %v7446 = vadd.f32 0.0, %v7445
        %7447 = vmatmul.f32.gmra.mxu0 %v7381
        %v7448 = vpop.f32.mrf.mxu0
        %v7449 = vadd.f32 0.0, %v7448
        %7450 = vmatmul.f32.gmra.mxu0 %v7384
        %v7451 = vpop.f32.mrf.mxu0
        %v7452 = vadd.f32 0.0, %v7451
        %7453 = vmatmul.f32.gmra.mxu0 %v7387
        %v7454 = vpop.f32.mrf.mxu0
        %v7455 = vadd.f32 0.0, %v7454
        %7456 = vdwg.mxu0
        %v7457 = vadd.f32 %v7302, %v7410
        %v7458 = vadd.f32 %v7303, %v7413
        %v7459 = vadd.f32 %v7304, %v7416
        %v7460 = vadd.f32 %v7305, %v7419
        %v7461 = vadd.f32 %v7306, %v7422
        %v7462 = vadd.f32 %v7307, %v7425
        %v7463 = vadd.f32 %v7308, %v7428
        %v7464 = vadd.f32 %v7309, %v7431
        %v7465 = vadd.f32 %v7310, %v7434
        %v7466 = vadd.f32 %v7311, %v7437
        %v7467 = vadd.f32 %v7312, %v7440
        %v7468 = vadd.f32 %v7313, %v7443
        %v7469 = vadd.f32 %v7314, %v7446
        %v7470 = vadd.f32 %v7315, %v7449
        %v7471 = vadd.f32 %v7316, %v7452
        %v7472 = vadd.f32 %v7317, %v7455
        %v7473 = vld [vmem:[%s7162 + $0x2] sm:$0xff]
        %v7474 = vld [vmem:[%s7162 + $0xa] sm:$0xff]
        %v7475 = vld [vmem:[%s7162 + $0x1a] sm:$0xff]
        %v7476 = vld [vmem:[%s7162 + $0x22] sm:$0xff]
        %v7477 = vld [vmem:[%s7162 + $0x32] sm:$0xff]
        %v7478 = vld [vmem:[%s7162 + $0x3a] sm:$0xff]
        %v7479 = vld [vmem:[%s7162 + $0x4a] sm:$0xff]
        %v7480 = vld [vmem:[%s7162 + $0x52] sm:$0xff]
        %v7481 = vld [vmem:[%s7162 + $0x62] sm:$0xff]
        %v7482 = vld [vmem:[%s7162 + $0x6a] sm:$0xff]
        %v7483 = vld [vmem:[%s7162 + $0x7a] sm:$0xff]
        %v7484 = vld [vmem:[%s7162 + $0x82] sm:$0xff]
        %v7485 = vld [vmem:[%s7162 + $0x92] sm:$0xff]
        %v7486 = vld [vmem:[%s7162 + $0x9a] sm:$0xff]
        %v7487 = vld [vmem:[%s7162 + $0xaa] sm:$0xff]
        %v7488 = vld [vmem:[%s7162 + $0xb2] sm:$0xff]
        %s7489 = scalar_lea.vmem %s1, 2112
        %v7490 = vld [vmem:[%s7489] sm:$0xff]
        %v7491 = vld [vmem:[%s7489 + $0x8] sm:$0xff]
        %v7492 = vld [vmem:[%s7489 + $0x10] sm:$0xff]
        %v7493 = vld [vmem:[%s7489 + $0x18] sm:$0xff]
        %v7494 = vld [vmem:[%s7489 + $0x20] sm:$0xff]
        %v7495 = vld [vmem:[%s7489 + $0x28] sm:$0xf]
        %v7497 = vsel %vm209, %v7473, 0
        %v7500 = vsel %vm209, %v7474, 0
        %v7503 = vsel %vm209, %v7475, 0
        %v7506 = vsel %vm209, %v7476, 0
        %v7509 = vsel %vm209, %v7477, 0
        %v7512 = vsel %vm209, %v7478, 0
        %v7515 = vsel %vm209, %v7479, 0
        %v7518 = vsel %vm209, %v7480, 0
        %v7521 = vsel %vm209, %v7481, 0
        %v7524 = vsel %vm209, %v7482, 0
        %v7527 = vsel %vm209, %v7483, 0
        %v7530 = vsel %vm209, %v7484, 0
        %v7533 = vsel %vm209, %v7485, 0
        %v7536 = vsel %vm209, %v7486, 0
        %v7539 = vsel %vm209, %v7487, 0
        %v7542 = vsel %vm209, %v7488, 0
        %v7545 = vsel %vm760, %v7495, 0
        %7547 = vmatpush.msra.mxu0 0.0
        %7548 = vmatpush.msra.mxu0 0.0
        %7549 = vmatpush.msra.mxu0 0.0
        %7550 = vmatpush.msra.mxu0 0.0
        %7551 = vmatpush.msra.mxu0 0.0
        %7552 = vmatpush.msra.mxu0 0.0
        %7553 = vmatpush.msra.mxu0 0.0
        %7554 = vmatpush.msra.mxu0 0.0
        %7555 = vmatpush.msra.mxu0 0.0
        %7556 = vmatpush.msra.mxu0 0.0
        %7557 = vmatpush.msra.mxu0 %v7545
        %7558 = vmatpush.msra.mxu0 %v7494
        %7559 = vmatpush.msra.mxu0 %v7493
        %7560 = vmatpush.msra.mxu0 %v7492
        %7561 = vmatpush.msra.mxu0 %v7491
        %7562 = vmatpush.msra.mxu0 %v7490
        %7563 = vmatmul.f32.gmra.mxu0 %v7497
        %v7564 = vpop.f32.mrf.mxu0
        %v7565 = vadd.f32 0.0, %v7564
        %7566 = vmatmul.f32.gmra.mxu0 %v7500
        %v7567 = vpop.f32.mrf.mxu0
        %v7568 = vadd.f32 0.0, %v7567
        %7569 = vmatmul.f32.gmra.mxu0 %v7503
        %v7570 = vpop.f32.mrf.mxu0
        %v7571 = vadd.f32 0.0, %v7570
        %7572 = vmatmul.f32.gmra.mxu0 %v7506
        %v7573 = vpop.f32.mrf.mxu0
        %v7574 = vadd.f32 0.0, %v7573
        %7575 = vmatmul.f32.gmra.mxu0 %v7509
        %v7576 = vpop.f32.mrf.mxu0
        %v7577 = vadd.f32 0.0, %v7576
        %7578 = vmatmul.f32.gmra.mxu0 %v7512
        %v7579 = vpop.f32.mrf.mxu0
        %v7580 = vadd.f32 0.0, %v7579
        %7581 = vmatmul.f32.gmra.mxu0 %v7515
        %v7582 = vpop.f32.mrf.mxu0
        %v7583 = vadd.f32 0.0, %v7582
        %7584 = vmatmul.f32.gmra.mxu0 %v7518
        %v7585 = vpop.f32.mrf.mxu0
        %v7586 = vadd.f32 0.0, %v7585
        %7587 = vmatmul.f32.gmra.mxu0 %v7521
        %v7588 = vpop.f32.mrf.mxu0
        %v7589 = vadd.f32 0.0, %v7588
        %7590 = vmatmul.f32.gmra.mxu0 %v7524
        %v7591 = vpop.f32.mrf.mxu0
        %v7592 = vadd.f32 0.0, %v7591
        %7593 = vmatmul.f32.gmra.mxu0 %v7527
        %v7594 = vpop.f32.mrf.mxu0
        %v7595 = vadd.f32 0.0, %v7594
        %7596 = vmatmul.f32.gmra.mxu0 %v7530
        %v7597 = vpop.f32.mrf.mxu0
        %v7598 = vadd.f32 0.0, %v7597
        %7599 = vmatmul.f32.gmra.mxu0 %v7533
        %v7600 = vpop.f32.mrf.mxu0
        %v7601 = vadd.f32 0.0, %v7600
        %7602 = vmatmul.f32.gmra.mxu0 %v7536
        %v7603 = vpop.f32.mrf.mxu0
        %v7604 = vadd.f32 0.0, %v7603
        %7605 = vmatmul.f32.gmra.mxu0 %v7539
        %v7606 = vpop.f32.mrf.mxu0
        %v7607 = vadd.f32 0.0, %v7606
        %7608 = vmatmul.f32.gmra.mxu0 %v7542
        %v7609 = vpop.f32.mrf.mxu0
        %v7610 = vadd.f32 0.0, %v7609
        %7611 = vdwg.mxu0
        %v7612 = vadd.f32 %v7457, %v7565
        %v7613 = vadd.f32 %v7458, %v7568
        %v7614 = vadd.f32 %v7459, %v7571
        %v7615 = vadd.f32 %v7460, %v7574
        %v7616 = vadd.f32 %v7461, %v7577
        %v7617 = vadd.f32 %v7462, %v7580
        %v7618 = vadd.f32 %v7463, %v7583
        %v7619 = vadd.f32 %v7464, %v7586
        %v7620 = vadd.f32 %v7465, %v7589
        %v7621 = vadd.f32 %v7466, %v7592
        %v7622 = vadd.f32 %v7467, %v7595
        %v7623 = vadd.f32 %v7468, %v7598
        %v7624 = vadd.f32 %v7469, %v7601
        %v7625 = vadd.f32 %v7470, %v7604
        %v7626 = vadd.f32 %v7471, %v7607
        %v7627 = vadd.f32 %v7472, %v7610
        %v7628 = vld [vmem:[%s7162 + $0x3] sm:$0xff]
        %v7629 = vld [vmem:[%s7162 + $0xb] sm:$0xff]
        %v7630 = vld [vmem:[%s7162 + $0x1b] sm:$0xff]
        %v7631 = vld [vmem:[%s7162 + $0x23] sm:$0xff]
        %v7632 = vld [vmem:[%s7162 + $0x33] sm:$0xff]
        %v7633 = vld [vmem:[%s7162 + $0x3b] sm:$0xff]
        %v7634 = vld [vmem:[%s7162 + $0x4b] sm:$0xff]
        %v7635 = vld [vmem:[%s7162 + $0x53] sm:$0xff]
        %v7636 = vld [vmem:[%s7162 + $0x63] sm:$0xff]
        %v7637 = vld [vmem:[%s7162 + $0x6b] sm:$0xff]
        %v7638 = vld [vmem:[%s7162 + $0x7b] sm:$0xff]
        %v7639 = vld [vmem:[%s7162 + $0x83] sm:$0xff]
        %v7640 = vld [vmem:[%s7162 + $0x93] sm:$0xff]
        %v7641 = vld [vmem:[%s7162 + $0x9b] sm:$0xff]
        %v7642 = vld [vmem:[%s7162 + $0xab] sm:$0xff]
        %v7643 = vld [vmem:[%s7162 + $0xb3] sm:$0xff]
        %s7644 = scalar_lea.vmem %s1, 2160
        %v7645 = vld [vmem:[%s7644] sm:$0xff]
        %v7646 = vld [vmem:[%s7644 + $0x8] sm:$0xff]
        %v7647 = vld [vmem:[%s7644 + $0x10] sm:$0xff]
        %v7648 = vld [vmem:[%s7644 + $0x18] sm:$0xff]
        %v7649 = vld [vmem:[%s7644 + $0x20] sm:$0xff]
        %v7650 = vld [vmem:[%s7644 + $0x28] sm:$0xf]
        %v7652 = vsel %vm209, %v7628, 0
        %v7655 = vsel %vm209, %v7629, 0
        %v7658 = vsel %vm209, %v7630, 0
        %v7661 = vsel %vm209, %v7631, 0
        %v7664 = vsel %vm209, %v7632, 0
        %v7667 = vsel %vm209, %v7633, 0
        %v7670 = vsel %vm209, %v7634, 0
        %v7673 = vsel %vm209, %v7635, 0
        %v7676 = vsel %vm209, %v7636, 0
        %v7679 = vsel %vm209, %v7637, 0
        %v7682 = vsel %vm209, %v7638, 0
        %v7685 = vsel %vm209, %v7639, 0
        %v7688 = vsel %vm209, %v7640, 0
        %v7691 = vsel %vm209, %v7641, 0
        %v7694 = vsel %vm209, %v7642, 0
        %v7697 = vsel %vm209, %v7643, 0
        %v7700 = vsel %vm760, %v7650, 0
        %7702 = vmatpush.msra.mxu0 0.0
        %7703 = vmatpush.msra.mxu0 0.0
        %7704 = vmatpush.msra.mxu0 0.0
        %7705 = vmatpush.msra.mxu0 0.0
        %7706 = vmatpush.msra.mxu0 0.0
        %7707 = vmatpush.msra.mxu0 0.0
        %7708 = vmatpush.msra.mxu0 0.0
        %7709 = vmatpush.msra.mxu0 0.0
        %7710 = vmatpush.msra.mxu0 0.0
        %7711 = vmatpush.msra.mxu0 0.0
        %7712 = vmatpush.msra.mxu0 %v7700
        %7713 = vmatpush.msra.mxu0 %v7649
        %7714 = vmatpush.msra.mxu0 %v7648
        %7715 = vmatpush.msra.mxu0 %v7647
        %7716 = vmatpush.msra.mxu0 %v7646
        %7717 = vmatpush.msra.mxu0 %v7645
        %7718 = vmatmul.f32.gmra.mxu0 %v7652
        %v7719 = vpop.f32.mrf.mxu0
        %v7720 = vadd.f32 0.0, %v7719
        %7721 = vmatmul.f32.gmra.mxu0 %v7655
        %v7722 = vpop.f32.mrf.mxu0
        %v7723 = vadd.f32 0.0, %v7722
        %7724 = vmatmul.f32.gmra.mxu0 %v7658
        %v7725 = vpop.f32.mrf.mxu0
        %v7726 = vadd.f32 0.0, %v7725
        %7727 = vmatmul.f32.gmra.mxu0 %v7661
        %v7728 = vpop.f32.mrf.mxu0
        %v7729 = vadd.f32 0.0, %v7728
        %7730 = vmatmul.f32.gmra.mxu0 %v7664
        %v7731 = vpop.f32.mrf.mxu0
        %v7732 = vadd.f32 0.0, %v7731
        %7733 = vmatmul.f32.gmra.mxu0 %v7667
        %v7734 = vpop.f32.mrf.mxu0
        %v7735 = vadd.f32 0.0, %v7734
        %7736 = vmatmul.f32.gmra.mxu0 %v7670
        %v7737 = vpop.f32.mrf.mxu0
        %v7738 = vadd.f32 0.0, %v7737
        %7739 = vmatmul.f32.gmra.mxu0 %v7673
        %v7740 = vpop.f32.mrf.mxu0
        %v7741 = vadd.f32 0.0, %v7740
        %7742 = vmatmul.f32.gmra.mxu0 %v7676
        %v7743 = vpop.f32.mrf.mxu0
        %v7744 = vadd.f32 0.0, %v7743
        %7745 = vmatmul.f32.gmra.mxu0 %v7679
        %v7746 = vpop.f32.mrf.mxu0
        %v7747 = vadd.f32 0.0, %v7746
        %7748 = vmatmul.f32.gmra.mxu0 %v7682
        %v7749 = vpop.f32.mrf.mxu0
        %v7750 = vadd.f32 0.0, %v7749
        %7751 = vmatmul.f32.gmra.mxu0 %v7685
        %v7752 = vpop.f32.mrf.mxu0
        %v7753 = vadd.f32 0.0, %v7752
        %7754 = vmatmul.f32.gmra.mxu0 %v7688
        %v7755 = vpop.f32.mrf.mxu0
        %v7756 = vadd.f32 0.0, %v7755
        %7757 = vmatmul.f32.gmra.mxu0 %v7691
        %v7758 = vpop.f32.mrf.mxu0
        %v7759 = vadd.f32 0.0, %v7758
        %7760 = vmatmul.f32.gmra.mxu0 %v7694
        %v7761 = vpop.f32.mrf.mxu0
        %v7762 = vadd.f32 0.0, %v7761
        %7763 = vmatmul.f32.gmra.mxu0 %v7697
        %v7764 = vpop.f32.mrf.mxu0
        %v7765 = vadd.f32 0.0, %v7764
        %7766 = vdwg.mxu0
        %v7767 = vadd.f32 %v7612, %v7720
        %v7768 = vadd.f32 %v7613, %v7723
        %v7769 = vadd.f32 %v7614, %v7726
        %v7770 = vadd.f32 %v7615, %v7729
        %v7771 = vadd.f32 %v7616, %v7732
        %v7772 = vadd.f32 %v7617, %v7735
        %v7773 = vadd.f32 %v7618, %v7738
        %v7774 = vadd.f32 %v7619, %v7741
        %v7775 = vadd.f32 %v7620, %v7744
        %v7776 = vadd.f32 %v7621, %v7747
        %v7777 = vadd.f32 %v7622, %v7750
        %v7778 = vadd.f32 %v7623, %v7753
        %v7779 = vadd.f32 %v7624, %v7756
        %v7780 = vadd.f32 %v7625, %v7759
        %v7781 = vadd.f32 %v7626, %v7762
        %v7782 = vadd.f32 %v7627, %v7765
        %v7783 = vld [vmem:[%s7162 + $0x4] sm:$0xff]
        %v7784 = vld [vmem:[%s7162 + $0xc] sm:$0xff]
        %v7785 = vld [vmem:[%s7162 + $0x1c] sm:$0xff]
        %v7786 = vld [vmem:[%s7162 + $0x24] sm:$0xff]
        %v7787 = vld [vmem:[%s7162 + $0x34] sm:$0xff]
        %v7788 = vld [vmem:[%s7162 + $0x3c] sm:$0xff]
        %v7789 = vld [vmem:[%s7162 + $0x4c] sm:$0xff]
        %v7790 = vld [vmem:[%s7162 + $0x54] sm:$0xff]
        %v7791 = vld [vmem:[%s7162 + $0x64] sm:$0xff]
        %v7792 = vld [vmem:[%s7162 + $0x6c] sm:$0xff]
        %v7793 = vld [vmem:[%s7162 + $0x7c] sm:$0xff]
        %v7794 = vld [vmem:[%s7162 + $0x84] sm:$0xff]
        %v7795 = vld [vmem:[%s7162 + $0x94] sm:$0xff]
        %v7796 = vld [vmem:[%s7162 + $0x9c] sm:$0xff]
        %v7797 = vld [vmem:[%s7162 + $0xac] sm:$0xff]
        %v7798 = vld [vmem:[%s7162 + $0xb4] sm:$0xff]
        %s7799 = scalar_lea.vmem %s1, 2208
        %v7800 = vld [vmem:[%s7799] sm:$0xff]
        %v7801 = vld [vmem:[%s7799 + $0x8] sm:$0xff]
        %v7802 = vld [vmem:[%s7799 + $0x10] sm:$0xff]
        %v7803 = vld [vmem:[%s7799 + $0x18] sm:$0xff]
        %v7804 = vld [vmem:[%s7799 + $0x20] sm:$0xff]
        %v7805 = vld [vmem:[%s7799 + $0x28] sm:$0xf]
        %v7807 = vsel %vm209, %v7783, 0
        %v7810 = vsel %vm209, %v7784, 0
        %v7813 = vsel %vm209, %v7785, 0
        %v7816 = vsel %vm209, %v7786, 0
        %v7819 = vsel %vm209, %v7787, 0
        %v7822 = vsel %vm209, %v7788, 0
        %v7825 = vsel %vm209, %v7789, 0
        %v7828 = vsel %vm209, %v7790, 0
        %v7831 = vsel %vm209, %v7791, 0
        %v7834 = vsel %vm209, %v7792, 0
        %v7837 = vsel %vm209, %v7793, 0
        %v7840 = vsel %vm209, %v7794, 0
        %v7843 = vsel %vm209, %v7795, 0
        %v7846 = vsel %vm209, %v7796, 0
        %v7849 = vsel %vm209, %v7797, 0
        %v7852 = vsel %vm209, %v7798, 0
        %v7855 = vsel %vm760, %v7805, 0
        %7857 = vmatpush.msra.mxu0 0.0
        %7858 = vmatpush.msra.mxu0 0.0
        %7859 = vmatpush.msra.mxu0 0.0
        %7860 = vmatpush.msra.mxu0 0.0
        %7861 = vmatpush.msra.mxu0 0.0
        %7862 = vmatpush.msra.mxu0 0.0
        %7863 = vmatpush.msra.mxu0 0.0
        %7864 = vmatpush.msra.mxu0 0.0
        %7865 = vmatpush.msra.mxu0 0.0
        %7866 = vmatpush.msra.mxu0 0.0
        %7867 = vmatpush.msra.mxu0 %v7855
        %7868 = vmatpush.msra.mxu0 %v7804
        %7869 = vmatpush.msra.mxu0 %v7803
        %7870 = vmatpush.msra.mxu0 %v7802
        %7871 = vmatpush.msra.mxu0 %v7801
        %7872 = vmatpush.msra.mxu0 %v7800
        %7873 = vmatmul.f32.gmra.mxu0 %v7807
        %v7874 = vpop.f32.mrf.mxu0
        %v7875 = vadd.f32 0.0, %v7874
        %7876 = vmatmul.f32.gmra.mxu0 %v7810
        %v7877 = vpop.f32.mrf.mxu0
        %v7878 = vadd.f32 0.0, %v7877
        %7879 = vmatmul.f32.gmra.mxu0 %v7813
        %v7880 = vpop.f32.mrf.mxu0
        %v7881 = vadd.f32 0.0, %v7880
        %7882 = vmatmul.f32.gmra.mxu0 %v7816
        %v7883 = vpop.f32.mrf.mxu0
        %v7884 = vadd.f32 0.0, %v7883
        %7885 = vmatmul.f32.gmra.mxu0 %v7819
        %v7886 = vpop.f32.mrf.mxu0
        %v7887 = vadd.f32 0.0, %v7886
        %7888 = vmatmul.f32.gmra.mxu0 %v7822
        %v7889 = vpop.f32.mrf.mxu0
        %v7890 = vadd.f32 0.0, %v7889
        %7891 = vmatmul.f32.gmra.mxu0 %v7825
        %v7892 = vpop.f32.mrf.mxu0
        %v7893 = vadd.f32 0.0, %v7892
        %7894 = vmatmul.f32.gmra.mxu0 %v7828
        %v7895 = vpop.f32.mrf.mxu0
        %v7896 = vadd.f32 0.0, %v7895
        %7897 = vmatmul.f32.gmra.mxu0 %v7831
        %v7898 = vpop.f32.mrf.mxu0
        %v7899 = vadd.f32 0.0, %v7898
        %7900 = vmatmul.f32.gmra.mxu0 %v7834
        %v7901 = vpop.f32.mrf.mxu0
        %v7902 = vadd.f32 0.0, %v7901
        %7903 = vmatmul.f32.gmra.mxu0 %v7837
        %v7904 = vpop.f32.mrf.mxu0
        %v7905 = vadd.f32 0.0, %v7904
        %7906 = vmatmul.f32.gmra.mxu0 %v7840
        %v7907 = vpop.f32.mrf.mxu0
        %v7908 = vadd.f32 0.0, %v7907
        %7909 = vmatmul.f32.gmra.mxu0 %v7843
        %v7910 = vpop.f32.mrf.mxu0
        %v7911 = vadd.f32 0.0, %v7910
        %7912 = vmatmul.f32.gmra.mxu0 %v7846
        %v7913 = vpop.f32.mrf.mxu0
        %v7914 = vadd.f32 0.0, %v7913
        %7915 = vmatmul.f32.gmra.mxu0 %v7849
        %v7916 = vpop.f32.mrf.mxu0
        %v7917 = vadd.f32 0.0, %v7916
        %7918 = vmatmul.f32.gmra.mxu0 %v7852
        %v7919 = vpop.f32.mrf.mxu0
        %v7920 = vadd.f32 0.0, %v7919
        %7921 = vdwg.mxu0
        %v7922 = vadd.f32 %v7767, %v7875
        %v7923 = vadd.f32 %v7768, %v7878
        %v7924 = vadd.f32 %v7769, %v7881
        %v7925 = vadd.f32 %v7770, %v7884
        %v7926 = vadd.f32 %v7771, %v7887
        %v7927 = vadd.f32 %v7772, %v7890
        %v7928 = vadd.f32 %v7773, %v7893
        %v7929 = vadd.f32 %v7774, %v7896
        %v7930 = vadd.f32 %v7775, %v7899
        %v7931 = vadd.f32 %v7776, %v7902
        %v7932 = vadd.f32 %v7777, %v7905
        %v7933 = vadd.f32 %v7778, %v7908
        %v7934 = vadd.f32 %v7779, %v7911
        %v7935 = vadd.f32 %v7780, %v7914
        %v7936 = vadd.f32 %v7781, %v7917
        %v7937 = vadd.f32 %v7782, %v7920
        %v7938 = vld [vmem:[%s7162 + $0x5] sm:$0xff]
        %v7939 = vld [vmem:[%s7162 + $0xd] sm:$0xff]
        %v7940 = vld [vmem:[%s7162 + $0x1d] sm:$0xff]
        %v7941 = vld [vmem:[%s7162 + $0x25] sm:$0xff]
        %v7942 = vld [vmem:[%s7162 + $0x35] sm:$0xff]
        %v7943 = vld [vmem:[%s7162 + $0x3d] sm:$0xff]
        %v7944 = vld [vmem:[%s7162 + $0x4d] sm:$0xff]
        %v7945 = vld [vmem:[%s7162 + $0x55] sm:$0xff]
        %v7946 = vld [vmem:[%s7162 + $0x65] sm:$0xff]
        %v7947 = vld [vmem:[%s7162 + $0x6d] sm:$0xff]
        %v7948 = vld [vmem:[%s7162 + $0x7d] sm:$0xff]
        %v7949 = vld [vmem:[%s7162 + $0x85] sm:$0xff]
        %v7950 = vld [vmem:[%s7162 + $0x95] sm:$0xff]
        %v7951 = vld [vmem:[%s7162 + $0x9d] sm:$0xff]
        %v7952 = vld [vmem:[%s7162 + $0xad] sm:$0xff]
        %v7953 = vld [vmem:[%s7162 + $0xb5] sm:$0xff]
        %s7954 = scalar_lea.vmem %s1, 2256
        %v7955 = vld [vmem:[%s7954] sm:$0xff]
        %v7956 = vld [vmem:[%s7954 + $0x8] sm:$0xff]
        %v7957 = vld [vmem:[%s7954 + $0x10] sm:$0xff]
        %v7958 = vld [vmem:[%s7954 + $0x18] sm:$0xff]
        %v7959 = vld [vmem:[%s7954 + $0x20] sm:$0xff]
        %v7960 = vld [vmem:[%s7954 + $0x28] sm:$0xf]
        %v7962 = vsel %vm209, %v7938, 0
        %v7965 = vsel %vm209, %v7939, 0
        %v7968 = vsel %vm209, %v7940, 0
        %v7971 = vsel %vm209, %v7941, 0
        %v7974 = vsel %vm209, %v7942, 0
        %v7977 = vsel %vm209, %v7943, 0
        %v7980 = vsel %vm209, %v7944, 0
        %v7983 = vsel %vm209, %v7945, 0
        %v7986 = vsel %vm209, %v7946, 0
        %v7989 = vsel %vm209, %v7947, 0
        %v7992 = vsel %vm209, %v7948, 0
        %v7995 = vsel %vm209, %v7949, 0
        %v7998 = vsel %vm209, %v7950, 0
        %v8001 = vsel %vm209, %v7951, 0
        %v8004 = vsel %vm209, %v7952, 0
        %v8007 = vsel %vm209, %v7953, 0
        %v8010 = vsel %vm760, %v7960, 0
        %8012 = vmatpush.msra.mxu0 0.0
        %8013 = vmatpush.msra.mxu0 0.0
        %8014 = vmatpush.msra.mxu0 0.0
        %8015 = vmatpush.msra.mxu0 0.0
        %8016 = vmatpush.msra.mxu0 0.0
        %8017 = vmatpush.msra.mxu0 0.0
        %8018 = vmatpush.msra.mxu0 0.0
        %8019 = vmatpush.msra.mxu0 0.0
        %8020 = vmatpush.msra.mxu0 0.0
        %8021 = vmatpush.msra.mxu0 0.0
        %8022 = vmatpush.msra.mxu0 %v8010
        %8023 = vmatpush.msra.mxu0 %v7959
        %8024 = vmatpush.msra.mxu0 %v7958
        %8025 = vmatpush.msra.mxu0 %v7957
        %8026 = vmatpush.msra.mxu0 %v7956
        %8027 = vmatpush.msra.mxu0 %v7955
        %8028 = vmatmul.f32.gmra.mxu0 %v7962
        %v8029 = vpop.f32.mrf.mxu0
        %v8030 = vadd.f32 0.0, %v8029
        %8031 = vmatmul.f32.gmra.mxu0 %v7965
        %v8032 = vpop.f32.mrf.mxu0
        %v8033 = vadd.f32 0.0, %v8032
        %8034 = vmatmul.f32.gmra.mxu0 %v7968
        %v8035 = vpop.f32.mrf.mxu0
        %v8036 = vadd.f32 0.0, %v8035
        %8037 = vmatmul.f32.gmra.mxu0 %v7971
        %v8038 = vpop.f32.mrf.mxu0
        %v8039 = vadd.f32 0.0, %v8038
        %8040 = vmatmul.f32.gmra.mxu0 %v7974
        %v8041 = vpop.f32.mrf.mxu0
        %v8042 = vadd.f32 0.0, %v8041
        %8043 = vmatmul.f32.gmra.mxu0 %v7977
        %v8044 = vpop.f32.mrf.mxu0
        %v8045 = vadd.f32 0.0, %v8044
        %8046 = vmatmul.f32.gmra.mxu0 %v7980
        %v8047 = vpop.f32.mrf.mxu0
        %v8048 = vadd.f32 0.0, %v8047
        %8049 = vmatmul.f32.gmra.mxu0 %v7983
        %v8050 = vpop.f32.mrf.mxu0
        %v8051 = vadd.f32 0.0, %v8050
        %8052 = vmatmul.f32.gmra.mxu0 %v7986
        %v8053 = vpop.f32.mrf.mxu0
        %v8054 = vadd.f32 0.0, %v8053
        %8055 = vmatmul.f32.gmra.mxu0 %v7989
        %v8056 = vpop.f32.mrf.mxu0
        %v8057 = vadd.f32 0.0, %v8056
        %8058 = vmatmul.f32.gmra.mxu0 %v7992
        %v8059 = vpop.f32.mrf.mxu0
        %v8060 = vadd.f32 0.0, %v8059
        %8061 = vmatmul.f32.gmra.mxu0 %v7995
        %v8062 = vpop.f32.mrf.mxu0
        %v8063 = vadd.f32 0.0, %v8062
        %8064 = vmatmul.f32.gmra.mxu0 %v7998
        %v8065 = vpop.f32.mrf.mxu0
        %v8066 = vadd.f32 0.0, %v8065
        %8067 = vmatmul.f32.gmra.mxu0 %v8001
        %v8068 = vpop.f32.mrf.mxu0
        %v8069 = vadd.f32 0.0, %v8068
        %8070 = vmatmul.f32.gmra.mxu0 %v8004
        %v8071 = vpop.f32.mrf.mxu0
        %v8072 = vadd.f32 0.0, %v8071
        %8073 = vmatmul.f32.gmra.mxu0 %v8007
        %v8074 = vpop.f32.mrf.mxu0
        %v8075 = vadd.f32 0.0, %v8074
        %8076 = vdwg.mxu0
        %v8077 = vadd.f32 %v7922, %v8030
        %v8078 = vadd.f32 %v7923, %v8033
        %v8079 = vadd.f32 %v7924, %v8036
        %v8080 = vadd.f32 %v7925, %v8039
        %v8081 = vadd.f32 %v7926, %v8042
        %v8082 = vadd.f32 %v7927, %v8045
        %v8083 = vadd.f32 %v7928, %v8048
        %v8084 = vadd.f32 %v7929, %v8051
        %v8085 = vadd.f32 %v7930, %v8054
        %v8086 = vadd.f32 %v7931, %v8057
        %v8087 = vadd.f32 %v7932, %v8060
        %v8088 = vadd.f32 %v7933, %v8063
        %v8089 = vadd.f32 %v7934, %v8066
        %v8090 = vadd.f32 %v7935, %v8069
        %v8091 = vadd.f32 %v7936, %v8072
        %v8092 = vadd.f32 %v7937, %v8075
        %v8093 = vld [vmem:[%s7162 + $0x6] sm:$0xff]
        %v8094 = vld [vmem:[%s7162 + $0xe] sm:$0xff]
        %v8095 = vld [vmem:[%s7162 + $0x1e] sm:$0xff]
        %v8096 = vld [vmem:[%s7162 + $0x26] sm:$0xff]
        %v8097 = vld [vmem:[%s7162 + $0x36] sm:$0xff]
        %v8098 = vld [vmem:[%s7162 + $0x3e] sm:$0xff]
        %v8099 = vld [vmem:[%s7162 + $0x4e] sm:$0xff]
        %v8100 = vld [vmem:[%s7162 + $0x56] sm:$0xff]
        %v8101 = vld [vmem:[%s7162 + $0x66] sm:$0xff]
        %v8102 = vld [vmem:[%s7162 + $0x6e] sm:$0xff]
        %v8103 = vld [vmem:[%s7162 + $0x7e] sm:$0xff]
        %v8104 = vld [vmem:[%s7162 + $0x86] sm:$0xff]
        %v8105 = vld [vmem:[%s7162 + $0x96] sm:$0xff]
        %v8106 = vld [vmem:[%s7162 + $0x9e] sm:$0xff]
        %v8107 = vld [vmem:[%s7162 + $0xae] sm:$0xff]
        %v8108 = vld [vmem:[%s7162 + $0xb6] sm:$0xff]
        %s8109 = scalar_lea.vmem %s1, 2304
        %v8110 = vld [vmem:[%s8109] sm:$0xff]
        %v8111 = vld [vmem:[%s8109 + $0x8] sm:$0xff]
        %v8112 = vld [vmem:[%s8109 + $0x10] sm:$0xff]
        %v8113 = vld [vmem:[%s8109 + $0x18] sm:$0xff]
        %v8114 = vld [vmem:[%s8109 + $0x20] sm:$0xff]
        %v8115 = vld [vmem:[%s8109 + $0x28] sm:$0xf]
        %v8117 = vsel %vm209, %v8093, 0
        %v8120 = vsel %vm209, %v8094, 0
        %v8123 = vsel %vm209, %v8095, 0
        %v8126 = vsel %vm209, %v8096, 0
        %v8129 = vsel %vm209, %v8097, 0
        %v8132 = vsel %vm209, %v8098, 0
        %v8135 = vsel %vm209, %v8099, 0
        %v8138 = vsel %vm209, %v8100, 0
        %v8141 = vsel %vm209, %v8101, 0
        %v8144 = vsel %vm209, %v8102, 0
        %v8147 = vsel %vm209, %v8103, 0
        %v8150 = vsel %vm209, %v8104, 0
        %v8153 = vsel %vm209, %v8105, 0
        %v8156 = vsel %vm209, %v8106, 0
        %v8159 = vsel %vm209, %v8107, 0
        %v8162 = vsel %vm209, %v8108, 0
        %v8165 = vsel %vm760, %v8115, 0
        %8167 = vmatpush.msra.mxu0 0.0
        %8168 = vmatpush.msra.mxu0 0.0
        %8169 = vmatpush.msra.mxu0 0.0
        %8170 = vmatpush.msra.mxu0 0.0
        %8171 = vmatpush.msra.mxu0 0.0
        %8172 = vmatpush.msra.mxu0 0.0
        %8173 = vmatpush.msra.mxu0 0.0
        %8174 = vmatpush.msra.mxu0 0.0
        %8175 = vmatpush.msra.mxu0 0.0
        %8176 = vmatpush.msra.mxu0 0.0
        %8177 = vmatpush.msra.mxu0 %v8165
        %8178 = vmatpush.msra.mxu0 %v8114
        %8179 = vmatpush.msra.mxu0 %v8113
        %8180 = vmatpush.msra.mxu0 %v8112
        %8181 = vmatpush.msra.mxu0 %v8111
        %8182 = vmatpush.msra.mxu0 %v8110
        %8183 = vmatmul.f32.gmra.mxu0 %v8117
        %v8184 = vpop.f32.mrf.mxu0
        %v8185 = vadd.f32 0.0, %v8184
        %8186 = vmatmul.f32.gmra.mxu0 %v8120
        %v8187 = vpop.f32.mrf.mxu0
        %v8188 = vadd.f32 0.0, %v8187
        %8189 = vmatmul.f32.gmra.mxu0 %v8123
        %v8190 = vpop.f32.mrf.mxu0
        %v8191 = vadd.f32 0.0, %v8190
        %8192 = vmatmul.f32.gmra.mxu0 %v8126
        %v8193 = vpop.f32.mrf.mxu0
        %v8194 = vadd.f32 0.0, %v8193
        %8195 = vmatmul.f32.gmra.mxu0 %v8129
        %v8196 = vpop.f32.mrf.mxu0
        %v8197 = vadd.f32 0.0, %v8196
        %8198 = vmatmul.f32.gmra.mxu0 %v8132
        %v8199 = vpop.f32.mrf.mxu0
        %v8200 = vadd.f32 0.0, %v8199
        %8201 = vmatmul.f32.gmra.mxu0 %v8135
        %v8202 = vpop.f32.mrf.mxu0
        %v8203 = vadd.f32 0.0, %v8202
        %8204 = vmatmul.f32.gmra.mxu0 %v8138
        %v8205 = vpop.f32.mrf.mxu0
        %v8206 = vadd.f32 0.0, %v8205
        %8207 = vmatmul.f32.gmra.mxu0 %v8141
        %v8208 = vpop.f32.mrf.mxu0
        %v8209 = vadd.f32 0.0, %v8208
        %8210 = vmatmul.f32.gmra.mxu0 %v8144
        %v8211 = vpop.f32.mrf.mxu0
        %v8212 = vadd.f32 0.0, %v8211
        %8213 = vmatmul.f32.gmra.mxu0 %v8147
        %v8214 = vpop.f32.mrf.mxu0
        %v8215 = vadd.f32 0.0, %v8214
        %8216 = vmatmul.f32.gmra.mxu0 %v8150
        %v8217 = vpop.f32.mrf.mxu0
        %v8218 = vadd.f32 0.0, %v8217
        %8219 = vmatmul.f32.gmra.mxu0 %v8153
        %v8220 = vpop.f32.mrf.mxu0
        %v8221 = vadd.f32 0.0, %v8220
        %8222 = vmatmul.f32.gmra.mxu0 %v8156
        %v8223 = vpop.f32.mrf.mxu0
        %v8224 = vadd.f32 0.0, %v8223
        %8225 = vmatmul.f32.gmra.mxu0 %v8159
        %v8226 = vpop.f32.mrf.mxu0
        %v8227 = vadd.f32 0.0, %v8226
        %8228 = vmatmul.f32.gmra.mxu0 %v8162
        %v8229 = vpop.f32.mrf.mxu0
        %v8230 = vadd.f32 0.0, %v8229
        %8231 = vdwg.mxu0
        %v8232 = vadd.f32 %v8077, %v8185
        %v8233 = vadd.f32 %v8078, %v8188
        %v8234 = vadd.f32 %v8079, %v8191
        %v8235 = vadd.f32 %v8080, %v8194
        %v8236 = vadd.f32 %v8081, %v8197
        %v8237 = vadd.f32 %v8082, %v8200
        %v8238 = vadd.f32 %v8083, %v8203
        %v8239 = vadd.f32 %v8084, %v8206
        %v8240 = vadd.f32 %v8085, %v8209
        %v8241 = vadd.f32 %v8086, %v8212
        %v8242 = vadd.f32 %v8087, %v8215
        %v8243 = vadd.f32 %v8088, %v8218
        %v8244 = vadd.f32 %v8089, %v8221
        %v8245 = vadd.f32 %v8090, %v8224
        %v8246 = vadd.f32 %v8091, %v8227
        %v8247 = vadd.f32 %v8092, %v8230
        %v8248 = vmax.f32 %v8232, 0.0
        %v8249 = vmax.f32 %v8233, 0.0
        %v8250 = vmax.f32 %v8234, 0.0
        %v8251 = vmax.f32 %v8235, 0.0
        %v8252 = vmax.f32 %v8236, 0.0
        %v8253 = vmax.f32 %v8237, 0.0
        %v8254 = vmax.f32 %v8238, 0.0
        %v8255 = vmax.f32 %v8239, 0.0
        %v8256 = vmax.f32 %v8240, 0.0
        %v8257 = vmax.f32 %v8241, 0.0
        %v8258 = vmax.f32 %v8242, 0.0
        %v8259 = vmax.f32 %v8243, 0.0
        %v8260 = vmax.f32 %v8244, 0.0
        %v8261 = vmax.f32 %v8245, 0.0
        %v8262 = vmax.f32 %v8246, 0.0
        %v8263 = vmax.f32 %v8247, 0.0
        %s8264 = sld [smem:[#allocation3]]
        %v8265 = vstv %s8264
        %v8266 = vmul.f32 %v8265, %v8248
        %v8267 = vmul.f32 %v8265, %v8249
        %v8268 = vmul.f32 %v8265, %v8250
        %v8269 = vmul.f32 %v8265, %v8251
        %v8270 = vmul.f32 %v8265, %v8252
        %v8271 = vmul.f32 %v8265, %v8253
        %v8272 = vmul.f32 %v8265, %v8254
        %v8273 = vmul.f32 %v8265, %v8255
        %v8274 = vmul.f32 %v8265, %v8256
        %v8275 = vmul.f32 %v8265, %v8257
        %v8276 = vmul.f32 %v8265, %v8258
        %v8277 = vmul.f32 %v8265, %v8259
        %v8278 = vmul.f32 %v8265, %v8260
        %v8279 = vmul.f32 %v8265, %v8261
        %v8280 = vmul.f32 %v8265, %v8262
        %v8281 = vmul.f32 %v8265, %v8263
        %s8282 = sld [smem:[#allocation3 + $0x1]]
        %v8283 = vstv %s8282
        %v8284 = vmul.f32 %v8283, %v8248
        %v8285 = vmul.f32 %v8283, %v8249
        %v8286 = vmul.f32 %v8283, %v8250
        %v8287 = vmul.f32 %v8283, %v8251
        %v8288 = vmul.f32 %v8283, %v8252
        %v8289 = vmul.f32 %v8283, %v8253
        %v8290 = vmul.f32 %v8283, %v8254
        %v8291 = vmul.f32 %v8283, %v8255
        %v8292 = vmul.f32 %v8283, %v8256
        %v8293 = vmul.f32 %v8283, %v8257
        %v8294 = vmul.f32 %v8283, %v8258
        %v8295 = vmul.f32 %v8283, %v8259
        %v8296 = vmul.f32 %v8283, %v8260
        %v8297 = vmul.f32 %v8283, %v8261
        %v8298 = vmul.f32 %v8283, %v8262
        %v8299 = vmul.f32 %v8283, %v8263
        %8316 = vrot.lane.b32.xlu0 %v8284, 112
        %v8317 = vpop.permute.xlu0 %8316
        %8318 = vrot.lane.b32.xlu0 %v8285, 112
        %v8319 = vpop.permute.xlu0 %8318
        %8320 = vrot.lane.b32.xlu0 %v8286, 112
        %v8321 = vpop.permute.xlu0 %8320
        %8322 = vrot.lane.b32.xlu0 %v8287, 112
        %v8323 = vpop.permute.xlu0 %8322
        %8324 = vrot.lane.b32.xlu0 %v8288, 112
        %v8325 = vpop.permute.xlu0 %8324
        %8326 = vrot.lane.b32.xlu0 %v8289, 112
        %v8327 = vpop.permute.xlu0 %8326
        %8328 = vrot.lane.b32.xlu0 %v8290, 112
        %v8329 = vpop.permute.xlu0 %8328
        %8330 = vrot.lane.b32.xlu0 %v8291, 112
        %v8331 = vpop.permute.xlu0 %8330
        %8332 = vrot.lane.b32.xlu0 %v8292, 112
        %v8333 = vpop.permute.xlu0 %8332
        %8334 = vrot.lane.b32.xlu0 %v8293, 112
        %v8335 = vpop.permute.xlu0 %8334
        %8336 = vrot.lane.b32.xlu0 %v8294, 112
        %v8337 = vpop.permute.xlu0 %8336
        %8338 = vrot.lane.b32.xlu0 %v8295, 112
        %v8339 = vpop.permute.xlu0 %8338
        %8340 = vrot.lane.b32.xlu0 %v8296, 112
        %v8341 = vpop.permute.xlu0 %8340
        %8342 = vrot.lane.b32.xlu0 %v8297, 112
        %v8343 = vpop.permute.xlu0 %8342
        %8344 = vrot.lane.b32.xlu0 %v8298, 112
        %v8345 = vpop.permute.xlu0 %8344
        %8346 = vrot.lane.b32.xlu0 %v8299, 112
        %v8347 = vpop.permute.xlu0 %8346
        %v8364 = vadd.f32 %v8266, %v8317
        %v8365 = vadd.f32 %v8267, %v8319
        %v8366 = vadd.f32 %v8268, %v8321
        %v8367 = vadd.f32 %v8269, %v8323
        %v8368 = vadd.f32 %v8270, %v8325
        %v8369 = vadd.f32 %v8271, %v8327
        %v8370 = vadd.f32 %v8272, %v8329
        %v8371 = vadd.f32 %v8273, %v8331
        %v8372 = vadd.f32 %v8274, %v8333
        %v8373 = vadd.f32 %v8275, %v8335
        %v8374 = vadd.f32 %v8276, %v8337
        %v8375 = vadd.f32 %v8277, %v8339
        %v8376 = vadd.f32 %v8278, %v8341
        %v8377 = vadd.f32 %v8279, %v8343
        %v8378 = vadd.f32 %v8280, %v8345
        %v8379 = vadd.f32 %v8281, %v8347
        %s8380 = sld [smem:[#allocation3 + $0x2]]
        %v8381 = vstv %s8380
        %v8382 = vmul.f32 %v8381, %v8248
        %v8383 = vmul.f32 %v8381, %v8249
        %v8384 = vmul.f32 %v8381, %v8250
        %v8385 = vmul.f32 %v8381, %v8251
        %v8386 = vmul.f32 %v8381, %v8252
        %v8387 = vmul.f32 %v8381, %v8253
        %v8388 = vmul.f32 %v8381, %v8254
        %v8389 = vmul.f32 %v8381, %v8255
        %v8390 = vmul.f32 %v8381, %v8256
        %v8391 = vmul.f32 %v8381, %v8257
        %v8392 = vmul.f32 %v8381, %v8258
        %v8393 = vmul.f32 %v8381, %v8259
        %v8394 = vmul.f32 %v8381, %v8260
        %v8395 = vmul.f32 %v8381, %v8261
        %v8396 = vmul.f32 %v8381, %v8262
        %v8397 = vmul.f32 %v8381, %v8263
        %8414 = vrot.lane.b32.xlu0 %v8382, 96
        %v8415 = vpop.permute.xlu0 %8414
        %8416 = vrot.lane.b32.xlu0 %v8383, 96
        %v8417 = vpop.permute.xlu0 %8416
        %8418 = vrot.lane.b32.xlu0 %v8384, 96
        %v8419 = vpop.permute.xlu0 %8418
        %8420 = vrot.lane.b32.xlu0 %v8385, 96
        %v8421 = vpop.permute.xlu0 %8420
        %8422 = vrot.lane.b32.xlu0 %v8386, 96
        %v8423 = vpop.permute.xlu0 %8422
        %8424 = vrot.lane.b32.xlu0 %v8387, 96
        %v8425 = vpop.permute.xlu0 %8424
        %8426 = vrot.lane.b32.xlu0 %v8388, 96
        %v8427 = vpop.permute.xlu0 %8426
        %8428 = vrot.lane.b32.xlu0 %v8389, 96
        %v8429 = vpop.permute.xlu0 %8428
        %8430 = vrot.lane.b32.xlu0 %v8390, 96
        %v8431 = vpop.permute.xlu0 %8430
        %8432 = vrot.lane.b32.xlu0 %v8391, 96
        %v8433 = vpop.permute.xlu0 %8432
        %8434 = vrot.lane.b32.xlu0 %v8392, 96
        %v8435 = vpop.permute.xlu0 %8434
        %8436 = vrot.lane.b32.xlu0 %v8393, 96
        %v8437 = vpop.permute.xlu0 %8436
        %8438 = vrot.lane.b32.xlu0 %v8394, 96
        %v8439 = vpop.permute.xlu0 %8438
        %8440 = vrot.lane.b32.xlu0 %v8395, 96
        %v8441 = vpop.permute.xlu0 %8440
        %8442 = vrot.lane.b32.xlu0 %v8396, 96
        %v8443 = vpop.permute.xlu0 %8442
        %8444 = vrot.lane.b32.xlu0 %v8397, 96
        %v8445 = vpop.permute.xlu0 %8444
        %v8462 = vadd.f32 %v8364, %v8415
        %v8463 = vadd.f32 %v8365, %v8417
        %v8464 = vadd.f32 %v8366, %v8419
        %v8465 = vadd.f32 %v8367, %v8421
        %v8466 = vadd.f32 %v8368, %v8423
        %v8467 = vadd.f32 %v8369, %v8425
        %v8468 = vadd.f32 %v8370, %v8427
        %v8469 = vadd.f32 %v8371, %v8429
        %v8470 = vadd.f32 %v8372, %v8431
        %v8471 = vadd.f32 %v8373, %v8433
        %v8472 = vadd.f32 %v8374, %v8435
        %v8473 = vadd.f32 %v8375, %v8437
        %v8474 = vadd.f32 %v8376, %v8439
        %v8475 = vadd.f32 %v8377, %v8441
        %v8476 = vadd.f32 %v8378, %v8443
        %v8477 = vadd.f32 %v8379, %v8445
        %s8478 = sld [smem:[#allocation3 + $0x3]]
        %v8479 = vstv %s8478
        %v8480 = vmul.f32 %v8479, %v8248
        %v8481 = vmul.f32 %v8479, %v8249
        %v8482 = vmul.f32 %v8479, %v8250
        %v8483 = vmul.f32 %v8479, %v8251
        %v8484 = vmul.f32 %v8479, %v8252
        %v8485 = vmul.f32 %v8479, %v8253
        %v8486 = vmul.f32 %v8479, %v8254
        %v8487 = vmul.f32 %v8479, %v8255
        %v8488 = vmul.f32 %v8479, %v8256
        %v8489 = vmul.f32 %v8479, %v8257
        %v8490 = vmul.f32 %v8479, %v8258
        %v8491 = vmul.f32 %v8479, %v8259
        %v8492 = vmul.f32 %v8479, %v8260
        %v8493 = vmul.f32 %v8479, %v8261
        %v8494 = vmul.f32 %v8479, %v8262
        %v8495 = vmul.f32 %v8479, %v8263
        %8512 = vrot.lane.b32.xlu0 %v8480, 80
        %v8513 = vpop.permute.xlu0 %8512
        %8514 = vrot.lane.b32.xlu0 %v8481, 80
        %v8515 = vpop.permute.xlu0 %8514
        %8516 = vrot.lane.b32.xlu0 %v8482, 80
        %v8517 = vpop.permute.xlu0 %8516
        %8518 = vrot.lane.b32.xlu0 %v8483, 80
        %v8519 = vpop.permute.xlu0 %8518
        %8520 = vrot.lane.b32.xlu0 %v8484, 80
        %v8521 = vpop.permute.xlu0 %8520
        %8522 = vrot.lane.b32.xlu0 %v8485, 80
        %v8523 = vpop.permute.xlu0 %8522
        %8524 = vrot.lane.b32.xlu0 %v8486, 80
        %v8525 = vpop.permute.xlu0 %8524
        %8526 = vrot.lane.b32.xlu0 %v8487, 80
        %v8527 = vpop.permute.xlu0 %8526
        %8528 = vrot.lane.b32.xlu0 %v8488, 80
        %v8529 = vpop.permute.xlu0 %8528
        %8530 = vrot.lane.b32.xlu0 %v8489, 80
        %v8531 = vpop.permute.xlu0 %8530
        %8532 = vrot.lane.b32.xlu0 %v8490, 80
        %v8533 = vpop.permute.xlu0 %8532
        %8534 = vrot.lane.b32.xlu0 %v8491, 80
        %v8535 = vpop.permute.xlu0 %8534
        %8536 = vrot.lane.b32.xlu0 %v8492, 80
        %v8537 = vpop.permute.xlu0 %8536
        %8538 = vrot.lane.b32.xlu0 %v8493, 80
        %v8539 = vpop.permute.xlu0 %8538
        %8540 = vrot.lane.b32.xlu0 %v8494, 80
        %v8541 = vpop.permute.xlu0 %8540
        %8542 = vrot.lane.b32.xlu0 %v8495, 80
        %v8543 = vpop.permute.xlu0 %8542
        %v8560 = vadd.f32 %v8462, %v8513
        %v8561 = vadd.f32 %v8463, %v8515
        %v8562 = vadd.f32 %v8464, %v8517
        %v8563 = vadd.f32 %v8465, %v8519
        %v8564 = vadd.f32 %v8466, %v8521
        %v8565 = vadd.f32 %v8467, %v8523
        %v8566 = vadd.f32 %v8468, %v8525
        %v8567 = vadd.f32 %v8469, %v8527
        %v8568 = vadd.f32 %v8470, %v8529
        %v8569 = vadd.f32 %v8471, %v8531
        %v8570 = vadd.f32 %v8472, %v8533
        %v8571 = vadd.f32 %v8473, %v8535
        %v8572 = vadd.f32 %v8474, %v8537
        %v8573 = vadd.f32 %v8475, %v8539
        %v8574 = vadd.f32 %v8476, %v8541
        %v8575 = vadd.f32 %v8477, %v8543
        %v8576 = vsub.f32 0.0, %v8560
        %v8577 = vsub.f32 0.0, %v8561
        %v8578 = vsub.f32 0.0, %v8562
        %v8579 = vsub.f32 0.0, %v8563
        %v8580 = vsub.f32 0.0, %v8564
        %v8581 = vsub.f32 0.0, %v8565
        %v8582 = vsub.f32 0.0, %v8566
        %v8583 = vsub.f32 0.0, %v8567
        %v8584 = vsub.f32 0.0, %v8568
        %v8585 = vsub.f32 0.0, %v8569
        %v8586 = vsub.f32 0.0, %v8570
        %v8587 = vsub.f32 0.0, %v8571
        %v8588 = vsub.f32 0.0, %v8572
        %v8589 = vsub.f32 0.0, %v8573
        %v8590 = vsub.f32 0.0, %v8574
        %v8591 = vsub.f32 0.0, %v8575
        %v8592 = vmul.f32 %v8576, 1.442695
        %v8593 = vpow.pop %v8592
        %v8594 = vmul.f32 %v8577, 1.442695
        %v8595 = vpow.pop %v8594
        %v8596 = vmul.f32 %v8578, 1.442695
        %v8597 = vpow.pop %v8596
        %v8598 = vmul.f32 %v8579, 1.442695
        %v8599 = vpow.pop %v8598
        %v8600 = vmul.f32 %v8580, 1.442695
        %v8601 = vpow.pop %v8600
        %v8602 = vmul.f32 %v8581, 1.442695
        %v8603 = vpow.pop %v8602
        %v8604 = vmul.f32 %v8582, 1.442695
        %v8605 = vpow.pop %v8604
        %v8606 = vmul.f32 %v8583, 1.442695
        %v8607 = vpow.pop %v8606
        %v8608 = vmul.f32 %v8584, 1.442695
        %v8609 = vpow.pop %v8608
        %v8610 = vmul.f32 %v8585, 1.442695
        %v8611 = vpow.pop %v8610
        %v8612 = vmul.f32 %v8586, 1.442695
        %v8613 = vpow.pop %v8612
        %v8614 = vmul.f32 %v8587, 1.442695
        %v8615 = vpow.pop %v8614
        %v8616 = vmul.f32 %v8588, 1.442695
        %v8617 = vpow.pop %v8616
        %v8618 = vmul.f32 %v8589, 1.442695
        %v8619 = vpow.pop %v8618
        %v8620 = vmul.f32 %v8590, 1.442695
        %v8621 = vpow.pop %v8620
        %v8622 = vmul.f32 %v8591, 1.442695
        %v8623 = vpow.pop %v8622
        %v8624 = vadd.f32 %v8593, 1.0
        %v8625 = vadd.f32 %v8595, 1.0
        %v8626 = vadd.f32 %v8597, 1.0
        %v8627 = vadd.f32 %v8599, 1.0
        %v8628 = vadd.f32 %v8601, 1.0
        %v8629 = vadd.f32 %v8603, 1.0
        %v8630 = vadd.f32 %v8605, 1.0
        %v8631 = vadd.f32 %v8607, 1.0
        %v8632 = vadd.f32 %v8609, 1.0
        %v8633 = vadd.f32 %v8611, 1.0
        %v8634 = vadd.f32 %v8613, 1.0
        %v8635 = vadd.f32 %v8615, 1.0
        %v8636 = vadd.f32 %v8617, 1.0
        %v8637 = vadd.f32 %v8619, 1.0
        %v8638 = vadd.f32 %v8621, 1.0
        %v8639 = vadd.f32 %v8623, 1.0
        %v8640 = vrcp.pop %v8624
        %v8641 = vmul.f32 %v8624, %v8640
        %v8642 = vsub.f32 1.0, %v8641
        %v8643 = vmul.f32 %v8640, %v8642
        %v8644 = vadd.f32 %v8640, %v8643
        %vm8645 = vweird.f32 %v8624
        %vm8646 = vweird.f32 %v8640
        %vm8647 = vmor %vm8645, %vm8646
        %v8648 = vsel %vm8647, %v8640, %v8644
        %v8649 = vand.u32 2147483647, %v8624
        %vm8650 = vcmp.eq.f32.partialorder %v8649, 8.507059e+37
        %v8651 = vand.u32 %v8624, 2147483648
        %v8652 = vor.u32 1.1754944e-38, %v8651
        %v8653 = vsel %vm8650, %v8652, %v8648
        %v8654 = vrcp.pop %v8625
        %v8655 = vmul.f32 %v8625, %v8654
        %v8656 = vsub.f32 1.0, %v8655
        %v8657 = vmul.f32 %v8654, %v8656
        %v8658 = vadd.f32 %v8654, %v8657
        %vm8659 = vweird.f32 %v8625
        %vm8660 = vweird.f32 %v8654
        %vm8661 = vmor %vm8659, %vm8660
        %v8662 = vsel %vm8661, %v8654, %v8658
        %v8663 = vand.u32 2147483647, %v8625
        %vm8664 = vcmp.eq.f32.partialorder %v8663, 8.507059e+37
        %v8665 = vand.u32 %v8625, 2147483648
        %v8666 = vor.u32 1.1754944e-38, %v8665
        %v8667 = vsel %vm8664, %v8666, %v8662
        %v8668 = vrcp.pop %v8626
        %v8669 = vmul.f32 %v8626, %v8668
        %v8670 = vsub.f32 1.0, %v8669
        %v8671 = vmul.f32 %v8668, %v8670
        %v8672 = vadd.f32 %v8668, %v8671
        %vm8673 = vweird.f32 %v8626
        %vm8674 = vweird.f32 %v8668
        %vm8675 = vmor %vm8673, %vm8674
        %v8676 = vsel %vm8675, %v8668, %v8672
        %v8677 = vand.u32 2147483647, %v8626
        %vm8678 = vcmp.eq.f32.partialorder %v8677, 8.507059e+37
        %v8679 = vand.u32 %v8626, 2147483648
        %v8680 = vor.u32 1.1754944e-38, %v8679
        %v8681 = vsel %vm8678, %v8680, %v8676
        %v8682 = vrcp.pop %v8627
        %v8683 = vmul.f32 %v8627, %v8682
        %v8684 = vsub.f32 1.0, %v8683
        %v8685 = vmul.f32 %v8682, %v8684
        %v8686 = vadd.f32 %v8682, %v8685
        %vm8687 = vweird.f32 %v8627
        %vm8688 = vweird.f32 %v8682
        %vm8689 = vmor %vm8687, %vm8688
        %v8690 = vsel %vm8689, %v8682, %v8686
        %v8691 = vand.u32 2147483647, %v8627
        %vm8692 = vcmp.eq.f32.partialorder %v8691, 8.507059e+37
        %v8693 = vand.u32 %v8627, 2147483648
        %v8694 = vor.u32 1.1754944e-38, %v8693
        %v8695 = vsel %vm8692, %v8694, %v8690
        %v8696 = vrcp.pop %v8628
        %v8697 = vmul.f32 %v8628, %v8696
        %v8698 = vsub.f32 1.0, %v8697
        %v8699 = vmul.f32 %v8696, %v8698
        %v8700 = vadd.f32 %v8696, %v8699
        %vm8701 = vweird.f32 %v8628
        %vm8702 = vweird.f32 %v8696
        %vm8703 = vmor %vm8701, %vm8702
        %v8704 = vsel %vm8703, %v8696, %v8700
        %v8705 = vand.u32 2147483647, %v8628
        %vm8706 = vcmp.eq.f32.partialorder %v8705, 8.507059e+37
        %v8707 = vand.u32 %v8628, 2147483648
        %v8708 = vor.u32 1.1754944e-38, %v8707
        %v8709 = vsel %vm8706, %v8708, %v8704
        %v8710 = vrcp.pop %v8629
        %v8711 = vmul.f32 %v8629, %v8710
        %v8712 = vsub.f32 1.0, %v8711
        %v8713 = vmul.f32 %v8710, %v8712
        %v8714 = vadd.f32 %v8710, %v8713
        %vm8715 = vweird.f32 %v8629
        %vm8716 = vweird.f32 %v8710
        %vm8717 = vmor %vm8715, %vm8716
        %v8718 = vsel %vm8717, %v8710, %v8714
        %v8719 = vand.u32 2147483647, %v8629
        %vm8720 = vcmp.eq.f32.partialorder %v8719, 8.507059e+37
        %v8721 = vand.u32 %v8629, 2147483648
        %v8722 = vor.u32 1.1754944e-38, %v8721
        %v8723 = vsel %vm8720, %v8722, %v8718
        %v8724 = vrcp.pop %v8630
        %v8725 = vmul.f32 %v8630, %v8724
        %v8726 = vsub.f32 1.0, %v8725
        %v8727 = vmul.f32 %v8724, %v8726
        %v8728 = vadd.f32 %v8724, %v8727
        %vm8729 = vweird.f32 %v8630
        %vm8730 = vweird.f32 %v8724
        %vm8731 = vmor %vm8729, %vm8730
        %v8732 = vsel %vm8731, %v8724, %v8728
        %v8733 = vand.u32 2147483647, %v8630
        %vm8734 = vcmp.eq.f32.partialorder %v8733, 8.507059e+37
        %v8735 = vand.u32 %v8630, 2147483648
        %v8736 = vor.u32 1.1754944e-38, %v8735
        %v8737 = vsel %vm8734, %v8736, %v8732
        %v8738 = vrcp.pop %v8631
        %v8739 = vmul.f32 %v8631, %v8738
        %v8740 = vsub.f32 1.0, %v8739
        %v8741 = vmul.f32 %v8738, %v8740
        %v8742 = vadd.f32 %v8738, %v8741
        %vm8743 = vweird.f32 %v8631
        %vm8744 = vweird.f32 %v8738
        %vm8745 = vmor %vm8743, %vm8744
        %v8746 = vsel %vm8745, %v8738, %v8742
        %v8747 = vand.u32 2147483647, %v8631
        %vm8748 = vcmp.eq.f32.partialorder %v8747, 8.507059e+37
        %v8749 = vand.u32 %v8631, 2147483648
        %v8750 = vor.u32 1.1754944e-38, %v8749
        %v8751 = vsel %vm8748, %v8750, %v8746
        %v8752 = vrcp.pop %v8632
        %v8753 = vmul.f32 %v8632, %v8752
        %v8754 = vsub.f32 1.0, %v8753
        %v8755 = vmul.f32 %v8752, %v8754
        %v8756 = vadd.f32 %v8752, %v8755
        %vm8757 = vweird.f32 %v8632
        %vm8758 = vweird.f32 %v8752
        %vm8759 = vmor %vm8757, %vm8758
        %v8760 = vsel %vm8759, %v8752, %v8756
        %v8761 = vand.u32 2147483647, %v8632
        %vm8762 = vcmp.eq.f32.partialorder %v8761, 8.507059e+37
        %v8763 = vand.u32 %v8632, 2147483648
        %v8764 = vor.u32 1.1754944e-38, %v8763
        %v8765 = vsel %vm8762, %v8764, %v8760
        %v8766 = vrcp.pop %v8633
        %v8767 = vmul.f32 %v8633, %v8766
        %v8768 = vsub.f32 1.0, %v8767
        %v8769 = vmul.f32 %v8766, %v8768
        %v8770 = vadd.f32 %v8766, %v8769
        %vm8771 = vweird.f32 %v8633
        %vm8772 = vweird.f32 %v8766
        %vm8773 = vmor %vm8771, %vm8772
        %v8774 = vsel %vm8773, %v8766, %v8770
        %v8775 = vand.u32 2147483647, %v8633
        %vm8776 = vcmp.eq.f32.partialorder %v8775, 8.507059e+37
        %v8777 = vand.u32 %v8633, 2147483648
        %v8778 = vor.u32 1.1754944e-38, %v8777
        %v8779 = vsel %vm8776, %v8778, %v8774
        %v8780 = vrcp.pop %v8634
        %v8781 = vmul.f32 %v8634, %v8780
        %v8782 = vsub.f32 1.0, %v8781
        %v8783 = vmul.f32 %v8780, %v8782
        %v8784 = vadd.f32 %v8780, %v8783
        %vm8785 = vweird.f32 %v8634
        %vm8786 = vweird.f32 %v8780
        %vm8787 = vmor %vm8785, %vm8786
        %v8788 = vsel %vm8787, %v8780, %v8784
        %v8789 = vand.u32 2147483647, %v8634
        %vm8790 = vcmp.eq.f32.partialorder %v8789, 8.507059e+37
        %v8791 = vand.u32 %v8634, 2147483648
        %v8792 = vor.u32 1.1754944e-38, %v8791
        %v8793 = vsel %vm8790, %v8792, %v8788
        %v8794 = vrcp.pop %v8635
        %v8795 = vmul.f32 %v8635, %v8794
        %v8796 = vsub.f32 1.0, %v8795
        %v8797 = vmul.f32 %v8794, %v8796
        %v8798 = vadd.f32 %v8794, %v8797
        %vm8799 = vweird.f32 %v8635
        %vm8800 = vweird.f32 %v8794
        %vm8801 = vmor %vm8799, %vm8800
        %v8802 = vsel %vm8801, %v8794, %v8798
        %v8803 = vand.u32 2147483647, %v8635
        %vm8804 = vcmp.eq.f32.partialorder %v8803, 8.507059e+37
        %v8805 = vand.u32 %v8635, 2147483648
        %v8806 = vor.u32 1.1754944e-38, %v8805
        %v8807 = vsel %vm8804, %v8806, %v8802
        %v8808 = vrcp.pop %v8636
        %v8809 = vmul.f32 %v8636, %v8808
        %v8810 = vsub.f32 1.0, %v8809
        %v8811 = vmul.f32 %v8808, %v8810
        %v8812 = vadd.f32 %v8808, %v8811
        %vm8813 = vweird.f32 %v8636
        %vm8814 = vweird.f32 %v8808
        %vm8815 = vmor %vm8813, %vm8814
        %v8816 = vsel %vm8815, %v8808, %v8812
        %v8817 = vand.u32 2147483647, %v8636
        %vm8818 = vcmp.eq.f32.partialorder %v8817, 8.507059e+37
        %v8819 = vand.u32 %v8636, 2147483648
        %v8820 = vor.u32 1.1754944e-38, %v8819
        %v8821 = vsel %vm8818, %v8820, %v8816
        %v8822 = vrcp.pop %v8637
        %v8823 = vmul.f32 %v8637, %v8822
        %v8824 = vsub.f32 1.0, %v8823
        %v8825 = vmul.f32 %v8822, %v8824
        %v8826 = vadd.f32 %v8822, %v8825
        %vm8827 = vweird.f32 %v8637
        %vm8828 = vweird.f32 %v8822
        %vm8829 = vmor %vm8827, %vm8828
        %v8830 = vsel %vm8829, %v8822, %v8826
        %v8831 = vand.u32 2147483647, %v8637
        %vm8832 = vcmp.eq.f32.partialorder %v8831, 8.507059e+37
        %v8833 = vand.u32 %v8637, 2147483648
        %v8834 = vor.u32 1.1754944e-38, %v8833
        %v8835 = vsel %vm8832, %v8834, %v8830
        %v8836 = vrcp.pop %v8638
        %v8837 = vmul.f32 %v8638, %v8836
        %v8838 = vsub.f32 1.0, %v8837
        %v8839 = vmul.f32 %v8836, %v8838
        %v8840 = vadd.f32 %v8836, %v8839
        %vm8841 = vweird.f32 %v8638
        %vm8842 = vweird.f32 %v8836
        %vm8843 = vmor %vm8841, %vm8842
        %v8844 = vsel %vm8843, %v8836, %v8840
        %v8845 = vand.u32 2147483647, %v8638
        %vm8846 = vcmp.eq.f32.partialorder %v8845, 8.507059e+37
        %v8847 = vand.u32 %v8638, 2147483648
        %v8848 = vor.u32 1.1754944e-38, %v8847
        %v8849 = vsel %vm8846, %v8848, %v8844
        %v8850 = vrcp.pop %v8639
        %v8851 = vmul.f32 %v8639, %v8850
        %v8852 = vsub.f32 1.0, %v8851
        %v8853 = vmul.f32 %v8850, %v8852
        %v8854 = vadd.f32 %v8850, %v8853
        %vm8855 = vweird.f32 %v8639
        %vm8856 = vweird.f32 %v8850
        %vm8857 = vmor %vm8855, %vm8856
        %v8858 = vsel %vm8857, %v8850, %v8854
        %v8859 = vand.u32 2147483647, %v8639
        %vm8860 = vcmp.eq.f32.partialorder %v8859, 8.507059e+37
        %v8861 = vand.u32 %v8639, 2147483648
        %v8862 = vor.u32 1.1754944e-38, %v8861
        %v8863 = vsel %vm8860, %v8862, %v8858
        %vm8864 = vcmask 130048
        %8865 = vst.msk [vmem:[%s206] sm:$0xff] %vm8864, %v8653
        %8866 = vst.msk [vmem:[%s206 + $0x8] sm:$0xff] %vm8864, %v8667
        %8867 = vst.msk [vmem:[%s206 + $0x10] sm:$0xff] %vm8864, %v8681
        %8868 = vst.msk [vmem:[%s206 + $0x18] sm:$0xff] %vm8864, %v8695
        %8869 = vst.msk [vmem:[%s206 + $0x20] sm:$0xff] %vm8864, %v8709
        %8870 = vst.msk [vmem:[%s206 + $0x28] sm:$0xff] %vm8864, %v8723
        %8871 = vst.msk [vmem:[%s206 + $0x30] sm:$0xff] %vm8864, %v8737
        %8872 = vst.msk [vmem:[%s206 + $0x38] sm:$0xff] %vm8864, %v8751
        %8873 = vst.msk [vmem:[%s206 + $0x40] sm:$0xff] %vm8864, %v8765
        %8874 = vst.msk [vmem:[%s206 + $0x48] sm:$0xff] %vm8864, %v8779
        %8875 = vst.msk [vmem:[%s206 + $0x50] sm:$0xff] %vm8864, %v8793
        %8876 = vst.msk [vmem:[%s206 + $0x58] sm:$0xff] %vm8864, %v8807
        %8877 = vst.msk [vmem:[%s206 + $0x60] sm:$0xff] %vm8864, %v8821
        %8878 = vst.msk [vmem:[%s206 + $0x68] sm:$0xff] %vm8864, %v8835
        %8879 = vst.msk [vmem:[%s206 + $0x70] sm:$0xff] %vm8864, %v8849
        %8880 = vst.msk [vmem:[%s206 + $0x78] sm:$0xff] %vm8864, %v8863
        %s8881 = smul.u32 16, %s20
        %p8882 = scmp.lt.s32.totalorder %s19, 1
        %s8883 = scalar_select %p8882, %s19, 1
        %p8884 = scmp.lt.s32.totalorder %s8881, 31
        %s8885 = scalar_select %p8884, %s8881, 31
        %s8886 = smul.addr %s8883, 32
        %s8887 = sadd.s32 %s8885, %s8886
        %s8888 = smul.addr %s8887, 8
        %s8889 = scalar_lea.vmem %s3, %s8888
        // Predicated region
        $region37: #{attention_forward.4} parent=31 // pred_check
          %p8890 = pneg %p115
        $region38: #{attention_forward.4} parent=31 // pred_check_branch
          %8892 = sbr.rel (%p8890) target = $region40
        $region39: #{attention_forward.4} parent=31 // pred_region
          %s8893 = smul.u32 16, %s20
        $region40: #{attention_forward.4} parent=31 // pred_fallthru
          _
      $region32: #{attention_forward.4} parent=5 // pred_fallthru
        _
      %p8894 = scmp.le.s32.totalorder 2, %s10
      // Predicated region
      $region41: #{attention_forward.4} parent=5 // pred_check
        %p8895 = pneg %p8894
      $region42: #{attention_forward.4} parent=5 // pred_check_branch
        %8897 = sbr.rel (%p8895) target = $region44
      $region43: #{attention_forward.4} parent=5 // pred_region
        %s8898 = ssub.s32 %s10, 2
        // Predicated region
        $region45: #{attention_forward.4} parent=43 // pred_check
          %p8899 = pneg %p121
        $region46: #{attention_forward.4} parent=43 // pred_check_branch
          %8901 = sbr.rel (%p8899) target = $region48
        $region47: #{attention_forward.4} parent=43 // pred_region
          %s8902 = smul.u32 16, %s22
          %p8903 = scmp.lt.s32.totalorder %s21, 1
          %s8904 = scalar_select %p8903, %s21, 1
          %p8905 = scmp.lt.s32.totalorder %s8902, 31
          %s8906 = scalar_select %p8905, %s8902, 31
          %s8907 = smul.addr %s8904, 32
          %s8908 = sadd.s32 %s8906, %s8907
          %s8909 = smul.addr %s8908, 8
          %s8910 = scalar_lea.vmem %s3, %s8909
        $region48: #{attention_forward.4} parent=43 // pred_fallthru
          _
      $region44: #{attention_forward.4} parent=5 // pred_fallthru
        _
    $region6: #{attention_forward.4} parent=1 // loop_footer
      %s14 = sadd.s32 1, %s10
    $region7: #{attention_forward.4} parent=1 // loop_footer_branch
      %9 = sbr.rel target = $region3
    $region8: #{attention_forward.4} parent=1 // loop_exit
      _
    %8911 = vsyncpa [#allocation4], 1
    %s8912 = scalar_lea.sflag [#allocation4], 1
    %8913 = vsyncpa %s8912, 1

</llo_original>
